<compile_context>
chip_gen: v7x
topology: tpu7x:2x2x1
jax: 0.10.0
libtpu: 0.0.40
codegen_flags: <defaults>
</compile_context>

<pallas_src>
import jax
import jax.numpy as jnp
from jax.experimental import pallas as pl
from jax.experimental.pallas import tpu as pltpu

EPS = 1e-5
TB = 128          # batch tile (rows per grid step)
OUT_PAD = 128     # classifier padded to a full 128-lane tile


def _mlp_kernel(x_ref, w1_ref, b1_ref, w2_ref, b2_ref, w3_ref, b3_ref, o_ref):
    # x_ref: (TB, 3072) bf16; weights bf16 (in, out); biases f32 (1, D).
    x = x_ref[...]

    # linear1 (+ folded BN1) + relu
    h = jnp.dot(x, w1_ref[...], preferred_element_type=jnp.float32) + b1_ref[...]
    h = jnp.maximum(h, 0.0)                                   # (TB, 512) f32

    # linear2 (+ folded BN2) + relu
    h = jnp.dot(h.astype(jnp.bfloat16), w2_ref[...],
                preferred_element_type=jnp.float32) + b2_ref[...]
    h = jnp.maximum(h, 0.0)                                   # (TB, 256) f32

    # dropout: identity in eval mode

    # linear3 (lane-dense, 128-wide padded output)
    o_ref[...] = jnp.dot(h.astype(jnp.bfloat16), w3_ref[...],
                         preferred_element_type=jnp.float32) + b3_ref[...]


def _fold_params(params):
    """Fold eval-mode BN into the linear layers; pad classifier to 128 lanes.

    Returns bf16 weights (in, out) and f32 biases (1, D) ready for the kernel.
    """
    s1 = params["g1"] * jax.lax.rsqrt(params["v1"] + EPS)        # (1, 512)
    w1 = (params["w1"] * s1).astype(jnp.bfloat16)                # (3072, 512)
    b1 = ((params["b1"] - params["m1"]) * s1 + params["be1"]).astype(jnp.float32)

    s2 = params["g2"] * jax.lax.rsqrt(params["v2"] + EPS)        # (1, 256)
    w2 = (params["w2"] * s2).astype(jnp.bfloat16)                # (512, 256)
    b2 = ((params["b2"] - params["m2"]) * s2 + params["be2"]).astype(jnp.float32)

    classes = params["w3"].shape[1]
    w3 = jnp.zeros((256, OUT_PAD), jnp.float32).at[:, :classes].set(params["w3"])
    b3 = jnp.zeros((1, OUT_PAD), jnp.float32).at[:, :classes].set(params["b3"])
    w3 = w3.astype(jnp.bfloat16)

    return w1, b1, w2, b2, w3, b3


def mlp_forward(x, params):
    """x: (B, 3, 32, 32) float32 -> (B, classes) float32 (eval-mode forward)."""
    B = x.shape[0]
    classes = params["w3"].shape[1]

    w1, b1, w2, b2, w3, b3 = _fold_params(params)

    # Flatten, cast to bf16 for the MXU, and pad batch to a multiple of TB.
    x2d = x.reshape(B, -1).astype(jnp.bfloat16)                  # (B, 3072)
    n_tiles = pl.cdiv(B, TB)
    B_pad = n_tiles * TB
    if B_pad != B:
        x2d = jnp.pad(x2d, ((0, B_pad - B), (0, 0)))

    grid_spec = pltpu.PrefetchScalarGridSpec(
        num_scalar_prefetch=0,
        grid=(n_tiles,),
        in_specs=[
            pl.BlockSpec((TB, 3072), lambda i: (i, 0)),          # x tile
            pl.BlockSpec((3072, 512), lambda i: (0, 0)),         # w1 (resident)
            pl.BlockSpec((1, 512), lambda i: (0, 0)),            # b1
            pl.BlockSpec((512, 256), lambda i: (0, 0)),          # w2
            pl.BlockSpec((1, 256), lambda i: (0, 0)),            # b2
            pl.BlockSpec((256, OUT_PAD), lambda i: (0, 0)),      # w3 (padded)
            pl.BlockSpec((1, OUT_PAD), lambda i: (0, 0)),        # b3
        ],
        out_specs=pl.BlockSpec((TB, OUT_PAD), lambda i: (i, 0)),
    )

    out = pl.pallas_call(
        _mlp_kernel,
        out_shape=jax.ShapeDtypeStruct((B_pad, OUT_PAD), jnp.float32),
        grid_spec=grid_spec,
        compiler_params=pltpu.CompilerParams(
            dimension_semantics=("parallel",)),
    )(x2d, w1, b1, w2, b2, w3, b3)

    return out[:B, :classes]


def make_params(key, classes=10):
    """Deterministic synthetic parameters matching the module's shapes.

    PyTorch nn.Linear stores weight as (out, in); we keep the transposed
    (in, out) version. BatchNorm params kept as (1, D) row vectors.
    """
    ks = jax.random.split(key, 16)
    p = {}
    # linear1: 3072 -> 512
    p["w1"] = jax.random.normal(ks[0], (3072, 512), jnp.float32) * 0.02
    p["b1"] = jax.random.normal(ks[1], (1, 512), jnp.float32) * 0.02
    # batchnorm1
    p["g1"] = 1.0 + 0.1 * jax.random.normal(ks[2], (1, 512), jnp.float32)
    p["be1"] = 0.1 * jax.random.normal(ks[3], (1, 512), jnp.float32)
    p["m1"] = 0.1 * jax.random.normal(ks[4], (1, 512), jnp.float32)
    p["v1"] = 1.0 + 0.1 * jax.random.uniform(ks[5], (1, 512), jnp.float32)
    # linear2: 512 -> 256
    p["w2"] = jax.random.normal(ks[6], (512, 256), jnp.float32) * 0.02
    p["b2"] = jax.random.normal(ks[7], (1, 256), jnp.float32) * 0.02
    # batchnorm2
    p["g2"] = 1.0 + 0.1 * jax.random.normal(ks[8], (1, 256), jnp.float32)
    p["be2"] = 0.1 * jax.random.normal(ks[9], (1, 256), jnp.float32)
    p["m2"] = 0.1 * jax.random.normal(ks[10], (1, 256), jnp.float32)
    p["v2"] = 1.0 + 0.1 * jax.random.uniform(ks[11], (1, 256), jnp.float32)
    # linear3: 256 -> classes
    p["w3"] = jax.random.normal(ks[12], (256, classes), jnp.float32) * 0.02
    p["b3"] = jax.random.normal(ks[13], (1, classes), jnp.float32) * 0.02
    return p


def _reference_f32(x, p):
    """Pure-JAX f32 reference of the original eval-mode module."""
    h = x.reshape(x.shape[0], -1)
    h = h @ p["w1"] + p["b1"]
    h = (h - p["m1"]) / jnp.sqrt(p["v1"] + EPS) * p["g1"] + p["be1"]
    h = jnp.maximum(h, 0.0)
    h = h @ p["w2"] + p["b2"]
    h = (h - p["m2"]) / jnp.sqrt(p["v2"] + EPS) * p["g2"] + p["be2"]
    h = jnp.maximum(h, 0.0)
    return h @ p["w3"] + p["b3"]


def _reference_folded_bf16(x, params):
    """Reference using the same folded/bf16 weights the kernel sees."""
    w1, b1, w2, b2, w3, b3 = _fold_params(params)
    classes = params["w3"].shape[1]
    h = x.reshape(x.shape[0], -1).astype(jnp.bfloat16)
    h = jnp.dot(h, w1, preferred_element_type=jnp.float32) + b1
    h = jnp.maximum(h, 0.0)
    h = jnp.dot(h.astype(jnp.bfloat16), w2, preferred_element_type=jnp.float32) + b2
    h = jnp.maximum(h, 0.0)
    out = jnp.dot(h.astype(jnp.bfloat16), w3, preferred_element_type=jnp.float32) + b3
    return out[:, :classes]


if __name__ == "__main__":
    key = jax.random.PRNGKey(0)
    k_x, k_p = jax.random.split(key)

    B, classes = 8, 10
    # Forward implies 3*32*32 = 3072 flattened features (linear1 is 3072->512).
    x = jax.random.normal(k_x, (B, 3, 32, 32), jnp.float32)
    params = make_params(k_p, classes=classes)

    out = mlp_forward(x, params)
    out = jax.block_until_ready(out)
    assert out.shape == (B, classes), out.shape

    # Exactness check vs a reference with identical (folded, bf16) numerics.
    ref_bf16 = _reference_folded_bf16(x, params)
    assert jnp.allclose(out, ref_bf16, atol=1e-4, rtol=1e-4), \
        "mismatch vs folded-bf16 reference"

    # Module-semantics check vs the full-f32 eval-mode forward (bf16 tolerance).
    ref_f32 = _reference_f32(x, params)
    assert jnp.allclose(out, ref_f32, atol=5e-2, rtol=5e-2), \
        "mismatch vs f32 reference beyond bf16 tolerance"

    print("KERNEL_OK")
</pallas_src>

<mosaic_0001>
module attributes {stable_mosaic.version = 11 : i64} {
  func.func @_mlp_kernel(%arg0: i32, %arg1: memref<128x3072xbf16, #tpu.memory_space<vmem>>, %arg2: memref<3072x512xbf16, #tpu.memory_space<vmem>>, %arg3: memref<1x512xf32, #tpu.memory_space<vmem>>, %arg4: memref<512x256xbf16, #tpu.memory_space<vmem>>, %arg5: memref<1x256xf32, #tpu.memory_space<vmem>>, %arg6: memref<256x128xbf16, #tpu.memory_space<vmem>>, %arg7: memref<1x128xf32, #tpu.memory_space<vmem>>, %arg8: memref<128x128xf32, #tpu.memory_space<vmem>>) attributes {dimension_semantics = [#tpu.dimension_semantics<parallel>], iteration_bounds = array<i64: 1>, scalar_prefetch = 0 : i64, scratch_operands = 0 : i64, tpu.core_type = #tpu.core_type<tc>, window_params = [{transform_indices = @transform_0, window_bounds = array<i64: 128, 3072>}, {pipeline_mode = #tpu.pipeline_mode<synchronous>, transform_indices = @transform_1, window_bounds = array<i64: 3072, 512>}, {pipeline_mode = #tpu.pipeline_mode<synchronous>, transform_indices = @transform_2, window_bounds = array<i64: 1, 512>}, {pipeline_mode = #tpu.pipeline_mode<synchronous>, transform_indices = @transform_3, window_bounds = array<i64: 512, 256>}, {pipeline_mode = #tpu.pipeline_mode<synchronous>, transform_indices = @transform_4, window_bounds = array<i64: 1, 256>}, {pipeline_mode = #tpu.pipeline_mode<synchronous>, transform_indices = @transform_5, window_bounds = array<i64: 256, 128>}, {pipeline_mode = #tpu.pipeline_mode<synchronous>, transform_indices = @transform_6, window_bounds = array<i64: 1, 128>}, {transform_indices = @transform_7, window_bounds = array<i64: 128, 128>}]} {
    %c0 = arith.constant 0 : index
    %c0_0 = arith.constant 0 : index
    %0 = vector.load %arg1[%c0, %c0_0] : memref<128x3072xbf16, #tpu.memory_space<vmem>>, vector<128x3072xbf16>
    %c0_1 = arith.constant 0 : index
    %c0_2 = arith.constant 0 : index
    %1 = vector.load %arg2[%c0_1, %c0_2] : memref<3072x512xbf16, #tpu.memory_space<vmem>>, vector<3072x512xbf16>
    %cst = arith.constant dense<0.000000e+00> : vector<128x512xf32>
    %2 = tpu.matmul %0, %1, %cst {dimension_numbers = #tpu.dot_dimension_numbers<[1], [0], [0], [1], [0, 0, 1, 1], [], []>} : vector<128x3072xbf16>, vector<3072x512xbf16>, vector<128x512xf32> -> vector<128x512xf32>
    %c0_3 = arith.constant 0 : index
    %c0_4 = arith.constant 0 : index
    %3 = vector.load %arg3[%c0_3, %c0_4] : memref<1x512xf32, #tpu.memory_space<vmem>>, vector<1x512xf32>
    %4 = vector.broadcast %3 : vector<1x512xf32> to vector<128x512xf32>
    %5 = arith.addf %2, %4 : vector<128x512xf32>
    %cst_5 = arith.constant 0.000000e+00 : f32
    %6 = vector.broadcast %cst_5 : f32 to vector<128x512xf32>
    %7 = arith.maximumf %5, %6 : vector<128x512xf32>
    %8 = arith.truncf %7 : vector<128x512xf32> to vector<128x512xbf16>
    %c0_6 = arith.constant 0 : index
    %c0_7 = arith.constant 0 : index
    %9 = vector.load %arg4[%c0_6, %c0_7] : memref<512x256xbf16, #tpu.memory_space<vmem>>, vector<512x256xbf16>
    %cst_8 = arith.constant dense<0.000000e+00> : vector<128x256xf32>
    %10 = tpu.matmul %8, %9, %cst_8 {dimension_numbers = #tpu.dot_dimension_numbers<[1], [0], [0], [1], [0, 0, 1, 1], [], []>} : vector<128x512xbf16>, vector<512x256xbf16>, vector<128x256xf32> -> vector<128x256xf32>
    %c0_9 = arith.constant 0 : index
    %c0_10 = arith.constant 0 : index
    %11 = vector.load %arg5[%c0_9, %c0_10] : memref<1x256xf32, #tpu.memory_space<vmem>>, vector<1x256xf32>
    %12 = vector.broadcast %11 : vector<1x256xf32> to vector<128x256xf32>
    %13 = arith.addf %10, %12 : vector<128x256xf32>
    %cst_11 = arith.constant 0.000000e+00 : f32
    %14 = vector.broadcast %cst_11 : f32 to vector<128x256xf32>
    %15 = arith.maximumf %13, %14 : vector<128x256xf32>
    %16 = arith.truncf %15 : vector<128x256xf32> to vector<128x256xbf16>
    %c0_12 = arith.constant 0 : index
    %c0_13 = arith.constant 0 : index
    %17 = vector.load %arg6[%c0_12, %c0_13] : memref<256x128xbf16, #tpu.memory_space<vmem>>, vector<256x128xbf16>
    %cst_14 = arith.constant dense<0.000000e+00> : vector<128x128xf32>
    %18 = tpu.matmul %16, %17, %cst_14 {dimension_numbers = #tpu.dot_dimension_numbers<[1], [0], [0], [1], [0, 0, 1, 1], [], []>} : vector<128x256xbf16>, vector<256x128xbf16>, vector<128x128xf32> -> vector<128x128xf32>
    %c0_15 = arith.constant 0 : index
    %c0_16 = arith.constant 0 : index
    %19 = vector.load %arg7[%c0_15, %c0_16] : memref<1x128xf32, #tpu.memory_space<vmem>>, vector<1x128xf32>
    %20 = vector.broadcast %19 : vector<1x128xf32> to vector<128x128xf32>
    %21 = arith.addf %18, %20 : vector<128x128xf32>
    %c0_17 = arith.constant 0 : index
    %c0_18 = arith.constant 0 : index
    %22 = vector.load %arg8[%c0_17, %c0_18] : memref<128x128xf32, #tpu.memory_space<vmem>>, vector<128x128xf32>
    tpu.vector_store %arg8[%c0_17, %c0_18], %21 {strides = array<i32>} : memref<128x128xf32, #tpu.memory_space<vmem>>, vector<128x128xf32>,
    return
  }
  func.func @transform_0(%arg0: i32) -> (i32, i32) {
    %c0_i32 = arith.constant 0 : i32
    %c0_i32_0 = arith.constant 0 : i32
    return %arg0, %c0_i32 : i32, i32
  }
  func.func @transform_1(%arg0: i32) -> (i32, i32) {
    %c0_i32 = arith.constant 0 : i32
    %c0_i32_0 = arith.constant 0 : i32
    %c0_i32_1 = arith.constant 0 : i32
    return %c0_i32, %c0_i32_0 : i32, i32
  }
  func.func @transform_2(%arg0: i32) -> (i32, i32) {
    %c0_i32 = arith.constant 0 : i32
    %c0_i32_0 = arith.constant 0 : i32
    %c0_i32_1 = arith.constant 0 : i32
    return %c0_i32, %c0_i32_0 : i32, i32
  }
  func.func @transform_3(%arg0: i32) -> (i32, i32) {
    %c0_i32 = arith.constant 0 : i32
    %c0_i32_0 = arith.constant 0 : i32
    %c0_i32_1 = arith.constant 0 : i32
    return %c0_i32, %c0_i32_0 : i32, i32
  }
  func.func @transform_4(%arg0: i32) -> (i32, i32) {
    %c0_i32 = arith.constant 0 : i32
    %c0_i32_0 = arith.constant 0 : i32
    %c0_i32_1 = arith.constant 0 : i32
    return %c0_i32, %c0_i32_0 : i32, i32
  }
  func.func @transform_5(%arg0: i32) -> (i32, i32) {
    %c0_i32 = arith.constant 0 : i32
    %c0_i32_0 = arith.constant 0 : i32
    %c0_i32_1 = arith.constant 0 : i32
    return %c0_i32, %c0_i32_0 : i32, i32
  }
  func.func @transform_6(%arg0: i32) -> (i32, i32) {
    %c0_i32 = arith.constant 0 : i32
    %c0_i32_0 = arith.constant 0 : i32
    %c0_i32_1 = arith.constant 0 : i32
    return %c0_i32, %c0_i32_0 : i32, i32
  }
  func.func @transform_7(%arg0: i32) -> (i32, i32) {
    %c0_i32 = arith.constant 0 : i32
    %c0_i32_0 = arith.constant 0 : i32
    return %arg0, %c0_i32 : i32, i32
  }
}

</mosaic_0001>

<llo_original>
// kernel: tpu_custom_call.1
$region0: #{tpu_custom_call.1}
  #allocation0 [shape = 'u32[]', space=smem, size = 0x4, offset = 0x4, fixed_abs, tag = 'smem constant byte address 0x4 - core index']
  #allocation1 [shape = 'u32[144,128]{1,0:T(1,128)}', space=vmem, size = 0x12000, scoped, tag = 'internal scratch']
  %s0 = inlined_call_operand.hbm [shape: bf16[128,3072], index: 0, kind: input, shape index: {}]
  %s1 = inlined_call_operand.hbm [shape: bf16[3072,512], index: 1, kind: input, shape index: {}]
  %s2 = inlined_call_operand.hbm [shape: f32[1,512], index: 2, kind: input, shape index: {}]
  %s3 = inlined_call_operand.hbm [shape: bf16[512,256], index: 3, kind: input, shape index: {}]
  %s4 = inlined_call_operand.hbm [shape: f32[1,256], index: 4, kind: input, shape index: {}]
  %s5 = inlined_call_operand.hbm [shape: bf16[256,128], index: 5, kind: input, shape index: {}]
  %s6 = inlined_call_operand.hbm [shape: f32[1,128], index: 6, kind: input, shape index: {}]
  %s7 = inlined_call_operand.hbm [shape: f32[128,128], index: 7, kind: output, shape index: {}]
  %s8 = sld [smem:[#allocation0]]
  $region66: #{tpu_custom_call.1} parent=0
    _
  %s10 = ssub.s32 1, %s8
  %s11 = scalar_select 0, %s10, %s8
  $region1: #{tpu_custom_call.1} parent=0
    #allocation2 [shape = 'u8[786432]{0}', space=vmem, size = 0xc0000, scoped, tag = 'input window, operand 0, single buffered']
    #allocation3 [shape = 's32[1]{0}', space=sflag, size = 0x4, scoped, tag = 'scoped memory for tpu_custom_call.1']
    #allocation4 [shape = 's32[1]{0}', space=sflag, size = 0x4, scoped, tag = 'scoped memory for tpu_custom_call.1']
    #allocation5 [shape = 'u8[3145728]{0}', space=vmem, size = 0x300000, scoped, tag = 'input window, operand 1, single buffered']
    #allocation6 [shape = 's32[1]{0}', space=sflag, size = 0x4, scoped, tag = 'scoped memory for tpu_custom_call.1']
    #allocation7 [shape = 'u8[2048]{0}', space=vmem, size = 0x800, scoped, tag = 'input window, operand 2, single buffered']
    #allocation8 [shape = 'u8[262144]{0}', space=vmem, size = 0x40000, scoped, tag = 'input window, operand 3, single buffered']
    #allocation9 [shape = 's32[1]{0}', space=sflag, size = 0x4, scoped, tag = 'scoped memory for tpu_custom_call.1']
    #allocation10 [shape = 'u8[1024]{0}', space=vmem, size = 0x400, scoped, tag = 'input window, operand 4, single buffered']
    #allocation11 [shape = 'u8[65536]{0}', space=vmem, size = 0x10000, scoped, tag = 'input window, operand 5, single buffered']
    #allocation12 [shape = 's32[1]{0}', space=sflag, size = 0x4, scoped, tag = 'scoped memory for tpu_custom_call.1']
    #allocation13 [shape = 'u8[512]{0}', space=vmem, size = 0x400, scoped, tag = 'input window, operand 6, single buffered']
    #allocation14 [shape = 'u8[65536]{0}', space=vmem, size = 0x10000, scoped, tag = 'output window, operand 0, single buffered']
    %12 = vsyncpa [#allocation3], 0
    %13 = vsyncpa [#allocation6], 0
    %14 = vsyncpa [#allocation9], 0
    %15 = vsyncpa [#allocation12], 0
    %16 = vsyncpa [#allocation4], 0
    // Predicated region
    $region2: #{tpu_custom_call.1} parent=1 // pred_check
      _
    $region3: #{tpu_custom_call.1} parent=1 // pred_check_branch
      %18 = sbr.rel (0) target = $region5
    $region4: #{tpu_custom_call.1} parent=1 // pred_region
      %s20 = ssub.s32 24576, 24576
      %21 = vsyncadd [#allocation3], %s20
      %s22 = sshll.u32 [#allocation2], 4
      %s23 = int_to_ptr.vmem [resolvable:$true] %s22
      %28 = dma.hbm_to_vmem [thread:$0]  %s0, 24576, %s23, [#allocation3], 1536, 1536, 96
    $region5: #{tpu_custom_call.1} parent=1 // pred_fallthru
      _
    // Predicated region
    $region6: #{tpu_custom_call.1} parent=1 // pred_check
      _
    $region7: #{tpu_custom_call.1} parent=1 // pred_check_branch
      %30 = sbr.rel (0) target = $region9
    $region8: #{tpu_custom_call.1} parent=1 // pred_region
      %s32 = ssub.s32 98304, 98304
      %33 = vsyncadd [#allocation6], %s32
      %s34 = sshll.u32 [#allocation5], 4
      %s35 = int_to_ptr.vmem [resolvable:$true] %s34
      %40 = dma.hbm_to_vmem [thread:$0]  %s1, 98304, %s35, [#allocation6], 256, 256, 16
    $region9: #{tpu_custom_call.1} parent=1 // pred_fallthru
      _
    // Predicated region
    $region10: #{tpu_custom_call.1} parent=1 // pred_check
      _
    $region11: #{tpu_custom_call.1} parent=1 // pred_check_branch
      %42 = sbr.rel (0) target = $region13
    $region12: #{tpu_custom_call.1} parent=1 // pred_region
      %s44 = ssub.s32 64, 64
      %45 = vsyncadd [#allocation6], %s44
      %s47 = sshll.u32 [#allocation7], 4
      %s48 = int_to_ptr.vmem [resolvable:$true] %s47
      %50 = dma.hbm_to_vmem [thread:$0]  %s2, 64, %s48, [#allocation6]
    $region13: #{tpu_custom_call.1} parent=1 // pred_fallthru
      _
    // Predicated region
    $region14: #{tpu_custom_call.1} parent=1 // pred_check
      _
    $region15: #{tpu_custom_call.1} parent=1 // pred_check_branch
      %52 = sbr.rel (0) target = $region17
    $region16: #{tpu_custom_call.1} parent=1 // pred_region
      %s54 = ssub.s32 8192, 8192
      %55 = vsyncadd [#allocation9], %s54
      %s56 = sshll.u32 [#allocation8], 4
      %s57 = int_to_ptr.vmem [resolvable:$true] %s56
      %62 = dma.hbm_to_vmem [thread:$0]  %s3, 8192, %s57, [#allocation9], 128, 128, 8
    $region17: #{tpu_custom_call.1} parent=1 // pred_fallthru
      _
    // Predicated region
    $region18: #{tpu_custom_call.1} parent=1 // pred_check
      _
    $region19: #{tpu_custom_call.1} parent=1 // pred_check_branch
      %64 = sbr.rel (0) target = $region21
    $region20: #{tpu_custom_call.1} parent=1 // pred_region
      %s66 = ssub.s32 32, 32
      %67 = vsyncadd [#allocation9], %s66
      %s69 = sshll.u32 [#allocation10], 4
      %s70 = int_to_ptr.vmem [resolvable:$true] %s69
      %72 = dma.hbm_to_vmem [thread:$0]  %s4, 32, %s70, [#allocation9]
    $region21: #{tpu_custom_call.1} parent=1 // pred_fallthru
      _
    // Predicated region
    $region22: #{tpu_custom_call.1} parent=1 // pred_check
      _
    $region23: #{tpu_custom_call.1} parent=1 // pred_check_branch
      %74 = sbr.rel (0) target = $region25
    $region24: #{tpu_custom_call.1} parent=1 // pred_region
      %s76 = ssub.s32 2048, 2048
      %77 = vsyncadd [#allocation12], %s76
      %s78 = sshll.u32 [#allocation11], 4
      %s79 = int_to_ptr.vmem [resolvable:$true] %s78
      %84 = dma.hbm_to_vmem [thread:$0]  %s5, 2048, %s79, [#allocation12], 64, 64, 4
    $region25: #{tpu_custom_call.1} parent=1 // pred_fallthru
      _
    // Predicated region
    $region26: #{tpu_custom_call.1} parent=1 // pred_check
      _
    $region27: #{tpu_custom_call.1} parent=1 // pred_check_branch
      %86 = sbr.rel (0) target = $region29
    $region28: #{tpu_custom_call.1} parent=1 // pred_region
      %s88 = ssub.s32 16, 16
      %89 = vsyncadd [#allocation12], %s88
      %s91 = sshll.u32 [#allocation13], 4
      %s92 = int_to_ptr.vmem [resolvable:$true] %s91
      %94 = dma.hbm_to_vmem [thread:$0]  %s6, 16, %s92, [#allocation12]
    $region29: #{tpu_custom_call.1} parent=1 // pred_fallthru
      _
    // Predicated region
    $region30: #{tpu_custom_call.1} parent=1 // pred_check
      _
    $region31: #{tpu_custom_call.1} parent=1 // pred_check_branch
      %96 = sbr.rel (0) target = $region33
    $region32: #{tpu_custom_call.1} parent=1 // pred_region
      %97 = dma.done [#allocation3], 24576
    $region33: #{tpu_custom_call.1} parent=1 // pred_fallthru
      _
    // Predicated region
    $region34: #{tpu_custom_call.1} parent=1 // pred_check
      _
    $region35: #{tpu_custom_call.1} parent=1 // pred_check_branch
      %99 = sbr.rel (0) target = $region37
    $region36: #{tpu_custom_call.1} parent=1 // pred_region
      %100 = dma.done [#allocation6], 98304
    $region37: #{tpu_custom_call.1} parent=1 // pred_fallthru
      _
    // Predicated region
    $region38: #{tpu_custom_call.1} parent=1 // pred_check
      _
    $region39: #{tpu_custom_call.1} parent=1 // pred_check_branch
      %102 = sbr.rel (0) target = $region41
    $region40: #{tpu_custom_call.1} parent=1 // pred_region
      %103 = dma.done [#allocation6], 64
    $region41: #{tpu_custom_call.1} parent=1 // pred_fallthru
      _
    // Predicated region
    $region42: #{tpu_custom_call.1} parent=1 // pred_check
      _
    $region43: #{tpu_custom_call.1} parent=1 // pred_check_branch
      %105 = sbr.rel (0) target = $region45
    $region44: #{tpu_custom_call.1} parent=1 // pred_region
      %106 = dma.done [#allocation9], 8192
    $region45: #{tpu_custom_call.1} parent=1 // pred_fallthru
      _
    // Predicated region
    $region46: #{tpu_custom_call.1} parent=1 // pred_check
      _
    $region47: #{tpu_custom_call.1} parent=1 // pred_check_branch
      %108 = sbr.rel (0) target = $region49
    $region48: #{tpu_custom_call.1} parent=1 // pred_region
      %109 = dma.done [#allocation9], 32
    $region49: #{tpu_custom_call.1} parent=1 // pred_fallthru
      _
    // Predicated region
    $region50: #{tpu_custom_call.1} parent=1 // pred_check
      _
    $region51: #{tpu_custom_call.1} parent=1 // pred_check_branch
      %111 = sbr.rel (0) target = $region53
    $region52: #{tpu_custom_call.1} parent=1 // pred_region
      %112 = dma.done [#allocation12], 2048
    $region53: #{tpu_custom_call.1} parent=1 // pred_fallthru
      _
    // Predicated region
    $region54: #{tpu_custom_call.1} parent=1 // pred_check
      _
    $region55: #{tpu_custom_call.1} parent=1 // pred_check_branch
      %114 = sbr.rel (0) target = $region57
    $region56: #{tpu_custom_call.1} parent=1 // pred_region
      %115 = dma.done [#allocation12], 16
    $region57: #{tpu_custom_call.1} parent=1 // pred_fallthru
      _
    %v117 = vld [vmem:[#allocation2] sm:$0xff]
    %v118 = vld [vmem:[#allocation2 + $0x8] sm:$0xff]
    %v119 = vld [vmem:[#allocation2 + $0x10] sm:$0xff]
    %v120 = vld [vmem:[#allocation2 + $0x18] sm:$0xff]
    %v121 = vld [vmem:[#allocation2 + $0x20] sm:$0xff]
    %v122 = vld [vmem:[#allocation2 + $0x28] sm:$0xff]
    %v123 = vld [vmem:[#allocation2 + $0x30] sm:$0xff]
    %v124 = vld [vmem:[#allocation2 + $0x38] sm:$0xff]
    %v125 = vld [vmem:[#allocation2 + $0x40] sm:$0xff]
    %v126 = vld [vmem:[#allocation2 + $0x48] sm:$0xff]
    %v127 = vld [vmem:[#allocation2 + $0x50] sm:$0xff]
    %v128 = vld [vmem:[#allocation2 + $0x58] sm:$0xff]
    %v129 = vld [vmem:[#allocation2 + $0x60] sm:$0xff]
    %v130 = vld [vmem:[#allocation2 + $0x68] sm:$0xff]
    %v131 = vld [vmem:[#allocation2 + $0x70] sm:$0xff]
    %v132 = vld [vmem:[#allocation2 + $0x78] sm:$0xff]
    %v133 = vld [vmem:[#allocation2 + $0x80] sm:$0xff]
    %v134 = vld [vmem:[#allocation2 + $0x88] sm:$0xff]
    %v135 = vld [vmem:[#allocation2 + $0x90] sm:$0xff]
    %v136 = vld [vmem:[#allocation2 + $0x98] sm:$0xff]
    %v137 = vld [vmem:[#allocation2 + $0xa0] sm:$0xff]
    %v138 = vld [vmem:[#allocation2 + $0xa8] sm:$0xff]
    %v139 = vld [vmem:[#allocation2 + $0xb0] sm:$0xff]
    %v140 = vld [vmem:[#allocation2 + $0xb8] sm:$0xff]
    %v141 = vld [vmem:[#allocation2 + $0xc0] sm:$0xff]
    %v142 = vld [vmem:[#allocation2 + $0xc8] sm:$0xff]
    %v143 = vld [vmem:[#allocation2 + $0xd0] sm:$0xff]
    %v144 = vld [vmem:[#allocation2 + $0xd8] sm:$0xff]
    %v145 = vld [vmem:[#allocation2 + $0xe0] sm:$0xff]
    %v146 = vld [vmem:[#allocation2 + $0xe8] sm:$0xff]
    %v147 = vld [vmem:[#allocation2 + $0xf0] sm:$0xff]
    %v148 = vld [vmem:[#allocation2 + $0xf8] sm:$0xff]
    %v149 = vld [vmem:[#allocation2 + $0x100] sm:$0xff]
    %v150 = vld [vmem:[#allocation2 + $0x108] sm:$0xff]
    %v151 = vld [vmem:[#allocation2 + $0x110] sm:$0xff]
    %v152 = vld [vmem:[#allocation2 + $0x118] sm:$0xff]
    %v153 = vld [vmem:[#allocation2 + $0x120] sm:$0xff]
    %v154 = vld [vmem:[#allocation2 + $0x128] sm:$0xff]
    %v155 = vld [vmem:[#allocation2 + $0x130] sm:$0xff]
    %v156 = vld [vmem:[#allocation2 + $0x138] sm:$0xff]
    %v157 = vld [vmem:[#allocation2 + $0x140] sm:$0xff]
    %v158 = vld [vmem:[#allocation2 + $0x148] sm:$0xff]
    %v159 = vld [vmem:[#allocation2 + $0x150] sm:$0xff]
    %v160 = vld [vmem:[#allocation2 + $0x158] sm:$0xff]
    %v161 = vld [vmem:[#allocation2 + $0x160] sm:$0xff]
    %v162 = vld [vmem:[#allocation2 + $0x168] sm:$0xff]
    %v163 = vld [vmem:[#allocation2 + $0x170] sm:$0xff]
    %v164 = vld [vmem:[#allocation2 + $0x178] sm:$0xff]
    %v165 = vld [vmem:[#allocation2 + $0x180] sm:$0xff]
    %v166 = vld [vmem:[#allocation2 + $0x188] sm:$0xff]
    %v167 = vld [vmem:[#allocation2 + $0x190] sm:$0xff]
    %v168 = vld [vmem:[#allocation2 + $0x198] sm:$0xff]
    %v169 = vld [vmem:[#allocation2 + $0x1a0] sm:$0xff]
    %v170 = vld [vmem:[#allocation2 + $0x1a8] sm:$0xff]
    %v171 = vld [vmem:[#allocation2 + $0x1b0] sm:$0xff]
    %v172 = vld [vmem:[#allocation2 + $0x1b8] sm:$0xff]
    %v173 = vld [vmem:[#allocation2 + $0x1c0] sm:$0xff]
    %v174 = vld [vmem:[#allocation2 + $0x1c8] sm:$0xff]
    %v175 = vld [vmem:[#allocation2 + $0x1d0] sm:$0xff]
    %v176 = vld [vmem:[#allocation2 + $0x1d8] sm:$0xff]
    %v177 = vld [vmem:[#allocation2 + $0x1e0] sm:$0xff]
    %v178 = vld [vmem:[#allocation2 + $0x1e8] sm:$0xff]
    %v179 = vld [vmem:[#allocation2 + $0x1f0] sm:$0xff]
    %v180 = vld [vmem:[#allocation2 + $0x1f8] sm:$0xff]
    %v181 = vld [vmem:[#allocation2 + $0x200] sm:$0xff]
    %v182 = vld [vmem:[#allocation2 + $0x208] sm:$0xff]
    %v183 = vld [vmem:[#allocation2 + $0x210] sm:$0xff]
    %v184 = vld [vmem:[#allocation2 + $0x218] sm:$0xff]
    %v185 = vld [vmem:[#allocation2 + $0x220] sm:$0xff]
    %v186 = vld [vmem:[#allocation2 + $0x228] sm:$0xff]
    %v187 = vld [vmem:[#allocation2 + $0x230] sm:$0xff]
    %v188 = vld [vmem:[#allocation2 + $0x238] sm:$0xff]
    %v189 = vld [vmem:[#allocation2 + $0x240] sm:$0xff]
    %v190 = vld [vmem:[#allocation2 + $0x248] sm:$0xff]
    %v191 = vld [vmem:[#allocation2 + $0x250] sm:$0xff]
    %v192 = vld [vmem:[#allocation2 + $0x258] sm:$0xff]
    %v193 = vld [vmem:[#allocation2 + $0x260] sm:$0xff]
    %v194 = vld [vmem:[#allocation2 + $0x268] sm:$0xff]
    %v195 = vld [vmem:[#allocation2 + $0x270] sm:$0xff]
    %v196 = vld [vmem:[#allocation2 + $0x278] sm:$0xff]
    %v197 = vld [vmem:[#allocation2 + $0x280] sm:$0xff]
    %v198 = vld [vmem:[#allocation2 + $0x288] sm:$0xff]
    %v199 = vld [vmem:[#allocation2 + $0x290] sm:$0xff]
    %v200 = vld [vmem:[#allocation2 + $0x298] sm:$0xff]
    %v201 = vld [vmem:[#allocation2 + $0x2a0] sm:$0xff]
    %v202 = vld [vmem:[#allocation2 + $0x2a8] sm:$0xff]
    %v203 = vld [vmem:[#allocation2 + $0x2b0] sm:$0xff]
    %v204 = vld [vmem:[#allocation2 + $0x2b8] sm:$0xff]
    %v205 = vld [vmem:[#allocation2 + $0x2c0] sm:$0xff]
    %v206 = vld [vmem:[#allocation2 + $0x2c8] sm:$0xff]
    %v207 = vld [vmem:[#allocation2 + $0x2d0] sm:$0xff]
    %v208 = vld [vmem:[#allocation2 + $0x2d8] sm:$0xff]
    %v209 = vld [vmem:[#allocation2 + $0x2e0] sm:$0xff]
    %v210 = vld [vmem:[#allocation2 + $0x2e8] sm:$0xff]
    %v211 = vld [vmem:[#allocation2 + $0x2f0] sm:$0xff]
    %v212 = vld [vmem:[#allocation2 + $0x2f8] sm:$0xff]
    %v213 = vld [vmem:[#allocation2 + $0x300] sm:$0xff]
    %v214 = vld [vmem:[#allocation2 + $0x308] sm:$0xff]
    %v215 = vld [vmem:[#allocation2 + $0x310] sm:$0xff]
    %v216 = vld [vmem:[#allocation2 + $0x318] sm:$0xff]
    %v217 = vld [vmem:[#allocation2 + $0x320] sm:$0xff]
    %v218 = vld [vmem:[#allocation2 + $0x328] sm:$0xff]
    %v219 = vld [vmem:[#allocation2 + $0x330] sm:$0xff]
    %v220 = vld [vmem:[#allocation2 + $0x338] sm:$0xff]
    %v221 = vld [vmem:[#allocation2 + $0x340] sm:$0xff]
    %v222 = vld [vmem:[#allocation2 + $0x348] sm:$0xff]
    %v223 = vld [vmem:[#allocation2 + $0x350] sm:$0xff]
    %v224 = vld [vmem:[#allocation2 + $0x358] sm:$0xff]
    %v225 = vld [vmem:[#allocation2 + $0x360] sm:$0xff]
    %v226 = vld [vmem:[#allocation2 + $0x368] sm:$0xff]
    %v227 = vld [vmem:[#allocation2 + $0x370] sm:$0xff]
    %v228 = vld [vmem:[#allocation2 + $0x378] sm:$0xff]
    %v229 = vld [vmem:[#allocation2 + $0x380] sm:$0xff]
    %v230 = vld [vmem:[#allocation2 + $0x388] sm:$0xff]
    %v231 = vld [vmem:[#allocation2 + $0x390] sm:$0xff]
    %v232 = vld [vmem:[#allocation2 + $0x398] sm:$0xff]
    %v233 = vld [vmem:[#allocation2 + $0x3a0] sm:$0xff]
    %v234 = vld [vmem:[#allocation2 + $0x3a8] sm:$0xff]
    %v235 = vld [vmem:[#allocation2 + $0x3b0] sm:$0xff]
    %v236 = vld [vmem:[#allocation2 + $0x3b8] sm:$0xff]
    %v237 = vld [vmem:[#allocation2 + $0x3c0] sm:$0xff]
    %v238 = vld [vmem:[#allocation2 + $0x3c8] sm:$0xff]
    %v239 = vld [vmem:[#allocation2 + $0x3d0] sm:$0xff]
    %v240 = vld [vmem:[#allocation2 + $0x3d8] sm:$0xff]
    %v241 = vld [vmem:[#allocation2 + $0x3e0] sm:$0xff]
    %v242 = vld [vmem:[#allocation2 + $0x3e8] sm:$0xff]
    %v243 = vld [vmem:[#allocation2 + $0x3f0] sm:$0xff]
    %v244 = vld [vmem:[#allocation2 + $0x3f8] sm:$0xff]
    %v245 = vld [vmem:[#allocation2 + $0x400] sm:$0xff]
    %v246 = vld [vmem:[#allocation2 + $0x408] sm:$0xff]
    %v247 = vld [vmem:[#allocation2 + $0x410] sm:$0xff]
    %v248 = vld [vmem:[#allocation2 + $0x418] sm:$0xff]
    %v249 = vld [vmem:[#allocation2 + $0x420] sm:$0xff]
    %v250 = vld [vmem:[#allocation2 + $0x428] sm:$0xff]
    %v251 = vld [vmem:[#allocation2 + $0x430] sm:$0xff]
    %v252 = vld [vmem:[#allocation2 + $0x438] sm:$0xff]
    %v253 = vld [vmem:[#allocation2 + $0x440] sm:$0xff]
    %v254 = vld [vmem:[#allocation2 + $0x448] sm:$0xff]
    %v255 = vld [vmem:[#allocation2 + $0x450] sm:$0xff]
    %v256 = vld [vmem:[#allocation2 + $0x458] sm:$0xff]
    %v257 = vld [vmem:[#allocation2 + $0x460] sm:$0xff]
    %v258 = vld [vmem:[#allocation2 + $0x468] sm:$0xff]
    %v259 = vld [vmem:[#allocation2 + $0x470] sm:$0xff]
    %v260 = vld [vmem:[#allocation2 + $0x478] sm:$0xff]
    %v261 = vld [vmem:[#allocation2 + $0x480] sm:$0xff]
    %v262 = vld [vmem:[#allocation2 + $0x488] sm:$0xff]
    %v263 = vld [vmem:[#allocation2 + $0x490] sm:$0xff]
    %v264 = vld [vmem:[#allocation2 + $0x498] sm:$0xff]
    %v265 = vld [vmem:[#allocation2 + $0x4a0] sm:$0xff]
    %v266 = vld [vmem:[#allocation2 + $0x4a8] sm:$0xff]
    %v267 = vld [vmem:[#allocation2 + $0x4b0] sm:$0xff]
    %v268 = vld [vmem:[#allocation2 + $0x4b8] sm:$0xff]
    %v269 = vld [vmem:[#allocation2 + $0x4c0] sm:$0xff]
    %v270 = vld [vmem:[#allocation2 + $0x4c8] sm:$0xff]
    %v271 = vld [vmem:[#allocation2 + $0x4d0] sm:$0xff]
    %v272 = vld [vmem:[#allocation2 + $0x4d8] sm:$0xff]
    %v273 = vld [vmem:[#allocation2 + $0x4e0] sm:$0xff]
    %v274 = vld [vmem:[#allocation2 + $0x4e8] sm:$0xff]
    %v275 = vld [vmem:[#allocation2 + $0x4f0] sm:$0xff]
    %v276 = vld [vmem:[#allocation2 + $0x4f8] sm:$0xff]
    %v277 = vld [vmem:[#allocation2 + $0x500] sm:$0xff]
    %v278 = vld [vmem:[#allocation2 + $0x508] sm:$0xff]
    %v279 = vld [vmem:[#allocation2 + $0x510] sm:$0xff]
    %v280 = vld [vmem:[#allocation2 + $0x518] sm:$0xff]
    %v281 = vld [vmem:[#allocation2 + $0x520] sm:$0xff]
    %v282 = vld [vmem:[#allocation2 + $0x528] sm:$0xff]
    %v283 = vld [vmem:[#allocation2 + $0x530] sm:$0xff]
    %v284 = vld [vmem:[#allocation2 + $0x538] sm:$0xff]
    %v285 = vld [vmem:[#allocation2 + $0x540] sm:$0xff]
    %v286 = vld [vmem:[#allocation2 + $0x548] sm:$0xff]
    %v287 = vld [vmem:[#allocation2 + $0x550] sm:$0xff]
    %v288 = vld [vmem:[#allocation2 + $0x558] sm:$0xff]
    %v289 = vld [vmem:[#allocation2 + $0x560] sm:$0xff]
    %v290 = vld [vmem:[#allocation2 + $0x568] sm:$0xff]
    %v291 = vld [vmem:[#allocation2 + $0x570] sm:$0xff]
    %v292 = vld [vmem:[#allocation2 + $0x578] sm:$0xff]
    %v293 = vld [vmem:[#allocation2 + $0x580] sm:$0xff]
    %v294 = vld [vmem:[#allocation2 + $0x588] sm:$0xff]
    %v295 = vld [vmem:[#allocation2 + $0x590] sm:$0xff]
    %v296 = vld [vmem:[#allocation2 + $0x598] sm:$0xff]
    %v297 = vld [vmem:[#allocation2 + $0x5a0] sm:$0xff]
    %v298 = vld [vmem:[#allocation2 + $0x5a8] sm:$0xff]
    %v299 = vld [vmem:[#allocation2 + $0x5b0] sm:$0xff]
    %v300 = vld [vmem:[#allocation2 + $0x5b8] sm:$0xff]
    %v301 = vld [vmem:[#allocation2 + $0x5c0] sm:$0xff]
    %v302 = vld [vmem:[#allocation2 + $0x5c8] sm:$0xff]
    %v303 = vld [vmem:[#allocation2 + $0x5d0] sm:$0xff]
    %v304 = vld [vmem:[#allocation2 + $0x5d8] sm:$0xff]
    %v305 = vld [vmem:[#allocation2 + $0x5e0] sm:$0xff]
    %v306 = vld [vmem:[#allocation2 + $0x5e8] sm:$0xff]
    %v307 = vld [vmem:[#allocation2 + $0x5f0] sm:$0xff]
    %v308 = vld [vmem:[#allocation2 + $0x5f8] sm:$0xff]
    %v309 = vld [vmem:[#allocation5] sm:$0xff]
    %v310 = vld [vmem:[#allocation5 + $0x8] sm:$0xff]
    %v311 = vld [vmem:[#allocation5 + $0x10] sm:$0xff]
    %v312 = vld [vmem:[#allocation5 + $0x18] sm:$0xff]
    %v313 = vld [vmem:[#allocation5 + $0x20] sm:$0xff]
    %v314 = vld [vmem:[#allocation5 + $0x28] sm:$0xff]
    %v315 = vld [vmem:[#allocation5 + $0x30] sm:$0xff]
    %v316 = vld [vmem:[#allocation5 + $0x38] sm:$0xff]
    %v317 = vld [vmem:[#allocation5 + $0x40] sm:$0xff]
    %v318 = vld [vmem:[#allocation5 + $0x48] sm:$0xff]
    %v319 = vld [vmem:[#allocation5 + $0x50] sm:$0xff]
    %v320 = vld [vmem:[#allocation5 + $0x58] sm:$0xff]
    %v321 = vld [vmem:[#allocation5 + $0x60] sm:$0xff]
    %v322 = vld [vmem:[#allocation5 + $0x68] sm:$0xff]
    %v323 = vld [vmem:[#allocation5 + $0x70] sm:$0xff]
    %v324 = vld [vmem:[#allocation5 + $0x78] sm:$0xff]
    %v325 = vld [vmem:[#allocation5 + $0x80] sm:$0xff]
    %v326 = vld [vmem:[#allocation5 + $0x88] sm:$0xff]
    %v327 = vld [vmem:[#allocation5 + $0x90] sm:$0xff]
    %v328 = vld [vmem:[#allocation5 + $0x98] sm:$0xff]
    %v329 = vld [vmem:[#allocation5 + $0xa0] sm:$0xff]
    %v330 = vld [vmem:[#allocation5 + $0xa8] sm:$0xff]
    %v331 = vld [vmem:[#allocation5 + $0xb0] sm:$0xff]
    %v332 = vld [vmem:[#allocation5 + $0xb8] sm:$0xff]
    %v333 = vld [vmem:[#allocation5 + $0xc0] sm:$0xff]
    %v334 = vld [vmem:[#allocation5 + $0xc8] sm:$0xff]
    %v335 = vld [vmem:[#allocation5 + $0xd0] sm:$0xff]
    %v336 = vld [vmem:[#allocation5 + $0xd8] sm:$0xff]
    %v337 = vld [vmem:[#allocation5 + $0xe0] sm:$0xff]
    %v338 = vld [vmem:[#allocation5 + $0xe8] sm:$0xff]
    %v339 = vld [vmem:[#allocation5 + $0xf0] sm:$0xff]
    %v340 = vld [vmem:[#allocation5 + $0xf8] sm:$0xff]
    %v341 = vld [vmem:[#allocation5 + $0x100] sm:$0xff]
    %v342 = vld [vmem:[#allocation5 + $0x108] sm:$0xff]
    %v343 = vld [vmem:[#allocation5 + $0x110] sm:$0xff]
    %v344 = vld [vmem:[#allocation5 + $0x118] sm:$0xff]
    %v345 = vld [vmem:[#allocation5 + $0x120] sm:$0xff]
    %v346 = vld [vmem:[#allocation5 + $0x128] sm:$0xff]
    %v347 = vld [vmem:[#allocation5 + $0x130] sm:$0xff]
    %v348 = vld [vmem:[#allocation5 + $0x138] sm:$0xff]
    %v349 = vld [vmem:[#allocation5 + $0x140] sm:$0xff]
    %v350 = vld [vmem:[#allocation5 + $0x148] sm:$0xff]
    %v351 = vld [vmem:[#allocation5 + $0x150] sm:$0xff]
    %v352 = vld [vmem:[#allocation5 + $0x158] sm:$0xff]
    %v353 = vld [vmem:[#allocation5 + $0x160] sm:$0xff]
    %v354 = vld [vmem:[#allocation5 + $0x168] sm:$0xff]
    %v355 = vld [vmem:[#allocation5 + $0x170] sm:$0xff]
    %v356 = vld [vmem:[#allocation5 + $0x178] sm:$0xff]
    %v357 = vld [vmem:[#allocation5 + $0x180] sm:$0xff]
    %v358 = vld [vmem:[#allocation5 + $0x188] sm:$0xff]
    %v359 = vld [vmem:[#allocation5 + $0x190] sm:$0xff]
    %v360 = vld [vmem:[#allocation5 + $0x198] sm:$0xff]
    %v361 = vld [vmem:[#allocation5 + $0x1a0] sm:$0xff]
    %v362 = vld [vmem:[#allocation5 + $0x1a8] sm:$0xff]
    %v363 = vld [vmem:[#allocation5 + $0x1b0] sm:$0xff]
    %v364 = vld [vmem:[#allocation5 + $0x1b8] sm:$0xff]
    %v365 = vld [vmem:[#allocation5 + $0x1c0] sm:$0xff]
    %v366 = vld [vmem:[#allocation5 + $0x1c8] sm:$0xff]
    %v367 = vld [vmem:[#allocation5 + $0x1d0] sm:$0xff]
    %v368 = vld [vmem:[#allocation5 + $0x1d8] sm:$0xff]
    %v369 = vld [vmem:[#allocation5 + $0x1e0] sm:$0xff]
    %v370 = vld [vmem:[#allocation5 + $0x1e8] sm:$0xff]
    %v371 = vld [vmem:[#allocation5 + $0x1f0] sm:$0xff]
    %v372 = vld [vmem:[#allocation5 + $0x1f8] sm:$0xff]
    %v373 = vld [vmem:[#allocation5 + $0x200] sm:$0xff]
    %v374 = vld [vmem:[#allocation5 + $0x208] sm:$0xff]
    %v375 = vld [vmem:[#allocation5 + $0x210] sm:$0xff]
    %v376 = vld [vmem:[#allocation5 + $0x218] sm:$0xff]
    %v377 = vld [vmem:[#allocation5 + $0x220] sm:$0xff]
    %v378 = vld [vmem:[#allocation5 + $0x228] sm:$0xff]
    %v379 = vld [vmem:[#allocation5 + $0x230] sm:$0xff]
    %v380 = vld [vmem:[#allocation5 + $0x238] sm:$0xff]
    %v381 = vld [vmem:[#allocation5 + $0x240] sm:$0xff]
    %v382 = vld [vmem:[#allocation5 + $0x248] sm:$0xff]
    %v383 = vld [vmem:[#allocation5 + $0x250] sm:$0xff]
    %v384 = vld [vmem:[#allocation5 + $0x258] sm:$0xff]
    %v385 = vld [vmem:[#allocation5 + $0x260] sm:$0xff]
    %v386 = vld [vmem:[#allocation5 + $0x268] sm:$0xff]
    %v387 = vld [vmem:[#allocation5 + $0x270] sm:$0xff]
    %v388 = vld [vmem:[#allocation5 + $0x278] sm:$0xff]
    %v389 = vld [vmem:[#allocation5 + $0x280] sm:$0xff]
    %v390 = vld [vmem:[#allocation5 + $0x288] sm:$0xff]
    %v391 = vld [vmem:[#allocation5 + $0x290] sm:$0xff]
    %v392 = vld [vmem:[#allocation5 + $0x298] sm:$0xff]
    %v393 = vld [vmem:[#allocation5 + $0x2a0] sm:$0xff]
    %v394 = vld [vmem:[#allocation5 + $0x2a8] sm:$0xff]
    %v395 = vld [vmem:[#allocation5 + $0x2b0] sm:$0xff]
    %v396 = vld [vmem:[#allocation5 + $0x2b8] sm:$0xff]
    %v397 = vld [vmem:[#allocation5 + $0x2c0] sm:$0xff]
    %v398 = vld [vmem:[#allocation5 + $0x2c8] sm:$0xff]
    %v399 = vld [vmem:[#allocation5 + $0x2d0] sm:$0xff]
    %v400 = vld [vmem:[#allocation5 + $0x2d8] sm:$0xff]
    %v401 = vld [vmem:[#allocation5 + $0x2e0] sm:$0xff]
    %v402 = vld [vmem:[#allocation5 + $0x2e8] sm:$0xff]
    %v403 = vld [vmem:[#allocation5 + $0x2f0] sm:$0xff]
    %v404 = vld [vmem:[#allocation5 + $0x2f8] sm:$0xff]
    %v405 = vld [vmem:[#allocation5 + $0x300] sm:$0xff]
    %v406 = vld [vmem:[#allocation5 + $0x308] sm:$0xff]
    %v407 = vld [vmem:[#allocation5 + $0x310] sm:$0xff]
    %v408 = vld [vmem:[#allocation5 + $0x318] sm:$0xff]
    %v409 = vld [vmem:[#allocation5 + $0x320] sm:$0xff]
    %v410 = vld [vmem:[#allocation5 + $0x328] sm:$0xff]
    %v411 = vld [vmem:[#allocation5 + $0x330] sm:$0xff]
    %v412 = vld [vmem:[#allocation5 + $0x338] sm:$0xff]
    %v413 = vld [vmem:[#allocation5 + $0x340] sm:$0xff]
    %v414 = vld [vmem:[#allocation5 + $0x348] sm:$0xff]
    %v415 = vld [vmem:[#allocation5 + $0x350] sm:$0xff]
    %v416 = vld [vmem:[#allocation5 + $0x358] sm:$0xff]
    %v417 = vld [vmem:[#allocation5 + $0x360] sm:$0xff]
    %v418 = vld [vmem:[#allocation5 + $0x368] sm:$0xff]
    %v419 = vld [vmem:[#allocation5 + $0x370] sm:$0xff]
    %v420 = vld [vmem:[#allocation5 + $0x378] sm:$0xff]
    %v421 = vld [vmem:[#allocation5 + $0x380] sm:$0xff]
    %v422 = vld [vmem:[#allocation5 + $0x388] sm:$0xff]
    %v423 = vld [vmem:[#allocation5 + $0x390] sm:$0xff]
    %v424 = vld [vmem:[#allocation5 + $0x398] sm:$0xff]
    %v425 = vld [vmem:[#allocation5 + $0x3a0] sm:$0xff]
    %v426 = vld [vmem:[#allocation5 + $0x3a8] sm:$0xff]
    %v427 = vld [vmem:[#allocation5 + $0x3b0] sm:$0xff]
    %v428 = vld [vmem:[#allocation5 + $0x3b8] sm:$0xff]
    %v429 = vld [vmem:[#allocation5 + $0x3c0] sm:$0xff]
    %v430 = vld [vmem:[#allocation5 + $0x3c8] sm:$0xff]
    %v431 = vld [vmem:[#allocation5 + $0x3d0] sm:$0xff]
    %v432 = vld [vmem:[#allocation5 + $0x3d8] sm:$0xff]
    %v433 = vld [vmem:[#allocation5 + $0x3e0] sm:$0xff]
    %v434 = vld [vmem:[#allocation5 + $0x3e8] sm:$0xff]
    %v435 = vld [vmem:[#allocation5 + $0x3f0] sm:$0xff]
    %v436 = vld [vmem:[#allocation5 + $0x3f8] sm:$0xff]
    %v437 = vld [vmem:[#allocation5 + $0x400] sm:$0xff]
    %v438 = vld [vmem:[#allocation5 + $0x408] sm:$0xff]
    %v439 = vld [vmem:[#allocation5 + $0x410] sm:$0xff]
    %v440 = vld [vmem:[#allocation5 + $0x418] sm:$0xff]
    %v441 = vld [vmem:[#allocation5 + $0x420] sm:$0xff]
    %v442 = vld [vmem:[#allocation5 + $0x428] sm:$0xff]
    %v443 = vld [vmem:[#allocation5 + $0x430] sm:$0xff]
    %v444 = vld [vmem:[#allocation5 + $0x438] sm:$0xff]
    %v445 = vld [vmem:[#allocation5 + $0x440] sm:$0xff]
    %v446 = vld [vmem:[#allocation5 + $0x448] sm:$0xff]
    %v447 = vld [vmem:[#allocation5 + $0x450] sm:$0xff]
    %v448 = vld [vmem:[#allocation5 + $0x458] sm:$0xff]
    %v449 = vld [vmem:[#allocation5 + $0x460] sm:$0xff]
    %v450 = vld [vmem:[#allocation5 + $0x468] sm:$0xff]
    %v451 = vld [vmem:[#allocation5 + $0x470] sm:$0xff]
    %v452 = vld [vmem:[#allocation5 + $0x478] sm:$0xff]
    %v453 = vld [vmem:[#allocation5 + $0x480] sm:$0xff]
    %v454 = vld [vmem:[#allocation5 + $0x488] sm:$0xff]
    %v455 = vld [vmem:[#allocation5 + $0x490] sm:$0xff]
    %v456 = vld [vmem:[#allocation5 + $0x498] sm:$0xff]
    %v457 = vld [vmem:[#allocation5 + $0x4a0] sm:$0xff]
    %v458 = vld [vmem:[#allocation5 + $0x4a8] sm:$0xff]
    %v459 = vld [vmem:[#allocation5 + $0x4b0] sm:$0xff]
    %v460 = vld [vmem:[#allocation5 + $0x4b8] sm:$0xff]
    %v461 = vld [vmem:[#allocation5 + $0x4c0] sm:$0xff]
    %v462 = vld [vmem:[#allocation5 + $0x4c8] sm:$0xff]
    %v463 = vld [vmem:[#allocation5 + $0x4d0] sm:$0xff]
    %v464 = vld [vmem:[#allocation5 + $0x4d8] sm:$0xff]
    %v465 = vld [vmem:[#allocation5 + $0x4e0] sm:$0xff]
    %v466 = vld [vmem:[#allocation5 + $0x4e8] sm:$0xff]
    %v467 = vld [vmem:[#allocation5 + $0x4f0] sm:$0xff]
    %v468 = vld [vmem:[#allocation5 + $0x4f8] sm:$0xff]
    %v469 = vld [vmem:[#allocation5 + $0x500] sm:$0xff]
    %v470 = vld [vmem:[#allocation5 + $0x508] sm:$0xff]
    %v471 = vld [vmem:[#allocation5 + $0x510] sm:$0xff]
    %v472 = vld [vmem:[#allocation5 + $0x518] sm:$0xff]
    %v473 = vld [vmem:[#allocation5 + $0x520] sm:$0xff]
    %v474 = vld [vmem:[#allocation5 + $0x528] sm:$0xff]
    %v475 = vld [vmem:[#allocation5 + $0x530] sm:$0xff]
    %v476 = vld [vmem:[#allocation5 + $0x538] sm:$0xff]
    %v477 = vld [vmem:[#allocation5 + $0x540] sm:$0xff]
    %v478 = vld [vmem:[#allocation5 + $0x548] sm:$0xff]
    %v479 = vld [vmem:[#allocation5 + $0x550] sm:$0xff]
    %v480 = vld [vmem:[#allocation5 + $0x558] sm:$0xff]
    %v481 = vld [vmem:[#allocation5 + $0x560] sm:$0xff]
    %v482 = vld [vmem:[#allocation5 + $0x568] sm:$0xff]
    %v483 = vld [vmem:[#allocation5 + $0x570] sm:$0xff]
    %v484 = vld [vmem:[#allocation5 + $0x578] sm:$0xff]
    %v485 = vld [vmem:[#allocation5 + $0x580] sm:$0xff]
    %v486 = vld [vmem:[#allocation5 + $0x588] sm:$0xff]
    %v487 = vld [vmem:[#allocation5 + $0x590] sm:$0xff]
    %v488 = vld [vmem:[#allocation5 + $0x598] sm:$0xff]
    %v489 = vld [vmem:[#allocation5 + $0x5a0] sm:$0xff]
    %v490 = vld [vmem:[#allocation5 + $0x5a8] sm:$0xff]
    %v491 = vld [vmem:[#allocation5 + $0x5b0] sm:$0xff]
    %v492 = vld [vmem:[#allocation5 + $0x5b8] sm:$0xff]
    %v493 = vld [vmem:[#allocation5 + $0x5c0] sm:$0xff]
    %v494 = vld [vmem:[#allocation5 + $0x5c8] sm:$0xff]
    %v495 = vld [vmem:[#allocation5 + $0x5d0] sm:$0xff]
    %v496 = vld [vmem:[#allocation5 + $0x5d8] sm:$0xff]
    %v497 = vld [vmem:[#allocation5 + $0x5e0] sm:$0xff]
    %v498 = vld [vmem:[#allocation5 + $0x5e8] sm:$0xff]
    %v499 = vld [vmem:[#allocation5 + $0x5f0] sm:$0xff]
    %v500 = vld [vmem:[#allocation5 + $0x5f8] sm:$0xff]
    %v501 = vld [vmem:[#allocation5 + $0x600] sm:$0xff]
    %v502 = vld [vmem:[#allocation5 + $0x608] sm:$0xff]
    %v503 = vld [vmem:[#allocation5 + $0x610] sm:$0xff]
    %v504 = vld [vmem:[#allocation5 + $0x618] sm:$0xff]
    %v505 = vld [vmem:[#allocation5 + $0x620] sm:$0xff]
    %v506 = vld [vmem:[#allocation5 + $0x628] sm:$0xff]
    %v507 = vld [vmem:[#allocation5 + $0x630] sm:$0xff]
    %v508 = vld [vmem:[#allocation5 + $0x638] sm:$0xff]
    %v509 = vld [vmem:[#allocation5 + $0x640] sm:$0xff]
    %v510 = vld [vmem:[#allocation5 + $0x648] sm:$0xff]
    %v511 = vld [vmem:[#allocation5 + $0x650] sm:$0xff]
    %v512 = vld [vmem:[#allocation5 + $0x658] sm:$0xff]
    %v513 = vld [vmem:[#allocation5 + $0x660] sm:$0xff]
    %v514 = vld [vmem:[#allocation5 + $0x668] sm:$0xff]
    %v515 = vld [vmem:[#allocation5 + $0x670] sm:$0xff]
    %v516 = vld [vmem:[#allocation5 + $0x678] sm:$0xff]
    %v517 = vld [vmem:[#allocation5 + $0x680] sm:$0xff]
    %v518 = vld [vmem:[#allocation5 + $0x688] sm:$0xff]
    %v519 = vld [vmem:[#allocation5 + $0x690] sm:$0xff]
    %v520 = vld [vmem:[#allocation5 + $0x698] sm:$0xff]
    %v521 = vld [vmem:[#allocation5 + $0x6a0] sm:$0xff]
    %v522 = vld [vmem:[#allocation5 + $0x6a8] sm:$0xff]
    %v523 = vld [vmem:[#allocation5 + $0x6b0] sm:$0xff]
    %v524 = vld [vmem:[#allocation5 + $0x6b8] sm:$0xff]
    %v525 = vld [vmem:[#allocation5 + $0x6c0] sm:$0xff]
    %v526 = vld [vmem:[#allocation5 + $0x6c8] sm:$0xff]
    %v527 = vld [vmem:[#allocation5 + $0x6d0] sm:$0xff]
    %v528 = vld [vmem:[#allocation5 + $0x6d8] sm:$0xff]
    %v529 = vld [vmem:[#allocation5 + $0x6e0] sm:$0xff]
    %v530 = vld [vmem:[#allocation5 + $0x6e8] sm:$0xff]
    %v531 = vld [vmem:[#allocation5 + $0x6f0] sm:$0xff]
    %v532 = vld [vmem:[#allocation5 + $0x6f8] sm:$0xff]
    %v533 = vld [vmem:[#allocation5 + $0x700] sm:$0xff]
    %v534 = vld [vmem:[#allocation5 + $0x708] sm:$0xff]
    %v535 = vld [vmem:[#allocation5 + $0x710] sm:$0xff]
    %v536 = vld [vmem:[#allocation5 + $0x718] sm:$0xff]
    %v537 = vld [vmem:[#allocation5 + $0x720] sm:$0xff]
    %v538 = vld [vmem:[#allocation5 + $0x728] sm:$0xff]
    %v539 = vld [vmem:[#allocation5 + $0x730] sm:$0xff]
    %v540 = vld [vmem:[#allocation5 + $0x738] sm:$0xff]
    %v541 = vld [vmem:[#allocation5 + $0x740] sm:$0xff]
    %v542 = vld [vmem:[#allocation5 + $0x748] sm:$0xff]
    %v543 = vld [vmem:[#allocation5 + $0x750] sm:$0xff]
    %v544 = vld [vmem:[#allocation5 + $0x758] sm:$0xff]
    %v545 = vld [vmem:[#allocation5 + $0x760] sm:$0xff]
    %v546 = vld [vmem:[#allocation5 + $0x768] sm:$0xff]
    %v547 = vld [vmem:[#allocation5 + $0x770] sm:$0xff]
    %v548 = vld [vmem:[#allocation5 + $0x778] sm:$0xff]
    %v549 = vld [vmem:[#allocation5 + $0x780] sm:$0xff]
    %v550 = vld [vmem:[#allocation5 + $0x788] sm:$0xff]
    %v551 = vld [vmem:[#allocation5 + $0x790] sm:$0xff]
    %v552 = vld [vmem:[#allocation5 + $0x798] sm:$0xff]
    %v553 = vld [vmem:[#allocation5 + $0x7a0] sm:$0xff]
    %v554 = vld [vmem:[#allocation5 + $0x7a8] sm:$0xff]
    %v555 = vld [vmem:[#allocation5 + $0x7b0] sm:$0xff]
    %v556 = vld [vmem:[#allocation5 + $0x7b8] sm:$0xff]
    %v557 = vld [vmem:[#allocation5 + $0x7c0] sm:$0xff]
    %v558 = vld [vmem:[#allocation5 + $0x7c8] sm:$0xff]
    %v559 = vld [vmem:[#allocation5 + $0x7d0] sm:$0xff]
    %v560 = vld [vmem:[#allocation5 + $0x7d8] sm:$0xff]
    %v561 = vld [vmem:[#allocation5 + $0x7e0] sm:$0xff]
    %v562 = vld [vmem:[#allocation5 + $0x7e8] sm:$0xff]
    %v563 = vld [vmem:[#allocation5 + $0x7f0] sm:$0xff]
    %v564 = vld [vmem:[#allocation5 + $0x7f8] sm:$0xff]
    %v565 = vld [vmem:[#allocation5 + $0x800] sm:$0xff]
    %v566 = vld [vmem:[#allocation5 + $0x808] sm:$0xff]
    %v567 = vld [vmem:[#allocation5 + $0x810] sm:$0xff]
    %v568 = vld [vmem:[#allocation5 + $0x818] sm:$0xff]
    %v569 = vld [vmem:[#allocation5 + $0x820] sm:$0xff]
    %v570 = vld [vmem:[#allocation5 + $0x828] sm:$0xff]
    %v571 = vld [vmem:[#allocation5 + $0x830] sm:$0xff]
    %v572 = vld [vmem:[#allocation5 + $0x838] sm:$0xff]
    %v573 = vld [vmem:[#allocation5 + $0x840] sm:$0xff]
    %v574 = vld [vmem:[#allocation5 + $0x848] sm:$0xff]
    %v575 = vld [vmem:[#allocation5 + $0x850] sm:$0xff]
    %v576 = vld [vmem:[#allocation5 + $0x858] sm:$0xff]
    %v577 = vld [vmem:[#allocation5 + $0x860] sm:$0xff]
    %v578 = vld [vmem:[#allocation5 + $0x868] sm:$0xff]
    %v579 = vld [vmem:[#allocation5 + $0x870] sm:$0xff]
    %v580 = vld [vmem:[#allocation5 + $0x878] sm:$0xff]
    %v581 = vld [vmem:[#allocation5 + $0x880] sm:$0xff]
    %v582 = vld [vmem:[#allocation5 + $0x888] sm:$0xff]
    %v583 = vld [vmem:[#allocation5 + $0x890] sm:$0xff]
    %v584 = vld [vmem:[#allocation5 + $0x898] sm:$0xff]
    %v585 = vld [vmem:[#allocation5 + $0x8a0] sm:$0xff]
    %v586 = vld [vmem:[#allocation5 + $0x8a8] sm:$0xff]
    %v587 = vld [vmem:[#allocation5 + $0x8b0] sm:$0xff]
    %v588 = vld [vmem:[#allocation5 + $0x8b8] sm:$0xff]
    %v589 = vld [vmem:[#allocation5 + $0x8c0] sm:$0xff]
    %v590 = vld [vmem:[#allocation5 + $0x8c8] sm:$0xff]
    %v591 = vld [vmem:[#allocation5 + $0x8d0] sm:$0xff]
    %v592 = vld [vmem:[#allocation5 + $0x8d8] sm:$0xff]
    %v593 = vld [vmem:[#allocation5 + $0x8e0] sm:$0xff]
    %v594 = vld [vmem:[#allocation5 + $0x8e8] sm:$0xff]
    %v595 = vld [vmem:[#allocation5 + $0x8f0] sm:$0xff]
    %v596 = vld [vmem:[#allocation5 + $0x8f8] sm:$0xff]
    %v597 = vld [vmem:[#allocation5 + $0x900] sm:$0xff]
    %v598 = vld [vmem:[#allocation5 + $0x908] sm:$0xff]
    %v599 = vld [vmem:[#allocation5 + $0x910] sm:$0xff]
    %v600 = vld [vmem:[#allocation5 + $0x918] sm:$0xff]
    %v601 = vld [vmem:[#allocation5 + $0x920] sm:$0xff]
    %v602 = vld [vmem:[#allocation5 + $0x928] sm:$0xff]
    %v603 = vld [vmem:[#allocation5 + $0x930] sm:$0xff]
    %v604 = vld [vmem:[#allocation5 + $0x938] sm:$0xff]
    %v605 = vld [vmem:[#allocation5 + $0x940] sm:$0xff]
    %v606 = vld [vmem:[#allocation5 + $0x948] sm:$0xff]
    %v607 = vld [vmem:[#allocation5 + $0x950] sm:$0xff]
    %v608 = vld [vmem:[#allocation5 + $0x958] sm:$0xff]
    %v609 = vld [vmem:[#allocation5 + $0x960] sm:$0xff]
    %v610 = vld [vmem:[#allocation5 + $0x968] sm:$0xff]
    %v611 = vld [vmem:[#allocation5 + $0x970] sm:$0xff]
    %v612 = vld [vmem:[#allocation5 + $0x978] sm:$0xff]
    %v613 = vld [vmem:[#allocation5 + $0x980] sm:$0xff]
    %v614 = vld [vmem:[#allocation5 + $0x988] sm:$0xff]
    %v615 = vld [vmem:[#allocation5 + $0x990] sm:$0xff]
    %v616 = vld [vmem:[#allocation5 + $0x998] sm:$0xff]
    %v617 = vld [vmem:[#allocation5 + $0x9a0] sm:$0xff]
    %v618 = vld [vmem:[#allocation5 + $0x9a8] sm:$0xff]
    %v619 = vld [vmem:[#allocation5 + $0x9b0] sm:$0xff]
    %v620 = vld [vmem:[#allocation5 + $0x9b8] sm:$0xff]
    %v621 = vld [vmem:[#allocation5 + $0x9c0] sm:$0xff]
    %v622 = vld [vmem:[#allocation5 + $0x9c8] sm:$0xff]
    %v623 = vld [vmem:[#allocation5 + $0x9d0] sm:$0xff]
    %v624 = vld [vmem:[#allocation5 + $0x9d8] sm:$0xff]
    %v625 = vld [vmem:[#allocation5 + $0x9e0] sm:$0xff]
    %v626 = vld [vmem:[#allocation5 + $0x9e8] sm:$0xff]
    %v627 = vld [vmem:[#allocation5 + $0x9f0] sm:$0xff]
    %v628 = vld [vmem:[#allocation5 + $0x9f8] sm:$0xff]
    %v629 = vld [vmem:[#allocation5 + $0xa00] sm:$0xff]
    %v630 = vld [vmem:[#allocation5 + $0xa08] sm:$0xff]
    %v631 = vld [vmem:[#allocation5 + $0xa10] sm:$0xff]
    %v632 = vld [vmem:[#allocation5 + $0xa18] sm:$0xff]
    %v633 = vld [vmem:[#allocation5 + $0xa20] sm:$0xff]
    %v634 = vld [vmem:[#allocation5 + $0xa28] sm:$0xff]
    %v635 = vld [vmem:[#allocation5 + $0xa30] sm:$0xff]
    %v636 = vld [vmem:[#allocation5 + $0xa38] sm:$0xff]
    %v637 = vld [vmem:[#allocation5 + $0xa40] sm:$0xff]
    %v638 = vld [vmem:[#allocation5 + $0xa48] sm:$0xff]
    %v639 = vld [vmem:[#allocation5 + $0xa50] sm:$0xff]
    %v640 = vld [vmem:[#allocation5 + $0xa58] sm:$0xff]
    %v641 = vld [vmem:[#allocation5 + $0xa60] sm:$0xff]
    %v642 = vld [vmem:[#allocation5 + $0xa68] sm:$0xff]
    %v643 = vld [vmem:[#allocation5 + $0xa70] sm:$0xff]
    %v644 = vld [vmem:[#allocation5 + $0xa78] sm:$0xff]
    %v645 = vld [vmem:[#allocation5 + $0xa80] sm:$0xff]
    %v646 = vld [vmem:[#allocation5 + $0xa88] sm:$0xff]
    %v647 = vld [vmem:[#allocation5 + $0xa90] sm:$0xff]
    %v648 = vld [vmem:[#allocation5 + $0xa98] sm:$0xff]
    %v649 = vld [vmem:[#allocation5 + $0xaa0] sm:$0xff]
    %v650 = vld [vmem:[#allocation5 + $0xaa8] sm:$0xff]
    %v651 = vld [vmem:[#allocation5 + $0xab0] sm:$0xff]
    %v652 = vld [vmem:[#allocation5 + $0xab8] sm:$0xff]
    %v653 = vld [vmem:[#allocation5 + $0xac0] sm:$0xff]
    %v654 = vld [vmem:[#allocation5 + $0xac8] sm:$0xff]
    %v655 = vld [vmem:[#allocation5 + $0xad0] sm:$0xff]
    %v656 = vld [vmem:[#allocation5 + $0xad8] sm:$0xff]
    %v657 = vld [vmem:[#allocation5 + $0xae0] sm:$0xff]
    %v658 = vld [vmem:[#allocation5 + $0xae8] sm:$0xff]
    %v659 = vld [vmem:[#allocation5 + $0xaf0] sm:$0xff]
    %v660 = vld [vmem:[#allocation5 + $0xaf8] sm:$0xff]
    %v661 = vld [vmem:[#allocation5 + $0xb00] sm:$0xff]
    %v662 = vld [vmem:[#allocation5 + $0xb08] sm:$0xff]
    %v663 = vld [vmem:[#allocation5 + $0xb10] sm:$0xff]
    %v664 = vld [vmem:[#allocation5 + $0xb18] sm:$0xff]
    %v665 = vld [vmem:[#allocation5 + $0xb20] sm:$0xff]
    %v666 = vld [vmem:[#allocation5 + $0xb28] sm:$0xff]
    %v667 = vld [vmem:[#allocation5 + $0xb30] sm:$0xff]
    %v668 = vld [vmem:[#allocation5 + $0xb38] sm:$0xff]
    %v669 = vld [vmem:[#allocation5 + $0xb40] sm:$0xff]
    %v670 = vld [vmem:[#allocation5 + $0xb48] sm:$0xff]
    %v671 = vld [vmem:[#allocation5 + $0xb50] sm:$0xff]
    %v672 = vld [vmem:[#allocation5 + $0xb58] sm:$0xff]
    %v673 = vld [vmem:[#allocation5 + $0xb60] sm:$0xff]
    %v674 = vld [vmem:[#allocation5 + $0xb68] sm:$0xff]
    %v675 = vld [vmem:[#allocation5 + $0xb70] sm:$0xff]
    %v676 = vld [vmem:[#allocation5 + $0xb78] sm:$0xff]
    %v677 = vld [vmem:[#allocation5 + $0xb80] sm:$0xff]
    %v678 = vld [vmem:[#allocation5 + $0xb88] sm:$0xff]
    %v679 = vld [vmem:[#allocation5 + $0xb90] sm:$0xff]
    %v680 = vld [vmem:[#allocation5 + $0xb98] sm:$0xff]
    %v681 = vld [vmem:[#allocation5 + $0xba0] sm:$0xff]
    %v682 = vld [vmem:[#allocation5 + $0xba8] sm:$0xff]
    %v683 = vld [vmem:[#allocation5 + $0xbb0] sm:$0xff]
    %v684 = vld [vmem:[#allocation5 + $0xbb8] sm:$0xff]
    %v685 = vld [vmem:[#allocation5 + $0xbc0] sm:$0xff]
    %v686 = vld [vmem:[#allocation5 + $0xbc8] sm:$0xff]
    %v687 = vld [vmem:[#allocation5 + $0xbd0] sm:$0xff]
    %v688 = vld [vmem:[#allocation5 + $0xbd8] sm:$0xff]
    %v689 = vld [vmem:[#allocation5 + $0xbe0] sm:$0xff]
    %v690 = vld [vmem:[#allocation5 + $0xbe8] sm:$0xff]
    %v691 = vld [vmem:[#allocation5 + $0xbf0] sm:$0xff]
    %v692 = vld [vmem:[#allocation5 + $0xbf8] sm:$0xff]
    %v693 = vld [vmem:[#allocation5 + $0xc00] sm:$0xff]
    %v694 = vld [vmem:[#allocation5 + $0xc08] sm:$0xff]
    %v695 = vld [vmem:[#allocation5 + $0xc10] sm:$0xff]
    %v696 = vld [vmem:[#allocation5 + $0xc18] sm:$0xff]
    %v697 = vld [vmem:[#allocation5 + $0xc20] sm:$0xff]
    %v698 = vld [vmem:[#allocation5 + $0xc28] sm:$0xff]
    %v699 = vld [vmem:[#allocation5 + $0xc30] sm:$0xff]
    %v700 = vld [vmem:[#allocation5 + $0xc38] sm:$0xff]
    %v701 = vld [vmem:[#allocation5 + $0xc40] sm:$0xff]
    %v702 = vld [vmem:[#allocation5 + $0xc48] sm:$0xff]
    %v703 = vld [vmem:[#allocation5 + $0xc50] sm:$0xff]
    %v704 = vld [vmem:[#allocation5 + $0xc58] sm:$0xff]
    %v705 = vld [vmem:[#allocation5 + $0xc60] sm:$0xff]
    %v706 = vld [vmem:[#allocation5 + $0xc68] sm:$0xff]
    %v707 = vld [vmem:[#allocation5 + $0xc70] sm:$0xff]
    %v708 = vld [vmem:[#allocation5 + $0xc78] sm:$0xff]
    %v709 = vld [vmem:[#allocation5 + $0xc80] sm:$0xff]
    %v710 = vld [vmem:[#allocation5 + $0xc88] sm:$0xff]
    %v711 = vld [vmem:[#allocation5 + $0xc90] sm:$0xff]
    %v712 = vld [vmem:[#allocation5 + $0xc98] sm:$0xff]
    %v713 = vld [vmem:[#allocation5 + $0xca0] sm:$0xff]
    %v714 = vld [vmem:[#allocation5 + $0xca8] sm:$0xff]
    %v715 = vld [vmem:[#allocation5 + $0xcb0] sm:$0xff]
    %v716 = vld [vmem:[#allocation5 + $0xcb8] sm:$0xff]
    %v717 = vld [vmem:[#allocation5 + $0xcc0] sm:$0xff]
    %v718 = vld [vmem:[#allocation5 + $0xcc8] sm:$0xff]
    %v719 = vld [vmem:[#allocation5 + $0xcd0] sm:$0xff]
    %v720 = vld [vmem:[#allocation5 + $0xcd8] sm:$0xff]
    %v721 = vld [vmem:[#allocation5 + $0xce0] sm:$0xff]
    %v722 = vld [vmem:[#allocation5 + $0xce8] sm:$0xff]
    %v723 = vld [vmem:[#allocation5 + $0xcf0] sm:$0xff]
    %v724 = vld [vmem:[#allocation5 + $0xcf8] sm:$0xff]
    %v725 = vld [vmem:[#allocation5 + $0xd00] sm:$0xff]
    %v726 = vld [vmem:[#allocation5 + $0xd08] sm:$0xff]
    %v727 = vld [vmem:[#allocation5 + $0xd10] sm:$0xff]
    %v728 = vld [vmem:[#allocation5 + $0xd18] sm:$0xff]
    %v729 = vld [vmem:[#allocation5 + $0xd20] sm:$0xff]
    %v730 = vld [vmem:[#allocation5 + $0xd28] sm:$0xff]
    %v731 = vld [vmem:[#allocation5 + $0xd30] sm:$0xff]
    %v732 = vld [vmem:[#allocation5 + $0xd38] sm:$0xff]
    %v733 = vld [vmem:[#allocation5 + $0xd40] sm:$0xff]
    %v734 = vld [vmem:[#allocation5 + $0xd48] sm:$0xff]
    %v735 = vld [vmem:[#allocation5 + $0xd50] sm:$0xff]
    %v736 = vld [vmem:[#allocation5 + $0xd58] sm:$0xff]
    %v737 = vld [vmem:[#allocation5 + $0xd60] sm:$0xff]
    %v738 = vld [vmem:[#allocation5 + $0xd68] sm:$0xff]
    %v739 = vld [vmem:[#allocation5 + $0xd70] sm:$0xff]
    %v740 = vld [vmem:[#allocation5 + $0xd78] sm:$0xff]
    %v741 = vld [vmem:[#allocation5 + $0xd80] sm:$0xff]
    %v742 = vld [vmem:[#allocation5 + $0xd88] sm:$0xff]
    %v743 = vld [vmem:[#allocation5 + $0xd90] sm:$0xff]
    %v744 = vld [vmem:[#allocation5 + $0xd98] sm:$0xff]
    %v745 = vld [vmem:[#allocation5 + $0xda0] sm:$0xff]
    %v746 = vld [vmem:[#allocation5 + $0xda8] sm:$0xff]
    %v747 = vld [vmem:[#allocation5 + $0xdb0] sm:$0xff]
    %v748 = vld [vmem:[#allocation5 + $0xdb8] sm:$0xff]
    %v749 = vld [vmem:[#allocation5 + $0xdc0] sm:$0xff]
    %v750 = vld [vmem:[#allocation5 + $0xdc8] sm:$0xff]
    %v751 = vld [vmem:[#allocation5 + $0xdd0] sm:$0xff]
    %v752 = vld [vmem:[#allocation5 + $0xdd8] sm:$0xff]
    %v753 = vld [vmem:[#allocation5 + $0xde0] sm:$0xff]
    %v754 = vld [vmem:[#allocation5 + $0xde8] sm:$0xff]
    %v755 = vld [vmem:[#allocation5 + $0xdf0] sm:$0xff]
    %v756 = vld [vmem:[#allocation5 + $0xdf8] sm:$0xff]
    %v757 = vld [vmem:[#allocation5 + $0xe00] sm:$0xff]
    %v758 = vld [vmem:[#allocation5 + $0xe08] sm:$0xff]
    %v759 = vld [vmem:[#allocation5 + $0xe10] sm:$0xff]
    %v760 = vld [vmem:[#allocation5 + $0xe18] sm:$0xff]
    %v761 = vld [vmem:[#allocation5 + $0xe20] sm:$0xff]
    %v762 = vld [vmem:[#allocation5 + $0xe28] sm:$0xff]
    %v763 = vld [vmem:[#allocation5 + $0xe30] sm:$0xff]
    %v764 = vld [vmem:[#allocation5 + $0xe38] sm:$0xff]
    %v765 = vld [vmem:[#allocation5 + $0xe40] sm:$0xff]
    %v766 = vld [vmem:[#allocation5 + $0xe48] sm:$0xff]
    %v767 = vld [vmem:[#allocation5 + $0xe50] sm:$0xff]
    %v768 = vld [vmem:[#allocation5 + $0xe58] sm:$0xff]
    %v769 = vld [vmem:[#allocation5 + $0xe60] sm:$0xff]
    %v770 = vld [vmem:[#allocation5 + $0xe68] sm:$0xff]
    %v771 = vld [vmem:[#allocation5 + $0xe70] sm:$0xff]
    %v772 = vld [vmem:[#allocation5 + $0xe78] sm:$0xff]
    %v773 = vld [vmem:[#allocation5 + $0xe80] sm:$0xff]
    %v774 = vld [vmem:[#allocation5 + $0xe88] sm:$0xff]
    %v775 = vld [vmem:[#allocation5 + $0xe90] sm:$0xff]
    %v776 = vld [vmem:[#allocation5 + $0xe98] sm:$0xff]
    %v777 = vld [vmem:[#allocation5 + $0xea0] sm:$0xff]
    %v778 = vld [vmem:[#allocation5 + $0xea8] sm:$0xff]
    %v779 = vld [vmem:[#allocation5 + $0xeb0] sm:$0xff]
    %v780 = vld [vmem:[#allocation5 + $0xeb8] sm:$0xff]
    %v781 = vld [vmem:[#allocation5 + $0xec0] sm:$0xff]
    %v782 = vld [vmem:[#allocation5 + $0xec8] sm:$0xff]
    %v783 = vld [vmem:[#allocation5 + $0xed0] sm:$0xff]
    %v784 = vld [vmem:[#allocation5 + $0xed8] sm:$0xff]
    %v785 = vld [vmem:[#allocation5 + $0xee0] sm:$0xff]
    %v786 = vld [vmem:[#allocation5 + $0xee8] sm:$0xff]
    %v787 = vld [vmem:[#allocation5 + $0xef0] sm:$0xff]
    %v788 = vld [vmem:[#allocation5 + $0xef8] sm:$0xff]
    %v789 = vld [vmem:[#allocation5 + $0xf00] sm:$0xff]
    %v790 = vld [vmem:[#allocation5 + $0xf08] sm:$0xff]
    %v791 = vld [vmem:[#allocation5 + $0xf10] sm:$0xff]
    %v792 = vld [vmem:[#allocation5 + $0xf18] sm:$0xff]
    %v793 = vld [vmem:[#allocation5 + $0xf20] sm:$0xff]
    %v794 = vld [vmem:[#allocation5 + $0xf28] sm:$0xff]
    %v795 = vld [vmem:[#allocation5 + $0xf30] sm:$0xff]
    %v796 = vld [vmem:[#allocation5 + $0xf38] sm:$0xff]
    %v797 = vld [vmem:[#allocation5 + $0xf40] sm:$0xff]
    %v798 = vld [vmem:[#allocation5 + $0xf48] sm:$0xff]
    %v799 = vld [vmem:[#allocation5 + $0xf50] sm:$0xff]
    %v800 = vld [vmem:[#allocation5 + $0xf58] sm:$0xff]
    %v801 = vld [vmem:[#allocation5 + $0xf60] sm:$0xff]
    %v802 = vld [vmem:[#allocation5 + $0xf68] sm:$0xff]
    %v803 = vld [vmem:[#allocation5 + $0xf70] sm:$0xff]
    %v804 = vld [vmem:[#allocation5 + $0xf78] sm:$0xff]
    %v805 = vld [vmem:[#allocation5 + $0xf80] sm:$0xff]
    %v806 = vld [vmem:[#allocation5 + $0xf88] sm:$0xff]
    %v807 = vld [vmem:[#allocation5 + $0xf90] sm:$0xff]
    %v808 = vld [vmem:[#allocation5 + $0xf98] sm:$0xff]
    %v809 = vld [vmem:[#allocation5 + $0xfa0] sm:$0xff]
    %v810 = vld [vmem:[#allocation5 + $0xfa8] sm:$0xff]
    %v811 = vld [vmem:[#allocation5 + $0xfb0] sm:$0xff]
    %v812 = vld [vmem:[#allocation5 + $0xfb8] sm:$0xff]
    %v813 = vld [vmem:[#allocation5 + $0xfc0] sm:$0xff]
    %v814 = vld [vmem:[#allocation5 + $0xfc8] sm:$0xff]
    %v815 = vld [vmem:[#allocation5 + $0xfd0] sm:$0xff]
    %v816 = vld [vmem:[#allocation5 + $0xfd8] sm:$0xff]
    %v817 = vld [vmem:[#allocation5 + $0xfe0] sm:$0xff]
    %v818 = vld [vmem:[#allocation5 + $0xfe8] sm:$0xff]
    %v819 = vld [vmem:[#allocation5 + $0xff0] sm:$0xff]
    %v820 = vld [vmem:[#allocation5 + $0xff8] sm:$0xff]
    %v821 = vld [vmem:[#allocation5 + $0x1000] sm:$0xff]
    %v822 = vld [vmem:[#allocation5 + $0x1008] sm:$0xff]
    %v823 = vld [vmem:[#allocation5 + $0x1010] sm:$0xff]
    %v824 = vld [vmem:[#allocation5 + $0x1018] sm:$0xff]
    %v825 = vld [vmem:[#allocation5 + $0x1020] sm:$0xff]
    %v826 = vld [vmem:[#allocation5 + $0x1028] sm:$0xff]
    %v827 = vld [vmem:[#allocation5 + $0x1030] sm:$0xff]
    %v828 = vld [vmem:[#allocation5 + $0x1038] sm:$0xff]
    %v829 = vld [vmem:[#allocation5 + $0x1040] sm:$0xff]
    %v830 = vld [vmem:[#allocation5 + $0x1048] sm:$0xff]
    %v831 = vld [vmem:[#allocation5 + $0x1050] sm:$0xff]
    %v832 = vld [vmem:[#allocation5 + $0x1058] sm:$0xff]
    %v833 = vld [vmem:[#allocation5 + $0x1060] sm:$0xff]
    %v834 = vld [vmem:[#allocation5 + $0x1068] sm:$0xff]
    %v835 = vld [vmem:[#allocation5 + $0x1070] sm:$0xff]
    %v836 = vld [vmem:[#allocation5 + $0x1078] sm:$0xff]
    %v837 = vld [vmem:[#allocation5 + $0x1080] sm:$0xff]
    %v838 = vld [vmem:[#allocation5 + $0x1088] sm:$0xff]
    %v839 = vld [vmem:[#allocation5 + $0x1090] sm:$0xff]
    %v840 = vld [vmem:[#allocation5 + $0x1098] sm:$0xff]
    %v841 = vld [vmem:[#allocation5 + $0x10a0] sm:$0xff]
    %v842 = vld [vmem:[#allocation5 + $0x10a8] sm:$0xff]
    %v843 = vld [vmem:[#allocation5 + $0x10b0] sm:$0xff]
    %v844 = vld [vmem:[#allocation5 + $0x10b8] sm:$0xff]
    %v845 = vld [vmem:[#allocation5 + $0x10c0] sm:$0xff]
    %v846 = vld [vmem:[#allocation5 + $0x10c8] sm:$0xff]
    %v847 = vld [vmem:[#allocation5 + $0x10d0] sm:$0xff]
    %v848 = vld [vmem:[#allocation5 + $0x10d8] sm:$0xff]
    %v849 = vld [vmem:[#allocation5 + $0x10e0] sm:$0xff]
    %v850 = vld [vmem:[#allocation5 + $0x10e8] sm:$0xff]
    %v851 = vld [vmem:[#allocation5 + $0x10f0] sm:$0xff]
    %v852 = vld [vmem:[#allocation5 + $0x10f8] sm:$0xff]
    %v853 = vld [vmem:[#allocation5 + $0x1100] sm:$0xff]
    %v854 = vld [vmem:[#allocation5 + $0x1108] sm:$0xff]
    %v855 = vld [vmem:[#allocation5 + $0x1110] sm:$0xff]
    %v856 = vld [vmem:[#allocation5 + $0x1118] sm:$0xff]
    %v857 = vld [vmem:[#allocation5 + $0x1120] sm:$0xff]
    %v858 = vld [vmem:[#allocation5 + $0x1128] sm:$0xff]
    %v859 = vld [vmem:[#allocation5 + $0x1130] sm:$0xff]
    %v860 = vld [vmem:[#allocation5 + $0x1138] sm:$0xff]
    %v861 = vld [vmem:[#allocation5 + $0x1140] sm:$0xff]
    %v862 = vld [vmem:[#allocation5 + $0x1148] sm:$0xff]
    %v863 = vld [vmem:[#allocation5 + $0x1150] sm:$0xff]
    %v864 = vld [vmem:[#allocation5 + $0x1158] sm:$0xff]
    %v865 = vld [vmem:[#allocation5 + $0x1160] sm:$0xff]
    %v866 = vld [vmem:[#allocation5 + $0x1168] sm:$0xff]
    %v867 = vld [vmem:[#allocation5 + $0x1170] sm:$0xff]
    %v868 = vld [vmem:[#allocation5 + $0x1178] sm:$0xff]
    %v869 = vld [vmem:[#allocation5 + $0x1180] sm:$0xff]
    %v870 = vld [vmem:[#allocation5 + $0x1188] sm:$0xff]
    %v871 = vld [vmem:[#allocation5 + $0x1190] sm:$0xff]
    %v872 = vld [vmem:[#allocation5 + $0x1198] sm:$0xff]
    %v873 = vld [vmem:[#allocation5 + $0x11a0] sm:$0xff]
    %v874 = vld [vmem:[#allocation5 + $0x11a8] sm:$0xff]
    %v875 = vld [vmem:[#allocation5 + $0x11b0] sm:$0xff]
    %v876 = vld [vmem:[#allocation5 + $0x11b8] sm:$0xff]
    %v877 = vld [vmem:[#allocation5 + $0x11c0] sm:$0xff]
    %v878 = vld [vmem:[#allocation5 + $0x11c8] sm:$0xff]
    %v879 = vld [vmem:[#allocation5 + $0x11d0] sm:$0xff]
    %v880 = vld [vmem:[#allocation5 + $0x11d8] sm:$0xff]
    %v881 = vld [vmem:[#allocation5 + $0x11e0] sm:$0xff]
    %v882 = vld [vmem:[#allocation5 + $0x11e8] sm:$0xff]
    %v883 = vld [vmem:[#allocation5 + $0x11f0] sm:$0xff]
    %v884 = vld [vmem:[#allocation5 + $0x11f8] sm:$0xff]
    %v885 = vld [vmem:[#allocation5 + $0x1200] sm:$0xff]
    %v886 = vld [vmem:[#allocation5 + $0x1208] sm:$0xff]
    %v887 = vld [vmem:[#allocation5 + $0x1210] sm:$0xff]
    %v888 = vld [vmem:[#allocation5 + $0x1218] sm:$0xff]
    %v889 = vld [vmem:[#allocation5 + $0x1220] sm:$0xff]
    %v890 = vld [vmem:[#allocation5 + $0x1228] sm:$0xff]
    %v891 = vld [vmem:[#allocation5 + $0x1230] sm:$0xff]
    %v892 = vld [vmem:[#allocation5 + $0x1238] sm:$0xff]
    %v893 = vld [vmem:[#allocation5 + $0x1240] sm:$0xff]
    %v894 = vld [vmem:[#allocation5 + $0x1248] sm:$0xff]
    %v895 = vld [vmem:[#allocation5 + $0x1250] sm:$0xff]
    %v896 = vld [vmem:[#allocation5 + $0x1258] sm:$0xff]
    %v897 = vld [vmem:[#allocation5 + $0x1260] sm:$0xff]
    %v898 = vld [vmem:[#allocation5 + $0x1268] sm:$0xff]
    %v899 = vld [vmem:[#allocation5 + $0x1270] sm:$0xff]
    %v900 = vld [vmem:[#allocation5 + $0x1278] sm:$0xff]
    %v901 = vld [vmem:[#allocation5 + $0x1280] sm:$0xff]
    %v902 = vld [vmem:[#allocation5 + $0x1288] sm:$0xff]
    %v903 = vld [vmem:[#allocation5 + $0x1290] sm:$0xff]
    %v904 = vld [vmem:[#allocation5 + $0x1298] sm:$0xff]
    %v905 = vld [vmem:[#allocation5 + $0x12a0] sm:$0xff]
    %v906 = vld [vmem:[#allocation5 + $0x12a8] sm:$0xff]
    %v907 = vld [vmem:[#allocation5 + $0x12b0] sm:$0xff]
    %v908 = vld [vmem:[#allocation5 + $0x12b8] sm:$0xff]
    %v909 = vld [vmem:[#allocation5 + $0x12c0] sm:$0xff]
    %v910 = vld [vmem:[#allocation5 + $0x12c8] sm:$0xff]
    %v911 = vld [vmem:[#allocation5 + $0x12d0] sm:$0xff]
    %v912 = vld [vmem:[#allocation5 + $0x12d8] sm:$0xff]
    %v913 = vld [vmem:[#allocation5 + $0x12e0] sm:$0xff]
    %v914 = vld [vmem:[#allocation5 + $0x12e8] sm:$0xff]
    %v915 = vld [vmem:[#allocation5 + $0x12f0] sm:$0xff]
    %v916 = vld [vmem:[#allocation5 + $0x12f8] sm:$0xff]
    %v917 = vld [vmem:[#allocation5 + $0x1300] sm:$0xff]
    %v918 = vld [vmem:[#allocation5 + $0x1308] sm:$0xff]
    %v919 = vld [vmem:[#allocation5 + $0x1310] sm:$0xff]
    %v920 = vld [vmem:[#allocation5 + $0x1318] sm:$0xff]
    %v921 = vld [vmem:[#allocation5 + $0x1320] sm:$0xff]
    %v922 = vld [vmem:[#allocation5 + $0x1328] sm:$0xff]
    %v923 = vld [vmem:[#allocation5 + $0x1330] sm:$0xff]
    %v924 = vld [vmem:[#allocation5 + $0x1338] sm:$0xff]
    %v925 = vld [vmem:[#allocation5 + $0x1340] sm:$0xff]
    %v926 = vld [vmem:[#allocation5 + $0x1348] sm:$0xff]
    %v927 = vld [vmem:[#allocation5 + $0x1350] sm:$0xff]
    %v928 = vld [vmem:[#allocation5 + $0x1358] sm:$0xff]
    %v929 = vld [vmem:[#allocation5 + $0x1360] sm:$0xff]
    %v930 = vld [vmem:[#allocation5 + $0x1368] sm:$0xff]
    %v931 = vld [vmem:[#allocation5 + $0x1370] sm:$0xff]
    %v932 = vld [vmem:[#allocation5 + $0x1378] sm:$0xff]
    %v933 = vld [vmem:[#allocation5 + $0x1380] sm:$0xff]
    %v934 = vld [vmem:[#allocation5 + $0x1388] sm:$0xff]
    %v935 = vld [vmem:[#allocation5 + $0x1390] sm:$0xff]
    %v936 = vld [vmem:[#allocation5 + $0x1398] sm:$0xff]
    %v937 = vld [vmem:[#allocation5 + $0x13a0] sm:$0xff]
    %v938 = vld [vmem:[#allocation5 + $0x13a8] sm:$0xff]
    %v939 = vld [vmem:[#allocation5 + $0x13b0] sm:$0xff]
    %v940 = vld [vmem:[#allocation5 + $0x13b8] sm:$0xff]
    %v941 = vld [vmem:[#allocation5 + $0x13c0] sm:$0xff]
    %v942 = vld [vmem:[#allocation5 + $0x13c8] sm:$0xff]
    %v943 = vld [vmem:[#allocation5 + $0x13d0] sm:$0xff]
    %v944 = vld [vmem:[#allocation5 + $0x13d8] sm:$0xff]
    %v945 = vld [vmem:[#allocation5 + $0x13e0] sm:$0xff]
    %v946 = vld [vmem:[#allocation5 + $0x13e8] sm:$0xff]
    %v947 = vld [vmem:[#allocation5 + $0x13f0] sm:$0xff]
    %v948 = vld [vmem:[#allocation5 + $0x13f8] sm:$0xff]
    %v949 = vld [vmem:[#allocation5 + $0x1400] sm:$0xff]
    %v950 = vld [vmem:[#allocation5 + $0x1408] sm:$0xff]
    %v951 = vld [vmem:[#allocation5 + $0x1410] sm:$0xff]
    %v952 = vld [vmem:[#allocation5 + $0x1418] sm:$0xff]
    %v953 = vld [vmem:[#allocation5 + $0x1420] sm:$0xff]
    %v954 = vld [vmem:[#allocation5 + $0x1428] sm:$0xff]
    %v955 = vld [vmem:[#allocation5 + $0x1430] sm:$0xff]
    %v956 = vld [vmem:[#allocation5 + $0x1438] sm:$0xff]
    %v957 = vld [vmem:[#allocation5 + $0x1440] sm:$0xff]
    %v958 = vld [vmem:[#allocation5 + $0x1448] sm:$0xff]
    %v959 = vld [vmem:[#allocation5 + $0x1450] sm:$0xff]
    %v960 = vld [vmem:[#allocation5 + $0x1458] sm:$0xff]
    %v961 = vld [vmem:[#allocation5 + $0x1460] sm:$0xff]
    %v962 = vld [vmem:[#allocation5 + $0x1468] sm:$0xff]
    %v963 = vld [vmem:[#allocation5 + $0x1470] sm:$0xff]
    %v964 = vld [vmem:[#allocation5 + $0x1478] sm:$0xff]
    %v965 = vld [vmem:[#allocation5 + $0x1480] sm:$0xff]
    %v966 = vld [vmem:[#allocation5 + $0x1488] sm:$0xff]
    %v967 = vld [vmem:[#allocation5 + $0x1490] sm:$0xff]
    %v968 = vld [vmem:[#allocation5 + $0x1498] sm:$0xff]
    %v969 = vld [vmem:[#allocation5 + $0x14a0] sm:$0xff]
    %v970 = vld [vmem:[#allocation5 + $0x14a8] sm:$0xff]
    %v971 = vld [vmem:[#allocation5 + $0x14b0] sm:$0xff]
    %v972 = vld [vmem:[#allocation5 + $0x14b8] sm:$0xff]
    %v973 = vld [vmem:[#allocation5 + $0x14c0] sm:$0xff]
    %v974 = vld [vmem:[#allocation5 + $0x14c8] sm:$0xff]
    %v975 = vld [vmem:[#allocation5 + $0x14d0] sm:$0xff]
    %v976 = vld [vmem:[#allocation5 + $0x14d8] sm:$0xff]
    %v977 = vld [vmem:[#allocation5 + $0x14e0] sm:$0xff]
    %v978 = vld [vmem:[#allocation5 + $0x14e8] sm:$0xff]
    %v979 = vld [vmem:[#allocation5 + $0x14f0] sm:$0xff]
    %v980 = vld [vmem:[#allocation5 + $0x14f8] sm:$0xff]
    %v981 = vld [vmem:[#allocation5 + $0x1500] sm:$0xff]
    %v982 = vld [vmem:[#allocation5 + $0x1508] sm:$0xff]
    %v983 = vld [vmem:[#allocation5 + $0x1510] sm:$0xff]
    %v984 = vld [vmem:[#allocation5 + $0x1518] sm:$0xff]
    %v985 = vld [vmem:[#allocation5 + $0x1520] sm:$0xff]
    %v986 = vld [vmem:[#allocation5 + $0x1528] sm:$0xff]
    %v987 = vld [vmem:[#allocation5 + $0x1530] sm:$0xff]
    %v988 = vld [vmem:[#allocation5 + $0x1538] sm:$0xff]
    %v989 = vld [vmem:[#allocation5 + $0x1540] sm:$0xff]
    %v990 = vld [vmem:[#allocation5 + $0x1548] sm:$0xff]
    %v991 = vld [vmem:[#allocation5 + $0x1550] sm:$0xff]
    %v992 = vld [vmem:[#allocation5 + $0x1558] sm:$0xff]
    %v993 = vld [vmem:[#allocation5 + $0x1560] sm:$0xff]
    %v994 = vld [vmem:[#allocation5 + $0x1568] sm:$0xff]
    %v995 = vld [vmem:[#allocation5 + $0x1570] sm:$0xff]
    %v996 = vld [vmem:[#allocation5 + $0x1578] sm:$0xff]
    %v997 = vld [vmem:[#allocation5 + $0x1580] sm:$0xff]
    %v998 = vld [vmem:[#allocation5 + $0x1588] sm:$0xff]
    %v999 = vld [vmem:[#allocation5 + $0x1590] sm:$0xff]
    %v1000 = vld [vmem:[#allocation5 + $0x1598] sm:$0xff]
    %v1001 = vld [vmem:[#allocation5 + $0x15a0] sm:$0xff]
    %v1002 = vld [vmem:[#allocation5 + $0x15a8] sm:$0xff]
    %v1003 = vld [vmem:[#allocation5 + $0x15b0] sm:$0xff]
    %v1004 = vld [vmem:[#allocation5 + $0x15b8] sm:$0xff]
    %v1005 = vld [vmem:[#allocation5 + $0x15c0] sm:$0xff]
    %v1006 = vld [vmem:[#allocation5 + $0x15c8] sm:$0xff]
    %v1007 = vld [vmem:[#allocation5 + $0x15d0] sm:$0xff]
    %v1008 = vld [vmem:[#allocation5 + $0x15d8] sm:$0xff]
    %v1009 = vld [vmem:[#allocation5 + $0x15e0] sm:$0xff]
    %v1010 = vld [vmem:[#allocation5 + $0x15e8] sm:$0xff]
    %v1011 = vld [vmem:[#allocation5 + $0x15f0] sm:$0xff]
    %v1012 = vld [vmem:[#allocation5 + $0x15f8] sm:$0xff]
    %v1013 = vld [vmem:[#allocation5 + $0x1600] sm:$0xff]
    %v1014 = vld [vmem:[#allocation5 + $0x1608] sm:$0xff]
    %v1015 = vld [vmem:[#allocation5 + $0x1610] sm:$0xff]
    %v1016 = vld [vmem:[#allocation5 + $0x1618] sm:$0xff]
    %v1017 = vld [vmem:[#allocation5 + $0x1620] sm:$0xff]
    %v1018 = vld [vmem:[#allocation5 + $0x1628] sm:$0xff]
    %v1019 = vld [vmem:[#allocation5 + $0x1630] sm:$0xff]
    %v1020 = vld [vmem:[#allocation5 + $0x1638] sm:$0xff]
    %v1021 = vld [vmem:[#allocation5 + $0x1640] sm:$0xff]
    %v1022 = vld [vmem:[#allocation5 + $0x1648] sm:$0xff]
    %v1023 = vld [vmem:[#allocation5 + $0x1650] sm:$0xff]
    %v1024 = vld [vmem:[#allocation5 + $0x1658] sm:$0xff]
    %v1025 = vld [vmem:[#allocation5 + $0x1660] sm:$0xff]
    %v1026 = vld [vmem:[#allocation5 + $0x1668] sm:$0xff]
    %v1027 = vld [vmem:[#allocation5 + $0x1670] sm:$0xff]
    %v1028 = vld [vmem:[#allocation5 + $0x1678] sm:$0xff]
    %v1029 = vld [vmem:[#allocation5 + $0x1680] sm:$0xff]
    %v1030 = vld [vmem:[#allocation5 + $0x1688] sm:$0xff]
    %v1031 = vld [vmem:[#allocation5 + $0x1690] sm:$0xff]
    %v1032 = vld [vmem:[#allocation5 + $0x1698] sm:$0xff]
    %v1033 = vld [vmem:[#allocation5 + $0x16a0] sm:$0xff]
    %v1034 = vld [vmem:[#allocation5 + $0x16a8] sm:$0xff]
    %v1035 = vld [vmem:[#allocation5 + $0x16b0] sm:$0xff]
    %v1036 = vld [vmem:[#allocation5 + $0x16b8] sm:$0xff]
    %v1037 = vld [vmem:[#allocation5 + $0x16c0] sm:$0xff]
    %v1038 = vld [vmem:[#allocation5 + $0x16c8] sm:$0xff]
    %v1039 = vld [vmem:[#allocation5 + $0x16d0] sm:$0xff]
    %v1040 = vld [vmem:[#allocation5 + $0x16d8] sm:$0xff]
    %v1041 = vld [vmem:[#allocation5 + $0x16e0] sm:$0xff]
    %v1042 = vld [vmem:[#allocation5 + $0x16e8] sm:$0xff]
    %v1043 = vld [vmem:[#allocation5 + $0x16f0] sm:$0xff]
    %v1044 = vld [vmem:[#allocation5 + $0x16f8] sm:$0xff]
    %v1045 = vld [vmem:[#allocation5 + $0x1700] sm:$0xff]
    %v1046 = vld [vmem:[#allocation5 + $0x1708] sm:$0xff]
    %v1047 = vld [vmem:[#allocation5 + $0x1710] sm:$0xff]
    %v1048 = vld [vmem:[#allocation5 + $0x1718] sm:$0xff]
    %v1049 = vld [vmem:[#allocation5 + $0x1720] sm:$0xff]
    %v1050 = vld [vmem:[#allocation5 + $0x1728] sm:$0xff]
    %v1051 = vld [vmem:[#allocation5 + $0x1730] sm:$0xff]
    %v1052 = vld [vmem:[#allocation5 + $0x1738] sm:$0xff]
    %v1053 = vld [vmem:[#allocation5 + $0x1740] sm:$0xff]
    %v1054 = vld [vmem:[#allocation5 + $0x1748] sm:$0xff]
    %v1055 = vld [vmem:[#allocation5 + $0x1750] sm:$0xff]
    %v1056 = vld [vmem:[#allocation5 + $0x1758] sm:$0xff]
    %v1057 = vld [vmem:[#allocation5 + $0x1760] sm:$0xff]
    %v1058 = vld [vmem:[#allocation5 + $0x1768] sm:$0xff]
    %v1059 = vld [vmem:[#allocation5 + $0x1770] sm:$0xff]
    %v1060 = vld [vmem:[#allocation5 + $0x1778] sm:$0xff]
    %v1061 = vld [vmem:[#allocation5 + $0x1780] sm:$0xff]
    %v1062 = vld [vmem:[#allocation5 + $0x1788] sm:$0xff]
    %v1063 = vld [vmem:[#allocation5 + $0x1790] sm:$0xff]
    %v1064 = vld [vmem:[#allocation5 + $0x1798] sm:$0xff]
    %v1065 = vld [vmem:[#allocation5 + $0x17a0] sm:$0xff]
    %v1066 = vld [vmem:[#allocation5 + $0x17a8] sm:$0xff]
    %v1067 = vld [vmem:[#allocation5 + $0x17b0] sm:$0xff]
    %v1068 = vld [vmem:[#allocation5 + $0x17b8] sm:$0xff]
    %v1069 = vld [vmem:[#allocation5 + $0x17c0] sm:$0xff]
    %v1070 = vld [vmem:[#allocation5 + $0x17c8] sm:$0xff]
    %v1071 = vld [vmem:[#allocation5 + $0x17d0] sm:$0xff]
    %v1072 = vld [vmem:[#allocation5 + $0x17d8] sm:$0xff]
    %v1073 = vld [vmem:[#allocation5 + $0x17e0] sm:$0xff]
    %v1074 = vld [vmem:[#allocation5 + $0x17e8] sm:$0xff]
    %v1075 = vld [vmem:[#allocation5 + $0x17f0] sm:$0xff]
    %v1076 = vld [vmem:[#allocation5 + $0x17f8] sm:$0xff]
    %v1077 = vld [vmem:[#allocation7] sm:$0xf]
    %v1079 = vlaneseq
    %v1080 = vshrl.u32 %v1079, 7
    %v1081 = vsub.s32 0, %v1080
    %v1082 = vrot.slane %v1077, %v1081
    %v1083 = vlaneseq
    %v1084 = vshrl.u32 %v1083, 7
    %v1085 = vsub.s32 1, %v1084
    %v1086 = vrot.slane %v1077, %v1085
    %v1087 = vlaneseq
    %v1088 = vshrl.u32 %v1087, 7
    %v1089 = vsub.s32 2, %v1088
    %v1090 = vrot.slane %v1077, %v1089
    %v1091 = vlaneseq
    %v1092 = vshrl.u32 %v1091, 7
    %v1093 = vsub.s32 3, %v1092
    %v1094 = vrot.slane %v1077, %v1093
    %v1291 = vunpack.c.l.b16 %v117
    %v1292 = vunpack.c.h.b16 %v117
    %v1293 = vunpack.c.l.b16 %v118
    %v1294 = vunpack.c.h.b16 %v118
    %v1295 = vunpack.c.l.b16 %v119
    %v1296 = vunpack.c.h.b16 %v119
    %v1297 = vunpack.c.l.b16 %v120
    %v1298 = vunpack.c.h.b16 %v120
    %v1299 = vunpack.c.l.b16 %v121
    %v1300 = vunpack.c.h.b16 %v121
    %v1301 = vunpack.c.l.b16 %v122
    %v1302 = vunpack.c.h.b16 %v122
    %v1303 = vunpack.c.l.b16 %v123
    %v1304 = vunpack.c.h.b16 %v123
    %v1305 = vunpack.c.l.b16 %v124
    %v1306 = vunpack.c.h.b16 %v124
    %v1307 = vunpack.c.l.b16 %v125
    %v1308 = vunpack.c.h.b16 %v125
    %v1309 = vunpack.c.l.b16 %v126
    %v1310 = vunpack.c.h.b16 %v126
    %v1311 = vunpack.c.l.b16 %v127
    %v1312 = vunpack.c.h.b16 %v127
    %v1313 = vunpack.c.l.b16 %v128
    %v1314 = vunpack.c.h.b16 %v128
    %v1315 = vunpack.c.l.b16 %v129
    %v1316 = vunpack.c.h.b16 %v129
    %v1317 = vunpack.c.l.b16 %v130
    %v1318 = vunpack.c.h.b16 %v130
    %v1319 = vunpack.c.l.b16 %v131
    %v1320 = vunpack.c.h.b16 %v131
    %v1321 = vunpack.c.l.b16 %v132
    %v1322 = vunpack.c.h.b16 %v132
    %v1323 = vunpack.c.l.b16 %v133
    %v1324 = vunpack.c.h.b16 %v133
    %v1325 = vunpack.c.l.b16 %v134
    %v1326 = vunpack.c.h.b16 %v134
    %v1327 = vunpack.c.l.b16 %v135
    %v1328 = vunpack.c.h.b16 %v135
    %v1329 = vunpack.c.l.b16 %v136
    %v1330 = vunpack.c.h.b16 %v136
    %v1331 = vunpack.c.l.b16 %v137
    %v1332 = vunpack.c.h.b16 %v137
    %v1333 = vunpack.c.l.b16 %v138
    %v1334 = vunpack.c.h.b16 %v138
    %v1335 = vunpack.c.l.b16 %v139
    %v1336 = vunpack.c.h.b16 %v139
    %v1337 = vunpack.c.l.b16 %v140
    %v1338 = vunpack.c.h.b16 %v140
    %v1339 = vunpack.c.l.b16 %v141
    %v1340 = vunpack.c.h.b16 %v141
    %v1341 = vunpack.c.l.b16 %v142
    %v1342 = vunpack.c.h.b16 %v142
    %v1343 = vunpack.c.l.b16 %v143
    %v1344 = vunpack.c.h.b16 %v143
    %v1345 = vunpack.c.l.b16 %v144
    %v1346 = vunpack.c.h.b16 %v144
    %v1347 = vunpack.c.l.b16 %v145
    %v1348 = vunpack.c.h.b16 %v145
    %v1349 = vunpack.c.l.b16 %v146
    %v1350 = vunpack.c.h.b16 %v146
    %v1351 = vunpack.c.l.b16 %v147
    %v1352 = vunpack.c.h.b16 %v147
    %v1353 = vunpack.c.l.b16 %v148
    %v1354 = vunpack.c.h.b16 %v148
    %v1355 = vunpack.c.l.b16 %v149
    %v1356 = vunpack.c.h.b16 %v149
    %v1357 = vunpack.c.l.b16 %v150
    %v1358 = vunpack.c.h.b16 %v150
    %v1359 = vunpack.c.l.b16 %v151
    %v1360 = vunpack.c.h.b16 %v151
    %v1361 = vunpack.c.l.b16 %v152
    %v1362 = vunpack.c.h.b16 %v152
    %v1363 = vunpack.c.l.b16 %v153
    %v1364 = vunpack.c.h.b16 %v153
    %v1365 = vunpack.c.l.b16 %v154
    %v1366 = vunpack.c.h.b16 %v154
    %v1367 = vunpack.c.l.b16 %v155
    %v1368 = vunpack.c.h.b16 %v155
    %v1369 = vunpack.c.l.b16 %v156
    %v1370 = vunpack.c.h.b16 %v156
    %v1371 = vunpack.c.l.b16 %v157
    %v1372 = vunpack.c.h.b16 %v157
    %v1373 = vunpack.c.l.b16 %v158
    %v1374 = vunpack.c.h.b16 %v158
    %v1375 = vunpack.c.l.b16 %v159
    %v1376 = vunpack.c.h.b16 %v159
    %v1377 = vunpack.c.l.b16 %v160
    %v1378 = vunpack.c.h.b16 %v160
    %v1379 = vunpack.c.l.b16 %v161
    %v1380 = vunpack.c.h.b16 %v161
    %v1381 = vunpack.c.l.b16 %v162
    %v1382 = vunpack.c.h.b16 %v162
    %v1383 = vunpack.c.l.b16 %v163
    %v1384 = vunpack.c.h.b16 %v163
    %v1385 = vunpack.c.l.b16 %v164
    %v1386 = vunpack.c.h.b16 %v164
    %v1387 = vunpack.c.l.b16 %v165
    %v1388 = vunpack.c.h.b16 %v165
    %v1389 = vunpack.c.l.b16 %v166
    %v1390 = vunpack.c.h.b16 %v166
    %v1391 = vunpack.c.l.b16 %v167
    %v1392 = vunpack.c.h.b16 %v167
    %v1393 = vunpack.c.l.b16 %v168
    %v1394 = vunpack.c.h.b16 %v168
    %v1395 = vunpack.c.l.b16 %v169
    %v1396 = vunpack.c.h.b16 %v169
    %v1397 = vunpack.c.l.b16 %v170
    %v1398 = vunpack.c.h.b16 %v170
    %v1399 = vunpack.c.l.b16 %v171
    %v1400 = vunpack.c.h.b16 %v171
    %v1401 = vunpack.c.l.b16 %v172
    %v1402 = vunpack.c.h.b16 %v172
    %v1403 = vunpack.c.l.b16 %v173
    %v1404 = vunpack.c.h.b16 %v173
    %v1405 = vunpack.c.l.b16 %v174
    %v1406 = vunpack.c.h.b16 %v174
    %v1407 = vunpack.c.l.b16 %v175
    %v1408 = vunpack.c.h.b16 %v175
    %v1409 = vunpack.c.l.b16 %v176
    %v1410 = vunpack.c.h.b16 %v176
    %v1411 = vunpack.c.l.b16 %v177
    %v1412 = vunpack.c.h.b16 %v177
    %v1413 = vunpack.c.l.b16 %v178
    %v1414 = vunpack.c.h.b16 %v178
    %v1415 = vunpack.c.l.b16 %v179
    %v1416 = vunpack.c.h.b16 %v179
    %v1417 = vunpack.c.l.b16 %v180
    %v1418 = vunpack.c.h.b16 %v180
    %v1419 = vunpack.c.l.b16 %v181
    %v1420 = vunpack.c.h.b16 %v181
    %v1421 = vunpack.c.l.b16 %v182
    %v1422 = vunpack.c.h.b16 %v182
    %v1423 = vunpack.c.l.b16 %v183
    %v1424 = vunpack.c.h.b16 %v183
    %v1425 = vunpack.c.l.b16 %v184
    %v1426 = vunpack.c.h.b16 %v184
    %v1427 = vunpack.c.l.b16 %v185
    %v1428 = vunpack.c.h.b16 %v185
    %v1429 = vunpack.c.l.b16 %v186
    %v1430 = vunpack.c.h.b16 %v186
    %v1431 = vunpack.c.l.b16 %v187
    %v1432 = vunpack.c.h.b16 %v187
    %v1433 = vunpack.c.l.b16 %v188
    %v1434 = vunpack.c.h.b16 %v188
    %v1435 = vunpack.c.l.b16 %v189
    %v1436 = vunpack.c.h.b16 %v189
    %v1437 = vunpack.c.l.b16 %v190
    %v1438 = vunpack.c.h.b16 %v190
    %v1439 = vunpack.c.l.b16 %v191
    %v1440 = vunpack.c.h.b16 %v191
    %v1441 = vunpack.c.l.b16 %v192
    %v1442 = vunpack.c.h.b16 %v192
    %v1443 = vunpack.c.l.b16 %v193
    %v1444 = vunpack.c.h.b16 %v193
    %v1445 = vunpack.c.l.b16 %v194
    %v1446 = vunpack.c.h.b16 %v194
    %v1447 = vunpack.c.l.b16 %v195
    %v1448 = vunpack.c.h.b16 %v195
    %v1449 = vunpack.c.l.b16 %v196
    %v1450 = vunpack.c.h.b16 %v196
    %v1451 = vunpack.c.l.b16 %v197
    %v1452 = vunpack.c.h.b16 %v197
    %v1453 = vunpack.c.l.b16 %v198
    %v1454 = vunpack.c.h.b16 %v198
    %v1455 = vunpack.c.l.b16 %v199
    %v1456 = vunpack.c.h.b16 %v199
    %v1457 = vunpack.c.l.b16 %v200
    %v1458 = vunpack.c.h.b16 %v200
    %v1459 = vunpack.c.l.b16 %v201
    %v1460 = vunpack.c.h.b16 %v201
    %v1461 = vunpack.c.l.b16 %v202
    %v1462 = vunpack.c.h.b16 %v202
    %v1463 = vunpack.c.l.b16 %v203
    %v1464 = vunpack.c.h.b16 %v203
    %v1465 = vunpack.c.l.b16 %v204
    %v1466 = vunpack.c.h.b16 %v204
    %v1467 = vunpack.c.l.b16 %v205
    %v1468 = vunpack.c.h.b16 %v205
    %v1469 = vunpack.c.l.b16 %v206
    %v1470 = vunpack.c.h.b16 %v206
    %v1471 = vunpack.c.l.b16 %v207
    %v1472 = vunpack.c.h.b16 %v207
    %v1473 = vunpack.c.l.b16 %v208
    %v1474 = vunpack.c.h.b16 %v208
    %v1475 = vunpack.c.l.b16 %v209
    %v1476 = vunpack.c.h.b16 %v209
    %v1477 = vunpack.c.l.b16 %v210
    %v1478 = vunpack.c.h.b16 %v210
    %v1479 = vunpack.c.l.b16 %v211
    %v1480 = vunpack.c.h.b16 %v211
    %v1481 = vunpack.c.l.b16 %v212
    %v1482 = vunpack.c.h.b16 %v212
    %v1483 = vunpack.c.l.b16 %v213
    %v1484 = vunpack.c.h.b16 %v213
    %v1485 = vunpack.c.l.b16 %v214
    %v1486 = vunpack.c.h.b16 %v214
    %v1487 = vunpack.c.l.b16 %v215
    %v1488 = vunpack.c.h.b16 %v215
    %v1489 = vunpack.c.l.b16 %v216
    %v1490 = vunpack.c.h.b16 %v216
    %v1491 = vunpack.c.l.b16 %v217
    %v1492 = vunpack.c.h.b16 %v217
    %v1493 = vunpack.c.l.b16 %v218
    %v1494 = vunpack.c.h.b16 %v218
    %v1495 = vunpack.c.l.b16 %v219
    %v1496 = vunpack.c.h.b16 %v219
    %v1497 = vunpack.c.l.b16 %v220
    %v1498 = vunpack.c.h.b16 %v220
    %v1499 = vunpack.c.l.b16 %v221
    %v1500 = vunpack.c.h.b16 %v221
    %v1501 = vunpack.c.l.b16 %v222
    %v1502 = vunpack.c.h.b16 %v222
    %v1503 = vunpack.c.l.b16 %v223
    %v1504 = vunpack.c.h.b16 %v223
    %v1505 = vunpack.c.l.b16 %v224
    %v1506 = vunpack.c.h.b16 %v224
    %v1507 = vunpack.c.l.b16 %v225
    %v1508 = vunpack.c.h.b16 %v225
    %v1509 = vunpack.c.l.b16 %v226
    %v1510 = vunpack.c.h.b16 %v226
    %v1511 = vunpack.c.l.b16 %v227
    %v1512 = vunpack.c.h.b16 %v227
    %v1513 = vunpack.c.l.b16 %v228
    %v1514 = vunpack.c.h.b16 %v228
    %v1515 = vunpack.c.l.b16 %v229
    %v1516 = vunpack.c.h.b16 %v229
    %v1517 = vunpack.c.l.b16 %v230
    %v1518 = vunpack.c.h.b16 %v230
    %v1519 = vunpack.c.l.b16 %v231
    %v1520 = vunpack.c.h.b16 %v231
    %v1521 = vunpack.c.l.b16 %v232
    %v1522 = vunpack.c.h.b16 %v232
    %v1523 = vunpack.c.l.b16 %v233
    %v1524 = vunpack.c.h.b16 %v233
    %v1525 = vunpack.c.l.b16 %v234
    %v1526 = vunpack.c.h.b16 %v234
    %v1527 = vunpack.c.l.b16 %v235
    %v1528 = vunpack.c.h.b16 %v235
    %v1529 = vunpack.c.l.b16 %v236
    %v1530 = vunpack.c.h.b16 %v236
    %v1531 = vunpack.c.l.b16 %v237
    %v1532 = vunpack.c.h.b16 %v237
    %v1533 = vunpack.c.l.b16 %v238
    %v1534 = vunpack.c.h.b16 %v238
    %v1535 = vunpack.c.l.b16 %v239
    %v1536 = vunpack.c.h.b16 %v239
    %v1537 = vunpack.c.l.b16 %v240
    %v1538 = vunpack.c.h.b16 %v240
    %v1539 = vunpack.c.l.b16 %v241
    %v1540 = vunpack.c.h.b16 %v241
    %v1541 = vunpack.c.l.b16 %v242
    %v1542 = vunpack.c.h.b16 %v242
    %v1543 = vunpack.c.l.b16 %v243
    %v1544 = vunpack.c.h.b16 %v243
    %v1545 = vunpack.c.l.b16 %v244
    %v1546 = vunpack.c.h.b16 %v244
    %v1547 = vunpack.c.l.b16 %v245
    %v1548 = vunpack.c.h.b16 %v245
    %v1549 = vunpack.c.l.b16 %v246
    %v1550 = vunpack.c.h.b16 %v246
    %v1551 = vunpack.c.l.b16 %v247
    %v1552 = vunpack.c.h.b16 %v247
    %v1553 = vunpack.c.l.b16 %v248
    %v1554 = vunpack.c.h.b16 %v248
    %v1555 = vunpack.c.l.b16 %v249
    %v1556 = vunpack.c.h.b16 %v249
    %v1557 = vunpack.c.l.b16 %v250
    %v1558 = vunpack.c.h.b16 %v250
    %v1559 = vunpack.c.l.b16 %v251
    %v1560 = vunpack.c.h.b16 %v251
    %v1561 = vunpack.c.l.b16 %v252
    %v1562 = vunpack.c.h.b16 %v252
    %v1563 = vunpack.c.l.b16 %v253
    %v1564 = vunpack.c.h.b16 %v253
    %v1565 = vunpack.c.l.b16 %v254
    %v1566 = vunpack.c.h.b16 %v254
    %v1567 = vunpack.c.l.b16 %v255
    %v1568 = vunpack.c.h.b16 %v255
    %v1569 = vunpack.c.l.b16 %v256
    %v1570 = vunpack.c.h.b16 %v256
    %v1571 = vunpack.c.l.b16 %v257
    %v1572 = vunpack.c.h.b16 %v257
    %v1573 = vunpack.c.l.b16 %v258
    %v1574 = vunpack.c.h.b16 %v258
    %v1575 = vunpack.c.l.b16 %v259
    %v1576 = vunpack.c.h.b16 %v259
    %v1577 = vunpack.c.l.b16 %v260
    %v1578 = vunpack.c.h.b16 %v260
    %v1579 = vunpack.c.l.b16 %v261
    %v1580 = vunpack.c.h.b16 %v261
    %v1581 = vunpack.c.l.b16 %v262
    %v1582 = vunpack.c.h.b16 %v262
    %v1583 = vunpack.c.l.b16 %v263
    %v1584 = vunpack.c.h.b16 %v263
    %v1585 = vunpack.c.l.b16 %v264
    %v1586 = vunpack.c.h.b16 %v264
    %v1587 = vunpack.c.l.b16 %v265
    %v1588 = vunpack.c.h.b16 %v265
    %v1589 = vunpack.c.l.b16 %v266
    %v1590 = vunpack.c.h.b16 %v266
    %v1591 = vunpack.c.l.b16 %v267
    %v1592 = vunpack.c.h.b16 %v267
    %v1593 = vunpack.c.l.b16 %v268
    %v1594 = vunpack.c.h.b16 %v268
    %v1595 = vunpack.c.l.b16 %v269
    %v1596 = vunpack.c.h.b16 %v269
    %v1597 = vunpack.c.l.b16 %v270
    %v1598 = vunpack.c.h.b16 %v270
    %v1599 = vunpack.c.l.b16 %v271
    %v1600 = vunpack.c.h.b16 %v271
    %v1601 = vunpack.c.l.b16 %v272
    %v1602 = vunpack.c.h.b16 %v272
    %v1603 = vunpack.c.l.b16 %v273
    %v1604 = vunpack.c.h.b16 %v273
    %v1605 = vunpack.c.l.b16 %v274
    %v1606 = vunpack.c.h.b16 %v274
    %v1607 = vunpack.c.l.b16 %v275
    %v1608 = vunpack.c.h.b16 %v275
    %v1609 = vunpack.c.l.b16 %v276
    %v1610 = vunpack.c.h.b16 %v276
    %v1611 = vunpack.c.l.b16 %v277
    %v1612 = vunpack.c.h.b16 %v277
    %v1613 = vunpack.c.l.b16 %v278
    %v1614 = vunpack.c.h.b16 %v278
    %v1615 = vunpack.c.l.b16 %v279
    %v1616 = vunpack.c.h.b16 %v279
    %v1617 = vunpack.c.l.b16 %v280
    %v1618 = vunpack.c.h.b16 %v280
    %v1619 = vunpack.c.l.b16 %v281
    %v1620 = vunpack.c.h.b16 %v281
    %v1621 = vunpack.c.l.b16 %v282
    %v1622 = vunpack.c.h.b16 %v282
    %v1623 = vunpack.c.l.b16 %v283
    %v1624 = vunpack.c.h.b16 %v283
    %v1625 = vunpack.c.l.b16 %v284
    %v1626 = vunpack.c.h.b16 %v284
    %v1627 = vunpack.c.l.b16 %v285
    %v1628 = vunpack.c.h.b16 %v285
    %v1629 = vunpack.c.l.b16 %v286
    %v1630 = vunpack.c.h.b16 %v286
    %v1631 = vunpack.c.l.b16 %v287
    %v1632 = vunpack.c.h.b16 %v287
    %v1633 = vunpack.c.l.b16 %v288
    %v1634 = vunpack.c.h.b16 %v288
    %v1635 = vunpack.c.l.b16 %v289
    %v1636 = vunpack.c.h.b16 %v289
    %v1637 = vunpack.c.l.b16 %v290
    %v1638 = vunpack.c.h.b16 %v290
    %v1639 = vunpack.c.l.b16 %v291
    %v1640 = vunpack.c.h.b16 %v291
    %v1641 = vunpack.c.l.b16 %v292
    %v1642 = vunpack.c.h.b16 %v292
    %v1643 = vunpack.c.l.b16 %v293
    %v1644 = vunpack.c.h.b16 %v293
    %v1645 = vunpack.c.l.b16 %v294
    %v1646 = vunpack.c.h.b16 %v294
    %v1647 = vunpack.c.l.b16 %v295
    %v1648 = vunpack.c.h.b16 %v295
    %v1649 = vunpack.c.l.b16 %v296
    %v1650 = vunpack.c.h.b16 %v296
    %v1651 = vunpack.c.l.b16 %v297
    %v1652 = vunpack.c.h.b16 %v297
    %v1653 = vunpack.c.l.b16 %v298
    %v1654 = vunpack.c.h.b16 %v298
    %v1655 = vunpack.c.l.b16 %v299
    %v1656 = vunpack.c.h.b16 %v299
    %v1657 = vunpack.c.l.b16 %v300
    %v1658 = vunpack.c.h.b16 %v300
    %v1659 = vunpack.c.l.b16 %v301
    %v1660 = vunpack.c.h.b16 %v301
    %v1661 = vunpack.c.l.b16 %v302
    %v1662 = vunpack.c.h.b16 %v302
    %v1663 = vunpack.c.l.b16 %v303
    %v1664 = vunpack.c.h.b16 %v303
    %v1665 = vunpack.c.l.b16 %v304
    %v1666 = vunpack.c.h.b16 %v304
    %v1667 = vunpack.c.l.b16 %v305
    %v1668 = vunpack.c.h.b16 %v305
    %v1669 = vunpack.c.l.b16 %v306
    %v1670 = vunpack.c.h.b16 %v306
    %v1671 = vunpack.c.l.b16 %v307
    %v1672 = vunpack.c.h.b16 %v307
    %v1673 = vunpack.c.l.b16 %v308
    %v1674 = vunpack.c.h.b16 %v308
    %v1675 = vpack.c.b16 %v1315, %v1291
    %v1676 = vpack.c.b16 %v1316, %v1292
    %v1677 = vpack.c.b16 %v1317, %v1293
    %v1678 = vpack.c.b16 %v1318, %v1294
    %v1679 = vpack.c.b16 %v1319, %v1295
    %v1680 = vpack.c.b16 %v1320, %v1296
    %v1681 = vpack.c.b16 %v1321, %v1297
    %v1682 = vpack.c.b16 %v1322, %v1298
    %v1683 = vpack.c.b16 %v1323, %v1299
    %v1684 = vpack.c.b16 %v1324, %v1300
    %v1685 = vpack.c.b16 %v1325, %v1301
    %v1686 = vpack.c.b16 %v1326, %v1302
    %v1687 = vpack.c.b16 %v1327, %v1303
    %v1688 = vpack.c.b16 %v1328, %v1304
    %v1689 = vpack.c.b16 %v1329, %v1305
    %v1690 = vpack.c.b16 %v1330, %v1306
    %v1691 = vpack.c.b16 %v1331, %v1307
    %v1692 = vpack.c.b16 %v1332, %v1308
    %v1693 = vpack.c.b16 %v1333, %v1309
    %v1694 = vpack.c.b16 %v1334, %v1310
    %v1695 = vpack.c.b16 %v1335, %v1311
    %v1696 = vpack.c.b16 %v1336, %v1312
    %v1697 = vpack.c.b16 %v1337, %v1313
    %v1698 = vpack.c.b16 %v1338, %v1314
    %v1699 = vpack.c.b16 %v1363, %v1339
    %v1700 = vpack.c.b16 %v1364, %v1340
    %v1701 = vpack.c.b16 %v1365, %v1341
    %v1702 = vpack.c.b16 %v1366, %v1342
    %v1703 = vpack.c.b16 %v1367, %v1343
    %v1704 = vpack.c.b16 %v1368, %v1344
    %v1705 = vpack.c.b16 %v1369, %v1345
    %v1706 = vpack.c.b16 %v1370, %v1346
    %v1707 = vpack.c.b16 %v1371, %v1347
    %v1708 = vpack.c.b16 %v1372, %v1348
    %v1709 = vpack.c.b16 %v1373, %v1349
    %v1710 = vpack.c.b16 %v1374, %v1350
    %v1711 = vpack.c.b16 %v1375, %v1351
    %v1712 = vpack.c.b16 %v1376, %v1352
    %v1713 = vpack.c.b16 %v1377, %v1353
    %v1714 = vpack.c.b16 %v1378, %v1354
    %v1715 = vpack.c.b16 %v1379, %v1355
    %v1716 = vpack.c.b16 %v1380, %v1356
    %v1717 = vpack.c.b16 %v1381, %v1357
    %v1718 = vpack.c.b16 %v1382, %v1358
    %v1719 = vpack.c.b16 %v1383, %v1359
    %v1720 = vpack.c.b16 %v1384, %v1360
    %v1721 = vpack.c.b16 %v1385, %v1361
    %v1722 = vpack.c.b16 %v1386, %v1362
    %v1723 = vpack.c.b16 %v1411, %v1387
    %v1724 = vpack.c.b16 %v1412, %v1388
    %v1725 = vpack.c.b16 %v1413, %v1389
    %v1726 = vpack.c.b16 %v1414, %v1390
    %v1727 = vpack.c.b16 %v1415, %v1391
    %v1728 = vpack.c.b16 %v1416, %v1392
    %v1729 = vpack.c.b16 %v1417, %v1393
    %v1730 = vpack.c.b16 %v1418, %v1394
    %v1731 = vpack.c.b16 %v1419, %v1395
    %v1732 = vpack.c.b16 %v1420, %v1396
    %v1733 = vpack.c.b16 %v1421, %v1397
    %v1734 = vpack.c.b16 %v1422, %v1398
    %v1735 = vpack.c.b16 %v1423, %v1399
    %v1736 = vpack.c.b16 %v1424, %v1400
    %v1737 = vpack.c.b16 %v1425, %v1401
    %v1738 = vpack.c.b16 %v1426, %v1402
    %v1739 = vpack.c.b16 %v1427, %v1403
    %v1740 = vpack.c.b16 %v1428, %v1404
    %v1741 = vpack.c.b16 %v1429, %v1405
    %v1742 = vpack.c.b16 %v1430, %v1406
    %v1743 = vpack.c.b16 %v1431, %v1407
    %v1744 = vpack.c.b16 %v1432, %v1408
    %v1745 = vpack.c.b16 %v1433, %v1409
    %v1746 = vpack.c.b16 %v1434, %v1410
    %v1747 = vpack.c.b16 %v1459, %v1435
    %v1748 = vpack.c.b16 %v1460, %v1436
    %v1749 = vpack.c.b16 %v1461, %v1437
    %v1750 = vpack.c.b16 %v1462, %v1438
    %v1751 = vpack.c.b16 %v1463, %v1439
    %v1752 = vpack.c.b16 %v1464, %v1440
    %v1753 = vpack.c.b16 %v1465, %v1441
    %v1754 = vpack.c.b16 %v1466, %v1442
    %v1755 = vpack.c.b16 %v1467, %v1443
    %v1756 = vpack.c.b16 %v1468, %v1444
    %v1757 = vpack.c.b16 %v1469, %v1445
    %v1758 = vpack.c.b16 %v1470, %v1446
    %v1759 = vpack.c.b16 %v1471, %v1447
    %v1760 = vpack.c.b16 %v1472, %v1448
    %v1761 = vpack.c.b16 %v1473, %v1449
    %v1762 = vpack.c.b16 %v1474, %v1450
    %v1763 = vpack.c.b16 %v1475, %v1451
    %v1764 = vpack.c.b16 %v1476, %v1452
    %v1765 = vpack.c.b16 %v1477, %v1453
    %v1766 = vpack.c.b16 %v1478, %v1454
    %v1767 = vpack.c.b16 %v1479, %v1455
    %v1768 = vpack.c.b16 %v1480, %v1456
    %v1769 = vpack.c.b16 %v1481, %v1457
    %v1770 = vpack.c.b16 %v1482, %v1458
    %v1771 = vpack.c.b16 %v1507, %v1483
    %v1772 = vpack.c.b16 %v1508, %v1484
    %v1773 = vpack.c.b16 %v1509, %v1485
    %v1774 = vpack.c.b16 %v1510, %v1486
    %v1775 = vpack.c.b16 %v1511, %v1487
    %v1776 = vpack.c.b16 %v1512, %v1488
    %v1777 = vpack.c.b16 %v1513, %v1489
    %v1778 = vpack.c.b16 %v1514, %v1490
    %v1779 = vpack.c.b16 %v1515, %v1491
    %v1780 = vpack.c.b16 %v1516, %v1492
    %v1781 = vpack.c.b16 %v1517, %v1493
    %v1782 = vpack.c.b16 %v1518, %v1494
    %v1783 = vpack.c.b16 %v1519, %v1495
    %v1784 = vpack.c.b16 %v1520, %v1496
    %v1785 = vpack.c.b16 %v1521, %v1497
    %v1786 = vpack.c.b16 %v1522, %v1498
    %v1787 = vpack.c.b16 %v1523, %v1499
    %v1788 = vpack.c.b16 %v1524, %v1500
    %v1789 = vpack.c.b16 %v1525, %v1501
    %v1790 = vpack.c.b16 %v1526, %v1502
    %v1791 = vpack.c.b16 %v1527, %v1503
    %v1792 = vpack.c.b16 %v1528, %v1504
    %v1793 = vpack.c.b16 %v1529, %v1505
    %v1794 = vpack.c.b16 %v1530, %v1506
    %v1795 = vpack.c.b16 %v1555, %v1531
    %v1796 = vpack.c.b16 %v1556, %v1532
    %v1797 = vpack.c.b16 %v1557, %v1533
    %v1798 = vpack.c.b16 %v1558, %v1534
    %v1799 = vpack.c.b16 %v1559, %v1535
    %v1800 = vpack.c.b16 %v1560, %v1536
    %v1801 = vpack.c.b16 %v1561, %v1537
    %v1802 = vpack.c.b16 %v1562, %v1538
    %v1803 = vpack.c.b16 %v1563, %v1539
    %v1804 = vpack.c.b16 %v1564, %v1540
    %v1805 = vpack.c.b16 %v1565, %v1541
    %v1806 = vpack.c.b16 %v1566, %v1542
    %v1807 = vpack.c.b16 %v1567, %v1543
    %v1808 = vpack.c.b16 %v1568, %v1544
    %v1809 = vpack.c.b16 %v1569, %v1545
    %v1810 = vpack.c.b16 %v1570, %v1546
    %v1811 = vpack.c.b16 %v1571, %v1547
    %v1812 = vpack.c.b16 %v1572, %v1548
    %v1813 = vpack.c.b16 %v1573, %v1549
    %v1814 = vpack.c.b16 %v1574, %v1550
    %v1815 = vpack.c.b16 %v1575, %v1551
    %v1816 = vpack.c.b16 %v1576, %v1552
    %v1817 = vpack.c.b16 %v1577, %v1553
    %v1818 = vpack.c.b16 %v1578, %v1554
    %v1819 = vpack.c.b16 %v1603, %v1579
    %v1820 = vpack.c.b16 %v1604, %v1580
    %v1821 = vpack.c.b16 %v1605, %v1581
    %v1822 = vpack.c.b16 %v1606, %v1582
    %v1823 = vpack.c.b16 %v1607, %v1583
    %v1824 = vpack.c.b16 %v1608, %v1584
    %v1825 = vpack.c.b16 %v1609, %v1585
    %v1826 = vpack.c.b16 %v1610, %v1586
    %v1827 = vpack.c.b16 %v1611, %v1587
    %v1828 = vpack.c.b16 %v1612, %v1588
    %v1829 = vpack.c.b16 %v1613, %v1589
    %v1830 = vpack.c.b16 %v1614, %v1590
    %v1831 = vpack.c.b16 %v1615, %v1591
    %v1832 = vpack.c.b16 %v1616, %v1592
    %v1833 = vpack.c.b16 %v1617, %v1593
    %v1834 = vpack.c.b16 %v1618, %v1594
    %v1835 = vpack.c.b16 %v1619, %v1595
    %v1836 = vpack.c.b16 %v1620, %v1596
    %v1837 = vpack.c.b16 %v1621, %v1597
    %v1838 = vpack.c.b16 %v1622, %v1598
    %v1839 = vpack.c.b16 %v1623, %v1599
    %v1840 = vpack.c.b16 %v1624, %v1600
    %v1841 = vpack.c.b16 %v1625, %v1601
    %v1842 = vpack.c.b16 %v1626, %v1602
    %v1843 = vpack.c.b16 %v1651, %v1627
    %v1844 = vpack.c.b16 %v1652, %v1628
    %v1845 = vpack.c.b16 %v1653, %v1629
    %v1846 = vpack.c.b16 %v1654, %v1630
    %v1847 = vpack.c.b16 %v1655, %v1631
    %v1848 = vpack.c.b16 %v1656, %v1632
    %v1849 = vpack.c.b16 %v1657, %v1633
    %v1850 = vpack.c.b16 %v1658, %v1634
    %v1851 = vpack.c.b16 %v1659, %v1635
    %v1852 = vpack.c.b16 %v1660, %v1636
    %v1853 = vpack.c.b16 %v1661, %v1637
    %v1854 = vpack.c.b16 %v1662, %v1638
    %v1855 = vpack.c.b16 %v1663, %v1639
    %v1856 = vpack.c.b16 %v1664, %v1640
    %v1857 = vpack.c.b16 %v1665, %v1641
    %v1858 = vpack.c.b16 %v1666, %v1642
    %v1859 = vpack.c.b16 %v1667, %v1643
    %v1860 = vpack.c.b16 %v1668, %v1644
    %v1861 = vpack.c.b16 %v1669, %v1645
    %v1862 = vpack.c.b16 %v1670, %v1646
    %v1863 = vpack.c.b16 %v1671, %v1647
    %v1864 = vpack.c.b16 %v1672, %v1648
    %v1865 = vpack.c.b16 %v1673, %v1649
    %v1866 = vpack.c.b16 %v1674, %v1650
    %v2827 = vunpack.c.l.b16 %v309
    %v2828 = vunpack.c.h.b16 %v309
    %v2829 = vunpack.c.l.b16 %v310
    %v2830 = vunpack.c.h.b16 %v310
    %v2831 = vunpack.c.l.b16 %v311
    %v2832 = vunpack.c.h.b16 %v311
    %v2833 = vunpack.c.l.b16 %v312
    %v2834 = vunpack.c.h.b16 %v312
    %v2835 = vunpack.c.l.b16 %v313
    %v2836 = vunpack.c.h.b16 %v313
    %v2837 = vunpack.c.l.b16 %v314
    %v2838 = vunpack.c.h.b16 %v314
    %v2839 = vunpack.c.l.b16 %v315
    %v2840 = vunpack.c.h.b16 %v315
    %v2841 = vunpack.c.l.b16 %v316
    %v2842 = vunpack.c.h.b16 %v316
    %v2843 = vunpack.c.l.b16 %v317
    %v2844 = vunpack.c.h.b16 %v317
    %v2845 = vunpack.c.l.b16 %v318
    %v2846 = vunpack.c.h.b16 %v318
    %v2847 = vunpack.c.l.b16 %v319
    %v2848 = vunpack.c.h.b16 %v319
    %v2849 = vunpack.c.l.b16 %v320
    %v2850 = vunpack.c.h.b16 %v320
    %v2851 = vunpack.c.l.b16 %v321
    %v2852 = vunpack.c.h.b16 %v321
    %v2853 = vunpack.c.l.b16 %v322
    %v2854 = vunpack.c.h.b16 %v322
    %v2855 = vunpack.c.l.b16 %v323
    %v2856 = vunpack.c.h.b16 %v323
    %v2857 = vunpack.c.l.b16 %v324
    %v2858 = vunpack.c.h.b16 %v324
    %v2859 = vunpack.c.l.b16 %v325
    %v2860 = vunpack.c.h.b16 %v325
    %v2861 = vunpack.c.l.b16 %v326
    %v2862 = vunpack.c.h.b16 %v326
    %v2863 = vunpack.c.l.b16 %v327
    %v2864 = vunpack.c.h.b16 %v327
    %v2865 = vunpack.c.l.b16 %v328
    %v2866 = vunpack.c.h.b16 %v328
    %v2867 = vunpack.c.l.b16 %v329
    %v2868 = vunpack.c.h.b16 %v329
    %v2869 = vunpack.c.l.b16 %v330
    %v2870 = vunpack.c.h.b16 %v330
    %v2871 = vunpack.c.l.b16 %v331
    %v2872 = vunpack.c.h.b16 %v331
    %v2873 = vunpack.c.l.b16 %v332
    %v2874 = vunpack.c.h.b16 %v332
    %v2875 = vunpack.c.l.b16 %v333
    %v2876 = vunpack.c.h.b16 %v333
    %v2877 = vunpack.c.l.b16 %v334
    %v2878 = vunpack.c.h.b16 %v334
    %v2879 = vunpack.c.l.b16 %v335
    %v2880 = vunpack.c.h.b16 %v335
    %v2881 = vunpack.c.l.b16 %v336
    %v2882 = vunpack.c.h.b16 %v336
    %v2883 = vunpack.c.l.b16 %v337
    %v2884 = vunpack.c.h.b16 %v337
    %v2885 = vunpack.c.l.b16 %v338
    %v2886 = vunpack.c.h.b16 %v338
    %v2887 = vunpack.c.l.b16 %v339
    %v2888 = vunpack.c.h.b16 %v339
    %v2889 = vunpack.c.l.b16 %v340
    %v2890 = vunpack.c.h.b16 %v340
    %v2891 = vunpack.c.l.b16 %v341
    %v2892 = vunpack.c.h.b16 %v341
    %v2893 = vunpack.c.l.b16 %v342
    %v2894 = vunpack.c.h.b16 %v342
    %v2895 = vunpack.c.l.b16 %v343
    %v2896 = vunpack.c.h.b16 %v343
    %v2897 = vunpack.c.l.b16 %v344
    %v2898 = vunpack.c.h.b16 %v344
    %v2899 = vunpack.c.l.b16 %v345
    %v2900 = vunpack.c.h.b16 %v345
    %v2901 = vunpack.c.l.b16 %v346
    %v2902 = vunpack.c.h.b16 %v346
    %v2903 = vunpack.c.l.b16 %v347
    %v2904 = vunpack.c.h.b16 %v347
    %v2905 = vunpack.c.l.b16 %v348
    %v2906 = vunpack.c.h.b16 %v348
    %v2907 = vunpack.c.l.b16 %v349
    %v2908 = vunpack.c.h.b16 %v349
    %v2909 = vunpack.c.l.b16 %v350
    %v2910 = vunpack.c.h.b16 %v350
    %v2911 = vunpack.c.l.b16 %v351
    %v2912 = vunpack.c.h.b16 %v351
    %v2913 = vunpack.c.l.b16 %v352
    %v2914 = vunpack.c.h.b16 %v352
    %v2915 = vunpack.c.l.b16 %v353
    %v2916 = vunpack.c.h.b16 %v353
    %v2917 = vunpack.c.l.b16 %v354
    %v2918 = vunpack.c.h.b16 %v354
    %v2919 = vunpack.c.l.b16 %v355
    %v2920 = vunpack.c.h.b16 %v355
    %v2921 = vunpack.c.l.b16 %v356
    %v2922 = vunpack.c.h.b16 %v356
    %v2923 = vunpack.c.l.b16 %v357
    %v2924 = vunpack.c.h.b16 %v357
    %v2925 = vunpack.c.l.b16 %v358
    %v2926 = vunpack.c.h.b16 %v358
    %v2927 = vunpack.c.l.b16 %v359
    %v2928 = vunpack.c.h.b16 %v359
    %v2929 = vunpack.c.l.b16 %v360
    %v2930 = vunpack.c.h.b16 %v360
    %v2931 = vunpack.c.l.b16 %v361
    %v2932 = vunpack.c.h.b16 %v361
    %v2933 = vunpack.c.l.b16 %v362
    %v2934 = vunpack.c.h.b16 %v362
    %v2935 = vunpack.c.l.b16 %v363
    %v2936 = vunpack.c.h.b16 %v363
    %v2937 = vunpack.c.l.b16 %v364
    %v2938 = vunpack.c.h.b16 %v364
    %v2939 = vunpack.c.l.b16 %v365
    %v2940 = vunpack.c.h.b16 %v365
    %v2941 = vunpack.c.l.b16 %v366
    %v2942 = vunpack.c.h.b16 %v366
    %v2943 = vunpack.c.l.b16 %v367
    %v2944 = vunpack.c.h.b16 %v367
    %v2945 = vunpack.c.l.b16 %v368
    %v2946 = vunpack.c.h.b16 %v368
    %v2947 = vunpack.c.l.b16 %v369
    %v2948 = vunpack.c.h.b16 %v369
    %v2949 = vunpack.c.l.b16 %v370
    %v2950 = vunpack.c.h.b16 %v370
    %v2951 = vunpack.c.l.b16 %v371
    %v2952 = vunpack.c.h.b16 %v371
    %v2953 = vunpack.c.l.b16 %v372
    %v2954 = vunpack.c.h.b16 %v372
    %v2955 = vunpack.c.l.b16 %v373
    %v2956 = vunpack.c.h.b16 %v373
    %v2957 = vunpack.c.l.b16 %v374
    %v2958 = vunpack.c.h.b16 %v374
    %v2959 = vunpack.c.l.b16 %v375
    %v2960 = vunpack.c.h.b16 %v375
    %v2961 = vunpack.c.l.b16 %v376
    %v2962 = vunpack.c.h.b16 %v376
    %v2963 = vunpack.c.l.b16 %v377
    %v2964 = vunpack.c.h.b16 %v377
    %v2965 = vunpack.c.l.b16 %v378
    %v2966 = vunpack.c.h.b16 %v378
    %v2967 = vunpack.c.l.b16 %v379
    %v2968 = vunpack.c.h.b16 %v379
    %v2969 = vunpack.c.l.b16 %v380
    %v2970 = vunpack.c.h.b16 %v380
    %v2971 = vunpack.c.l.b16 %v381
    %v2972 = vunpack.c.h.b16 %v381
    %v2973 = vunpack.c.l.b16 %v382
    %v2974 = vunpack.c.h.b16 %v382
    %v2975 = vunpack.c.l.b16 %v383
    %v2976 = vunpack.c.h.b16 %v383
    %v2977 = vunpack.c.l.b16 %v384
    %v2978 = vunpack.c.h.b16 %v384
    %v2979 = vunpack.c.l.b16 %v385
    %v2980 = vunpack.c.h.b16 %v385
    %v2981 = vunpack.c.l.b16 %v386
    %v2982 = vunpack.c.h.b16 %v386
    %v2983 = vunpack.c.l.b16 %v387
    %v2984 = vunpack.c.h.b16 %v387
    %v2985 = vunpack.c.l.b16 %v388
    %v2986 = vunpack.c.h.b16 %v388
    %v2987 = vunpack.c.l.b16 %v389
    %v2988 = vunpack.c.h.b16 %v389
    %v2989 = vunpack.c.l.b16 %v390
    %v2990 = vunpack.c.h.b16 %v390
    %v2991 = vunpack.c.l.b16 %v391
    %v2992 = vunpack.c.h.b16 %v391
    %v2993 = vunpack.c.l.b16 %v392
    %v2994 = vunpack.c.h.b16 %v392
    %v2995 = vunpack.c.l.b16 %v393
    %v2996 = vunpack.c.h.b16 %v393
    %v2997 = vunpack.c.l.b16 %v394
    %v2998 = vunpack.c.h.b16 %v394
    %v2999 = vunpack.c.l.b16 %v395
    %v3000 = vunpack.c.h.b16 %v395
    %v3001 = vunpack.c.l.b16 %v396
    %v3002 = vunpack.c.h.b16 %v396
    %v3003 = vunpack.c.l.b16 %v397
    %v3004 = vunpack.c.h.b16 %v397
    %v3005 = vunpack.c.l.b16 %v398
    %v3006 = vunpack.c.h.b16 %v398
    %v3007 = vunpack.c.l.b16 %v399
    %v3008 = vunpack.c.h.b16 %v399
    %v3009 = vunpack.c.l.b16 %v400
    %v3010 = vunpack.c.h.b16 %v400
    %v3011 = vunpack.c.l.b16 %v401
    %v3012 = vunpack.c.h.b16 %v401
    %v3013 = vunpack.c.l.b16 %v402
    %v3014 = vunpack.c.h.b16 %v402
    %v3015 = vunpack.c.l.b16 %v403
    %v3016 = vunpack.c.h.b16 %v403
    %v3017 = vunpack.c.l.b16 %v404
    %v3018 = vunpack.c.h.b16 %v404
    %v3019 = vunpack.c.l.b16 %v405
    %v3020 = vunpack.c.h.b16 %v405
    %v3021 = vunpack.c.l.b16 %v406
    %v3022 = vunpack.c.h.b16 %v406
    %v3023 = vunpack.c.l.b16 %v407
    %v3024 = vunpack.c.h.b16 %v407
    %v3025 = vunpack.c.l.b16 %v408
    %v3026 = vunpack.c.h.b16 %v408
    %v3027 = vunpack.c.l.b16 %v409
    %v3028 = vunpack.c.h.b16 %v409
    %v3029 = vunpack.c.l.b16 %v410
    %v3030 = vunpack.c.h.b16 %v410
    %v3031 = vunpack.c.l.b16 %v411
    %v3032 = vunpack.c.h.b16 %v411
    %v3033 = vunpack.c.l.b16 %v412
    %v3034 = vunpack.c.h.b16 %v412
    %v3035 = vunpack.c.l.b16 %v413
    %v3036 = vunpack.c.h.b16 %v413
    %v3037 = vunpack.c.l.b16 %v414
    %v3038 = vunpack.c.h.b16 %v414
    %v3039 = vunpack.c.l.b16 %v415
    %v3040 = vunpack.c.h.b16 %v415
    %v3041 = vunpack.c.l.b16 %v416
    %v3042 = vunpack.c.h.b16 %v416
    %v3043 = vunpack.c.l.b16 %v417
    %v3044 = vunpack.c.h.b16 %v417
    %v3045 = vunpack.c.l.b16 %v418
    %v3046 = vunpack.c.h.b16 %v418
    %v3047 = vunpack.c.l.b16 %v419
    %v3048 = vunpack.c.h.b16 %v419
    %v3049 = vunpack.c.l.b16 %v420
    %v3050 = vunpack.c.h.b16 %v420
    %v3051 = vunpack.c.l.b16 %v421
    %v3052 = vunpack.c.h.b16 %v421
    %v3053 = vunpack.c.l.b16 %v422
    %v3054 = vunpack.c.h.b16 %v422
    %v3055 = vunpack.c.l.b16 %v423
    %v3056 = vunpack.c.h.b16 %v423
    %v3057 = vunpack.c.l.b16 %v424
    %v3058 = vunpack.c.h.b16 %v424
    %v3059 = vunpack.c.l.b16 %v425
    %v3060 = vunpack.c.h.b16 %v425
    %v3061 = vunpack.c.l.b16 %v426
    %v3062 = vunpack.c.h.b16 %v426
    %v3063 = vunpack.c.l.b16 %v427
    %v3064 = vunpack.c.h.b16 %v427
    %v3065 = vunpack.c.l.b16 %v428
    %v3066 = vunpack.c.h.b16 %v428
    %v3067 = vunpack.c.l.b16 %v429
    %v3068 = vunpack.c.h.b16 %v429
    %v3069 = vunpack.c.l.b16 %v430
    %v3070 = vunpack.c.h.b16 %v430
    %v3071 = vunpack.c.l.b16 %v431
    %v3072 = vunpack.c.h.b16 %v431
    %v3073 = vunpack.c.l.b16 %v432
    %v3074 = vunpack.c.h.b16 %v432
    %v3075 = vunpack.c.l.b16 %v433
    %v3076 = vunpack.c.h.b16 %v433
    %v3077 = vunpack.c.l.b16 %v434
    %v3078 = vunpack.c.h.b16 %v434
    %v3079 = vunpack.c.l.b16 %v435
    %v3080 = vunpack.c.h.b16 %v435
    %v3081 = vunpack.c.l.b16 %v436
    %v3082 = vunpack.c.h.b16 %v436
    %v3083 = vunpack.c.l.b16 %v437
    %v3084 = vunpack.c.h.b16 %v437
    %v3085 = vunpack.c.l.b16 %v438
    %v3086 = vunpack.c.h.b16 %v438
    %v3087 = vunpack.c.l.b16 %v439
    %v3088 = vunpack.c.h.b16 %v439
    %v3089 = vunpack.c.l.b16 %v440
    %v3090 = vunpack.c.h.b16 %v440
    %v3091 = vunpack.c.l.b16 %v441
    %v3092 = vunpack.c.h.b16 %v441
    %v3093 = vunpack.c.l.b16 %v442
    %v3094 = vunpack.c.h.b16 %v442
    %v3095 = vunpack.c.l.b16 %v443
    %v3096 = vunpack.c.h.b16 %v443
    %v3097 = vunpack.c.l.b16 %v444
    %v3098 = vunpack.c.h.b16 %v444
    %v3099 = vunpack.c.l.b16 %v445
    %v3100 = vunpack.c.h.b16 %v445
    %v3101 = vunpack.c.l.b16 %v446
    %v3102 = vunpack.c.h.b16 %v446
    %v3103 = vunpack.c.l.b16 %v447
    %v3104 = vunpack.c.h.b16 %v447
    %v3105 = vunpack.c.l.b16 %v448
    %v3106 = vunpack.c.h.b16 %v448
    %v3107 = vunpack.c.l.b16 %v449
    %v3108 = vunpack.c.h.b16 %v449
    %v3109 = vunpack.c.l.b16 %v450
    %v3110 = vunpack.c.h.b16 %v450
    %v3111 = vunpack.c.l.b16 %v451
    %v3112 = vunpack.c.h.b16 %v451
    %v3113 = vunpack.c.l.b16 %v452
    %v3114 = vunpack.c.h.b16 %v452
    %v3115 = vunpack.c.l.b16 %v453
    %v3116 = vunpack.c.h.b16 %v453
    %v3117 = vunpack.c.l.b16 %v454
    %v3118 = vunpack.c.h.b16 %v454
    %v3119 = vunpack.c.l.b16 %v455
    %v3120 = vunpack.c.h.b16 %v455
    %v3121 = vunpack.c.l.b16 %v456
    %v3122 = vunpack.c.h.b16 %v456
    %v3123 = vunpack.c.l.b16 %v457
    %v3124 = vunpack.c.h.b16 %v457
    %v3125 = vunpack.c.l.b16 %v458
    %v3126 = vunpack.c.h.b16 %v458
    %v3127 = vunpack.c.l.b16 %v459
    %v3128 = vunpack.c.h.b16 %v459
    %v3129 = vunpack.c.l.b16 %v460
    %v3130 = vunpack.c.h.b16 %v460
    %v3131 = vunpack.c.l.b16 %v461
    %v3132 = vunpack.c.h.b16 %v461
    %v3133 = vunpack.c.l.b16 %v462
    %v3134 = vunpack.c.h.b16 %v462
    %v3135 = vunpack.c.l.b16 %v463
    %v3136 = vunpack.c.h.b16 %v463
    %v3137 = vunpack.c.l.b16 %v464
    %v3138 = vunpack.c.h.b16 %v464
    %v3139 = vunpack.c.l.b16 %v465
    %v3140 = vunpack.c.h.b16 %v465
    %v3141 = vunpack.c.l.b16 %v466
    %v3142 = vunpack.c.h.b16 %v466
    %v3143 = vunpack.c.l.b16 %v467
    %v3144 = vunpack.c.h.b16 %v467
    %v3145 = vunpack.c.l.b16 %v468
    %v3146 = vunpack.c.h.b16 %v468
    %v3147 = vunpack.c.l.b16 %v469
    %v3148 = vunpack.c.h.b16 %v469
    %v3149 = vunpack.c.l.b16 %v470
    %v3150 = vunpack.c.h.b16 %v470
    %v3151 = vunpack.c.l.b16 %v471
    %v3152 = vunpack.c.h.b16 %v471
    %v3153 = vunpack.c.l.b16 %v472
    %v3154 = vunpack.c.h.b16 %v472
    %v3155 = vunpack.c.l.b16 %v473
    %v3156 = vunpack.c.h.b16 %v473
    %v3157 = vunpack.c.l.b16 %v474
    %v3158 = vunpack.c.h.b16 %v474
    %v3159 = vunpack.c.l.b16 %v475
    %v3160 = vunpack.c.h.b16 %v475
    %v3161 = vunpack.c.l.b16 %v476
    %v3162 = vunpack.c.h.b16 %v476
    %v3163 = vunpack.c.l.b16 %v477
    %v3164 = vunpack.c.h.b16 %v477
    %v3165 = vunpack.c.l.b16 %v478
    %v3166 = vunpack.c.h.b16 %v478
    %v3167 = vunpack.c.l.b16 %v479
    %v3168 = vunpack.c.h.b16 %v479
    %v3169 = vunpack.c.l.b16 %v480
    %v3170 = vunpack.c.h.b16 %v480
    %v3171 = vunpack.c.l.b16 %v481
    %v3172 = vunpack.c.h.b16 %v481
    %v3173 = vunpack.c.l.b16 %v482
    %v3174 = vunpack.c.h.b16 %v482
    %v3175 = vunpack.c.l.b16 %v483
    %v3176 = vunpack.c.h.b16 %v483
    %v3177 = vunpack.c.l.b16 %v484
    %v3178 = vunpack.c.h.b16 %v484
    %v3179 = vunpack.c.l.b16 %v485
    %v3180 = vunpack.c.h.b16 %v485
    %v3181 = vunpack.c.l.b16 %v486
    %v3182 = vunpack.c.h.b16 %v486
    %v3183 = vunpack.c.l.b16 %v487
    %v3184 = vunpack.c.h.b16 %v487
    %v3185 = vunpack.c.l.b16 %v488
    %v3186 = vunpack.c.h.b16 %v488
    %v3187 = vunpack.c.l.b16 %v489
    %v3188 = vunpack.c.h.b16 %v489
    %v3189 = vunpack.c.l.b16 %v490
    %v3190 = vunpack.c.h.b16 %v490
    %v3191 = vunpack.c.l.b16 %v491
    %v3192 = vunpack.c.h.b16 %v491
    %v3193 = vunpack.c.l.b16 %v492
    %v3194 = vunpack.c.h.b16 %v492
    %v3195 = vunpack.c.l.b16 %v493
    %v3196 = vunpack.c.h.b16 %v493
    %v3197 = vunpack.c.l.b16 %v494
    %v3198 = vunpack.c.h.b16 %v494
    %v3199 = vunpack.c.l.b16 %v495
    %v3200 = vunpack.c.h.b16 %v495
    %v3201 = vunpack.c.l.b16 %v496
    %v3202 = vunpack.c.h.b16 %v496
    %v3203 = vunpack.c.l.b16 %v497
    %v3204 = vunpack.c.h.b16 %v497
    %v3205 = vunpack.c.l.b16 %v498
    %v3206 = vunpack.c.h.b16 %v498
    %v3207 = vunpack.c.l.b16 %v499
    %v3208 = vunpack.c.h.b16 %v499
    %v3209 = vunpack.c.l.b16 %v500
    %v3210 = vunpack.c.h.b16 %v500
    %v3211 = vunpack.c.l.b16 %v501
    %v3212 = vunpack.c.h.b16 %v501
    %v3213 = vunpack.c.l.b16 %v502
    %v3214 = vunpack.c.h.b16 %v502
    %v3215 = vunpack.c.l.b16 %v503
    %v3216 = vunpack.c.h.b16 %v503
    %v3217 = vunpack.c.l.b16 %v504
    %v3218 = vunpack.c.h.b16 %v504
    %v3219 = vunpack.c.l.b16 %v505
    %v3220 = vunpack.c.h.b16 %v505
    %v3221 = vunpack.c.l.b16 %v506
    %v3222 = vunpack.c.h.b16 %v506
    %v3223 = vunpack.c.l.b16 %v507
    %v3224 = vunpack.c.h.b16 %v507
    %v3225 = vunpack.c.l.b16 %v508
    %v3226 = vunpack.c.h.b16 %v508
    %v3227 = vunpack.c.l.b16 %v509
    %v3228 = vunpack.c.h.b16 %v509
    %v3229 = vunpack.c.l.b16 %v510
    %v3230 = vunpack.c.h.b16 %v510
    %v3231 = vunpack.c.l.b16 %v511
    %v3232 = vunpack.c.h.b16 %v511
    %v3233 = vunpack.c.l.b16 %v512
    %v3234 = vunpack.c.h.b16 %v512
    %v3235 = vunpack.c.l.b16 %v513
    %v3236 = vunpack.c.h.b16 %v513
    %v3237 = vunpack.c.l.b16 %v514
    %v3238 = vunpack.c.h.b16 %v514
    %v3239 = vunpack.c.l.b16 %v515
    %v3240 = vunpack.c.h.b16 %v515
    %v3241 = vunpack.c.l.b16 %v516
    %v3242 = vunpack.c.h.b16 %v516
    %v3243 = vunpack.c.l.b16 %v517
    %v3244 = vunpack.c.h.b16 %v517
    %v3245 = vunpack.c.l.b16 %v518
    %v3246 = vunpack.c.h.b16 %v518
    %v3247 = vunpack.c.l.b16 %v519
    %v3248 = vunpack.c.h.b16 %v519
    %v3249 = vunpack.c.l.b16 %v520
    %v3250 = vunpack.c.h.b16 %v520
    %v3251 = vunpack.c.l.b16 %v521
    %v3252 = vunpack.c.h.b16 %v521
    %v3253 = vunpack.c.l.b16 %v522
    %v3254 = vunpack.c.h.b16 %v522
    %v3255 = vunpack.c.l.b16 %v523
    %v3256 = vunpack.c.h.b16 %v523
    %v3257 = vunpack.c.l.b16 %v524
    %v3258 = vunpack.c.h.b16 %v524
    %v3259 = vunpack.c.l.b16 %v525
    %v3260 = vunpack.c.h.b16 %v525
    %v3261 = vunpack.c.l.b16 %v526
    %v3262 = vunpack.c.h.b16 %v526
    %v3263 = vunpack.c.l.b16 %v527
    %v3264 = vunpack.c.h.b16 %v527
    %v3265 = vunpack.c.l.b16 %v528
    %v3266 = vunpack.c.h.b16 %v528
    %v3267 = vunpack.c.l.b16 %v529
    %v3268 = vunpack.c.h.b16 %v529
    %v3269 = vunpack.c.l.b16 %v530
    %v3270 = vunpack.c.h.b16 %v530
    %v3271 = vunpack.c.l.b16 %v531
    %v3272 = vunpack.c.h.b16 %v531
    %v3273 = vunpack.c.l.b16 %v532
    %v3274 = vunpack.c.h.b16 %v532
    %v3275 = vunpack.c.l.b16 %v533
    %v3276 = vunpack.c.h.b16 %v533
    %v3277 = vunpack.c.l.b16 %v534
    %v3278 = vunpack.c.h.b16 %v534
    %v3279 = vunpack.c.l.b16 %v535
    %v3280 = vunpack.c.h.b16 %v535
    %v3281 = vunpack.c.l.b16 %v536
    %v3282 = vunpack.c.h.b16 %v536
    %v3283 = vunpack.c.l.b16 %v537
    %v3284 = vunpack.c.h.b16 %v537
    %v3285 = vunpack.c.l.b16 %v538
    %v3286 = vunpack.c.h.b16 %v538
    %v3287 = vunpack.c.l.b16 %v539
    %v3288 = vunpack.c.h.b16 %v539
    %v3289 = vunpack.c.l.b16 %v540
    %v3290 = vunpack.c.h.b16 %v540
    %v3291 = vunpack.c.l.b16 %v541
    %v3292 = vunpack.c.h.b16 %v541
    %v3293 = vunpack.c.l.b16 %v542
    %v3294 = vunpack.c.h.b16 %v542
    %v3295 = vunpack.c.l.b16 %v543
    %v3296 = vunpack.c.h.b16 %v543
    %v3297 = vunpack.c.l.b16 %v544
    %v3298 = vunpack.c.h.b16 %v544
    %v3299 = vunpack.c.l.b16 %v545
    %v3300 = vunpack.c.h.b16 %v545
    %v3301 = vunpack.c.l.b16 %v546
    %v3302 = vunpack.c.h.b16 %v546
    %v3303 = vunpack.c.l.b16 %v547
    %v3304 = vunpack.c.h.b16 %v547
    %v3305 = vunpack.c.l.b16 %v548
    %v3306 = vunpack.c.h.b16 %v548
    %v3307 = vunpack.c.l.b16 %v549
    %v3308 = vunpack.c.h.b16 %v549
    %v3309 = vunpack.c.l.b16 %v550
    %v3310 = vunpack.c.h.b16 %v550
    %v3311 = vunpack.c.l.b16 %v551
    %v3312 = vunpack.c.h.b16 %v551
    %v3313 = vunpack.c.l.b16 %v552
    %v3314 = vunpack.c.h.b16 %v552
    %v3315 = vunpack.c.l.b16 %v553
    %v3316 = vunpack.c.h.b16 %v553
    %v3317 = vunpack.c.l.b16 %v554
    %v3318 = vunpack.c.h.b16 %v554
    %v3319 = vunpack.c.l.b16 %v555
    %v3320 = vunpack.c.h.b16 %v555
    %v3321 = vunpack.c.l.b16 %v556
    %v3322 = vunpack.c.h.b16 %v556
    %v3323 = vunpack.c.l.b16 %v557
    %v3324 = vunpack.c.h.b16 %v557
    %v3325 = vunpack.c.l.b16 %v558
    %v3326 = vunpack.c.h.b16 %v558
    %v3327 = vunpack.c.l.b16 %v559
    %v3328 = vunpack.c.h.b16 %v559
    %v3329 = vunpack.c.l.b16 %v560
    %v3330 = vunpack.c.h.b16 %v560
    %v3331 = vunpack.c.l.b16 %v561
    %v3332 = vunpack.c.h.b16 %v561
    %v3333 = vunpack.c.l.b16 %v562
    %v3334 = vunpack.c.h.b16 %v562
    %v3335 = vunpack.c.l.b16 %v563
    %v3336 = vunpack.c.h.b16 %v563
    %v3337 = vunpack.c.l.b16 %v564
    %v3338 = vunpack.c.h.b16 %v564
    %v3339 = vunpack.c.l.b16 %v565
    %v3340 = vunpack.c.h.b16 %v565
    %v3341 = vunpack.c.l.b16 %v566
    %v3342 = vunpack.c.h.b16 %v566
    %v3343 = vunpack.c.l.b16 %v567
    %v3344 = vunpack.c.h.b16 %v567
    %v3345 = vunpack.c.l.b16 %v568
    %v3346 = vunpack.c.h.b16 %v568
    %v3347 = vunpack.c.l.b16 %v569
    %v3348 = vunpack.c.h.b16 %v569
    %v3349 = vunpack.c.l.b16 %v570
    %v3350 = vunpack.c.h.b16 %v570
    %v3351 = vunpack.c.l.b16 %v571
    %v3352 = vunpack.c.h.b16 %v571
    %v3353 = vunpack.c.l.b16 %v572
    %v3354 = vunpack.c.h.b16 %v572
    %v3355 = vunpack.c.l.b16 %v573
    %v3356 = vunpack.c.h.b16 %v573
    %v3357 = vunpack.c.l.b16 %v574
    %v3358 = vunpack.c.h.b16 %v574
    %v3359 = vunpack.c.l.b16 %v575
    %v3360 = vunpack.c.h.b16 %v575
    %v3361 = vunpack.c.l.b16 %v576
    %v3362 = vunpack.c.h.b16 %v576
    %v3363 = vunpack.c.l.b16 %v577
    %v3364 = vunpack.c.h.b16 %v577
    %v3365 = vunpack.c.l.b16 %v578
    %v3366 = vunpack.c.h.b16 %v578
    %v3367 = vunpack.c.l.b16 %v579
    %v3368 = vunpack.c.h.b16 %v579
    %v3369 = vunpack.c.l.b16 %v580
    %v3370 = vunpack.c.h.b16 %v580
    %v3371 = vunpack.c.l.b16 %v581
    %v3372 = vunpack.c.h.b16 %v581
    %v3373 = vunpack.c.l.b16 %v582
    %v3374 = vunpack.c.h.b16 %v582
    %v3375 = vunpack.c.l.b16 %v583
    %v3376 = vunpack.c.h.b16 %v583
    %v3377 = vunpack.c.l.b16 %v584
    %v3378 = vunpack.c.h.b16 %v584
    %v3379 = vunpack.c.l.b16 %v585
    %v3380 = vunpack.c.h.b16 %v585
    %v3381 = vunpack.c.l.b16 %v586
    %v3382 = vunpack.c.h.b16 %v586
    %v3383 = vunpack.c.l.b16 %v587
    %v3384 = vunpack.c.h.b16 %v587
    %v3385 = vunpack.c.l.b16 %v588
    %v3386 = vunpack.c.h.b16 %v588
    %v3387 = vunpack.c.l.b16 %v589
    %v3388 = vunpack.c.h.b16 %v589
    %v3389 = vunpack.c.l.b16 %v590
    %v3390 = vunpack.c.h.b16 %v590
    %v3391 = vunpack.c.l.b16 %v591
    %v3392 = vunpack.c.h.b16 %v591
    %v3393 = vunpack.c.l.b16 %v592
    %v3394 = vunpack.c.h.b16 %v592
    %v3395 = vunpack.c.l.b16 %v593
    %v3396 = vunpack.c.h.b16 %v593
    %v3397 = vunpack.c.l.b16 %v594
    %v3398 = vunpack.c.h.b16 %v594
    %v3399 = vunpack.c.l.b16 %v595
    %v3400 = vunpack.c.h.b16 %v595
    %v3401 = vunpack.c.l.b16 %v596
    %v3402 = vunpack.c.h.b16 %v596
    %v3403 = vunpack.c.l.b16 %v597
    %v3404 = vunpack.c.h.b16 %v597
    %v3405 = vunpack.c.l.b16 %v598
    %v3406 = vunpack.c.h.b16 %v598
    %v3407 = vunpack.c.l.b16 %v599
    %v3408 = vunpack.c.h.b16 %v599
    %v3409 = vunpack.c.l.b16 %v600
    %v3410 = vunpack.c.h.b16 %v600
    %v3411 = vunpack.c.l.b16 %v601
    %v3412 = vunpack.c.h.b16 %v601
    %v3413 = vunpack.c.l.b16 %v602
    %v3414 = vunpack.c.h.b16 %v602
    %v3415 = vunpack.c.l.b16 %v603
    %v3416 = vunpack.c.h.b16 %v603
    %v3417 = vunpack.c.l.b16 %v604
    %v3418 = vunpack.c.h.b16 %v604
    %v3419 = vunpack.c.l.b16 %v605
    %v3420 = vunpack.c.h.b16 %v605
    %v3421 = vunpack.c.l.b16 %v606
    %v3422 = vunpack.c.h.b16 %v606
    %v3423 = vunpack.c.l.b16 %v607
    %v3424 = vunpack.c.h.b16 %v607
    %v3425 = vunpack.c.l.b16 %v608
    %v3426 = vunpack.c.h.b16 %v608
    %v3427 = vunpack.c.l.b16 %v609
    %v3428 = vunpack.c.h.b16 %v609
    %v3429 = vunpack.c.l.b16 %v610
    %v3430 = vunpack.c.h.b16 %v610
    %v3431 = vunpack.c.l.b16 %v611
    %v3432 = vunpack.c.h.b16 %v611
    %v3433 = vunpack.c.l.b16 %v612
    %v3434 = vunpack.c.h.b16 %v612
    %v3435 = vunpack.c.l.b16 %v613
    %v3436 = vunpack.c.h.b16 %v613
    %v3437 = vunpack.c.l.b16 %v614
    %v3438 = vunpack.c.h.b16 %v614
    %v3439 = vunpack.c.l.b16 %v615
    %v3440 = vunpack.c.h.b16 %v615
    %v3441 = vunpack.c.l.b16 %v616
    %v3442 = vunpack.c.h.b16 %v616
    %v3443 = vunpack.c.l.b16 %v617
    %v3444 = vunpack.c.h.b16 %v617
    %v3445 = vunpack.c.l.b16 %v618
    %v3446 = vunpack.c.h.b16 %v618
    %v3447 = vunpack.c.l.b16 %v619
    %v3448 = vunpack.c.h.b16 %v619
    %v3449 = vunpack.c.l.b16 %v620
    %v3450 = vunpack.c.h.b16 %v620
    %v3451 = vunpack.c.l.b16 %v621
    %v3452 = vunpack.c.h.b16 %v621
    %v3453 = vunpack.c.l.b16 %v622
    %v3454 = vunpack.c.h.b16 %v622
    %v3455 = vunpack.c.l.b16 %v623
    %v3456 = vunpack.c.h.b16 %v623
    %v3457 = vunpack.c.l.b16 %v624
    %v3458 = vunpack.c.h.b16 %v624
    %v3459 = vunpack.c.l.b16 %v625
    %v3460 = vunpack.c.h.b16 %v625
    %v3461 = vunpack.c.l.b16 %v626
    %v3462 = vunpack.c.h.b16 %v626
    %v3463 = vunpack.c.l.b16 %v627
    %v3464 = vunpack.c.h.b16 %v627
    %v3465 = vunpack.c.l.b16 %v628
    %v3466 = vunpack.c.h.b16 %v628
    %v3467 = vunpack.c.l.b16 %v629
    %v3468 = vunpack.c.h.b16 %v629
    %v3469 = vunpack.c.l.b16 %v630
    %v3470 = vunpack.c.h.b16 %v630
    %v3471 = vunpack.c.l.b16 %v631
    %v3472 = vunpack.c.h.b16 %v631
    %v3473 = vunpack.c.l.b16 %v632
    %v3474 = vunpack.c.h.b16 %v632
    %v3475 = vunpack.c.l.b16 %v633
    %v3476 = vunpack.c.h.b16 %v633
    %v3477 = vunpack.c.l.b16 %v634
    %v3478 = vunpack.c.h.b16 %v634
    %v3479 = vunpack.c.l.b16 %v635
    %v3480 = vunpack.c.h.b16 %v635
    %v3481 = vunpack.c.l.b16 %v636
    %v3482 = vunpack.c.h.b16 %v636
    %v3483 = vunpack.c.l.b16 %v637
    %v3484 = vunpack.c.h.b16 %v637
    %v3485 = vunpack.c.l.b16 %v638
    %v3486 = vunpack.c.h.b16 %v638
    %v3487 = vunpack.c.l.b16 %v639
    %v3488 = vunpack.c.h.b16 %v639
    %v3489 = vunpack.c.l.b16 %v640
    %v3490 = vunpack.c.h.b16 %v640
    %v3491 = vunpack.c.l.b16 %v641
    %v3492 = vunpack.c.h.b16 %v641
    %v3493 = vunpack.c.l.b16 %v642
    %v3494 = vunpack.c.h.b16 %v642
    %v3495 = vunpack.c.l.b16 %v643
    %v3496 = vunpack.c.h.b16 %v643
    %v3497 = vunpack.c.l.b16 %v644
    %v3498 = vunpack.c.h.b16 %v644
    %v3499 = vunpack.c.l.b16 %v645
    %v3500 = vunpack.c.h.b16 %v645
    %v3501 = vunpack.c.l.b16 %v646
    %v3502 = vunpack.c.h.b16 %v646
    %v3503 = vunpack.c.l.b16 %v647
    %v3504 = vunpack.c.h.b16 %v647
    %v3505 = vunpack.c.l.b16 %v648
    %v3506 = vunpack.c.h.b16 %v648
    %v3507 = vunpack.c.l.b16 %v649
    %v3508 = vunpack.c.h.b16 %v649
    %v3509 = vunpack.c.l.b16 %v650
    %v3510 = vunpack.c.h.b16 %v650
    %v3511 = vunpack.c.l.b16 %v651
    %v3512 = vunpack.c.h.b16 %v651
    %v3513 = vunpack.c.l.b16 %v652
    %v3514 = vunpack.c.h.b16 %v652
    %v3515 = vunpack.c.l.b16 %v653
    %v3516 = vunpack.c.h.b16 %v653
    %v3517 = vunpack.c.l.b16 %v654
    %v3518 = vunpack.c.h.b16 %v654
    %v3519 = vunpack.c.l.b16 %v655
    %v3520 = vunpack.c.h.b16 %v655
    %v3521 = vunpack.c.l.b16 %v656
    %v3522 = vunpack.c.h.b16 %v656
    %v3523 = vunpack.c.l.b16 %v657
    %v3524 = vunpack.c.h.b16 %v657
    %v3525 = vunpack.c.l.b16 %v658
    %v3526 = vunpack.c.h.b16 %v658
    %v3527 = vunpack.c.l.b16 %v659
    %v3528 = vunpack.c.h.b16 %v659
    %v3529 = vunpack.c.l.b16 %v660
    %v3530 = vunpack.c.h.b16 %v660
    %v3531 = vunpack.c.l.b16 %v661
    %v3532 = vunpack.c.h.b16 %v661
    %v3533 = vunpack.c.l.b16 %v662
    %v3534 = vunpack.c.h.b16 %v662
    %v3535 = vunpack.c.l.b16 %v663
    %v3536 = vunpack.c.h.b16 %v663
    %v3537 = vunpack.c.l.b16 %v664
    %v3538 = vunpack.c.h.b16 %v664
    %v3539 = vunpack.c.l.b16 %v665
    %v3540 = vunpack.c.h.b16 %v665
    %v3541 = vunpack.c.l.b16 %v666
    %v3542 = vunpack.c.h.b16 %v666
    %v3543 = vunpack.c.l.b16 %v667
    %v3544 = vunpack.c.h.b16 %v667
    %v3545 = vunpack.c.l.b16 %v668
    %v3546 = vunpack.c.h.b16 %v668
    %v3547 = vunpack.c.l.b16 %v669
    %v3548 = vunpack.c.h.b16 %v669
    %v3549 = vunpack.c.l.b16 %v670
    %v3550 = vunpack.c.h.b16 %v670
    %v3551 = vunpack.c.l.b16 %v671
    %v3552 = vunpack.c.h.b16 %v671
    %v3553 = vunpack.c.l.b16 %v672
    %v3554 = vunpack.c.h.b16 %v672
    %v3555 = vunpack.c.l.b16 %v673
    %v3556 = vunpack.c.h.b16 %v673
    %v3557 = vunpack.c.l.b16 %v674
    %v3558 = vunpack.c.h.b16 %v674
    %v3559 = vunpack.c.l.b16 %v675
    %v3560 = vunpack.c.h.b16 %v675
    %v3561 = vunpack.c.l.b16 %v676
    %v3562 = vunpack.c.h.b16 %v676
    %v3563 = vunpack.c.l.b16 %v677
    %v3564 = vunpack.c.h.b16 %v677
    %v3565 = vunpack.c.l.b16 %v678
    %v3566 = vunpack.c.h.b16 %v678
    %v3567 = vunpack.c.l.b16 %v679
    %v3568 = vunpack.c.h.b16 %v679
    %v3569 = vunpack.c.l.b16 %v680
    %v3570 = vunpack.c.h.b16 %v680
    %v3571 = vunpack.c.l.b16 %v681
    %v3572 = vunpack.c.h.b16 %v681
    %v3573 = vunpack.c.l.b16 %v682
    %v3574 = vunpack.c.h.b16 %v682
    %v3575 = vunpack.c.l.b16 %v683
    %v3576 = vunpack.c.h.b16 %v683
    %v3577 = vunpack.c.l.b16 %v684
    %v3578 = vunpack.c.h.b16 %v684
    %v3579 = vunpack.c.l.b16 %v685
    %v3580 = vunpack.c.h.b16 %v685
    %v3581 = vunpack.c.l.b16 %v686
    %v3582 = vunpack.c.h.b16 %v686
    %v3583 = vunpack.c.l.b16 %v687
    %v3584 = vunpack.c.h.b16 %v687
    %v3585 = vunpack.c.l.b16 %v688
    %v3586 = vunpack.c.h.b16 %v688
    %v3587 = vunpack.c.l.b16 %v689
    %v3588 = vunpack.c.h.b16 %v689
    %v3589 = vunpack.c.l.b16 %v690
    %v3590 = vunpack.c.h.b16 %v690
    %v3591 = vunpack.c.l.b16 %v691
    %v3592 = vunpack.c.h.b16 %v691
    %v3593 = vunpack.c.l.b16 %v692
    %v3594 = vunpack.c.h.b16 %v692
    %v3595 = vunpack.c.l.b16 %v693
    %v3596 = vunpack.c.h.b16 %v693
    %v3597 = vunpack.c.l.b16 %v694
    %v3598 = vunpack.c.h.b16 %v694
    %v3599 = vunpack.c.l.b16 %v695
    %v3600 = vunpack.c.h.b16 %v695
    %v3601 = vunpack.c.l.b16 %v696
    %v3602 = vunpack.c.h.b16 %v696
    %v3603 = vunpack.c.l.b16 %v697
    %v3604 = vunpack.c.h.b16 %v697
    %v3605 = vunpack.c.l.b16 %v698
    %v3606 = vunpack.c.h.b16 %v698
    %v3607 = vunpack.c.l.b16 %v699
    %v3608 = vunpack.c.h.b16 %v699
    %v3609 = vunpack.c.l.b16 %v700
    %v3610 = vunpack.c.h.b16 %v700
    %v3611 = vunpack.c.l.b16 %v701
    %v3612 = vunpack.c.h.b16 %v701
    %v3613 = vunpack.c.l.b16 %v702
    %v3614 = vunpack.c.h.b16 %v702
    %v3615 = vunpack.c.l.b16 %v703
    %v3616 = vunpack.c.h.b16 %v703
    %v3617 = vunpack.c.l.b16 %v704
    %v3618 = vunpack.c.h.b16 %v704
    %v3619 = vunpack.c.l.b16 %v705
    %v3620 = vunpack.c.h.b16 %v705
    %v3621 = vunpack.c.l.b16 %v706
    %v3622 = vunpack.c.h.b16 %v706
    %v3623 = vunpack.c.l.b16 %v707
    %v3624 = vunpack.c.h.b16 %v707
    %v3625 = vunpack.c.l.b16 %v708
    %v3626 = vunpack.c.h.b16 %v708
    %v3627 = vunpack.c.l.b16 %v709
    %v3628 = vunpack.c.h.b16 %v709
    %v3629 = vunpack.c.l.b16 %v710
    %v3630 = vunpack.c.h.b16 %v710
    %v3631 = vunpack.c.l.b16 %v711
    %v3632 = vunpack.c.h.b16 %v711
    %v3633 = vunpack.c.l.b16 %v712
    %v3634 = vunpack.c.h.b16 %v712
    %v3635 = vunpack.c.l.b16 %v713
    %v3636 = vunpack.c.h.b16 %v713
    %v3637 = vunpack.c.l.b16 %v714
    %v3638 = vunpack.c.h.b16 %v714
    %v3639 = vunpack.c.l.b16 %v715
    %v3640 = vunpack.c.h.b16 %v715
    %v3641 = vunpack.c.l.b16 %v716
    %v3642 = vunpack.c.h.b16 %v716
    %v3643 = vunpack.c.l.b16 %v717
    %v3644 = vunpack.c.h.b16 %v717
    %v3645 = vunpack.c.l.b16 %v718
    %v3646 = vunpack.c.h.b16 %v718
    %v3647 = vunpack.c.l.b16 %v719
    %v3648 = vunpack.c.h.b16 %v719
    %v3649 = vunpack.c.l.b16 %v720
    %v3650 = vunpack.c.h.b16 %v720
    %v3651 = vunpack.c.l.b16 %v721
    %v3652 = vunpack.c.h.b16 %v721
    %v3653 = vunpack.c.l.b16 %v722
    %v3654 = vunpack.c.h.b16 %v722
    %v3655 = vunpack.c.l.b16 %v723
    %v3656 = vunpack.c.h.b16 %v723
    %v3657 = vunpack.c.l.b16 %v724
    %v3658 = vunpack.c.h.b16 %v724
    %v3659 = vunpack.c.l.b16 %v725
    %v3660 = vunpack.c.h.b16 %v725
    %v3661 = vunpack.c.l.b16 %v726
    %v3662 = vunpack.c.h.b16 %v726
    %v3663 = vunpack.c.l.b16 %v727
    %v3664 = vunpack.c.h.b16 %v727
    %v3665 = vunpack.c.l.b16 %v728
    %v3666 = vunpack.c.h.b16 %v728
    %v3667 = vunpack.c.l.b16 %v729
    %v3668 = vunpack.c.h.b16 %v729
    %v3669 = vunpack.c.l.b16 %v730
    %v3670 = vunpack.c.h.b16 %v730
    %v3671 = vunpack.c.l.b16 %v731
    %v3672 = vunpack.c.h.b16 %v731
    %v3673 = vunpack.c.l.b16 %v732
    %v3674 = vunpack.c.h.b16 %v732
    %v3675 = vunpack.c.l.b16 %v733
    %v3676 = vunpack.c.h.b16 %v733
    %v3677 = vunpack.c.l.b16 %v734
    %v3678 = vunpack.c.h.b16 %v734
    %v3679 = vunpack.c.l.b16 %v735
    %v3680 = vunpack.c.h.b16 %v735
    %v3681 = vunpack.c.l.b16 %v736
    %v3682 = vunpack.c.h.b16 %v736
    %v3683 = vunpack.c.l.b16 %v737
    %v3684 = vunpack.c.h.b16 %v737
    %v3685 = vunpack.c.l.b16 %v738
    %v3686 = vunpack.c.h.b16 %v738
    %v3687 = vunpack.c.l.b16 %v739
    %v3688 = vunpack.c.h.b16 %v739
    %v3689 = vunpack.c.l.b16 %v740
    %v3690 = vunpack.c.h.b16 %v740
    %v3691 = vunpack.c.l.b16 %v741
    %v3692 = vunpack.c.h.b16 %v741
    %v3693 = vunpack.c.l.b16 %v742
    %v3694 = vunpack.c.h.b16 %v742
    %v3695 = vunpack.c.l.b16 %v743
    %v3696 = vunpack.c.h.b16 %v743
    %v3697 = vunpack.c.l.b16 %v744
    %v3698 = vunpack.c.h.b16 %v744
    %v3699 = vunpack.c.l.b16 %v745
    %v3700 = vunpack.c.h.b16 %v745
    %v3701 = vunpack.c.l.b16 %v746
    %v3702 = vunpack.c.h.b16 %v746
    %v3703 = vunpack.c.l.b16 %v747
    %v3704 = vunpack.c.h.b16 %v747
    %v3705 = vunpack.c.l.b16 %v748
    %v3706 = vunpack.c.h.b16 %v748
    %v3707 = vunpack.c.l.b16 %v749
    %v3708 = vunpack.c.h.b16 %v749
    %v3709 = vunpack.c.l.b16 %v750
    %v3710 = vunpack.c.h.b16 %v750
    %v3711 = vunpack.c.l.b16 %v751
    %v3712 = vunpack.c.h.b16 %v751
    %v3713 = vunpack.c.l.b16 %v752
    %v3714 = vunpack.c.h.b16 %v752
    %v3715 = vunpack.c.l.b16 %v753
    %v3716 = vunpack.c.h.b16 %v753
    %v3717 = vunpack.c.l.b16 %v754
    %v3718 = vunpack.c.h.b16 %v754
    %v3719 = vunpack.c.l.b16 %v755
    %v3720 = vunpack.c.h.b16 %v755
    %v3721 = vunpack.c.l.b16 %v756
    %v3722 = vunpack.c.h.b16 %v756
    %v3723 = vunpack.c.l.b16 %v757
    %v3724 = vunpack.c.h.b16 %v757
    %v3725 = vunpack.c.l.b16 %v758
    %v3726 = vunpack.c.h.b16 %v758
    %v3727 = vunpack.c.l.b16 %v759
    %v3728 = vunpack.c.h.b16 %v759
    %v3729 = vunpack.c.l.b16 %v760
    %v3730 = vunpack.c.h.b16 %v760
    %v3731 = vunpack.c.l.b16 %v761
    %v3732 = vunpack.c.h.b16 %v761
    %v3733 = vunpack.c.l.b16 %v762
    %v3734 = vunpack.c.h.b16 %v762
    %v3735 = vunpack.c.l.b16 %v763
    %v3736 = vunpack.c.h.b16 %v763
    %v3737 = vunpack.c.l.b16 %v764
    %v3738 = vunpack.c.h.b16 %v764
    %v3739 = vunpack.c.l.b16 %v765
    %v3740 = vunpack.c.h.b16 %v765
    %v3741 = vunpack.c.l.b16 %v766
    %v3742 = vunpack.c.h.b16 %v766
    %v3743 = vunpack.c.l.b16 %v767
    %v3744 = vunpack.c.h.b16 %v767
    %v3745 = vunpack.c.l.b16 %v768
    %v3746 = vunpack.c.h.b16 %v768
    %v3747 = vunpack.c.l.b16 %v769
    %v3748 = vunpack.c.h.b16 %v769
    %v3749 = vunpack.c.l.b16 %v770
    %v3750 = vunpack.c.h.b16 %v770
    %v3751 = vunpack.c.l.b16 %v771
    %v3752 = vunpack.c.h.b16 %v771
    %v3753 = vunpack.c.l.b16 %v772
    %v3754 = vunpack.c.h.b16 %v772
    %v3755 = vunpack.c.l.b16 %v773
    %v3756 = vunpack.c.h.b16 %v773
    %v3757 = vunpack.c.l.b16 %v774
    %v3758 = vunpack.c.h.b16 %v774
    %v3759 = vunpack.c.l.b16 %v775
    %v3760 = vunpack.c.h.b16 %v775
    %v3761 = vunpack.c.l.b16 %v776
    %v3762 = vunpack.c.h.b16 %v776
    %v3763 = vunpack.c.l.b16 %v777
    %v3764 = vunpack.c.h.b16 %v777
    %v3765 = vunpack.c.l.b16 %v778
    %v3766 = vunpack.c.h.b16 %v778
    %v3767 = vunpack.c.l.b16 %v779
    %v3768 = vunpack.c.h.b16 %v779
    %v3769 = vunpack.c.l.b16 %v780
    %v3770 = vunpack.c.h.b16 %v780
    %v3771 = vunpack.c.l.b16 %v781
    %v3772 = vunpack.c.h.b16 %v781
    %v3773 = vunpack.c.l.b16 %v782
    %v3774 = vunpack.c.h.b16 %v782
    %v3775 = vunpack.c.l.b16 %v783
    %v3776 = vunpack.c.h.b16 %v783
    %v3777 = vunpack.c.l.b16 %v784
    %v3778 = vunpack.c.h.b16 %v784
    %v3779 = vunpack.c.l.b16 %v785
    %v3780 = vunpack.c.h.b16 %v785
    %v3781 = vunpack.c.l.b16 %v786
    %v3782 = vunpack.c.h.b16 %v786
    %v3783 = vunpack.c.l.b16 %v787
    %v3784 = vunpack.c.h.b16 %v787
    %v3785 = vunpack.c.l.b16 %v788
    %v3786 = vunpack.c.h.b16 %v788
    %v3787 = vunpack.c.l.b16 %v789
    %v3788 = vunpack.c.h.b16 %v789
    %v3789 = vunpack.c.l.b16 %v790
    %v3790 = vunpack.c.h.b16 %v790
    %v3791 = vunpack.c.l.b16 %v791
    %v3792 = vunpack.c.h.b16 %v791
    %v3793 = vunpack.c.l.b16 %v792
    %v3794 = vunpack.c.h.b16 %v792
    %v3795 = vunpack.c.l.b16 %v793
    %v3796 = vunpack.c.h.b16 %v793
    %v3797 = vunpack.c.l.b16 %v794
    %v3798 = vunpack.c.h.b16 %v794
    %v3799 = vunpack.c.l.b16 %v795
    %v3800 = vunpack.c.h.b16 %v795
    %v3801 = vunpack.c.l.b16 %v796
    %v3802 = vunpack.c.h.b16 %v796
    %v3803 = vunpack.c.l.b16 %v797
    %v3804 = vunpack.c.h.b16 %v797
    %v3805 = vunpack.c.l.b16 %v798
    %v3806 = vunpack.c.h.b16 %v798
    %v3807 = vunpack.c.l.b16 %v799
    %v3808 = vunpack.c.h.b16 %v799
    %v3809 = vunpack.c.l.b16 %v800
    %v3810 = vunpack.c.h.b16 %v800
    %v3811 = vunpack.c.l.b16 %v801
    %v3812 = vunpack.c.h.b16 %v801
    %v3813 = vunpack.c.l.b16 %v802
    %v3814 = vunpack.c.h.b16 %v802
    %v3815 = vunpack.c.l.b16 %v803
    %v3816 = vunpack.c.h.b16 %v803
    %v3817 = vunpack.c.l.b16 %v804
    %v3818 = vunpack.c.h.b16 %v804
    %v3819 = vunpack.c.l.b16 %v805
    %v3820 = vunpack.c.h.b16 %v805
    %v3821 = vunpack.c.l.b16 %v806
    %v3822 = vunpack.c.h.b16 %v806
    %v3823 = vunpack.c.l.b16 %v807
    %v3824 = vunpack.c.h.b16 %v807
    %v3825 = vunpack.c.l.b16 %v808
    %v3826 = vunpack.c.h.b16 %v808
    %v3827 = vunpack.c.l.b16 %v809
    %v3828 = vunpack.c.h.b16 %v809
    %v3829 = vunpack.c.l.b16 %v810
    %v3830 = vunpack.c.h.b16 %v810
    %v3831 = vunpack.c.l.b16 %v811
    %v3832 = vunpack.c.h.b16 %v811
    %v3833 = vunpack.c.l.b16 %v812
    %v3834 = vunpack.c.h.b16 %v812
    %v3835 = vunpack.c.l.b16 %v813
    %v3836 = vunpack.c.h.b16 %v813
    %v3837 = vunpack.c.l.b16 %v814
    %v3838 = vunpack.c.h.b16 %v814
    %v3839 = vunpack.c.l.b16 %v815
    %v3840 = vunpack.c.h.b16 %v815
    %v3841 = vunpack.c.l.b16 %v816
    %v3842 = vunpack.c.h.b16 %v816
    %v3843 = vunpack.c.l.b16 %v817
    %v3844 = vunpack.c.h.b16 %v817
    %v3845 = vunpack.c.l.b16 %v818
    %v3846 = vunpack.c.h.b16 %v818
    %v3847 = vunpack.c.l.b16 %v819
    %v3848 = vunpack.c.h.b16 %v819
    %v3849 = vunpack.c.l.b16 %v820
    %v3850 = vunpack.c.h.b16 %v820
    %v3851 = vunpack.c.l.b16 %v821
    %v3852 = vunpack.c.h.b16 %v821
    %v3853 = vunpack.c.l.b16 %v822
    %v3854 = vunpack.c.h.b16 %v822
    %v3855 = vunpack.c.l.b16 %v823
    %v3856 = vunpack.c.h.b16 %v823
    %v3857 = vunpack.c.l.b16 %v824
    %v3858 = vunpack.c.h.b16 %v824
    %v3859 = vunpack.c.l.b16 %v825
    %v3860 = vunpack.c.h.b16 %v825
    %v3861 = vunpack.c.l.b16 %v826
    %v3862 = vunpack.c.h.b16 %v826
    %v3863 = vunpack.c.l.b16 %v827
    %v3864 = vunpack.c.h.b16 %v827
    %v3865 = vunpack.c.l.b16 %v828
    %v3866 = vunpack.c.h.b16 %v828
    %v3867 = vunpack.c.l.b16 %v829
    %v3868 = vunpack.c.h.b16 %v829
    %v3869 = vunpack.c.l.b16 %v830
    %v3870 = vunpack.c.h.b16 %v830
    %v3871 = vunpack.c.l.b16 %v831
    %v3872 = vunpack.c.h.b16 %v831
    %v3873 = vunpack.c.l.b16 %v832
    %v3874 = vunpack.c.h.b16 %v832
    %v3875 = vunpack.c.l.b16 %v833
    %v3876 = vunpack.c.h.b16 %v833
    %v3877 = vunpack.c.l.b16 %v834
    %v3878 = vunpack.c.h.b16 %v834
    %v3879 = vunpack.c.l.b16 %v835
    %v3880 = vunpack.c.h.b16 %v835
    %v3881 = vunpack.c.l.b16 %v836
    %v3882 = vunpack.c.h.b16 %v836
    %v3883 = vunpack.c.l.b16 %v837
    %v3884 = vunpack.c.h.b16 %v837
    %v3885 = vunpack.c.l.b16 %v838
    %v3886 = vunpack.c.h.b16 %v838
    %v3887 = vunpack.c.l.b16 %v839
    %v3888 = vunpack.c.h.b16 %v839
    %v3889 = vunpack.c.l.b16 %v840
    %v3890 = vunpack.c.h.b16 %v840
    %v3891 = vunpack.c.l.b16 %v841
    %v3892 = vunpack.c.h.b16 %v841
    %v3893 = vunpack.c.l.b16 %v842
    %v3894 = vunpack.c.h.b16 %v842
    %v3895 = vunpack.c.l.b16 %v843
    %v3896 = vunpack.c.h.b16 %v843
    %v3897 = vunpack.c.l.b16 %v844
    %v3898 = vunpack.c.h.b16 %v844
    %v3899 = vunpack.c.l.b16 %v845
    %v3900 = vunpack.c.h.b16 %v845
    %v3901 = vunpack.c.l.b16 %v846
    %v3902 = vunpack.c.h.b16 %v846
    %v3903 = vunpack.c.l.b16 %v847
    %v3904 = vunpack.c.h.b16 %v847
    %v3905 = vunpack.c.l.b16 %v848
    %v3906 = vunpack.c.h.b16 %v848
    %v3907 = vunpack.c.l.b16 %v849
    %v3908 = vunpack.c.h.b16 %v849
    %v3909 = vunpack.c.l.b16 %v850
    %v3910 = vunpack.c.h.b16 %v850
    %v3911 = vunpack.c.l.b16 %v851
    %v3912 = vunpack.c.h.b16 %v851
    %v3913 = vunpack.c.l.b16 %v852
    %v3914 = vunpack.c.h.b16 %v852
    %v3915 = vunpack.c.l.b16 %v853
    %v3916 = vunpack.c.h.b16 %v853
    %v3917 = vunpack.c.l.b16 %v854
    %v3918 = vunpack.c.h.b16 %v854
    %v3919 = vunpack.c.l.b16 %v855
    %v3920 = vunpack.c.h.b16 %v855
    %v3921 = vunpack.c.l.b16 %v856
    %v3922 = vunpack.c.h.b16 %v856
    %v3923 = vunpack.c.l.b16 %v857
    %v3924 = vunpack.c.h.b16 %v857
    %v3925 = vunpack.c.l.b16 %v858
    %v3926 = vunpack.c.h.b16 %v858
    %v3927 = vunpack.c.l.b16 %v859
    %v3928 = vunpack.c.h.b16 %v859
    %v3929 = vunpack.c.l.b16 %v860
    %v3930 = vunpack.c.h.b16 %v860
    %v3931 = vunpack.c.l.b16 %v861
    %v3932 = vunpack.c.h.b16 %v861
    %v3933 = vunpack.c.l.b16 %v862
    %v3934 = vunpack.c.h.b16 %v862
    %v3935 = vunpack.c.l.b16 %v863
    %v3936 = vunpack.c.h.b16 %v863
    %v3937 = vunpack.c.l.b16 %v864
    %v3938 = vunpack.c.h.b16 %v864
    %v3939 = vunpack.c.l.b16 %v865
    %v3940 = vunpack.c.h.b16 %v865
    %v3941 = vunpack.c.l.b16 %v866
    %v3942 = vunpack.c.h.b16 %v866
    %v3943 = vunpack.c.l.b16 %v867
    %v3944 = vunpack.c.h.b16 %v867
    %v3945 = vunpack.c.l.b16 %v868
    %v3946 = vunpack.c.h.b16 %v868
    %v3947 = vunpack.c.l.b16 %v869
    %v3948 = vunpack.c.h.b16 %v869
    %v3949 = vunpack.c.l.b16 %v870
    %v3950 = vunpack.c.h.b16 %v870
    %v3951 = vunpack.c.l.b16 %v871
    %v3952 = vunpack.c.h.b16 %v871
    %v3953 = vunpack.c.l.b16 %v872
    %v3954 = vunpack.c.h.b16 %v872
    %v3955 = vunpack.c.l.b16 %v873
    %v3956 = vunpack.c.h.b16 %v873
    %v3957 = vunpack.c.l.b16 %v874
    %v3958 = vunpack.c.h.b16 %v874
    %v3959 = vunpack.c.l.b16 %v875
    %v3960 = vunpack.c.h.b16 %v875
    %v3961 = vunpack.c.l.b16 %v876
    %v3962 = vunpack.c.h.b16 %v876
    %v3963 = vunpack.c.l.b16 %v877
    %v3964 = vunpack.c.h.b16 %v877
    %v3965 = vunpack.c.l.b16 %v878
    %v3966 = vunpack.c.h.b16 %v878
    %v3967 = vunpack.c.l.b16 %v879
    %v3968 = vunpack.c.h.b16 %v879
    %v3969 = vunpack.c.l.b16 %v880
    %v3970 = vunpack.c.h.b16 %v880
    %v3971 = vunpack.c.l.b16 %v881
    %v3972 = vunpack.c.h.b16 %v881
    %v3973 = vunpack.c.l.b16 %v882
    %v3974 = vunpack.c.h.b16 %v882
    %v3975 = vunpack.c.l.b16 %v883
    %v3976 = vunpack.c.h.b16 %v883
    %v3977 = vunpack.c.l.b16 %v884
    %v3978 = vunpack.c.h.b16 %v884
    %v3979 = vunpack.c.l.b16 %v885
    %v3980 = vunpack.c.h.b16 %v885
    %v3981 = vunpack.c.l.b16 %v886
    %v3982 = vunpack.c.h.b16 %v886
    %v3983 = vunpack.c.l.b16 %v887
    %v3984 = vunpack.c.h.b16 %v887
    %v3985 = vunpack.c.l.b16 %v888
    %v3986 = vunpack.c.h.b16 %v888
    %v3987 = vunpack.c.l.b16 %v889
    %v3988 = vunpack.c.h.b16 %v889
    %v3989 = vunpack.c.l.b16 %v890
    %v3990 = vunpack.c.h.b16 %v890
    %v3991 = vunpack.c.l.b16 %v891
    %v3992 = vunpack.c.h.b16 %v891
    %v3993 = vunpack.c.l.b16 %v892
    %v3994 = vunpack.c.h.b16 %v892
    %v3995 = vunpack.c.l.b16 %v893
    %v3996 = vunpack.c.h.b16 %v893
    %v3997 = vunpack.c.l.b16 %v894
    %v3998 = vunpack.c.h.b16 %v894
    %v3999 = vunpack.c.l.b16 %v895
    %v4000 = vunpack.c.h.b16 %v895
    %v4001 = vunpack.c.l.b16 %v896
    %v4002 = vunpack.c.h.b16 %v896
    %v4003 = vunpack.c.l.b16 %v897
    %v4004 = vunpack.c.h.b16 %v897
    %v4005 = vunpack.c.l.b16 %v898
    %v4006 = vunpack.c.h.b16 %v898
    %v4007 = vunpack.c.l.b16 %v899
    %v4008 = vunpack.c.h.b16 %v899
    %v4009 = vunpack.c.l.b16 %v900
    %v4010 = vunpack.c.h.b16 %v900
    %v4011 = vunpack.c.l.b16 %v901
    %v4012 = vunpack.c.h.b16 %v901
    %v4013 = vunpack.c.l.b16 %v902
    %v4014 = vunpack.c.h.b16 %v902
    %v4015 = vunpack.c.l.b16 %v903
    %v4016 = vunpack.c.h.b16 %v903
    %v4017 = vunpack.c.l.b16 %v904
    %v4018 = vunpack.c.h.b16 %v904
    %v4019 = vunpack.c.l.b16 %v905
    %v4020 = vunpack.c.h.b16 %v905
    %v4021 = vunpack.c.l.b16 %v906
    %v4022 = vunpack.c.h.b16 %v906
    %v4023 = vunpack.c.l.b16 %v907
    %v4024 = vunpack.c.h.b16 %v907
    %v4025 = vunpack.c.l.b16 %v908
    %v4026 = vunpack.c.h.b16 %v908
    %v4027 = vunpack.c.l.b16 %v909
    %v4028 = vunpack.c.h.b16 %v909
    %v4029 = vunpack.c.l.b16 %v910
    %v4030 = vunpack.c.h.b16 %v910
    %v4031 = vunpack.c.l.b16 %v911
    %v4032 = vunpack.c.h.b16 %v911
    %v4033 = vunpack.c.l.b16 %v912
    %v4034 = vunpack.c.h.b16 %v912
    %v4035 = vunpack.c.l.b16 %v913
    %v4036 = vunpack.c.h.b16 %v913
    %v4037 = vunpack.c.l.b16 %v914
    %v4038 = vunpack.c.h.b16 %v914
    %v4039 = vunpack.c.l.b16 %v915
    %v4040 = vunpack.c.h.b16 %v915
    %v4041 = vunpack.c.l.b16 %v916
    %v4042 = vunpack.c.h.b16 %v916
    %v4043 = vunpack.c.l.b16 %v917
    %v4044 = vunpack.c.h.b16 %v917
    %v4045 = vunpack.c.l.b16 %v918
    %v4046 = vunpack.c.h.b16 %v918
    %v4047 = vunpack.c.l.b16 %v919
    %v4048 = vunpack.c.h.b16 %v919
    %v4049 = vunpack.c.l.b16 %v920
    %v4050 = vunpack.c.h.b16 %v920
    %v4051 = vunpack.c.l.b16 %v921
    %v4052 = vunpack.c.h.b16 %v921
    %v4053 = vunpack.c.l.b16 %v922
    %v4054 = vunpack.c.h.b16 %v922
    %v4055 = vunpack.c.l.b16 %v923
    %v4056 = vunpack.c.h.b16 %v923
    %v4057 = vunpack.c.l.b16 %v924
    %v4058 = vunpack.c.h.b16 %v924
    %v4059 = vunpack.c.l.b16 %v925
    %v4060 = vunpack.c.h.b16 %v925
    %v4061 = vunpack.c.l.b16 %v926
    %v4062 = vunpack.c.h.b16 %v926
    %v4063 = vunpack.c.l.b16 %v927
    %v4064 = vunpack.c.h.b16 %v927
    %v4065 = vunpack.c.l.b16 %v928
    %v4066 = vunpack.c.h.b16 %v928
    %v4067 = vunpack.c.l.b16 %v929
    %v4068 = vunpack.c.h.b16 %v929
    %v4069 = vunpack.c.l.b16 %v930
    %v4070 = vunpack.c.h.b16 %v930
    %v4071 = vunpack.c.l.b16 %v931
    %v4072 = vunpack.c.h.b16 %v931
    %v4073 = vunpack.c.l.b16 %v932
    %v4074 = vunpack.c.h.b16 %v932
    %v4075 = vunpack.c.l.b16 %v933
    %v4076 = vunpack.c.h.b16 %v933
    %v4077 = vunpack.c.l.b16 %v934
    %v4078 = vunpack.c.h.b16 %v934
    %v4079 = vunpack.c.l.b16 %v935
    %v4080 = vunpack.c.h.b16 %v935
    %v4081 = vunpack.c.l.b16 %v936
    %v4082 = vunpack.c.h.b16 %v936
    %v4083 = vunpack.c.l.b16 %v937
    %v4084 = vunpack.c.h.b16 %v937
    %v4085 = vunpack.c.l.b16 %v938
    %v4086 = vunpack.c.h.b16 %v938
    %v4087 = vunpack.c.l.b16 %v939
    %v4088 = vunpack.c.h.b16 %v939
    %v4089 = vunpack.c.l.b16 %v940
    %v4090 = vunpack.c.h.b16 %v940
    %v4091 = vunpack.c.l.b16 %v941
    %v4092 = vunpack.c.h.b16 %v941
    %v4093 = vunpack.c.l.b16 %v942
    %v4094 = vunpack.c.h.b16 %v942
    %v4095 = vunpack.c.l.b16 %v943
    %v4096 = vunpack.c.h.b16 %v943
    %v4097 = vunpack.c.l.b16 %v944
    %v4098 = vunpack.c.h.b16 %v944
    %v4099 = vunpack.c.l.b16 %v945
    %v4100 = vunpack.c.h.b16 %v945
    %v4101 = vunpack.c.l.b16 %v946
    %v4102 = vunpack.c.h.b16 %v946
    %v4103 = vunpack.c.l.b16 %v947
    %v4104 = vunpack.c.h.b16 %v947
    %v4105 = vunpack.c.l.b16 %v948
    %v4106 = vunpack.c.h.b16 %v948
    %v4107 = vunpack.c.l.b16 %v949
    %v4108 = vunpack.c.h.b16 %v949
    %v4109 = vunpack.c.l.b16 %v950
    %v4110 = vunpack.c.h.b16 %v950
    %v4111 = vunpack.c.l.b16 %v951
    %v4112 = vunpack.c.h.b16 %v951
    %v4113 = vunpack.c.l.b16 %v952
    %v4114 = vunpack.c.h.b16 %v952
    %v4115 = vunpack.c.l.b16 %v953
    %v4116 = vunpack.c.h.b16 %v953
    %v4117 = vunpack.c.l.b16 %v954
    %v4118 = vunpack.c.h.b16 %v954
    %v4119 = vunpack.c.l.b16 %v955
    %v4120 = vunpack.c.h.b16 %v955
    %v4121 = vunpack.c.l.b16 %v956
    %v4122 = vunpack.c.h.b16 %v956
    %v4123 = vunpack.c.l.b16 %v957
    %v4124 = vunpack.c.h.b16 %v957
    %v4125 = vunpack.c.l.b16 %v958
    %v4126 = vunpack.c.h.b16 %v958
    %v4127 = vunpack.c.l.b16 %v959
    %v4128 = vunpack.c.h.b16 %v959
    %v4129 = vunpack.c.l.b16 %v960
    %v4130 = vunpack.c.h.b16 %v960
    %v4131 = vunpack.c.l.b16 %v961
    %v4132 = vunpack.c.h.b16 %v961
    %v4133 = vunpack.c.l.b16 %v962
    %v4134 = vunpack.c.h.b16 %v962
    %v4135 = vunpack.c.l.b16 %v963
    %v4136 = vunpack.c.h.b16 %v963
    %v4137 = vunpack.c.l.b16 %v964
    %v4138 = vunpack.c.h.b16 %v964
    %v4139 = vunpack.c.l.b16 %v965
    %v4140 = vunpack.c.h.b16 %v965
    %v4141 = vunpack.c.l.b16 %v966
    %v4142 = vunpack.c.h.b16 %v966
    %v4143 = vunpack.c.l.b16 %v967
    %v4144 = vunpack.c.h.b16 %v967
    %v4145 = vunpack.c.l.b16 %v968
    %v4146 = vunpack.c.h.b16 %v968
    %v4147 = vunpack.c.l.b16 %v969
    %v4148 = vunpack.c.h.b16 %v969
    %v4149 = vunpack.c.l.b16 %v970
    %v4150 = vunpack.c.h.b16 %v970
    %v4151 = vunpack.c.l.b16 %v971
    %v4152 = vunpack.c.h.b16 %v971
    %v4153 = vunpack.c.l.b16 %v972
    %v4154 = vunpack.c.h.b16 %v972
    %v4155 = vunpack.c.l.b16 %v973
    %v4156 = vunpack.c.h.b16 %v973
    %v4157 = vunpack.c.l.b16 %v974
    %v4158 = vunpack.c.h.b16 %v974
    %v4159 = vunpack.c.l.b16 %v975
    %v4160 = vunpack.c.h.b16 %v975
    %v4161 = vunpack.c.l.b16 %v976
    %v4162 = vunpack.c.h.b16 %v976
    %v4163 = vunpack.c.l.b16 %v977
    %v4164 = vunpack.c.h.b16 %v977
    %v4165 = vunpack.c.l.b16 %v978
    %v4166 = vunpack.c.h.b16 %v978
    %v4167 = vunpack.c.l.b16 %v979
    %v4168 = vunpack.c.h.b16 %v979
    %v4169 = vunpack.c.l.b16 %v980
    %v4170 = vunpack.c.h.b16 %v980
    %v4171 = vunpack.c.l.b16 %v981
    %v4172 = vunpack.c.h.b16 %v981
    %v4173 = vunpack.c.l.b16 %v982
    %v4174 = vunpack.c.h.b16 %v982
    %v4175 = vunpack.c.l.b16 %v983
    %v4176 = vunpack.c.h.b16 %v983
    %v4177 = vunpack.c.l.b16 %v984
    %v4178 = vunpack.c.h.b16 %v984
    %v4179 = vunpack.c.l.b16 %v985
    %v4180 = vunpack.c.h.b16 %v985
    %v4181 = vunpack.c.l.b16 %v986
    %v4182 = vunpack.c.h.b16 %v986
    %v4183 = vunpack.c.l.b16 %v987
    %v4184 = vunpack.c.h.b16 %v987
    %v4185 = vunpack.c.l.b16 %v988
    %v4186 = vunpack.c.h.b16 %v988
    %v4187 = vunpack.c.l.b16 %v989
    %v4188 = vunpack.c.h.b16 %v989
    %v4189 = vunpack.c.l.b16 %v990
    %v4190 = vunpack.c.h.b16 %v990
    %v4191 = vunpack.c.l.b16 %v991
    %v4192 = vunpack.c.h.b16 %v991
    %v4193 = vunpack.c.l.b16 %v992
    %v4194 = vunpack.c.h.b16 %v992
    %v4195 = vunpack.c.l.b16 %v993
    %v4196 = vunpack.c.h.b16 %v993
    %v4197 = vunpack.c.l.b16 %v994
    %v4198 = vunpack.c.h.b16 %v994
    %v4199 = vunpack.c.l.b16 %v995
    %v4200 = vunpack.c.h.b16 %v995
    %v4201 = vunpack.c.l.b16 %v996
    %v4202 = vunpack.c.h.b16 %v996
    %v4203 = vunpack.c.l.b16 %v997
    %v4204 = vunpack.c.h.b16 %v997
    %v4205 = vunpack.c.l.b16 %v998
    %v4206 = vunpack.c.h.b16 %v998
    %v4207 = vunpack.c.l.b16 %v999
    %v4208 = vunpack.c.h.b16 %v999
    %v4209 = vunpack.c.l.b16 %v1000
    %v4210 = vunpack.c.h.b16 %v1000
    %v4211 = vunpack.c.l.b16 %v1001
    %v4212 = vunpack.c.h.b16 %v1001
    %v4213 = vunpack.c.l.b16 %v1002
    %v4214 = vunpack.c.h.b16 %v1002
    %v4215 = vunpack.c.l.b16 %v1003
    %v4216 = vunpack.c.h.b16 %v1003
    %v4217 = vunpack.c.l.b16 %v1004
    %v4218 = vunpack.c.h.b16 %v1004
    %v4219 = vunpack.c.l.b16 %v1005
    %v4220 = vunpack.c.h.b16 %v1005
    %v4221 = vunpack.c.l.b16 %v1006
    %v4222 = vunpack.c.h.b16 %v1006
    %v4223 = vunpack.c.l.b16 %v1007
    %v4224 = vunpack.c.h.b16 %v1007
    %v4225 = vunpack.c.l.b16 %v1008
    %v4226 = vunpack.c.h.b16 %v1008
    %v4227 = vunpack.c.l.b16 %v1009
    %v4228 = vunpack.c.h.b16 %v1009
    %v4229 = vunpack.c.l.b16 %v1010
    %v4230 = vunpack.c.h.b16 %v1010
    %v4231 = vunpack.c.l.b16 %v1011
    %v4232 = vunpack.c.h.b16 %v1011
    %v4233 = vunpack.c.l.b16 %v1012
    %v4234 = vunpack.c.h.b16 %v1012
    %v4235 = vunpack.c.l.b16 %v1013
    %v4236 = vunpack.c.h.b16 %v1013
    %v4237 = vunpack.c.l.b16 %v1014
    %v4238 = vunpack.c.h.b16 %v1014
    %v4239 = vunpack.c.l.b16 %v1015
    %v4240 = vunpack.c.h.b16 %v1015
    %v4241 = vunpack.c.l.b16 %v1016
    %v4242 = vunpack.c.h.b16 %v1016
    %v4243 = vunpack.c.l.b16 %v1017
    %v4244 = vunpack.c.h.b16 %v1017
    %v4245 = vunpack.c.l.b16 %v1018
    %v4246 = vunpack.c.h.b16 %v1018
    %v4247 = vunpack.c.l.b16 %v1019
    %v4248 = vunpack.c.h.b16 %v1019
    %v4249 = vunpack.c.l.b16 %v1020
    %v4250 = vunpack.c.h.b16 %v1020
    %v4251 = vunpack.c.l.b16 %v1021
    %v4252 = vunpack.c.h.b16 %v1021
    %v4253 = vunpack.c.l.b16 %v1022
    %v4254 = vunpack.c.h.b16 %v1022
    %v4255 = vunpack.c.l.b16 %v1023
    %v4256 = vunpack.c.h.b16 %v1023
    %v4257 = vunpack.c.l.b16 %v1024
    %v4258 = vunpack.c.h.b16 %v1024
    %v4259 = vunpack.c.l.b16 %v1025
    %v4260 = vunpack.c.h.b16 %v1025
    %v4261 = vunpack.c.l.b16 %v1026
    %v4262 = vunpack.c.h.b16 %v1026
    %v4263 = vunpack.c.l.b16 %v1027
    %v4264 = vunpack.c.h.b16 %v1027
    %v4265 = vunpack.c.l.b16 %v1028
    %v4266 = vunpack.c.h.b16 %v1028
    %v4267 = vunpack.c.l.b16 %v1029
    %v4268 = vunpack.c.h.b16 %v1029
    %v4269 = vunpack.c.l.b16 %v1030
    %v4270 = vunpack.c.h.b16 %v1030
    %v4271 = vunpack.c.l.b16 %v1031
    %v4272 = vunpack.c.h.b16 %v1031
    %v4273 = vunpack.c.l.b16 %v1032
    %v4274 = vunpack.c.h.b16 %v1032
    %v4275 = vunpack.c.l.b16 %v1033
    %v4276 = vunpack.c.h.b16 %v1033
    %v4277 = vunpack.c.l.b16 %v1034
    %v4278 = vunpack.c.h.b16 %v1034
    %v4279 = vunpack.c.l.b16 %v1035
    %v4280 = vunpack.c.h.b16 %v1035
    %v4281 = vunpack.c.l.b16 %v1036
    %v4282 = vunpack.c.h.b16 %v1036
    %v4283 = vunpack.c.l.b16 %v1037
    %v4284 = vunpack.c.h.b16 %v1037
    %v4285 = vunpack.c.l.b16 %v1038
    %v4286 = vunpack.c.h.b16 %v1038
    %v4287 = vunpack.c.l.b16 %v1039
    %v4288 = vunpack.c.h.b16 %v1039
    %v4289 = vunpack.c.l.b16 %v1040
    %v4290 = vunpack.c.h.b16 %v1040
    %v4291 = vunpack.c.l.b16 %v1041
    %v4292 = vunpack.c.h.b16 %v1041
    %v4293 = vunpack.c.l.b16 %v1042
    %v4294 = vunpack.c.h.b16 %v1042
    %v4295 = vunpack.c.l.b16 %v1043
    %v4296 = vunpack.c.h.b16 %v1043
    %v4297 = vunpack.c.l.b16 %v1044
    %v4298 = vunpack.c.h.b16 %v1044
    %v4299 = vunpack.c.l.b16 %v1045
    %v4300 = vunpack.c.h.b16 %v1045
    %v4301 = vunpack.c.l.b16 %v1046
    %v4302 = vunpack.c.h.b16 %v1046
    %v4303 = vunpack.c.l.b16 %v1047
    %v4304 = vunpack.c.h.b16 %v1047
    %v4305 = vunpack.c.l.b16 %v1048
    %v4306 = vunpack.c.h.b16 %v1048
    %v4307 = vunpack.c.l.b16 %v1049
    %v4308 = vunpack.c.h.b16 %v1049
    %v4309 = vunpack.c.l.b16 %v1050
    %v4310 = vunpack.c.h.b16 %v1050
    %v4311 = vunpack.c.l.b16 %v1051
    %v4312 = vunpack.c.h.b16 %v1051
    %v4313 = vunpack.c.l.b16 %v1052
    %v4314 = vunpack.c.h.b16 %v1052
    %v4315 = vunpack.c.l.b16 %v1053
    %v4316 = vunpack.c.h.b16 %v1053
    %v4317 = vunpack.c.l.b16 %v1054
    %v4318 = vunpack.c.h.b16 %v1054
    %v4319 = vunpack.c.l.b16 %v1055
    %v4320 = vunpack.c.h.b16 %v1055
    %v4321 = vunpack.c.l.b16 %v1056
    %v4322 = vunpack.c.h.b16 %v1056
    %v4323 = vunpack.c.l.b16 %v1057
    %v4324 = vunpack.c.h.b16 %v1057
    %v4325 = vunpack.c.l.b16 %v1058
    %v4326 = vunpack.c.h.b16 %v1058
    %v4327 = vunpack.c.l.b16 %v1059
    %v4328 = vunpack.c.h.b16 %v1059
    %v4329 = vunpack.c.l.b16 %v1060
    %v4330 = vunpack.c.h.b16 %v1060
    %v4331 = vunpack.c.l.b16 %v1061
    %v4332 = vunpack.c.h.b16 %v1061
    %v4333 = vunpack.c.l.b16 %v1062
    %v4334 = vunpack.c.h.b16 %v1062
    %v4335 = vunpack.c.l.b16 %v1063
    %v4336 = vunpack.c.h.b16 %v1063
    %v4337 = vunpack.c.l.b16 %v1064
    %v4338 = vunpack.c.h.b16 %v1064
    %v4339 = vunpack.c.l.b16 %v1065
    %v4340 = vunpack.c.h.b16 %v1065
    %v4341 = vunpack.c.l.b16 %v1066
    %v4342 = vunpack.c.h.b16 %v1066
    %v4343 = vunpack.c.l.b16 %v1067
    %v4344 = vunpack.c.h.b16 %v1067
    %v4345 = vunpack.c.l.b16 %v1068
    %v4346 = vunpack.c.h.b16 %v1068
    %v4347 = vunpack.c.l.b16 %v1069
    %v4348 = vunpack.c.h.b16 %v1069
    %v4349 = vunpack.c.l.b16 %v1070
    %v4350 = vunpack.c.h.b16 %v1070
    %v4351 = vunpack.c.l.b16 %v1071
    %v4352 = vunpack.c.h.b16 %v1071
    %v4353 = vunpack.c.l.b16 %v1072
    %v4354 = vunpack.c.h.b16 %v1072
    %v4355 = vunpack.c.l.b16 %v1073
    %v4356 = vunpack.c.h.b16 %v1073
    %v4357 = vunpack.c.l.b16 %v1074
    %v4358 = vunpack.c.h.b16 %v1074
    %v4359 = vunpack.c.l.b16 %v1075
    %v4360 = vunpack.c.h.b16 %v1075
    %v4361 = vunpack.c.l.b16 %v1076
    %v4362 = vunpack.c.h.b16 %v1076
    %v4363 = vpack.c.b16 %v2831, %v2827
    %v4364 = vpack.c.b16 %v2832, %v2828
    %v4365 = vpack.c.b16 %v2833, %v2829
    %v4366 = vpack.c.b16 %v2834, %v2830
    %v4367 = vpack.c.b16 %v2839, %v2835
    %v4368 = vpack.c.b16 %v2840, %v2836
    %v4369 = vpack.c.b16 %v2841, %v2837
    %v4370 = vpack.c.b16 %v2842, %v2838
    %v4371 = vpack.c.b16 %v2847, %v2843
    %v4372 = vpack.c.b16 %v2848, %v2844
    %v4373 = vpack.c.b16 %v2849, %v2845
    %v4374 = vpack.c.b16 %v2850, %v2846
    %v4375 = vpack.c.b16 %v2855, %v2851
    %v4376 = vpack.c.b16 %v2856, %v2852
    %v4377 = vpack.c.b16 %v2857, %v2853
    %v4378 = vpack.c.b16 %v2858, %v2854
    %v4379 = vpack.c.b16 %v2863, %v2859
    %v4380 = vpack.c.b16 %v2864, %v2860
    %v4381 = vpack.c.b16 %v2865, %v2861
    %v4382 = vpack.c.b16 %v2866, %v2862
    %v4383 = vpack.c.b16 %v2871, %v2867
    %v4384 = vpack.c.b16 %v2872, %v2868
    %v4385 = vpack.c.b16 %v2873, %v2869
    %v4386 = vpack.c.b16 %v2874, %v2870
    %v4387 = vpack.c.b16 %v2879, %v2875
    %v4388 = vpack.c.b16 %v2880, %v2876
    %v4389 = vpack.c.b16 %v2881, %v2877
    %v4390 = vpack.c.b16 %v2882, %v2878
    %v4391 = vpack.c.b16 %v2887, %v2883
    %v4392 = vpack.c.b16 %v2888, %v2884
    %v4393 = vpack.c.b16 %v2889, %v2885
    %v4394 = vpack.c.b16 %v2890, %v2886
    %v4395 = vpack.c.b16 %v2895, %v2891
    %v4396 = vpack.c.b16 %v2896, %v2892
    %v4397 = vpack.c.b16 %v2897, %v2893
    %v4398 = vpack.c.b16 %v2898, %v2894
    %v4399 = vpack.c.b16 %v2903, %v2899
    %v4400 = vpack.c.b16 %v2904, %v2900
    %v4401 = vpack.c.b16 %v2905, %v2901
    %v4402 = vpack.c.b16 %v2906, %v2902
    %v4403 = vpack.c.b16 %v2911, %v2907
    %v4404 = vpack.c.b16 %v2912, %v2908
    %v4405 = vpack.c.b16 %v2913, %v2909
    %v4406 = vpack.c.b16 %v2914, %v2910
    %v4407 = vpack.c.b16 %v2919, %v2915
    %v4408 = vpack.c.b16 %v2920, %v2916
    %v4409 = vpack.c.b16 %v2921, %v2917
    %v4410 = vpack.c.b16 %v2922, %v2918
    %v4411 = vpack.c.b16 %v2927, %v2923
    %v4412 = vpack.c.b16 %v2928, %v2924
    %v4413 = vpack.c.b16 %v2929, %v2925
    %v4414 = vpack.c.b16 %v2930, %v2926
    %v4415 = vpack.c.b16 %v2935, %v2931
    %v4416 = vpack.c.b16 %v2936, %v2932
    %v4417 = vpack.c.b16 %v2937, %v2933
    %v4418 = vpack.c.b16 %v2938, %v2934
    %v4419 = vpack.c.b16 %v2943, %v2939
    %v4420 = vpack.c.b16 %v2944, %v2940
    %v4421 = vpack.c.b16 %v2945, %v2941
    %v4422 = vpack.c.b16 %v2946, %v2942
    %v4423 = vpack.c.b16 %v2951, %v2947
    %v4424 = vpack.c.b16 %v2952, %v2948
    %v4425 = vpack.c.b16 %v2953, %v2949
    %v4426 = vpack.c.b16 %v2954, %v2950
    %v4427 = vpack.c.b16 %v2959, %v2955
    %v4428 = vpack.c.b16 %v2960, %v2956
    %v4429 = vpack.c.b16 %v2961, %v2957
    %v4430 = vpack.c.b16 %v2962, %v2958
    %v4431 = vpack.c.b16 %v2967, %v2963
    %v4432 = vpack.c.b16 %v2968, %v2964
    %v4433 = vpack.c.b16 %v2969, %v2965
    %v4434 = vpack.c.b16 %v2970, %v2966
    %v4435 = vpack.c.b16 %v2975, %v2971
    %v4436 = vpack.c.b16 %v2976, %v2972
    %v4437 = vpack.c.b16 %v2977, %v2973
    %v4438 = vpack.c.b16 %v2978, %v2974
    %v4439 = vpack.c.b16 %v2983, %v2979
    %v4440 = vpack.c.b16 %v2984, %v2980
    %v4441 = vpack.c.b16 %v2985, %v2981
    %v4442 = vpack.c.b16 %v2986, %v2982
    %v4443 = vpack.c.b16 %v2991, %v2987
    %v4444 = vpack.c.b16 %v2992, %v2988
    %v4445 = vpack.c.b16 %v2993, %v2989
    %v4446 = vpack.c.b16 %v2994, %v2990
    %v4447 = vpack.c.b16 %v2999, %v2995
    %v4448 = vpack.c.b16 %v3000, %v2996
    %v4449 = vpack.c.b16 %v3001, %v2997
    %v4450 = vpack.c.b16 %v3002, %v2998
    %v4451 = vpack.c.b16 %v3007, %v3003
    %v4452 = vpack.c.b16 %v3008, %v3004
    %v4453 = vpack.c.b16 %v3009, %v3005
    %v4454 = vpack.c.b16 %v3010, %v3006
    %v4455 = vpack.c.b16 %v3015, %v3011
    %v4456 = vpack.c.b16 %v3016, %v3012
    %v4457 = vpack.c.b16 %v3017, %v3013
    %v4458 = vpack.c.b16 %v3018, %v3014
    %v4459 = vpack.c.b16 %v3023, %v3019
    %v4460 = vpack.c.b16 %v3024, %v3020
    %v4461 = vpack.c.b16 %v3025, %v3021
    %v4462 = vpack.c.b16 %v3026, %v3022
    %v4463 = vpack.c.b16 %v3031, %v3027
    %v4464 = vpack.c.b16 %v3032, %v3028
    %v4465 = vpack.c.b16 %v3033, %v3029
    %v4466 = vpack.c.b16 %v3034, %v3030
    %v4467 = vpack.c.b16 %v3039, %v3035
    %v4468 = vpack.c.b16 %v3040, %v3036
    %v4469 = vpack.c.b16 %v3041, %v3037
    %v4470 = vpack.c.b16 %v3042, %v3038
    %v4471 = vpack.c.b16 %v3047, %v3043
    %v4472 = vpack.c.b16 %v3048, %v3044
    %v4473 = vpack.c.b16 %v3049, %v3045
    %v4474 = vpack.c.b16 %v3050, %v3046
    %v4475 = vpack.c.b16 %v3055, %v3051
    %v4476 = vpack.c.b16 %v3056, %v3052
    %v4477 = vpack.c.b16 %v3057, %v3053
    %v4478 = vpack.c.b16 %v3058, %v3054
    %v4479 = vpack.c.b16 %v3063, %v3059
    %v4480 = vpack.c.b16 %v3064, %v3060
    %v4481 = vpack.c.b16 %v3065, %v3061
    %v4482 = vpack.c.b16 %v3066, %v3062
    %v4483 = vpack.c.b16 %v3071, %v3067
    %v4484 = vpack.c.b16 %v3072, %v3068
    %v4485 = vpack.c.b16 %v3073, %v3069
    %v4486 = vpack.c.b16 %v3074, %v3070
    %v4487 = vpack.c.b16 %v3079, %v3075
    %v4488 = vpack.c.b16 %v3080, %v3076
    %v4489 = vpack.c.b16 %v3081, %v3077
    %v4490 = vpack.c.b16 %v3082, %v3078
    %v4491 = vpack.c.b16 %v3087, %v3083
    %v4492 = vpack.c.b16 %v3088, %v3084
    %v4493 = vpack.c.b16 %v3089, %v3085
    %v4494 = vpack.c.b16 %v3090, %v3086
    %v4495 = vpack.c.b16 %v3095, %v3091
    %v4496 = vpack.c.b16 %v3096, %v3092
    %v4497 = vpack.c.b16 %v3097, %v3093
    %v4498 = vpack.c.b16 %v3098, %v3094
    %v4499 = vpack.c.b16 %v3103, %v3099
    %v4500 = vpack.c.b16 %v3104, %v3100
    %v4501 = vpack.c.b16 %v3105, %v3101
    %v4502 = vpack.c.b16 %v3106, %v3102
    %v4503 = vpack.c.b16 %v3111, %v3107
    %v4504 = vpack.c.b16 %v3112, %v3108
    %v4505 = vpack.c.b16 %v3113, %v3109
    %v4506 = vpack.c.b16 %v3114, %v3110
    %v4507 = vpack.c.b16 %v3119, %v3115
    %v4508 = vpack.c.b16 %v3120, %v3116
    %v4509 = vpack.c.b16 %v3121, %v3117
    %v4510 = vpack.c.b16 %v3122, %v3118
    %v4511 = vpack.c.b16 %v3127, %v3123
    %v4512 = vpack.c.b16 %v3128, %v3124
    %v4513 = vpack.c.b16 %v3129, %v3125
    %v4514 = vpack.c.b16 %v3130, %v3126
    %v4515 = vpack.c.b16 %v3135, %v3131
    %v4516 = vpack.c.b16 %v3136, %v3132
    %v4517 = vpack.c.b16 %v3137, %v3133
    %v4518 = vpack.c.b16 %v3138, %v3134
    %v4519 = vpack.c.b16 %v3143, %v3139
    %v4520 = vpack.c.b16 %v3144, %v3140
    %v4521 = vpack.c.b16 %v3145, %v3141
    %v4522 = vpack.c.b16 %v3146, %v3142
    %v4523 = vpack.c.b16 %v3151, %v3147
    %v4524 = vpack.c.b16 %v3152, %v3148
    %v4525 = vpack.c.b16 %v3153, %v3149
    %v4526 = vpack.c.b16 %v3154, %v3150
    %v4527 = vpack.c.b16 %v3159, %v3155
    %v4528 = vpack.c.b16 %v3160, %v3156
    %v4529 = vpack.c.b16 %v3161, %v3157
    %v4530 = vpack.c.b16 %v3162, %v3158
    %v4531 = vpack.c.b16 %v3167, %v3163
    %v4532 = vpack.c.b16 %v3168, %v3164
    %v4533 = vpack.c.b16 %v3169, %v3165
    %v4534 = vpack.c.b16 %v3170, %v3166
    %v4535 = vpack.c.b16 %v3175, %v3171
    %v4536 = vpack.c.b16 %v3176, %v3172
    %v4537 = vpack.c.b16 %v3177, %v3173
    %v4538 = vpack.c.b16 %v3178, %v3174
    %v4539 = vpack.c.b16 %v3183, %v3179
    %v4540 = vpack.c.b16 %v3184, %v3180
    %v4541 = vpack.c.b16 %v3185, %v3181
    %v4542 = vpack.c.b16 %v3186, %v3182
    %v4543 = vpack.c.b16 %v3191, %v3187
    %v4544 = vpack.c.b16 %v3192, %v3188
    %v4545 = vpack.c.b16 %v3193, %v3189
    %v4546 = vpack.c.b16 %v3194, %v3190
    %v4547 = vpack.c.b16 %v3199, %v3195
    %v4548 = vpack.c.b16 %v3200, %v3196
    %v4549 = vpack.c.b16 %v3201, %v3197
    %v4550 = vpack.c.b16 %v3202, %v3198
    %v4551 = vpack.c.b16 %v3207, %v3203
    %v4552 = vpack.c.b16 %v3208, %v3204
    %v4553 = vpack.c.b16 %v3209, %v3205
    %v4554 = vpack.c.b16 %v3210, %v3206
    %v4555 = vpack.c.b16 %v3215, %v3211
    %v4556 = vpack.c.b16 %v3216, %v3212
    %v4557 = vpack.c.b16 %v3217, %v3213
    %v4558 = vpack.c.b16 %v3218, %v3214
    %v4559 = vpack.c.b16 %v3223, %v3219
    %v4560 = vpack.c.b16 %v3224, %v3220
    %v4561 = vpack.c.b16 %v3225, %v3221
    %v4562 = vpack.c.b16 %v3226, %v3222
    %v4563 = vpack.c.b16 %v3231, %v3227
    %v4564 = vpack.c.b16 %v3232, %v3228
    %v4565 = vpack.c.b16 %v3233, %v3229
    %v4566 = vpack.c.b16 %v3234, %v3230
    %v4567 = vpack.c.b16 %v3239, %v3235
    %v4568 = vpack.c.b16 %v3240, %v3236
    %v4569 = vpack.c.b16 %v3241, %v3237
    %v4570 = vpack.c.b16 %v3242, %v3238
    %v4571 = vpack.c.b16 %v3247, %v3243
    %v4572 = vpack.c.b16 %v3248, %v3244
    %v4573 = vpack.c.b16 %v3249, %v3245
    %v4574 = vpack.c.b16 %v3250, %v3246
    %v4575 = vpack.c.b16 %v3255, %v3251
    %v4576 = vpack.c.b16 %v3256, %v3252
    %v4577 = vpack.c.b16 %v3257, %v3253
    %v4578 = vpack.c.b16 %v3258, %v3254
    %v4579 = vpack.c.b16 %v3263, %v3259
    %v4580 = vpack.c.b16 %v3264, %v3260
    %v4581 = vpack.c.b16 %v3265, %v3261
    %v4582 = vpack.c.b16 %v3266, %v3262
    %v4583 = vpack.c.b16 %v3271, %v3267
    %v4584 = vpack.c.b16 %v3272, %v3268
    %v4585 = vpack.c.b16 %v3273, %v3269
    %v4586 = vpack.c.b16 %v3274, %v3270
    %v4587 = vpack.c.b16 %v3279, %v3275
    %v4588 = vpack.c.b16 %v3280, %v3276
    %v4589 = vpack.c.b16 %v3281, %v3277
    %v4590 = vpack.c.b16 %v3282, %v3278
    %v4591 = vpack.c.b16 %v3287, %v3283
    %v4592 = vpack.c.b16 %v3288, %v3284
    %v4593 = vpack.c.b16 %v3289, %v3285
    %v4594 = vpack.c.b16 %v3290, %v3286
    %v4595 = vpack.c.b16 %v3295, %v3291
    %v4596 = vpack.c.b16 %v3296, %v3292
    %v4597 = vpack.c.b16 %v3297, %v3293
    %v4598 = vpack.c.b16 %v3298, %v3294
    %v4599 = vpack.c.b16 %v3303, %v3299
    %v4600 = vpack.c.b16 %v3304, %v3300
    %v4601 = vpack.c.b16 %v3305, %v3301
    %v4602 = vpack.c.b16 %v3306, %v3302
    %v4603 = vpack.c.b16 %v3311, %v3307
    %v4604 = vpack.c.b16 %v3312, %v3308
    %v4605 = vpack.c.b16 %v3313, %v3309
    %v4606 = vpack.c.b16 %v3314, %v3310
    %v4607 = vpack.c.b16 %v3319, %v3315
    %v4608 = vpack.c.b16 %v3320, %v3316
    %v4609 = vpack.c.b16 %v3321, %v3317
    %v4610 = vpack.c.b16 %v3322, %v3318
    %v4611 = vpack.c.b16 %v3327, %v3323
    %v4612 = vpack.c.b16 %v3328, %v3324
    %v4613 = vpack.c.b16 %v3329, %v3325
    %v4614 = vpack.c.b16 %v3330, %v3326
    %v4615 = vpack.c.b16 %v3335, %v3331
    %v4616 = vpack.c.b16 %v3336, %v3332
    %v4617 = vpack.c.b16 %v3337, %v3333
    %v4618 = vpack.c.b16 %v3338, %v3334
    %v4619 = vpack.c.b16 %v3343, %v3339
    %v4620 = vpack.c.b16 %v3344, %v3340
    %v4621 = vpack.c.b16 %v3345, %v3341
    %v4622 = vpack.c.b16 %v3346, %v3342
    %v4623 = vpack.c.b16 %v3351, %v3347
    %v4624 = vpack.c.b16 %v3352, %v3348
    %v4625 = vpack.c.b16 %v3353, %v3349
    %v4626 = vpack.c.b16 %v3354, %v3350
    %v4627 = vpack.c.b16 %v3359, %v3355
    %v4628 = vpack.c.b16 %v3360, %v3356
    %v4629 = vpack.c.b16 %v3361, %v3357
    %v4630 = vpack.c.b16 %v3362, %v3358
    %v4631 = vpack.c.b16 %v3367, %v3363
    %v4632 = vpack.c.b16 %v3368, %v3364
    %v4633 = vpack.c.b16 %v3369, %v3365
    %v4634 = vpack.c.b16 %v3370, %v3366
    %v4635 = vpack.c.b16 %v3375, %v3371
    %v4636 = vpack.c.b16 %v3376, %v3372
    %v4637 = vpack.c.b16 %v3377, %v3373
    %v4638 = vpack.c.b16 %v3378, %v3374
    %v4639 = vpack.c.b16 %v3383, %v3379
    %v4640 = vpack.c.b16 %v3384, %v3380
    %v4641 = vpack.c.b16 %v3385, %v3381
    %v4642 = vpack.c.b16 %v3386, %v3382
    %v4643 = vpack.c.b16 %v3391, %v3387
    %v4644 = vpack.c.b16 %v3392, %v3388
    %v4645 = vpack.c.b16 %v3393, %v3389
    %v4646 = vpack.c.b16 %v3394, %v3390
    %v4647 = vpack.c.b16 %v3399, %v3395
    %v4648 = vpack.c.b16 %v3400, %v3396
    %v4649 = vpack.c.b16 %v3401, %v3397
    %v4650 = vpack.c.b16 %v3402, %v3398
    %v4651 = vpack.c.b16 %v3407, %v3403
    %v4652 = vpack.c.b16 %v3408, %v3404
    %v4653 = vpack.c.b16 %v3409, %v3405
    %v4654 = vpack.c.b16 %v3410, %v3406
    %v4655 = vpack.c.b16 %v3415, %v3411
    %v4656 = vpack.c.b16 %v3416, %v3412
    %v4657 = vpack.c.b16 %v3417, %v3413
    %v4658 = vpack.c.b16 %v3418, %v3414
    %v4659 = vpack.c.b16 %v3423, %v3419
    %v4660 = vpack.c.b16 %v3424, %v3420
    %v4661 = vpack.c.b16 %v3425, %v3421
    %v4662 = vpack.c.b16 %v3426, %v3422
    %v4663 = vpack.c.b16 %v3431, %v3427
    %v4664 = vpack.c.b16 %v3432, %v3428
    %v4665 = vpack.c.b16 %v3433, %v3429
    %v4666 = vpack.c.b16 %v3434, %v3430
    %v4667 = vpack.c.b16 %v3439, %v3435
    %v4668 = vpack.c.b16 %v3440, %v3436
    %v4669 = vpack.c.b16 %v3441, %v3437
    %v4670 = vpack.c.b16 %v3442, %v3438
    %v4671 = vpack.c.b16 %v3447, %v3443
    %v4672 = vpack.c.b16 %v3448, %v3444
    %v4673 = vpack.c.b16 %v3449, %v3445
    %v4674 = vpack.c.b16 %v3450, %v3446
    %v4675 = vpack.c.b16 %v3455, %v3451
    %v4676 = vpack.c.b16 %v3456, %v3452
    %v4677 = vpack.c.b16 %v3457, %v3453
    %v4678 = vpack.c.b16 %v3458, %v3454
    %v4679 = vpack.c.b16 %v3463, %v3459
    %v4680 = vpack.c.b16 %v3464, %v3460
    %v4681 = vpack.c.b16 %v3465, %v3461
    %v4682 = vpack.c.b16 %v3466, %v3462
    %v4683 = vpack.c.b16 %v3471, %v3467
    %v4684 = vpack.c.b16 %v3472, %v3468
    %v4685 = vpack.c.b16 %v3473, %v3469
    %v4686 = vpack.c.b16 %v3474, %v3470
    %v4687 = vpack.c.b16 %v3479, %v3475
    %v4688 = vpack.c.b16 %v3480, %v3476
    %v4689 = vpack.c.b16 %v3481, %v3477
    %v4690 = vpack.c.b16 %v3482, %v3478
    %v4691 = vpack.c.b16 %v3487, %v3483
    %v4692 = vpack.c.b16 %v3488, %v3484
    %v4693 = vpack.c.b16 %v3489, %v3485
    %v4694 = vpack.c.b16 %v3490, %v3486
    %v4695 = vpack.c.b16 %v3495, %v3491
    %v4696 = vpack.c.b16 %v3496, %v3492
    %v4697 = vpack.c.b16 %v3497, %v3493
    %v4698 = vpack.c.b16 %v3498, %v3494
    %v4699 = vpack.c.b16 %v3503, %v3499
    %v4700 = vpack.c.b16 %v3504, %v3500
    %v4701 = vpack.c.b16 %v3505, %v3501
    %v4702 = vpack.c.b16 %v3506, %v3502
    %v4703 = vpack.c.b16 %v3511, %v3507
    %v4704 = vpack.c.b16 %v3512, %v3508
    %v4705 = vpack.c.b16 %v3513, %v3509
    %v4706 = vpack.c.b16 %v3514, %v3510
    %v4707 = vpack.c.b16 %v3519, %v3515
    %v4708 = vpack.c.b16 %v3520, %v3516
    %v4709 = vpack.c.b16 %v3521, %v3517
    %v4710 = vpack.c.b16 %v3522, %v3518
    %v4711 = vpack.c.b16 %v3527, %v3523
    %v4712 = vpack.c.b16 %v3528, %v3524
    %v4713 = vpack.c.b16 %v3529, %v3525
    %v4714 = vpack.c.b16 %v3530, %v3526
    %v4715 = vpack.c.b16 %v3535, %v3531
    %v4716 = vpack.c.b16 %v3536, %v3532
    %v4717 = vpack.c.b16 %v3537, %v3533
    %v4718 = vpack.c.b16 %v3538, %v3534
    %v4719 = vpack.c.b16 %v3543, %v3539
    %v4720 = vpack.c.b16 %v3544, %v3540
    %v4721 = vpack.c.b16 %v3545, %v3541
    %v4722 = vpack.c.b16 %v3546, %v3542
    %v4723 = vpack.c.b16 %v3551, %v3547
    %v4724 = vpack.c.b16 %v3552, %v3548
    %v4725 = vpack.c.b16 %v3553, %v3549
    %v4726 = vpack.c.b16 %v3554, %v3550
    %v4727 = vpack.c.b16 %v3559, %v3555
    %v4728 = vpack.c.b16 %v3560, %v3556
    %v4729 = vpack.c.b16 %v3561, %v3557
    %v4730 = vpack.c.b16 %v3562, %v3558
    %v4731 = vpack.c.b16 %v3567, %v3563
    %v4732 = vpack.c.b16 %v3568, %v3564
    %v4733 = vpack.c.b16 %v3569, %v3565
    %v4734 = vpack.c.b16 %v3570, %v3566
    %v4735 = vpack.c.b16 %v3575, %v3571
    %v4736 = vpack.c.b16 %v3576, %v3572
    %v4737 = vpack.c.b16 %v3577, %v3573
    %v4738 = vpack.c.b16 %v3578, %v3574
    %v4739 = vpack.c.b16 %v3583, %v3579
    %v4740 = vpack.c.b16 %v3584, %v3580
    %v4741 = vpack.c.b16 %v3585, %v3581
    %v4742 = vpack.c.b16 %v3586, %v3582
    %v4743 = vpack.c.b16 %v3591, %v3587
    %v4744 = vpack.c.b16 %v3592, %v3588
    %v4745 = vpack.c.b16 %v3593, %v3589
    %v4746 = vpack.c.b16 %v3594, %v3590
    %v4747 = vpack.c.b16 %v3599, %v3595
    %v4748 = vpack.c.b16 %v3600, %v3596
    %v4749 = vpack.c.b16 %v3601, %v3597
    %v4750 = vpack.c.b16 %v3602, %v3598
    %v4751 = vpack.c.b16 %v3607, %v3603
    %v4752 = vpack.c.b16 %v3608, %v3604
    %v4753 = vpack.c.b16 %v3609, %v3605
    %v4754 = vpack.c.b16 %v3610, %v3606
    %v4755 = vpack.c.b16 %v3615, %v3611
    %v4756 = vpack.c.b16 %v3616, %v3612
    %v4757 = vpack.c.b16 %v3617, %v3613
    %v4758 = vpack.c.b16 %v3618, %v3614
    %v4759 = vpack.c.b16 %v3623, %v3619
    %v4760 = vpack.c.b16 %v3624, %v3620
    %v4761 = vpack.c.b16 %v3625, %v3621
    %v4762 = vpack.c.b16 %v3626, %v3622
    %v4763 = vpack.c.b16 %v3631, %v3627
    %v4764 = vpack.c.b16 %v3632, %v3628
    %v4765 = vpack.c.b16 %v3633, %v3629
    %v4766 = vpack.c.b16 %v3634, %v3630
    %v4767 = vpack.c.b16 %v3639, %v3635
    %v4768 = vpack.c.b16 %v3640, %v3636
    %v4769 = vpack.c.b16 %v3641, %v3637
    %v4770 = vpack.c.b16 %v3642, %v3638
    %v4771 = vpack.c.b16 %v3647, %v3643
    %v4772 = vpack.c.b16 %v3648, %v3644
    %v4773 = vpack.c.b16 %v3649, %v3645
    %v4774 = vpack.c.b16 %v3650, %v3646
    %v4775 = vpack.c.b16 %v3655, %v3651
    %v4776 = vpack.c.b16 %v3656, %v3652
    %v4777 = vpack.c.b16 %v3657, %v3653
    %v4778 = vpack.c.b16 %v3658, %v3654
    %v4779 = vpack.c.b16 %v3663, %v3659
    %v4780 = vpack.c.b16 %v3664, %v3660
    %v4781 = vpack.c.b16 %v3665, %v3661
    %v4782 = vpack.c.b16 %v3666, %v3662
    %v4783 = vpack.c.b16 %v3671, %v3667
    %v4784 = vpack.c.b16 %v3672, %v3668
    %v4785 = vpack.c.b16 %v3673, %v3669
    %v4786 = vpack.c.b16 %v3674, %v3670
    %v4787 = vpack.c.b16 %v3679, %v3675
    %v4788 = vpack.c.b16 %v3680, %v3676
    %v4789 = vpack.c.b16 %v3681, %v3677
    %v4790 = vpack.c.b16 %v3682, %v3678
    %v4791 = vpack.c.b16 %v3687, %v3683
    %v4792 = vpack.c.b16 %v3688, %v3684
    %v4793 = vpack.c.b16 %v3689, %v3685
    %v4794 = vpack.c.b16 %v3690, %v3686
    %v4795 = vpack.c.b16 %v3695, %v3691
    %v4796 = vpack.c.b16 %v3696, %v3692
    %v4797 = vpack.c.b16 %v3697, %v3693
    %v4798 = vpack.c.b16 %v3698, %v3694
    %v4799 = vpack.c.b16 %v3703, %v3699
    %v4800 = vpack.c.b16 %v3704, %v3700
    %v4801 = vpack.c.b16 %v3705, %v3701
    %v4802 = vpack.c.b16 %v3706, %v3702
    %v4803 = vpack.c.b16 %v3711, %v3707
    %v4804 = vpack.c.b16 %v3712, %v3708
    %v4805 = vpack.c.b16 %v3713, %v3709
    %v4806 = vpack.c.b16 %v3714, %v3710
    %v4807 = vpack.c.b16 %v3719, %v3715
    %v4808 = vpack.c.b16 %v3720, %v3716
    %v4809 = vpack.c.b16 %v3721, %v3717
    %v4810 = vpack.c.b16 %v3722, %v3718
    %v4811 = vpack.c.b16 %v3727, %v3723
    %v4812 = vpack.c.b16 %v3728, %v3724
    %v4813 = vpack.c.b16 %v3729, %v3725
    %v4814 = vpack.c.b16 %v3730, %v3726
    %v4815 = vpack.c.b16 %v3735, %v3731
    %v4816 = vpack.c.b16 %v3736, %v3732
    %v4817 = vpack.c.b16 %v3737, %v3733
    %v4818 = vpack.c.b16 %v3738, %v3734
    %v4819 = vpack.c.b16 %v3743, %v3739
    %v4820 = vpack.c.b16 %v3744, %v3740
    %v4821 = vpack.c.b16 %v3745, %v3741
    %v4822 = vpack.c.b16 %v3746, %v3742
    %v4823 = vpack.c.b16 %v3751, %v3747
    %v4824 = vpack.c.b16 %v3752, %v3748
    %v4825 = vpack.c.b16 %v3753, %v3749
    %v4826 = vpack.c.b16 %v3754, %v3750
    %v4827 = vpack.c.b16 %v3759, %v3755
    %v4828 = vpack.c.b16 %v3760, %v3756
    %v4829 = vpack.c.b16 %v3761, %v3757
    %v4830 = vpack.c.b16 %v3762, %v3758
    %v4831 = vpack.c.b16 %v3767, %v3763
    %v4832 = vpack.c.b16 %v3768, %v3764
    %v4833 = vpack.c.b16 %v3769, %v3765
    %v4834 = vpack.c.b16 %v3770, %v3766
    %v4835 = vpack.c.b16 %v3775, %v3771
    %v4836 = vpack.c.b16 %v3776, %v3772
    %v4837 = vpack.c.b16 %v3777, %v3773
    %v4838 = vpack.c.b16 %v3778, %v3774
    %v4839 = vpack.c.b16 %v3783, %v3779
    %v4840 = vpack.c.b16 %v3784, %v3780
    %v4841 = vpack.c.b16 %v3785, %v3781
    %v4842 = vpack.c.b16 %v3786, %v3782
    %v4843 = vpack.c.b16 %v3791, %v3787
    %v4844 = vpack.c.b16 %v3792, %v3788
    %v4845 = vpack.c.b16 %v3793, %v3789
    %v4846 = vpack.c.b16 %v3794, %v3790
    %v4847 = vpack.c.b16 %v3799, %v3795
    %v4848 = vpack.c.b16 %v3800, %v3796
    %v4849 = vpack.c.b16 %v3801, %v3797
    %v4850 = vpack.c.b16 %v3802, %v3798
    %v4851 = vpack.c.b16 %v3807, %v3803
    %v4852 = vpack.c.b16 %v3808, %v3804
    %v4853 = vpack.c.b16 %v3809, %v3805
    %v4854 = vpack.c.b16 %v3810, %v3806
    %v4855 = vpack.c.b16 %v3815, %v3811
    %v4856 = vpack.c.b16 %v3816, %v3812
    %v4857 = vpack.c.b16 %v3817, %v3813
    %v4858 = vpack.c.b16 %v3818, %v3814
    %v4859 = vpack.c.b16 %v3823, %v3819
    %v4860 = vpack.c.b16 %v3824, %v3820
    %v4861 = vpack.c.b16 %v3825, %v3821
    %v4862 = vpack.c.b16 %v3826, %v3822
    %v4863 = vpack.c.b16 %v3831, %v3827
    %v4864 = vpack.c.b16 %v3832, %v3828
    %v4865 = vpack.c.b16 %v3833, %v3829
    %v4866 = vpack.c.b16 %v3834, %v3830
    %v4867 = vpack.c.b16 %v3839, %v3835
    %v4868 = vpack.c.b16 %v3840, %v3836
    %v4869 = vpack.c.b16 %v3841, %v3837
    %v4870 = vpack.c.b16 %v3842, %v3838
    %v4871 = vpack.c.b16 %v3847, %v3843
    %v4872 = vpack.c.b16 %v3848, %v3844
    %v4873 = vpack.c.b16 %v3849, %v3845
    %v4874 = vpack.c.b16 %v3850, %v3846
    %v4875 = vpack.c.b16 %v3855, %v3851
    %v4876 = vpack.c.b16 %v3856, %v3852
    %v4877 = vpack.c.b16 %v3857, %v3853
    %v4878 = vpack.c.b16 %v3858, %v3854
    %v4879 = vpack.c.b16 %v3863, %v3859
    %v4880 = vpack.c.b16 %v3864, %v3860
    %v4881 = vpack.c.b16 %v3865, %v3861
    %v4882 = vpack.c.b16 %v3866, %v3862
    %v4883 = vpack.c.b16 %v3871, %v3867
    %v4884 = vpack.c.b16 %v3872, %v3868
    %v4885 = vpack.c.b16 %v3873, %v3869
    %v4886 = vpack.c.b16 %v3874, %v3870
    %v4887 = vpack.c.b16 %v3879, %v3875
    %v4888 = vpack.c.b16 %v3880, %v3876
    %v4889 = vpack.c.b16 %v3881, %v3877
    %v4890 = vpack.c.b16 %v3882, %v3878
    %v4891 = vpack.c.b16 %v3887, %v3883
    %v4892 = vpack.c.b16 %v3888, %v3884
    %v4893 = vpack.c.b16 %v3889, %v3885
    %v4894 = vpack.c.b16 %v3890, %v3886
    %v4895 = vpack.c.b16 %v3895, %v3891
    %v4896 = vpack.c.b16 %v3896, %v3892
    %v4897 = vpack.c.b16 %v3897, %v3893
    %v4898 = vpack.c.b16 %v3898, %v3894
    %v4899 = vpack.c.b16 %v3903, %v3899
    %v4900 = vpack.c.b16 %v3904, %v3900
    %v4901 = vpack.c.b16 %v3905, %v3901
    %v4902 = vpack.c.b16 %v3906, %v3902
    %v4903 = vpack.c.b16 %v3911, %v3907
    %v4904 = vpack.c.b16 %v3912, %v3908
    %v4905 = vpack.c.b16 %v3913, %v3909
    %v4906 = vpack.c.b16 %v3914, %v3910
    %v4907 = vpack.c.b16 %v3919, %v3915
    %v4908 = vpack.c.b16 %v3920, %v3916
    %v4909 = vpack.c.b16 %v3921, %v3917
    %v4910 = vpack.c.b16 %v3922, %v3918
    %v4911 = vpack.c.b16 %v3927, %v3923
    %v4912 = vpack.c.b16 %v3928, %v3924
    %v4913 = vpack.c.b16 %v3929, %v3925
    %v4914 = vpack.c.b16 %v3930, %v3926
    %v4915 = vpack.c.b16 %v3935, %v3931
    %v4916 = vpack.c.b16 %v3936, %v3932
    %v4917 = vpack.c.b16 %v3937, %v3933
    %v4918 = vpack.c.b16 %v3938, %v3934
    %v4919 = vpack.c.b16 %v3943, %v3939
    %v4920 = vpack.c.b16 %v3944, %v3940
    %v4921 = vpack.c.b16 %v3945, %v3941
    %v4922 = vpack.c.b16 %v3946, %v3942
    %v4923 = vpack.c.b16 %v3951, %v3947
    %v4924 = vpack.c.b16 %v3952, %v3948
    %v4925 = vpack.c.b16 %v3953, %v3949
    %v4926 = vpack.c.b16 %v3954, %v3950
    %v4927 = vpack.c.b16 %v3959, %v3955
    %v4928 = vpack.c.b16 %v3960, %v3956
    %v4929 = vpack.c.b16 %v3961, %v3957
    %v4930 = vpack.c.b16 %v3962, %v3958
    %v4931 = vpack.c.b16 %v3967, %v3963
    %v4932 = vpack.c.b16 %v3968, %v3964
    %v4933 = vpack.c.b16 %v3969, %v3965
    %v4934 = vpack.c.b16 %v3970, %v3966
    %v4935 = vpack.c.b16 %v3975, %v3971
    %v4936 = vpack.c.b16 %v3976, %v3972
    %v4937 = vpack.c.b16 %v3977, %v3973
    %v4938 = vpack.c.b16 %v3978, %v3974
    %v4939 = vpack.c.b16 %v3983, %v3979
    %v4940 = vpack.c.b16 %v3984, %v3980
    %v4941 = vpack.c.b16 %v3985, %v3981
    %v4942 = vpack.c.b16 %v3986, %v3982
    %v4943 = vpack.c.b16 %v3991, %v3987
    %v4944 = vpack.c.b16 %v3992, %v3988
    %v4945 = vpack.c.b16 %v3993, %v3989
    %v4946 = vpack.c.b16 %v3994, %v3990
    %v4947 = vpack.c.b16 %v3999, %v3995
    %v4948 = vpack.c.b16 %v4000, %v3996
    %v4949 = vpack.c.b16 %v4001, %v3997
    %v4950 = vpack.c.b16 %v4002, %v3998
    %v4951 = vpack.c.b16 %v4007, %v4003
    %v4952 = vpack.c.b16 %v4008, %v4004
    %v4953 = vpack.c.b16 %v4009, %v4005
    %v4954 = vpack.c.b16 %v4010, %v4006
    %v4955 = vpack.c.b16 %v4015, %v4011
    %v4956 = vpack.c.b16 %v4016, %v4012
    %v4957 = vpack.c.b16 %v4017, %v4013
    %v4958 = vpack.c.b16 %v4018, %v4014
    %v4959 = vpack.c.b16 %v4023, %v4019
    %v4960 = vpack.c.b16 %v4024, %v4020
    %v4961 = vpack.c.b16 %v4025, %v4021
    %v4962 = vpack.c.b16 %v4026, %v4022
    %v4963 = vpack.c.b16 %v4031, %v4027
    %v4964 = vpack.c.b16 %v4032, %v4028
    %v4965 = vpack.c.b16 %v4033, %v4029
    %v4966 = vpack.c.b16 %v4034, %v4030
    %v4967 = vpack.c.b16 %v4039, %v4035
    %v4968 = vpack.c.b16 %v4040, %v4036
    %v4969 = vpack.c.b16 %v4041, %v4037
    %v4970 = vpack.c.b16 %v4042, %v4038
    %v4971 = vpack.c.b16 %v4047, %v4043
    %v4972 = vpack.c.b16 %v4048, %v4044
    %v4973 = vpack.c.b16 %v4049, %v4045
    %v4974 = vpack.c.b16 %v4050, %v4046
    %v4975 = vpack.c.b16 %v4055, %v4051
    %v4976 = vpack.c.b16 %v4056, %v4052
    %v4977 = vpack.c.b16 %v4057, %v4053
    %v4978 = vpack.c.b16 %v4058, %v4054
    %v4979 = vpack.c.b16 %v4063, %v4059
    %v4980 = vpack.c.b16 %v4064, %v4060
    %v4981 = vpack.c.b16 %v4065, %v4061
    %v4982 = vpack.c.b16 %v4066, %v4062
    %v4983 = vpack.c.b16 %v4071, %v4067
    %v4984 = vpack.c.b16 %v4072, %v4068
    %v4985 = vpack.c.b16 %v4073, %v4069
    %v4986 = vpack.c.b16 %v4074, %v4070
    %v4987 = vpack.c.b16 %v4079, %v4075
    %v4988 = vpack.c.b16 %v4080, %v4076
    %v4989 = vpack.c.b16 %v4081, %v4077
    %v4990 = vpack.c.b16 %v4082, %v4078
    %v4991 = vpack.c.b16 %v4087, %v4083
    %v4992 = vpack.c.b16 %v4088, %v4084
    %v4993 = vpack.c.b16 %v4089, %v4085
    %v4994 = vpack.c.b16 %v4090, %v4086
    %v4995 = vpack.c.b16 %v4095, %v4091
    %v4996 = vpack.c.b16 %v4096, %v4092
    %v4997 = vpack.c.b16 %v4097, %v4093
    %v4998 = vpack.c.b16 %v4098, %v4094
    %v4999 = vpack.c.b16 %v4103, %v4099
    %v5000 = vpack.c.b16 %v4104, %v4100
    %v5001 = vpack.c.b16 %v4105, %v4101
    %v5002 = vpack.c.b16 %v4106, %v4102
    %v5003 = vpack.c.b16 %v4111, %v4107
    %v5004 = vpack.c.b16 %v4112, %v4108
    %v5005 = vpack.c.b16 %v4113, %v4109
    %v5006 = vpack.c.b16 %v4114, %v4110
    %v5007 = vpack.c.b16 %v4119, %v4115
    %v5008 = vpack.c.b16 %v4120, %v4116
    %v5009 = vpack.c.b16 %v4121, %v4117
    %v5010 = vpack.c.b16 %v4122, %v4118
    %v5011 = vpack.c.b16 %v4127, %v4123
    %v5012 = vpack.c.b16 %v4128, %v4124
    %v5013 = vpack.c.b16 %v4129, %v4125
    %v5014 = vpack.c.b16 %v4130, %v4126
    %v5015 = vpack.c.b16 %v4135, %v4131
    %v5016 = vpack.c.b16 %v4136, %v4132
    %v5017 = vpack.c.b16 %v4137, %v4133
    %v5018 = vpack.c.b16 %v4138, %v4134
    %v5019 = vpack.c.b16 %v4143, %v4139
    %v5020 = vpack.c.b16 %v4144, %v4140
    %v5021 = vpack.c.b16 %v4145, %v4141
    %v5022 = vpack.c.b16 %v4146, %v4142
    %v5023 = vpack.c.b16 %v4151, %v4147
    %v5024 = vpack.c.b16 %v4152, %v4148
    %v5025 = vpack.c.b16 %v4153, %v4149
    %v5026 = vpack.c.b16 %v4154, %v4150
    %v5027 = vpack.c.b16 %v4159, %v4155
    %v5028 = vpack.c.b16 %v4160, %v4156
    %v5029 = vpack.c.b16 %v4161, %v4157
    %v5030 = vpack.c.b16 %v4162, %v4158
    %v5031 = vpack.c.b16 %v4167, %v4163
    %v5032 = vpack.c.b16 %v4168, %v4164
    %v5033 = vpack.c.b16 %v4169, %v4165
    %v5034 = vpack.c.b16 %v4170, %v4166
    %v5035 = vpack.c.b16 %v4175, %v4171
    %v5036 = vpack.c.b16 %v4176, %v4172
    %v5037 = vpack.c.b16 %v4177, %v4173
    %v5038 = vpack.c.b16 %v4178, %v4174
    %v5039 = vpack.c.b16 %v4183, %v4179
    %v5040 = vpack.c.b16 %v4184, %v4180
    %v5041 = vpack.c.b16 %v4185, %v4181
    %v5042 = vpack.c.b16 %v4186, %v4182
    %v5043 = vpack.c.b16 %v4191, %v4187
    %v5044 = vpack.c.b16 %v4192, %v4188
    %v5045 = vpack.c.b16 %v4193, %v4189
    %v5046 = vpack.c.b16 %v4194, %v4190
    %v5047 = vpack.c.b16 %v4199, %v4195
    %v5048 = vpack.c.b16 %v4200, %v4196
    %v5049 = vpack.c.b16 %v4201, %v4197
    %v5050 = vpack.c.b16 %v4202, %v4198
    %v5051 = vpack.c.b16 %v4207, %v4203
    %v5052 = vpack.c.b16 %v4208, %v4204
    %v5053 = vpack.c.b16 %v4209, %v4205
    %v5054 = vpack.c.b16 %v4210, %v4206
    %v5055 = vpack.c.b16 %v4215, %v4211
    %v5056 = vpack.c.b16 %v4216, %v4212
    %v5057 = vpack.c.b16 %v4217, %v4213
    %v5058 = vpack.c.b16 %v4218, %v4214
    %v5059 = vpack.c.b16 %v4223, %v4219
    %v5060 = vpack.c.b16 %v4224, %v4220
    %v5061 = vpack.c.b16 %v4225, %v4221
    %v5062 = vpack.c.b16 %v4226, %v4222
    %v5063 = vpack.c.b16 %v4231, %v4227
    %v5064 = vpack.c.b16 %v4232, %v4228
    %v5065 = vpack.c.b16 %v4233, %v4229
    %v5066 = vpack.c.b16 %v4234, %v4230
    %v5067 = vpack.c.b16 %v4239, %v4235
    %v5068 = vpack.c.b16 %v4240, %v4236
    %v5069 = vpack.c.b16 %v4241, %v4237
    %v5070 = vpack.c.b16 %v4242, %v4238
    %v5071 = vpack.c.b16 %v4247, %v4243
    %v5072 = vpack.c.b16 %v4248, %v4244
    %v5073 = vpack.c.b16 %v4249, %v4245
    %v5074 = vpack.c.b16 %v4250, %v4246
    %v5075 = vpack.c.b16 %v4255, %v4251
    %v5076 = vpack.c.b16 %v4256, %v4252
    %v5077 = vpack.c.b16 %v4257, %v4253
    %v5078 = vpack.c.b16 %v4258, %v4254
    %v5079 = vpack.c.b16 %v4263, %v4259
    %v5080 = vpack.c.b16 %v4264, %v4260
    %v5081 = vpack.c.b16 %v4265, %v4261
    %v5082 = vpack.c.b16 %v4266, %v4262
    %v5083 = vpack.c.b16 %v4271, %v4267
    %v5084 = vpack.c.b16 %v4272, %v4268
    %v5085 = vpack.c.b16 %v4273, %v4269
    %v5086 = vpack.c.b16 %v4274, %v4270
    %v5087 = vpack.c.b16 %v4279, %v4275
    %v5088 = vpack.c.b16 %v4280, %v4276
    %v5089 = vpack.c.b16 %v4281, %v4277
    %v5090 = vpack.c.b16 %v4282, %v4278
    %v5091 = vpack.c.b16 %v4287, %v4283
    %v5092 = vpack.c.b16 %v4288, %v4284
    %v5093 = vpack.c.b16 %v4289, %v4285
    %v5094 = vpack.c.b16 %v4290, %v4286
    %v5095 = vpack.c.b16 %v4295, %v4291
    %v5096 = vpack.c.b16 %v4296, %v4292
    %v5097 = vpack.c.b16 %v4297, %v4293
    %v5098 = vpack.c.b16 %v4298, %v4294
    %v5099 = vpack.c.b16 %v4303, %v4299
    %v5100 = vpack.c.b16 %v4304, %v4300
    %v5101 = vpack.c.b16 %v4305, %v4301
    %v5102 = vpack.c.b16 %v4306, %v4302
    %v5103 = vpack.c.b16 %v4311, %v4307
    %v5104 = vpack.c.b16 %v4312, %v4308
    %v5105 = vpack.c.b16 %v4313, %v4309
    %v5106 = vpack.c.b16 %v4314, %v4310
    %v5107 = vpack.c.b16 %v4319, %v4315
    %v5108 = vpack.c.b16 %v4320, %v4316
    %v5109 = vpack.c.b16 %v4321, %v4317
    %v5110 = vpack.c.b16 %v4322, %v4318
    %v5111 = vpack.c.b16 %v4327, %v4323
    %v5112 = vpack.c.b16 %v4328, %v4324
    %v5113 = vpack.c.b16 %v4329, %v4325
    %v5114 = vpack.c.b16 %v4330, %v4326
    %v5115 = vpack.c.b16 %v4335, %v4331
    %v5116 = vpack.c.b16 %v4336, %v4332
    %v5117 = vpack.c.b16 %v4337, %v4333
    %v5118 = vpack.c.b16 %v4338, %v4334
    %v5119 = vpack.c.b16 %v4343, %v4339
    %v5120 = vpack.c.b16 %v4344, %v4340
    %v5121 = vpack.c.b16 %v4345, %v4341
    %v5122 = vpack.c.b16 %v4346, %v4342
    %v5123 = vpack.c.b16 %v4351, %v4347
    %v5124 = vpack.c.b16 %v4352, %v4348
    %v5125 = vpack.c.b16 %v4353, %v4349
    %v5126 = vpack.c.b16 %v4354, %v4350
    %v5127 = vpack.c.b16 %v4359, %v4355
    %v5128 = vpack.c.b16 %v4360, %v4356
    %v5129 = vpack.c.b16 %v4361, %v4357
    %v5130 = vpack.c.b16 %v4362, %v4358
    %5899 = vmatprep.subr.bf16.mxu0 %v4364
    %5900 = vmatpush1.bf16.msra.mxu0 %v4363
    %5901 = vmatprep.subr.bf16.mxu0 %v4368
    %5902 = vmatpush1.bf16.msra.mxu0 %v4367
    %5903 = vmatprep.subr.bf16.mxu0 %v4372
    %5904 = vmatpush1.bf16.msra.mxu0 %v4371
    %5905 = vmatprep.subr.bf16.mxu0 %v4376
    %5906 = vmatpush1.bf16.msra.mxu0 %v4375
    %5907 = vmatprep.subr.bf16.mxu0 %v4380
    %5908 = vmatpush1.bf16.msra.mxu0 %v4379
    %5909 = vmatprep.subr.bf16.mxu0 %v4384
    %5910 = vmatpush1.bf16.msra.mxu0 %v4383
    %5911 = vmatprep.subr.bf16.mxu0 %v4388
    %5912 = vmatpush1.bf16.msra.mxu0 %v4387
    %5913 = vmatprep.subr.bf16.mxu0 %v4392
    %5914 = vmatpush1.bf16.msra.mxu0 %v4391
    %5915 = vmatprep.subr.bf16.mxu0 %v4396
    %5916 = vmatpush1.bf16.msra.mxu0 %v4395
    %5917 = vmatprep.subr.bf16.mxu0 %v4400
    %5918 = vmatpush1.bf16.msra.mxu0 %v4399
    %5919 = vmatprep.subr.bf16.mxu0 %v4404
    %5920 = vmatpush1.bf16.msra.mxu0 %v4403
    %5921 = vmatprep.subr.bf16.mxu0 %v4408
    %5922 = vmatpush1.bf16.msra.mxu0 %v4407
    %5923 = vmatprep.subr.bf16.mxu0 %v4412
    %5924 = vmatpush1.bf16.msra.mxu0 %v4411
    %5925 = vmatprep.subr.bf16.mxu0 %v4416
    %5926 = vmatpush1.bf16.msra.mxu0 %v4415
    %5927 = vmatprep.subr.bf16.mxu0 %v4420
    %5928 = vmatpush1.bf16.msra.mxu0 %v4419
    %5929 = vmatprep.subr.bf16.mxu0 %v4424
    %5930 = vmatpush1.bf16.msra.mxu0 %v4423
    %5931 = vmatprep.mubr.bf16.mxu0 %v1676
    %5932 = vmatmul.mubr.bf16.gmra.mrb[0].mxu0 %v1675
    %v5933 = vpop.f32.mrb[0].mxu0
    %v5934 = vadd.f32 %v1082, %v5933
    %v5935 = vpop.f32.mrb[0].mxu0
    %v5936 = vadd.f32 %v1086, %v5935
    %v5937 = vpop.f32.mrb[0].mxu0
    %v5938 = vadd.f32 %v1082, %v5937
    %v5939 = vpop.f32.mrb[0].mxu0
    %v5940 = vadd.f32 %v1086, %v5939
    %5941 = vmatprep.mubr.bf16.mxu0 %v1700
    %5942 = vmatmul.mubr.bf16.gmra.mrb[0].mxu0 %v1699
    %v5943 = vpop.f32.mrb[0].mxu0
    %v5944 = vadd.f32 %v1082, %v5943
    %v5945 = vpop.f32.mrb[0].mxu0
    %v5946 = vadd.f32 %v1086, %v5945
    %v5947 = vpop.f32.mrb[0].mxu0
    %v5948 = vadd.f32 %v1082, %v5947
    %v5949 = vpop.f32.mrb[0].mxu0
    %v5950 = vadd.f32 %v1086, %v5949
    %5951 = vmatprep.mubr.bf16.mxu0 %v1724
    %5952 = vmatmul.mubr.bf16.gmra.mrb[0].mxu0 %v1723
    %v5953 = vpop.f32.mrb[0].mxu0
    %v5954 = vadd.f32 %v1082, %v5953
    %v5955 = vpop.f32.mrb[0].mxu0
    %v5956 = vadd.f32 %v1086, %v5955
    %v5957 = vpop.f32.mrb[0].mxu0
    %v5958 = vadd.f32 %v1082, %v5957
    %v5959 = vpop.f32.mrb[0].mxu0
    %v5960 = vadd.f32 %v1086, %v5959
    %5961 = vmatprep.mubr.bf16.mxu0 %v1748
    %5962 = vmatmul.mubr.bf16.gmra.mrb[0].mxu0 %v1747
    %v5963 = vpop.f32.mrb[0].mxu0
    %v5964 = vadd.f32 %v1082, %v5963
    %v5965 = vpop.f32.mrb[0].mxu0
    %v5966 = vadd.f32 %v1086, %v5965
    %v5967 = vpop.f32.mrb[0].mxu0
    %v5968 = vadd.f32 %v1082, %v5967
    %v5969 = vpop.f32.mrb[0].mxu0
    %v5970 = vadd.f32 %v1086, %v5969
    %5971 = vmatprep.mubr.bf16.mxu0 %v1772
    %5972 = vmatmul.mubr.bf16.gmra.mrb[0].mxu0 %v1771
    %v5973 = vpop.f32.mrb[0].mxu0
    %v5974 = vadd.f32 %v1082, %v5973
    %v5975 = vpop.f32.mrb[0].mxu0
    %v5976 = vadd.f32 %v1086, %v5975
    %v5977 = vpop.f32.mrb[0].mxu0
    %v5978 = vadd.f32 %v1082, %v5977
    %v5979 = vpop.f32.mrb[0].mxu0
    %v5980 = vadd.f32 %v1086, %v5979
    %5981 = vmatprep.mubr.bf16.mxu0 %v1796
    %5982 = vmatmul.mubr.bf16.gmra.mrb[0].mxu0 %v1795
    %v5983 = vpop.f32.mrb[0].mxu0
    %v5984 = vadd.f32 %v1082, %v5983
    %v5985 = vpop.f32.mrb[0].mxu0
    %v5986 = vadd.f32 %v1086, %v5985
    %v5987 = vpop.f32.mrb[0].mxu0
    %v5988 = vadd.f32 %v1082, %v5987
    %v5989 = vpop.f32.mrb[0].mxu0
    %v5990 = vadd.f32 %v1086, %v5989
    %5991 = vmatprep.mubr.bf16.mxu0 %v1820
    %5992 = vmatmul.mubr.bf16.gmra.mrb[0].mxu0 %v1819
    %v5993 = vpop.f32.mrb[0].mxu0
    %v5994 = vadd.f32 %v1082, %v5993
    %v5995 = vpop.f32.mrb[0].mxu0
    %v5996 = vadd.f32 %v1086, %v5995
    %v5997 = vpop.f32.mrb[0].mxu0
    %v5998 = vadd.f32 %v1082, %v5997
    %v5999 = vpop.f32.mrb[0].mxu0
    %v6000 = vadd.f32 %v1086, %v5999
    %6001 = vmatprep.mubr.bf16.mxu0 %v1844
    %6002 = vmatmul.mubr.bf16.gmra.mrb[0].mxu0 %v1843
    %v6003 = vpop.f32.mrb[0].mxu0
    %v6004 = vadd.f32 %v1082, %v6003
    %v6005 = vpop.f32.mrb[0].mxu0
    %v6006 = vadd.f32 %v1086, %v6005
    %v6007 = vpop.f32.mrb[0].mxu0
    %v6008 = vadd.f32 %v1082, %v6007
    %v6009 = vpop.f32.mrb[0].mxu0
    %v6010 = vadd.f32 %v1086, %v6009
    %6011 = vdwg.mxu0
    %6012 = vmatprep.subr.bf16.mxu0 %v4428
    %6013 = vmatpush1.bf16.msra.mxu0 %v4427
    %6014 = vmatprep.subr.bf16.mxu0 %v4432
    %6015 = vmatpush1.bf16.msra.mxu0 %v4431
    %6016 = vmatprep.subr.bf16.mxu0 %v4436
    %6017 = vmatpush1.bf16.msra.mxu0 %v4435
    %6018 = vmatprep.subr.bf16.mxu0 %v4440
    %6019 = vmatpush1.bf16.msra.mxu0 %v4439
    %6020 = vmatprep.subr.bf16.mxu0 %v4444
    %6021 = vmatpush1.bf16.msra.mxu0 %v4443
    %6022 = vmatprep.subr.bf16.mxu0 %v4448
    %6023 = vmatpush1.bf16.msra.mxu0 %v4447
    %6024 = vmatprep.subr.bf16.mxu0 %v4452
    %6025 = vmatpush1.bf16.msra.mxu0 %v4451
    %6026 = vmatprep.subr.bf16.mxu0 %v4456
    %6027 = vmatpush1.bf16.msra.mxu0 %v4455
    %6028 = vmatprep.subr.bf16.mxu0 %v4460
    %6029 = vmatpush1.bf16.msra.mxu0 %v4459
    %6030 = vmatprep.subr.bf16.mxu0 %v4464
    %6031 = vmatpush1.bf16.msra.mxu0 %v4463
    %6032 = vmatprep.subr.bf16.mxu0 %v4468
    %6033 = vmatpush1.bf16.msra.mxu0 %v4467
    %6034 = vmatprep.subr.bf16.mxu0 %v4472
    %6035 = vmatpush1.bf16.msra.mxu0 %v4471
    %6036 = vmatprep.subr.bf16.mxu0 %v4476
    %6037 = vmatpush1.bf16.msra.mxu0 %v4475
    %6038 = vmatprep.subr.bf16.mxu0 %v4480
    %6039 = vmatpush1.bf16.msra.mxu0 %v4479
    %6040 = vmatprep.subr.bf16.mxu0 %v4484
    %6041 = vmatpush1.bf16.msra.mxu0 %v4483
    %6042 = vmatprep.subr.bf16.mxu0 %v4488
    %6043 = vmatpush1.bf16.msra.mxu0 %v4487
    %6044 = vmatprep.mubr.bf16.mxu0 %v1678
    %6045 = vmatmul.mubr.bf16.gmra.mrb[0].mxu0 %v1677
    %v6046 = vpop.f32.mrb[0].mxu0
    %v6047 = vadd.f32 %v5934, %v6046
    %v6048 = vpop.f32.mrb[0].mxu0
    %v6049 = vadd.f32 %v5936, %v6048
    %v6050 = vpop.f32.mrb[0].mxu0
    %v6051 = vadd.f32 %v5938, %v6050
    %v6052 = vpop.f32.mrb[0].mxu0
    %v6053 = vadd.f32 %v5940, %v6052
    %6054 = vmatprep.mubr.bf16.mxu0 %v1702
    %6055 = vmatmul.mubr.bf16.gmra.mrb[0].mxu0 %v1701
    %v6056 = vpop.f32.mrb[0].mxu0
    %v6057 = vadd.f32 %v5944, %v6056
    %v6058 = vpop.f32.mrb[0].mxu0
    %v6059 = vadd.f32 %v5946, %v6058
    %v6060 = vpop.f32.mrb[0].mxu0
    %v6061 = vadd.f32 %v5948, %v6060
    %v6062 = vpop.f32.mrb[0].mxu0
    %v6063 = vadd.f32 %v5950, %v6062
    %6064 = vmatprep.mubr.bf16.mxu0 %v1726
    %6065 = vmatmul.mubr.bf16.gmra.mrb[0].mxu0 %v1725
    %v6066 = vpop.f32.mrb[0].mxu0
    %v6067 = vadd.f32 %v5954, %v6066
    %v6068 = vpop.f32.mrb[0].mxu0
    %v6069 = vadd.f32 %v5956, %v6068
    %v6070 = vpop.f32.mrb[0].mxu0
    %v6071 = vadd.f32 %v5958, %v6070
    %v6072 = vpop.f32.mrb[0].mxu0
    %v6073 = vadd.f32 %v5960, %v6072
    %6074 = vmatprep.mubr.bf16.mxu0 %v1750
    %6075 = vmatmul.mubr.bf16.gmra.mrb[0].mxu0 %v1749
    %v6076 = vpop.f32.mrb[0].mxu0
    %v6077 = vadd.f32 %v5964, %v6076
    %v6078 = vpop.f32.mrb[0].mxu0
    %v6079 = vadd.f32 %v5966, %v6078
    %v6080 = vpop.f32.mrb[0].mxu0
    %v6081 = vadd.f32 %v5968, %v6080
    %v6082 = vpop.f32.mrb[0].mxu0
    %v6083 = vadd.f32 %v5970, %v6082
    %6084 = vmatprep.mubr.bf16.mxu0 %v1774
    %6085 = vmatmul.mubr.bf16.gmra.mrb[0].mxu0 %v1773
    %v6086 = vpop.f32.mrb[0].mxu0
    %v6087 = vadd.f32 %v5974, %v6086
    %v6088 = vpop.f32.mrb[0].mxu0
    %v6089 = vadd.f32 %v5976, %v6088
    %v6090 = vpop.f32.mrb[0].mxu0
    %v6091 = vadd.f32 %v5978, %v6090
    %v6092 = vpop.f32.mrb[0].mxu0
    %v6093 = vadd.f32 %v5980, %v6092
    %6094 = vmatprep.mubr.bf16.mxu0 %v1798
    %6095 = vmatmul.mubr.bf16.gmra.mrb[0].mxu0 %v1797
    %v6096 = vpop.f32.mrb[0].mxu0
    %v6097 = vadd.f32 %v5984, %v6096
    %v6098 = vpop.f32.mrb[0].mxu0
    %v6099 = vadd.f32 %v5986, %v6098
    %v6100 = vpop.f32.mrb[0].mxu0
    %v6101 = vadd.f32 %v5988, %v6100
    %v6102 = vpop.f32.mrb[0].mxu0
    %v6103 = vadd.f32 %v5990, %v6102
    %6104 = vmatprep.mubr.bf16.mxu0 %v1822
    %6105 = vmatmul.mubr.bf16.gmra.mrb[0].mxu0 %v1821
    %v6106 = vpop.f32.mrb[0].mxu0
    %v6107 = vadd.f32 %v5994, %v6106
    %v6108 = vpop.f32.mrb[0].mxu0
    %v6109 = vadd.f32 %v5996, %v6108
    %v6110 = vpop.f32.mrb[0].mxu0
    %v6111 = vadd.f32 %v5998, %v6110
    %v6112 = vpop.f32.mrb[0].mxu0
    %v6113 = vadd.f32 %v6000, %v6112
    %6114 = vmatprep.mubr.bf16.mxu0 %v1846
    %6115 = vmatmul.mubr.bf16.gmra.mrb[0].mxu0 %v1845
    %v6116 = vpop.f32.mrb[0].mxu0
    %v6117 = vadd.f32 %v6004, %v6116
    %v6118 = vpop.f32.mrb[0].mxu0
    %v6119 = vadd.f32 %v6006, %v6118
    %v6120 = vpop.f32.mrb[0].mxu0
    %v6121 = vadd.f32 %v6008, %v6120
    %v6122 = vpop.f32.mrb[0].mxu0
    %v6123 = vadd.f32 %v6010, %v6122
    %6124 = vdwg.mxu0
    %6125 = vmatprep.subr.bf16.mxu0 %v4492
    %6126 = vmatpush1.bf16.msra.mxu0 %v4491
    %6127 = vmatprep.subr.bf16.mxu0 %v4496
    %6128 = vmatpush1.bf16.msra.mxu0 %v4495
    %6129 = vmatprep.subr.bf16.mxu0 %v4500
    %6130 = vmatpush1.bf16.msra.mxu0 %v4499
    %6131 = vmatprep.subr.bf16.mxu0 %v4504
    %6132 = vmatpush1.bf16.msra.mxu0 %v4503
    %6133 = vmatprep.subr.bf16.mxu0 %v4508
    %6134 = vmatpush1.bf16.msra.mxu0 %v4507
    %6135 = vmatprep.subr.bf16.mxu0 %v4512
    %6136 = vmatpush1.bf16.msra.mxu0 %v4511
    %6137 = vmatprep.subr.bf16.mxu0 %v4516
    %6138 = vmatpush1.bf16.msra.mxu0 %v4515
    %6139 = vmatprep.subr.bf16.mxu0 %v4520
    %6140 = vmatpush1.bf16.msra.mxu0 %v4519
    %6141 = vmatprep.subr.bf16.mxu0 %v4524
    %6142 = vmatpush1.bf16.msra.mxu0 %v4523
    %6143 = vmatprep.subr.bf16.mxu0 %v4528
    %6144 = vmatpush1.bf16.msra.mxu0 %v4527
    %6145 = vmatprep.subr.bf16.mxu0 %v4532
    %6146 = vmatpush1.bf16.msra.mxu0 %v4531
    %6147 = vmatprep.subr.bf16.mxu0 %v4536
    %6148 = vmatpush1.bf16.msra.mxu0 %v4535
    %6149 = vmatprep.subr.bf16.mxu0 %v4540
    %6150 = vmatpush1.bf16.msra.mxu0 %v4539
    %6151 = vmatprep.subr.bf16.mxu0 %v4544
    %6152 = vmatpush1.bf16.msra.mxu0 %v4543
    %6153 = vmatprep.subr.bf16.mxu0 %v4548
    %6154 = vmatpush1.bf16.msra.mxu0 %v4547
    %6155 = vmatprep.subr.bf16.mxu0 %v4552
    %6156 = vmatpush1.bf16.msra.mxu0 %v4551
    %6157 = vmatprep.mubr.bf16.mxu0 %v1680
    %6158 = vmatmul.mubr.bf16.gmra.mrb[0].mxu0 %v1679
    %v6159 = vpop.f32.mrb[0].mxu0
    %v6160 = vadd.f32 %v6047, %v6159
    %v6161 = vpop.f32.mrb[0].mxu0
    %v6162 = vadd.f32 %v6049, %v6161
    %v6163 = vpop.f32.mrb[0].mxu0
    %v6164 = vadd.f32 %v6051, %v6163
    %v6165 = vpop.f32.mrb[0].mxu0
    %v6166 = vadd.f32 %v6053, %v6165
    %6167 = vmatprep.mubr.bf16.mxu0 %v1704
    %6168 = vmatmul.mubr.bf16.gmra.mrb[0].mxu0 %v1703
    %v6169 = vpop.f32.mrb[0].mxu0
    %v6170 = vadd.f32 %v6057, %v6169
    %v6171 = vpop.f32.mrb[0].mxu0
    %v6172 = vadd.f32 %v6059, %v6171
    %v6173 = vpop.f32.mrb[0].mxu0
    %v6174 = vadd.f32 %v6061, %v6173
    %v6175 = vpop.f32.mrb[0].mxu0
    %v6176 = vadd.f32 %v6063, %v6175
    %6177 = vmatprep.mubr.bf16.mxu0 %v1728
    %6178 = vmatmul.mubr.bf16.gmra.mrb[0].mxu0 %v1727
    %v6179 = vpop.f32.mrb[0].mxu0
    %v6180 = vadd.f32 %v6067, %v6179
    %v6181 = vpop.f32.mrb[0].mxu0
    %v6182 = vadd.f32 %v6069, %v6181
    %v6183 = vpop.f32.mrb[0].mxu0
    %v6184 = vadd.f32 %v6071, %v6183
    %v6185 = vpop.f32.mrb[0].mxu0
    %v6186 = vadd.f32 %v6073, %v6185
    %6187 = vmatprep.mubr.bf16.mxu0 %v1752
    %6188 = vmatmul.mubr.bf16.gmra.mrb[0].mxu0 %v1751
    %v6189 = vpop.f32.mrb[0].mxu0
    %v6190 = vadd.f32 %v6077, %v6189
    %v6191 = vpop.f32.mrb[0].mxu0
    %v6192 = vadd.f32 %v6079, %v6191
    %v6193 = vpop.f32.mrb[0].mxu0
    %v6194 = vadd.f32 %v6081, %v6193
    %v6195 = vpop.f32.mrb[0].mxu0
    %v6196 = vadd.f32 %v6083, %v6195
    %6197 = vmatprep.mubr.bf16.mxu0 %v1776
    %6198 = vmatmul.mubr.bf16.gmra.mrb[0].mxu0 %v1775
    %v6199 = vpop.f32.mrb[0].mxu0
    %v6200 = vadd.f32 %v6087, %v6199
    %v6201 = vpop.f32.mrb[0].mxu0
    %v6202 = vadd.f32 %v6089, %v6201
    %v6203 = vpop.f32.mrb[0].mxu0
    %v6204 = vadd.f32 %v6091, %v6203
    %v6205 = vpop.f32.mrb[0].mxu0
    %v6206 = vadd.f32 %v6093, %v6205
    %6207 = vmatprep.mubr.bf16.mxu0 %v1800
    %6208 = vmatmul.mubr.bf16.gmra.mrb[0].mxu0 %v1799
    %v6209 = vpop.f32.mrb[0].mxu0
    %v6210 = vadd.f32 %v6097, %v6209
    %v6211 = vpop.f32.mrb[0].mxu0
    %v6212 = vadd.f32 %v6099, %v6211
    %v6213 = vpop.f32.mrb[0].mxu0
    %v6214 = vadd.f32 %v6101, %v6213
    %v6215 = vpop.f32.mrb[0].mxu0
    %v6216 = vadd.f32 %v6103, %v6215
    %6217 = vmatprep.mubr.bf16.mxu0 %v1824
    %6218 = vmatmul.mubr.bf16.gmra.mrb[0].mxu0 %v1823
    %v6219 = vpop.f32.mrb[0].mxu0
    %v6220 = vadd.f32 %v6107, %v6219
    %v6221 = vpop.f32.mrb[0].mxu0
    %v6222 = vadd.f32 %v6109, %v6221
    %v6223 = vpop.f32.mrb[0].mxu0
    %v6224 = vadd.f32 %v6111, %v6223
    %v6225 = vpop.f32.mrb[0].mxu0
    %v6226 = vadd.f32 %v6113, %v6225
    %6227 = vmatprep.mubr.bf16.mxu0 %v1848
    %6228 = vmatmul.mubr.bf16.gmra.mrb[0].mxu0 %v1847
    %v6229 = vpop.f32.mrb[0].mxu0
    %v6230 = vadd.f32 %v6117, %v6229
    %v6231 = vpop.f32.mrb[0].mxu0
    %v6232 = vadd.f32 %v6119, %v6231
    %v6233 = vpop.f32.mrb[0].mxu0
    %v6234 = vadd.f32 %v6121, %v6233
    %v6235 = vpop.f32.mrb[0].mxu0
    %v6236 = vadd.f32 %v6123, %v6235
    %6237 = vdwg.mxu0
    %6238 = vmatprep.subr.bf16.mxu0 %v4556
    %6239 = vmatpush1.bf16.msra.mxu0 %v4555
    %6240 = vmatprep.subr.bf16.mxu0 %v4560
    %6241 = vmatpush1.bf16.msra.mxu0 %v4559
    %6242 = vmatprep.subr.bf16.mxu0 %v4564
    %6243 = vmatpush1.bf16.msra.mxu0 %v4563
    %6244 = vmatprep.subr.bf16.mxu0 %v4568
    %6245 = vmatpush1.bf16.msra.mxu0 %v4567
    %6246 = vmatprep.subr.bf16.mxu0 %v4572
    %6247 = vmatpush1.bf16.msra.mxu0 %v4571
    %6248 = vmatprep.subr.bf16.mxu0 %v4576
    %6249 = vmatpush1.bf16.msra.mxu0 %v4575
    %6250 = vmatprep.subr.bf16.mxu0 %v4580
    %6251 = vmatpush1.bf16.msra.mxu0 %v4579
    %6252 = vmatprep.subr.bf16.mxu0 %v4584
    %6253 = vmatpush1.bf16.msra.mxu0 %v4583
    %6254 = vmatprep.subr.bf16.mxu0 %v4588
    %6255 = vmatpush1.bf16.msra.mxu0 %v4587
    %6256 = vmatprep.subr.bf16.mxu0 %v4592
    %6257 = vmatpush1.bf16.msra.mxu0 %v4591
    %6258 = vmatprep.subr.bf16.mxu0 %v4596
    %6259 = vmatpush1.bf16.msra.mxu0 %v4595
    %6260 = vmatprep.subr.bf16.mxu0 %v4600
    %6261 = vmatpush1.bf16.msra.mxu0 %v4599
    %6262 = vmatprep.subr.bf16.mxu0 %v4604
    %6263 = vmatpush1.bf16.msra.mxu0 %v4603
    %6264 = vmatprep.subr.bf16.mxu0 %v4608
    %6265 = vmatpush1.bf16.msra.mxu0 %v4607
    %6266 = vmatprep.subr.bf16.mxu0 %v4612
    %6267 = vmatpush1.bf16.msra.mxu0 %v4611
    %6268 = vmatprep.subr.bf16.mxu0 %v4616
    %6269 = vmatpush1.bf16.msra.mxu0 %v4615
    %6270 = vmatprep.mubr.bf16.mxu0 %v1682
    %6271 = vmatmul.mubr.bf16.gmra.mrb[0].mxu0 %v1681
    %v6272 = vpop.f32.mrb[0].mxu0
    %v6273 = vadd.f32 %v6160, %v6272
    %v6274 = vpop.f32.mrb[0].mxu0
    %v6275 = vadd.f32 %v6162, %v6274
    %v6276 = vpop.f32.mrb[0].mxu0
    %v6277 = vadd.f32 %v6164, %v6276
    %v6278 = vpop.f32.mrb[0].mxu0
    %v6279 = vadd.f32 %v6166, %v6278
    %6280 = vmatprep.mubr.bf16.mxu0 %v1706
    %6281 = vmatmul.mubr.bf16.gmra.mrb[0].mxu0 %v1705
    %v6282 = vpop.f32.mrb[0].mxu0
    %v6283 = vadd.f32 %v6170, %v6282
    %v6284 = vpop.f32.mrb[0].mxu0
    %v6285 = vadd.f32 %v6172, %v6284
    %v6286 = vpop.f32.mrb[0].mxu0
    %v6287 = vadd.f32 %v6174, %v6286
    %v6288 = vpop.f32.mrb[0].mxu0
    %v6289 = vadd.f32 %v6176, %v6288
    %6290 = vmatprep.mubr.bf16.mxu0 %v1730
    %6291 = vmatmul.mubr.bf16.gmra.mrb[0].mxu0 %v1729
    %v6292 = vpop.f32.mrb[0].mxu0
    %v6293 = vadd.f32 %v6180, %v6292
    %v6294 = vpop.f32.mrb[0].mxu0
    %v6295 = vadd.f32 %v6182, %v6294
    %v6296 = vpop.f32.mrb[0].mxu0
    %v6297 = vadd.f32 %v6184, %v6296
    %v6298 = vpop.f32.mrb[0].mxu0
    %v6299 = vadd.f32 %v6186, %v6298
    %6300 = vmatprep.mubr.bf16.mxu0 %v1754
    %6301 = vmatmul.mubr.bf16.gmra.mrb[0].mxu0 %v1753
    %v6302 = vpop.f32.mrb[0].mxu0
    %v6303 = vadd.f32 %v6190, %v6302
    %v6304 = vpop.f32.mrb[0].mxu0
    %v6305 = vadd.f32 %v6192, %v6304
    %v6306 = vpop.f32.mrb[0].mxu0
    %v6307 = vadd.f32 %v6194, %v6306
    %v6308 = vpop.f32.mrb[0].mxu0
    %v6309 = vadd.f32 %v6196, %v6308
    %6310 = vmatprep.mubr.bf16.mxu0 %v1778
    %6311 = vmatmul.mubr.bf16.gmra.mrb[0].mxu0 %v1777
    %v6312 = vpop.f32.mrb[0].mxu0
    %v6313 = vadd.f32 %v6200, %v6312
    %v6314 = vpop.f32.mrb[0].mxu0
    %v6315 = vadd.f32 %v6202, %v6314
    %v6316 = vpop.f32.mrb[0].mxu0
    %v6317 = vadd.f32 %v6204, %v6316
    %v6318 = vpop.f32.mrb[0].mxu0
    %v6319 = vadd.f32 %v6206, %v6318
    %6320 = vmatprep.mubr.bf16.mxu0 %v1802
    %6321 = vmatmul.mubr.bf16.gmra.mrb[0].mxu0 %v1801
    %v6322 = vpop.f32.mrb[0].mxu0
    %v6323 = vadd.f32 %v6210, %v6322
    %v6324 = vpop.f32.mrb[0].mxu0
    %v6325 = vadd.f32 %v6212, %v6324
    %v6326 = vpop.f32.mrb[0].mxu0
    %v6327 = vadd.f32 %v6214, %v6326
    %v6328 = vpop.f32.mrb[0].mxu0
    %v6329 = vadd.f32 %v6216, %v6328
    %6330 = vmatprep.mubr.bf16.mxu0 %v1826
    %6331 = vmatmul.mubr.bf16.gmra.mrb[0].mxu0 %v1825
    %v6332 = vpop.f32.mrb[0].mxu0
    %v6333 = vadd.f32 %v6220, %v6332
    %v6334 = vpop.f32.mrb[0].mxu0
    %v6335 = vadd.f32 %v6222, %v6334
    %v6336 = vpop.f32.mrb[0].mxu0
    %v6337 = vadd.f32 %v6224, %v6336
    %v6338 = vpop.f32.mrb[0].mxu0
    %v6339 = vadd.f32 %v6226, %v6338
    %6340 = vmatprep.mubr.bf16.mxu0 %v1850
    %6341 = vmatmul.mubr.bf16.gmra.mrb[0].mxu0 %v1849
    %v6342 = vpop.f32.mrb[0].mxu0
    %v6343 = vadd.f32 %v6230, %v6342
    %v6344 = vpop.f32.mrb[0].mxu0
    %v6345 = vadd.f32 %v6232, %v6344
    %v6346 = vpop.f32.mrb[0].mxu0
    %v6347 = vadd.f32 %v6234, %v6346
    %v6348 = vpop.f32.mrb[0].mxu0
    %v6349 = vadd.f32 %v6236, %v6348
    %6350 = vdwg.mxu0
    %6351 = vmatprep.subr.bf16.mxu0 %v4620
    %6352 = vmatpush1.bf16.msra.mxu0 %v4619
    %6353 = vmatprep.subr.bf16.mxu0 %v4624
    %6354 = vmatpush1.bf16.msra.mxu0 %v4623
    %6355 = vmatprep.subr.bf16.mxu0 %v4628
    %6356 = vmatpush1.bf16.msra.mxu0 %v4627
    %6357 = vmatprep.subr.bf16.mxu0 %v4632
    %6358 = vmatpush1.bf16.msra.mxu0 %v4631
    %6359 = vmatprep.subr.bf16.mxu0 %v4636
    %6360 = vmatpush1.bf16.msra.mxu0 %v4635
    %6361 = vmatprep.subr.bf16.mxu0 %v4640
    %6362 = vmatpush1.bf16.msra.mxu0 %v4639
    %6363 = vmatprep.subr.bf16.mxu0 %v4644
    %6364 = vmatpush1.bf16.msra.mxu0 %v4643
    %6365 = vmatprep.subr.bf16.mxu0 %v4648
    %6366 = vmatpush1.bf16.msra.mxu0 %v4647
    %6367 = vmatprep.subr.bf16.mxu0 %v4652
    %6368 = vmatpush1.bf16.msra.mxu0 %v4651
    %6369 = vmatprep.subr.bf16.mxu0 %v4656
    %6370 = vmatpush1.bf16.msra.mxu0 %v4655
    %6371 = vmatprep.subr.bf16.mxu0 %v4660
    %6372 = vmatpush1.bf16.msra.mxu0 %v4659
    %6373 = vmatprep.subr.bf16.mxu0 %v4664
    %6374 = vmatpush1.bf16.msra.mxu0 %v4663
    %6375 = vmatprep.subr.bf16.mxu0 %v4668
    %6376 = vmatpush1.bf16.msra.mxu0 %v4667
    %6377 = vmatprep.subr.bf16.mxu0 %v4672
    %6378 = vmatpush1.bf16.msra.mxu0 %v4671
    %6379 = vmatprep.subr.bf16.mxu0 %v4676
    %6380 = vmatpush1.bf16.msra.mxu0 %v4675
    %6381 = vmatprep.subr.bf16.mxu0 %v4680
    %6382 = vmatpush1.bf16.msra.mxu0 %v4679
    %6383 = vmatprep.mubr.bf16.mxu0 %v1684
    %6384 = vmatmul.mubr.bf16.gmra.mrb[0].mxu0 %v1683
    %v6385 = vpop.f32.mrb[0].mxu0
    %v6386 = vadd.f32 %v6273, %v6385
    %v6387 = vpop.f32.mrb[0].mxu0
    %v6388 = vadd.f32 %v6275, %v6387
    %v6389 = vpop.f32.mrb[0].mxu0
    %v6390 = vadd.f32 %v6277, %v6389
    %v6391 = vpop.f32.mrb[0].mxu0
    %v6392 = vadd.f32 %v6279, %v6391
    %6393 = vmatprep.mubr.bf16.mxu0 %v1708
    %6394 = vmatmul.mubr.bf16.gmra.mrb[0].mxu0 %v1707
    %v6395 = vpop.f32.mrb[0].mxu0
    %v6396 = vadd.f32 %v6283, %v6395
    %v6397 = vpop.f32.mrb[0].mxu0
    %v6398 = vadd.f32 %v6285, %v6397
    %v6399 = vpop.f32.mrb[0].mxu0
    %v6400 = vadd.f32 %v6287, %v6399
    %v6401 = vpop.f32.mrb[0].mxu0
    %v6402 = vadd.f32 %v6289, %v6401
    %6403 = vmatprep.mubr.bf16.mxu0 %v1732
    %6404 = vmatmul.mubr.bf16.gmra.mrb[0].mxu0 %v1731
    %v6405 = vpop.f32.mrb[0].mxu0
    %v6406 = vadd.f32 %v6293, %v6405
    %v6407 = vpop.f32.mrb[0].mxu0
    %v6408 = vadd.f32 %v6295, %v6407
    %v6409 = vpop.f32.mrb[0].mxu0
    %v6410 = vadd.f32 %v6297, %v6409
    %v6411 = vpop.f32.mrb[0].mxu0
    %v6412 = vadd.f32 %v6299, %v6411
    %6413 = vmatprep.mubr.bf16.mxu0 %v1756
    %6414 = vmatmul.mubr.bf16.gmra.mrb[0].mxu0 %v1755
    %v6415 = vpop.f32.mrb[0].mxu0
    %v6416 = vadd.f32 %v6303, %v6415
    %v6417 = vpop.f32.mrb[0].mxu0
    %v6418 = vadd.f32 %v6305, %v6417
    %v6419 = vpop.f32.mrb[0].mxu0
    %v6420 = vadd.f32 %v6307, %v6419
    %v6421 = vpop.f32.mrb[0].mxu0
    %v6422 = vadd.f32 %v6309, %v6421
    %6423 = vmatprep.mubr.bf16.mxu0 %v1780
    %6424 = vmatmul.mubr.bf16.gmra.mrb[0].mxu0 %v1779
    %v6425 = vpop.f32.mrb[0].mxu0
    %v6426 = vadd.f32 %v6313, %v6425
    %v6427 = vpop.f32.mrb[0].mxu0
    %v6428 = vadd.f32 %v6315, %v6427
    %v6429 = vpop.f32.mrb[0].mxu0
    %v6430 = vadd.f32 %v6317, %v6429
    %v6431 = vpop.f32.mrb[0].mxu0
    %v6432 = vadd.f32 %v6319, %v6431
    %6433 = vmatprep.mubr.bf16.mxu0 %v1804
    %6434 = vmatmul.mubr.bf16.gmra.mrb[0].mxu0 %v1803
    %v6435 = vpop.f32.mrb[0].mxu0
    %v6436 = vadd.f32 %v6323, %v6435
    %v6437 = vpop.f32.mrb[0].mxu0
    %v6438 = vadd.f32 %v6325, %v6437
    %v6439 = vpop.f32.mrb[0].mxu0
    %v6440 = vadd.f32 %v6327, %v6439
    %v6441 = vpop.f32.mrb[0].mxu0
    %v6442 = vadd.f32 %v6329, %v6441
    %6443 = vmatprep.mubr.bf16.mxu0 %v1828
    %6444 = vmatmul.mubr.bf16.gmra.mrb[0].mxu0 %v1827
    %v6445 = vpop.f32.mrb[0].mxu0
    %v6446 = vadd.f32 %v6333, %v6445
    %v6447 = vpop.f32.mrb[0].mxu0
    %v6448 = vadd.f32 %v6335, %v6447
    %v6449 = vpop.f32.mrb[0].mxu0
    %v6450 = vadd.f32 %v6337, %v6449
    %v6451 = vpop.f32.mrb[0].mxu0
    %v6452 = vadd.f32 %v6339, %v6451
    %6453 = vmatprep.mubr.bf16.mxu0 %v1852
    %6454 = vmatmul.mubr.bf16.gmra.mrb[0].mxu0 %v1851
    %v6455 = vpop.f32.mrb[0].mxu0
    %v6456 = vadd.f32 %v6343, %v6455
    %v6457 = vpop.f32.mrb[0].mxu0
    %v6458 = vadd.f32 %v6345, %v6457
    %v6459 = vpop.f32.mrb[0].mxu0
    %v6460 = vadd.f32 %v6347, %v6459
    %v6461 = vpop.f32.mrb[0].mxu0
    %v6462 = vadd.f32 %v6349, %v6461
    %6463 = vdwg.mxu0
    %6464 = vmatprep.subr.bf16.mxu0 %v4684
    %6465 = vmatpush1.bf16.msra.mxu0 %v4683
    %6466 = vmatprep.subr.bf16.mxu0 %v4688
    %6467 = vmatpush1.bf16.msra.mxu0 %v4687
    %6468 = vmatprep.subr.bf16.mxu0 %v4692
    %6469 = vmatpush1.bf16.msra.mxu0 %v4691
    %6470 = vmatprep.subr.bf16.mxu0 %v4696
    %6471 = vmatpush1.bf16.msra.mxu0 %v4695
    %6472 = vmatprep.subr.bf16.mxu0 %v4700
    %6473 = vmatpush1.bf16.msra.mxu0 %v4699
    %6474 = vmatprep.subr.bf16.mxu0 %v4704
    %6475 = vmatpush1.bf16.msra.mxu0 %v4703
    %6476 = vmatprep.subr.bf16.mxu0 %v4708
    %6477 = vmatpush1.bf16.msra.mxu0 %v4707
    %6478 = vmatprep.subr.bf16.mxu0 %v4712
    %6479 = vmatpush1.bf16.msra.mxu0 %v4711
    %6480 = vmatprep.subr.bf16.mxu0 %v4716
    %6481 = vmatpush1.bf16.msra.mxu0 %v4715
    %6482 = vmatprep.subr.bf16.mxu0 %v4720
    %6483 = vmatpush1.bf16.msra.mxu0 %v4719
    %6484 = vmatprep.subr.bf16.mxu0 %v4724
    %6485 = vmatpush1.bf16.msra.mxu0 %v4723
    %6486 = vmatprep.subr.bf16.mxu0 %v4728
    %6487 = vmatpush1.bf16.msra.mxu0 %v4727
    %6488 = vmatprep.subr.bf16.mxu0 %v4732
    %6489 = vmatpush1.bf16.msra.mxu0 %v4731
    %6490 = vmatprep.subr.bf16.mxu0 %v4736
    %6491 = vmatpush1.bf16.msra.mxu0 %v4735
    %6492 = vmatprep.subr.bf16.mxu0 %v4740
    %6493 = vmatpush1.bf16.msra.mxu0 %v4739
    %6494 = vmatprep.subr.bf16.mxu0 %v4744
    %6495 = vmatpush1.bf16.msra.mxu0 %v4743
    %6496 = vmatprep.mubr.bf16.mxu0 %v1686
    %6497 = vmatmul.mubr.bf16.gmra.mrb[0].mxu0 %v1685
    %v6498 = vpop.f32.mrb[0].mxu0
    %v6499 = vadd.f32 %v6386, %v6498
    %v6500 = vpop.f32.mrb[0].mxu0
    %v6501 = vadd.f32 %v6388, %v6500
    %v6502 = vpop.f32.mrb[0].mxu0
    %v6503 = vadd.f32 %v6390, %v6502
    %v6504 = vpop.f32.mrb[0].mxu0
    %v6505 = vadd.f32 %v6392, %v6504
    %6506 = vmatprep.mubr.bf16.mxu0 %v1710
    %6507 = vmatmul.mubr.bf16.gmra.mrb[0].mxu0 %v1709
    %v6508 = vpop.f32.mrb[0].mxu0
    %v6509 = vadd.f32 %v6396, %v6508
    %v6510 = vpop.f32.mrb[0].mxu0
    %v6511 = vadd.f32 %v6398, %v6510
    %v6512 = vpop.f32.mrb[0].mxu0
    %v6513 = vadd.f32 %v6400, %v6512
    %v6514 = vpop.f32.mrb[0].mxu0
    %v6515 = vadd.f32 %v6402, %v6514
    %6516 = vmatprep.mubr.bf16.mxu0 %v1734
    %6517 = vmatmul.mubr.bf16.gmra.mrb[0].mxu0 %v1733
    %v6518 = vpop.f32.mrb[0].mxu0
    %v6519 = vadd.f32 %v6406, %v6518
    %v6520 = vpop.f32.mrb[0].mxu0
    %v6521 = vadd.f32 %v6408, %v6520
    %v6522 = vpop.f32.mrb[0].mxu0
    %v6523 = vadd.f32 %v6410, %v6522
    %v6524 = vpop.f32.mrb[0].mxu0
    %v6525 = vadd.f32 %v6412, %v6524
    %6526 = vmatprep.mubr.bf16.mxu0 %v1758
    %6527 = vmatmul.mubr.bf16.gmra.mrb[0].mxu0 %v1757
    %v6528 = vpop.f32.mrb[0].mxu0
    %v6529 = vadd.f32 %v6416, %v6528
    %v6530 = vpop.f32.mrb[0].mxu0
    %v6531 = vadd.f32 %v6418, %v6530
    %v6532 = vpop.f32.mrb[0].mxu0
    %v6533 = vadd.f32 %v6420, %v6532
    %v6534 = vpop.f32.mrb[0].mxu0
    %v6535 = vadd.f32 %v6422, %v6534
    %6536 = vmatprep.mubr.bf16.mxu0 %v1782
    %6537 = vmatmul.mubr.bf16.gmra.mrb[0].mxu0 %v1781
    %v6538 = vpop.f32.mrb[0].mxu0
    %v6539 = vadd.f32 %v6426, %v6538
    %v6540 = vpop.f32.mrb[0].mxu0
    %v6541 = vadd.f32 %v6428, %v6540
    %v6542 = vpop.f32.mrb[0].mxu0
    %v6543 = vadd.f32 %v6430, %v6542
    %v6544 = vpop.f32.mrb[0].mxu0
    %v6545 = vadd.f32 %v6432, %v6544
    %6546 = vmatprep.mubr.bf16.mxu0 %v1806
    %6547 = vmatmul.mubr.bf16.gmra.mrb[0].mxu0 %v1805
    %v6548 = vpop.f32.mrb[0].mxu0
    %v6549 = vadd.f32 %v6436, %v6548
    %v6550 = vpop.f32.mrb[0].mxu0
    %v6551 = vadd.f32 %v6438, %v6550
    %v6552 = vpop.f32.mrb[0].mxu0
    %v6553 = vadd.f32 %v6440, %v6552
    %v6554 = vpop.f32.mrb[0].mxu0
    %v6555 = vadd.f32 %v6442, %v6554
    %6556 = vmatprep.mubr.bf16.mxu0 %v1830
    %6557 = vmatmul.mubr.bf16.gmra.mrb[0].mxu0 %v1829
    %v6558 = vpop.f32.mrb[0].mxu0
    %v6559 = vadd.f32 %v6446, %v6558
    %v6560 = vpop.f32.mrb[0].mxu0
    %v6561 = vadd.f32 %v6448, %v6560
    %v6562 = vpop.f32.mrb[0].mxu0
    %v6563 = vadd.f32 %v6450, %v6562
    %v6564 = vpop.f32.mrb[0].mxu0
    %v6565 = vadd.f32 %v6452, %v6564
    %6566 = vmatprep.mubr.bf16.mxu0 %v1854
    %6567 = vmatmul.mubr.bf16.gmra.mrb[0].mxu0 %v1853
    %v6568 = vpop.f32.mrb[0].mxu0
    %v6569 = vadd.f32 %v6456, %v6568
    %v6570 = vpop.f32.mrb[0].mxu0
    %v6571 = vadd.f32 %v6458, %v6570
    %v6572 = vpop.f32.mrb[0].mxu0
    %v6573 = vadd.f32 %v6460, %v6572
    %v6574 = vpop.f32.mrb[0].mxu0
    %v6575 = vadd.f32 %v6462, %v6574
    %6576 = vdwg.mxu0
    %6577 = vmatprep.subr.bf16.mxu0 %v4748
    %6578 = vmatpush1.bf16.msra.mxu0 %v4747
    %6579 = vmatprep.subr.bf16.mxu0 %v4752
    %6580 = vmatpush1.bf16.msra.mxu0 %v4751
    %6581 = vmatprep.subr.bf16.mxu0 %v4756
    %6582 = vmatpush1.bf16.msra.mxu0 %v4755
    %6583 = vmatprep.subr.bf16.mxu0 %v4760
    %6584 = vmatpush1.bf16.msra.mxu0 %v4759
    %6585 = vmatprep.subr.bf16.mxu0 %v4764
    %6586 = vmatpush1.bf16.msra.mxu0 %v4763
    %6587 = vmatprep.subr.bf16.mxu0 %v4768
    %6588 = vmatpush1.bf16.msra.mxu0 %v4767
    %6589 = vmatprep.subr.bf16.mxu0 %v4772
    %6590 = vmatpush1.bf16.msra.mxu0 %v4771
    %6591 = vmatprep.subr.bf16.mxu0 %v4776
    %6592 = vmatpush1.bf16.msra.mxu0 %v4775
    %6593 = vmatprep.subr.bf16.mxu0 %v4780
    %6594 = vmatpush1.bf16.msra.mxu0 %v4779
    %6595 = vmatprep.subr.bf16.mxu0 %v4784
    %6596 = vmatpush1.bf16.msra.mxu0 %v4783
    %6597 = vmatprep.subr.bf16.mxu0 %v4788
    %6598 = vmatpush1.bf16.msra.mxu0 %v4787
    %6599 = vmatprep.subr.bf16.mxu0 %v4792
    %6600 = vmatpush1.bf16.msra.mxu0 %v4791
    %6601 = vmatprep.subr.bf16.mxu0 %v4796
    %6602 = vmatpush1.bf16.msra.mxu0 %v4795
    %6603 = vmatprep.subr.bf16.mxu0 %v4800
    %6604 = vmatpush1.bf16.msra.mxu0 %v4799
    %6605 = vmatprep.subr.bf16.mxu0 %v4804
    %6606 = vmatpush1.bf16.msra.mxu0 %v4803
    %6607 = vmatprep.subr.bf16.mxu0 %v4808
    %6608 = vmatpush1.bf16.msra.mxu0 %v4807
    %6609 = vmatprep.mubr.bf16.mxu0 %v1688
    %6610 = vmatmul.mubr.bf16.gmra.mrb[0].mxu0 %v1687
    %v6611 = vpop.f32.mrb[0].mxu0
    %v6612 = vadd.f32 %v6499, %v6611
    %v6613 = vpop.f32.mrb[0].mxu0
    %v6614 = vadd.f32 %v6501, %v6613
    %v6615 = vpop.f32.mrb[0].mxu0
    %v6616 = vadd.f32 %v6503, %v6615
    %v6617 = vpop.f32.mrb[0].mxu0
    %v6618 = vadd.f32 %v6505, %v6617
    %6619 = vmatprep.mubr.bf16.mxu0 %v1712
    %6620 = vmatmul.mubr.bf16.gmra.mrb[0].mxu0 %v1711
    %v6621 = vpop.f32.mrb[0].mxu0
    %v6622 = vadd.f32 %v6509, %v6621
    %v6623 = vpop.f32.mrb[0].mxu0
    %v6624 = vadd.f32 %v6511, %v6623
    %v6625 = vpop.f32.mrb[0].mxu0
    %v6626 = vadd.f32 %v6513, %v6625
    %v6627 = vpop.f32.mrb[0].mxu0
    %v6628 = vadd.f32 %v6515, %v6627
    %6629 = vmatprep.mubr.bf16.mxu0 %v1736
    %6630 = vmatmul.mubr.bf16.gmra.mrb[0].mxu0 %v1735
    %v6631 = vpop.f32.mrb[0].mxu0
    %v6632 = vadd.f32 %v6519, %v6631
    %v6633 = vpop.f32.mrb[0].mxu0
    %v6634 = vadd.f32 %v6521, %v6633
    %v6635 = vpop.f32.mrb[0].mxu0
    %v6636 = vadd.f32 %v6523, %v6635
    %v6637 = vpop.f32.mrb[0].mxu0
    %v6638 = vadd.f32 %v6525, %v6637
    %6639 = vmatprep.mubr.bf16.mxu0 %v1760
    %6640 = vmatmul.mubr.bf16.gmra.mrb[0].mxu0 %v1759
    %v6641 = vpop.f32.mrb[0].mxu0
    %v6642 = vadd.f32 %v6529, %v6641
    %v6643 = vpop.f32.mrb[0].mxu0
    %v6644 = vadd.f32 %v6531, %v6643
    %v6645 = vpop.f32.mrb[0].mxu0
    %v6646 = vadd.f32 %v6533, %v6645
    %v6647 = vpop.f32.mrb[0].mxu0
    %v6648 = vadd.f32 %v6535, %v6647
    %6649 = vmatprep.mubr.bf16.mxu0 %v1784
    %6650 = vmatmul.mubr.bf16.gmra.mrb[0].mxu0 %v1783
    %v6651 = vpop.f32.mrb[0].mxu0
    %v6652 = vadd.f32 %v6539, %v6651
    %v6653 = vpop.f32.mrb[0].mxu0
    %v6654 = vadd.f32 %v6541, %v6653
    %v6655 = vpop.f32.mrb[0].mxu0
    %v6656 = vadd.f32 %v6543, %v6655
    %v6657 = vpop.f32.mrb[0].mxu0
    %v6658 = vadd.f32 %v6545, %v6657
    %6659 = vmatprep.mubr.bf16.mxu0 %v1808
    %6660 = vmatmul.mubr.bf16.gmra.mrb[0].mxu0 %v1807
    %v6661 = vpop.f32.mrb[0].mxu0
    %v6662 = vadd.f32 %v6549, %v6661
    %v6663 = vpop.f32.mrb[0].mxu0
    %v6664 = vadd.f32 %v6551, %v6663
    %v6665 = vpop.f32.mrb[0].mxu0
    %v6666 = vadd.f32 %v6553, %v6665
    %v6667 = vpop.f32.mrb[0].mxu0
    %v6668 = vadd.f32 %v6555, %v6667
    %6669 = vmatprep.mubr.bf16.mxu0 %v1832
    %6670 = vmatmul.mubr.bf16.gmra.mrb[0].mxu0 %v1831
    %v6671 = vpop.f32.mrb[0].mxu0
    %v6672 = vadd.f32 %v6559, %v6671
    %v6673 = vpop.f32.mrb[0].mxu0
    %v6674 = vadd.f32 %v6561, %v6673
    %v6675 = vpop.f32.mrb[0].mxu0
    %v6676 = vadd.f32 %v6563, %v6675
    %v6677 = vpop.f32.mrb[0].mxu0
    %v6678 = vadd.f32 %v6565, %v6677
    %6679 = vmatprep.mubr.bf16.mxu0 %v1856
    %6680 = vmatmul.mubr.bf16.gmra.mrb[0].mxu0 %v1855
    %v6681 = vpop.f32.mrb[0].mxu0
    %v6682 = vadd.f32 %v6569, %v6681
    %v6683 = vpop.f32.mrb[0].mxu0
    %v6684 = vadd.f32 %v6571, %v6683
    %v6685 = vpop.f32.mrb[0].mxu0
    %v6686 = vadd.f32 %v6573, %v6685
    %v6687 = vpop.f32.mrb[0].mxu0
    %v6688 = vadd.f32 %v6575, %v6687
    %6689 = vdwg.mxu0
    %6690 = vmatprep.subr.bf16.mxu0 %v4812
    %6691 = vmatpush1.bf16.msra.mxu0 %v4811
    %6692 = vmatprep.subr.bf16.mxu0 %v4816
    %6693 = vmatpush1.bf16.msra.mxu0 %v4815
    %6694 = vmatprep.subr.bf16.mxu0 %v4820
    %6695 = vmatpush1.bf16.msra.mxu0 %v4819
    %6696 = vmatprep.subr.bf16.mxu0 %v4824
    %6697 = vmatpush1.bf16.msra.mxu0 %v4823
    %6698 = vmatprep.subr.bf16.mxu0 %v4828
    %6699 = vmatpush1.bf16.msra.mxu0 %v4827
    %6700 = vmatprep.subr.bf16.mxu0 %v4832
    %6701 = vmatpush1.bf16.msra.mxu0 %v4831
    %6702 = vmatprep.subr.bf16.mxu0 %v4836
    %6703 = vmatpush1.bf16.msra.mxu0 %v4835
    %6704 = vmatprep.subr.bf16.mxu0 %v4840
    %6705 = vmatpush1.bf16.msra.mxu0 %v4839
    %6706 = vmatprep.subr.bf16.mxu0 %v4844
    %6707 = vmatpush1.bf16.msra.mxu0 %v4843
    %6708 = vmatprep.subr.bf16.mxu0 %v4848
    %6709 = vmatpush1.bf16.msra.mxu0 %v4847
    %6710 = vmatprep.subr.bf16.mxu0 %v4852
    %6711 = vmatpush1.bf16.msra.mxu0 %v4851
    %6712 = vmatprep.subr.bf16.mxu0 %v4856
    %6713 = vmatpush1.bf16.msra.mxu0 %v4855
    %6714 = vmatprep.subr.bf16.mxu0 %v4860
    %6715 = vmatpush1.bf16.msra.mxu0 %v4859
    %6716 = vmatprep.subr.bf16.mxu0 %v4864
    %6717 = vmatpush1.bf16.msra.mxu0 %v4863
    %6718 = vmatprep.subr.bf16.mxu0 %v4868
    %6719 = vmatpush1.bf16.msra.mxu0 %v4867
    %6720 = vmatprep.subr.bf16.mxu0 %v4872
    %6721 = vmatpush1.bf16.msra.mxu0 %v4871
    %6722 = vmatprep.mubr.bf16.mxu0 %v1690
    %6723 = vmatmul.mubr.bf16.gmra.mrb[0].mxu0 %v1689
    %v6724 = vpop.f32.mrb[0].mxu0
    %v6725 = vadd.f32 %v6612, %v6724
    %v6726 = vpop.f32.mrb[0].mxu0
    %v6727 = vadd.f32 %v6614, %v6726
    %v6728 = vpop.f32.mrb[0].mxu0
    %v6729 = vadd.f32 %v6616, %v6728
    %v6730 = vpop.f32.mrb[0].mxu0
    %v6731 = vadd.f32 %v6618, %v6730
    %6732 = vmatprep.mubr.bf16.mxu0 %v1714
    %6733 = vmatmul.mubr.bf16.gmra.mrb[0].mxu0 %v1713
    %v6734 = vpop.f32.mrb[0].mxu0
    %v6735 = vadd.f32 %v6622, %v6734
    %v6736 = vpop.f32.mrb[0].mxu0
    %v6737 = vadd.f32 %v6624, %v6736
    %v6738 = vpop.f32.mrb[0].mxu0
    %v6739 = vadd.f32 %v6626, %v6738
    %v6740 = vpop.f32.mrb[0].mxu0
    %v6741 = vadd.f32 %v6628, %v6740
    %6742 = vmatprep.mubr.bf16.mxu0 %v1738
    %6743 = vmatmul.mubr.bf16.gmra.mrb[0].mxu0 %v1737
    %v6744 = vpop.f32.mrb[0].mxu0
    %v6745 = vadd.f32 %v6632, %v6744
    %v6746 = vpop.f32.mrb[0].mxu0
    %v6747 = vadd.f32 %v6634, %v6746
    %v6748 = vpop.f32.mrb[0].mxu0
    %v6749 = vadd.f32 %v6636, %v6748
    %v6750 = vpop.f32.mrb[0].mxu0
    %v6751 = vadd.f32 %v6638, %v6750
    %6752 = vmatprep.mubr.bf16.mxu0 %v1762
    %6753 = vmatmul.mubr.bf16.gmra.mrb[0].mxu0 %v1761
    %v6754 = vpop.f32.mrb[0].mxu0
    %v6755 = vadd.f32 %v6642, %v6754
    %v6756 = vpop.f32.mrb[0].mxu0
    %v6757 = vadd.f32 %v6644, %v6756
    %v6758 = vpop.f32.mrb[0].mxu0
    %v6759 = vadd.f32 %v6646, %v6758
    %v6760 = vpop.f32.mrb[0].mxu0
    %v6761 = vadd.f32 %v6648, %v6760
    %6762 = vmatprep.mubr.bf16.mxu0 %v1786
    %6763 = vmatmul.mubr.bf16.gmra.mrb[0].mxu0 %v1785
    %v6764 = vpop.f32.mrb[0].mxu0
    %v6765 = vadd.f32 %v6652, %v6764
    %v6766 = vpop.f32.mrb[0].mxu0
    %v6767 = vadd.f32 %v6654, %v6766
    %v6768 = vpop.f32.mrb[0].mxu0
    %v6769 = vadd.f32 %v6656, %v6768
    %v6770 = vpop.f32.mrb[0].mxu0
    %v6771 = vadd.f32 %v6658, %v6770
    %6772 = vmatprep.mubr.bf16.mxu0 %v1810
    %6773 = vmatmul.mubr.bf16.gmra.mrb[0].mxu0 %v1809
    %v6774 = vpop.f32.mrb[0].mxu0
    %v6775 = vadd.f32 %v6662, %v6774
    %v6776 = vpop.f32.mrb[0].mxu0
    %v6777 = vadd.f32 %v6664, %v6776
    %v6778 = vpop.f32.mrb[0].mxu0
    %v6779 = vadd.f32 %v6666, %v6778
    %v6780 = vpop.f32.mrb[0].mxu0
    %v6781 = vadd.f32 %v6668, %v6780
    %6782 = vmatprep.mubr.bf16.mxu0 %v1834
    %6783 = vmatmul.mubr.bf16.gmra.mrb[0].mxu0 %v1833
    %v6784 = vpop.f32.mrb[0].mxu0
    %v6785 = vadd.f32 %v6672, %v6784
    %v6786 = vpop.f32.mrb[0].mxu0
    %v6787 = vadd.f32 %v6674, %v6786
    %v6788 = vpop.f32.mrb[0].mxu0
    %v6789 = vadd.f32 %v6676, %v6788
    %v6790 = vpop.f32.mrb[0].mxu0
    %v6791 = vadd.f32 %v6678, %v6790
    %6792 = vmatprep.mubr.bf16.mxu0 %v1858
    %6793 = vmatmul.mubr.bf16.gmra.mrb[0].mxu0 %v1857
    %v6794 = vpop.f32.mrb[0].mxu0
    %v6795 = vadd.f32 %v6682, %v6794
    %v6796 = vpop.f32.mrb[0].mxu0
    %v6797 = vadd.f32 %v6684, %v6796
    %v6798 = vpop.f32.mrb[0].mxu0
    %v6799 = vadd.f32 %v6686, %v6798
    %v6800 = vpop.f32.mrb[0].mxu0
    %v6801 = vadd.f32 %v6688, %v6800
    %6802 = vdwg.mxu0
    %6803 = vmatprep.subr.bf16.mxu0 %v4876
    %6804 = vmatpush1.bf16.msra.mxu0 %v4875
    %6805 = vmatprep.subr.bf16.mxu0 %v4880
    %6806 = vmatpush1.bf16.msra.mxu0 %v4879
    %6807 = vmatprep.subr.bf16.mxu0 %v4884
    %6808 = vmatpush1.bf16.msra.mxu0 %v4883
    %6809 = vmatprep.subr.bf16.mxu0 %v4888
    %6810 = vmatpush1.bf16.msra.mxu0 %v4887
    %6811 = vmatprep.subr.bf16.mxu0 %v4892
    %6812 = vmatpush1.bf16.msra.mxu0 %v4891
    %6813 = vmatprep.subr.bf16.mxu0 %v4896
    %6814 = vmatpush1.bf16.msra.mxu0 %v4895
    %6815 = vmatprep.subr.bf16.mxu0 %v4900
    %6816 = vmatpush1.bf16.msra.mxu0 %v4899
    %6817 = vmatprep.subr.bf16.mxu0 %v4904
    %6818 = vmatpush1.bf16.msra.mxu0 %v4903
    %6819 = vmatprep.subr.bf16.mxu0 %v4908
    %6820 = vmatpush1.bf16.msra.mxu0 %v4907
    %6821 = vmatprep.subr.bf16.mxu0 %v4912
    %6822 = vmatpush1.bf16.msra.mxu0 %v4911
    %6823 = vmatprep.subr.bf16.mxu0 %v4916
    %6824 = vmatpush1.bf16.msra.mxu0 %v4915
    %6825 = vmatprep.subr.bf16.mxu0 %v4920
    %6826 = vmatpush1.bf16.msra.mxu0 %v4919
    %6827 = vmatprep.subr.bf16.mxu0 %v4924
    %6828 = vmatpush1.bf16.msra.mxu0 %v4923
    %6829 = vmatprep.subr.bf16.mxu0 %v4928
    %6830 = vmatpush1.bf16.msra.mxu0 %v4927
    %6831 = vmatprep.subr.bf16.mxu0 %v4932
    %6832 = vmatpush1.bf16.msra.mxu0 %v4931
    %6833 = vmatprep.subr.bf16.mxu0 %v4936
    %6834 = vmatpush1.bf16.msra.mxu0 %v4935
    %6835 = vmatprep.mubr.bf16.mxu0 %v1692
    %6836 = vmatmul.mubr.bf16.gmra.mrb[0].mxu0 %v1691
    %v6837 = vpop.f32.mrb[0].mxu0
    %v6838 = vadd.f32 %v6725, %v6837
    %v6839 = vpop.f32.mrb[0].mxu0
    %v6840 = vadd.f32 %v6727, %v6839
    %v6841 = vpop.f32.mrb[0].mxu0
    %v6842 = vadd.f32 %v6729, %v6841
    %v6843 = vpop.f32.mrb[0].mxu0
    %v6844 = vadd.f32 %v6731, %v6843
    %6845 = vmatprep.mubr.bf16.mxu0 %v1716
    %6846 = vmatmul.mubr.bf16.gmra.mrb[0].mxu0 %v1715
    %v6847 = vpop.f32.mrb[0].mxu0
    %v6848 = vadd.f32 %v6735, %v6847
    %v6849 = vpop.f32.mrb[0].mxu0
    %v6850 = vadd.f32 %v6737, %v6849
    %v6851 = vpop.f32.mrb[0].mxu0
    %v6852 = vadd.f32 %v6739, %v6851
    %v6853 = vpop.f32.mrb[0].mxu0
    %v6854 = vadd.f32 %v6741, %v6853
    %6855 = vmatprep.mubr.bf16.mxu0 %v1740
    %6856 = vmatmul.mubr.bf16.gmra.mrb[0].mxu0 %v1739
    %v6857 = vpop.f32.mrb[0].mxu0
    %v6858 = vadd.f32 %v6745, %v6857
    %v6859 = vpop.f32.mrb[0].mxu0
    %v6860 = vadd.f32 %v6747, %v6859
    %v6861 = vpop.f32.mrb[0].mxu0
    %v6862 = vadd.f32 %v6749, %v6861
    %v6863 = vpop.f32.mrb[0].mxu0
    %v6864 = vadd.f32 %v6751, %v6863
    %6865 = vmatprep.mubr.bf16.mxu0 %v1764
    %6866 = vmatmul.mubr.bf16.gmra.mrb[0].mxu0 %v1763
    %v6867 = vpop.f32.mrb[0].mxu0
    %v6868 = vadd.f32 %v6755, %v6867
    %v6869 = vpop.f32.mrb[0].mxu0
    %v6870 = vadd.f32 %v6757, %v6869
    %v6871 = vpop.f32.mrb[0].mxu0
    %v6872 = vadd.f32 %v6759, %v6871
    %v6873 = vpop.f32.mrb[0].mxu0
    %v6874 = vadd.f32 %v6761, %v6873
    %6875 = vmatprep.mubr.bf16.mxu0 %v1788
    %6876 = vmatmul.mubr.bf16.gmra.mrb[0].mxu0 %v1787
    %v6877 = vpop.f32.mrb[0].mxu0
    %v6878 = vadd.f32 %v6765, %v6877
    %v6879 = vpop.f32.mrb[0].mxu0
    %v6880 = vadd.f32 %v6767, %v6879
    %v6881 = vpop.f32.mrb[0].mxu0
    %v6882 = vadd.f32 %v6769, %v6881
    %v6883 = vpop.f32.mrb[0].mxu0
    %v6884 = vadd.f32 %v6771, %v6883
    %6885 = vmatprep.mubr.bf16.mxu0 %v1812
    %6886 = vmatmul.mubr.bf16.gmra.mrb[0].mxu0 %v1811
    %v6887 = vpop.f32.mrb[0].mxu0
    %v6888 = vadd.f32 %v6775, %v6887
    %v6889 = vpop.f32.mrb[0].mxu0
    %v6890 = vadd.f32 %v6777, %v6889
    %v6891 = vpop.f32.mrb[0].mxu0
    %v6892 = vadd.f32 %v6779, %v6891
    %v6893 = vpop.f32.mrb[0].mxu0
    %v6894 = vadd.f32 %v6781, %v6893
    %6895 = vmatprep.mubr.bf16.mxu0 %v1836
    %6896 = vmatmul.mubr.bf16.gmra.mrb[0].mxu0 %v1835
    %v6897 = vpop.f32.mrb[0].mxu0
    %v6898 = vadd.f32 %v6785, %v6897
    %v6899 = vpop.f32.mrb[0].mxu0
    %v6900 = vadd.f32 %v6787, %v6899
    %v6901 = vpop.f32.mrb[0].mxu0
    %v6902 = vadd.f32 %v6789, %v6901
    %v6903 = vpop.f32.mrb[0].mxu0
    %v6904 = vadd.f32 %v6791, %v6903
    %6905 = vmatprep.mubr.bf16.mxu0 %v1860
    %6906 = vmatmul.mubr.bf16.gmra.mrb[0].mxu0 %v1859
    %v6907 = vpop.f32.mrb[0].mxu0
    %v6908 = vadd.f32 %v6795, %v6907
    %v6909 = vpop.f32.mrb[0].mxu0
    %v6910 = vadd.f32 %v6797, %v6909
    %v6911 = vpop.f32.mrb[0].mxu0
    %v6912 = vadd.f32 %v6799, %v6911
    %v6913 = vpop.f32.mrb[0].mxu0
    %v6914 = vadd.f32 %v6801, %v6913
    %6915 = vdwg.mxu0
    %6916 = vmatprep.subr.bf16.mxu0 %v4940
    %6917 = vmatpush1.bf16.msra.mxu0 %v4939
    %6918 = vmatprep.subr.bf16.mxu0 %v4944
    %6919 = vmatpush1.bf16.msra.mxu0 %v4943
    %6920 = vmatprep.subr.bf16.mxu0 %v4948
    %6921 = vmatpush1.bf16.msra.mxu0 %v4947
    %6922 = vmatprep.subr.bf16.mxu0 %v4952
    %6923 = vmatpush1.bf16.msra.mxu0 %v4951
    %6924 = vmatprep.subr.bf16.mxu0 %v4956
    %6925 = vmatpush1.bf16.msra.mxu0 %v4955
    %6926 = vmatprep.subr.bf16.mxu0 %v4960
    %6927 = vmatpush1.bf16.msra.mxu0 %v4959
    %6928 = vmatprep.subr.bf16.mxu0 %v4964
    %6929 = vmatpush1.bf16.msra.mxu0 %v4963
    %6930 = vmatprep.subr.bf16.mxu0 %v4968
    %6931 = vmatpush1.bf16.msra.mxu0 %v4967
    %6932 = vmatprep.subr.bf16.mxu0 %v4972
    %6933 = vmatpush1.bf16.msra.mxu0 %v4971
    %6934 = vmatprep.subr.bf16.mxu0 %v4976
    %6935 = vmatpush1.bf16.msra.mxu0 %v4975
    %6936 = vmatprep.subr.bf16.mxu0 %v4980
    %6937 = vmatpush1.bf16.msra.mxu0 %v4979
    %6938 = vmatprep.subr.bf16.mxu0 %v4984
    %6939 = vmatpush1.bf16.msra.mxu0 %v4983
    %6940 = vmatprep.subr.bf16.mxu0 %v4988
    %6941 = vmatpush1.bf16.msra.mxu0 %v4987
    %6942 = vmatprep.subr.bf16.mxu0 %v4992
    %6943 = vmatpush1.bf16.msra.mxu0 %v4991
    %6944 = vmatprep.subr.bf16.mxu0 %v4996
    %6945 = vmatpush1.bf16.msra.mxu0 %v4995
    %6946 = vmatprep.subr.bf16.mxu0 %v5000
    %6947 = vmatpush1.bf16.msra.mxu0 %v4999
    %6948 = vmatprep.mubr.bf16.mxu0 %v1694
    %6949 = vmatmul.mubr.bf16.gmra.mrb[0].mxu0 %v1693
    %v6950 = vpop.f32.mrb[0].mxu0
    %v6951 = vadd.f32 %v6838, %v6950
    %v6952 = vpop.f32.mrb[0].mxu0
    %v6953 = vadd.f32 %v6840, %v6952
    %v6954 = vpop.f32.mrb[0].mxu0
    %v6955 = vadd.f32 %v6842, %v6954
    %v6956 = vpop.f32.mrb[0].mxu0
    %v6957 = vadd.f32 %v6844, %v6956
    %6958 = vmatprep.mubr.bf16.mxu0 %v1718
    %6959 = vmatmul.mubr.bf16.gmra.mrb[0].mxu0 %v1717
    %v6960 = vpop.f32.mrb[0].mxu0
    %v6961 = vadd.f32 %v6848, %v6960
    %v6962 = vpop.f32.mrb[0].mxu0
    %v6963 = vadd.f32 %v6850, %v6962
    %v6964 = vpop.f32.mrb[0].mxu0
    %v6965 = vadd.f32 %v6852, %v6964
    %v6966 = vpop.f32.mrb[0].mxu0
    %v6967 = vadd.f32 %v6854, %v6966
    %6968 = vmatprep.mubr.bf16.mxu0 %v1742
    %6969 = vmatmul.mubr.bf16.gmra.mrb[0].mxu0 %v1741
    %v6970 = vpop.f32.mrb[0].mxu0
    %v6971 = vadd.f32 %v6858, %v6970
    %v6972 = vpop.f32.mrb[0].mxu0
    %v6973 = vadd.f32 %v6860, %v6972
    %v6974 = vpop.f32.mrb[0].mxu0
    %v6975 = vadd.f32 %v6862, %v6974
    %v6976 = vpop.f32.mrb[0].mxu0
    %v6977 = vadd.f32 %v6864, %v6976
    %6978 = vmatprep.mubr.bf16.mxu0 %v1766
    %6979 = vmatmul.mubr.bf16.gmra.mrb[0].mxu0 %v1765
    %v6980 = vpop.f32.mrb[0].mxu0
    %v6981 = vadd.f32 %v6868, %v6980
    %v6982 = vpop.f32.mrb[0].mxu0
    %v6983 = vadd.f32 %v6870, %v6982
    %v6984 = vpop.f32.mrb[0].mxu0
    %v6985 = vadd.f32 %v6872, %v6984
    %v6986 = vpop.f32.mrb[0].mxu0
    %v6987 = vadd.f32 %v6874, %v6986
    %6988 = vmatprep.mubr.bf16.mxu0 %v1790
    %6989 = vmatmul.mubr.bf16.gmra.mrb[0].mxu0 %v1789
    %v6990 = vpop.f32.mrb[0].mxu0
    %v6991 = vadd.f32 %v6878, %v6990
    %v6992 = vpop.f32.mrb[0].mxu0
    %v6993 = vadd.f32 %v6880, %v6992
    %v6994 = vpop.f32.mrb[0].mxu0
    %v6995 = vadd.f32 %v6882, %v6994
    %v6996 = vpop.f32.mrb[0].mxu0
    %v6997 = vadd.f32 %v6884, %v6996
    %6998 = vmatprep.mubr.bf16.mxu0 %v1814
    %6999 = vmatmul.mubr.bf16.gmra.mrb[0].mxu0 %v1813
    %v7000 = vpop.f32.mrb[0].mxu0
    %v7001 = vadd.f32 %v6888, %v7000
    %v7002 = vpop.f32.mrb[0].mxu0
    %v7003 = vadd.f32 %v6890, %v7002
    %v7004 = vpop.f32.mrb[0].mxu0
    %v7005 = vadd.f32 %v6892, %v7004
    %v7006 = vpop.f32.mrb[0].mxu0
    %v7007 = vadd.f32 %v6894, %v7006
    %7008 = vmatprep.mubr.bf16.mxu0 %v1838
    %7009 = vmatmul.mubr.bf16.gmra.mrb[0].mxu0 %v1837
    %v7010 = vpop.f32.mrb[0].mxu0
    %v7011 = vadd.f32 %v6898, %v7010
    %v7012 = vpop.f32.mrb[0].mxu0
    %v7013 = vadd.f32 %v6900, %v7012
    %v7014 = vpop.f32.mrb[0].mxu0
    %v7015 = vadd.f32 %v6902, %v7014
    %v7016 = vpop.f32.mrb[0].mxu0
    %v7017 = vadd.f32 %v6904, %v7016
    %7018 = vmatprep.mubr.bf16.mxu0 %v1862
    %7019 = vmatmul.mubr.bf16.gmra.mrb[0].mxu0 %v1861
    %v7020 = vpop.f32.mrb[0].mxu0
    %v7021 = vadd.f32 %v6908, %v7020
    %v7022 = vpop.f32.mrb[0].mxu0
    %v7023 = vadd.f32 %v6910, %v7022
    %v7024 = vpop.f32.mrb[0].mxu0
    %v7025 = vadd.f32 %v6912, %v7024
    %v7026 = vpop.f32.mrb[0].mxu0
    %v7027 = vadd.f32 %v6914, %v7026
    %7028 = vdwg.mxu0
    %7029 = vmatprep.subr.bf16.mxu0 %v5004
    %7030 = vmatpush1.bf16.msra.mxu0 %v5003
    %7031 = vmatprep.subr.bf16.mxu0 %v5008
    %7032 = vmatpush1.bf16.msra.mxu0 %v5007
    %7033 = vmatprep.subr.bf16.mxu0 %v5012
    %7034 = vmatpush1.bf16.msra.mxu0 %v5011
    %7035 = vmatprep.subr.bf16.mxu0 %v5016
    %7036 = vmatpush1.bf16.msra.mxu0 %v5015
    %7037 = vmatprep.subr.bf16.mxu0 %v5020
    %7038 = vmatpush1.bf16.msra.mxu0 %v5019
    %7039 = vmatprep.subr.bf16.mxu0 %v5024
    %7040 = vmatpush1.bf16.msra.mxu0 %v5023
    %7041 = vmatprep.subr.bf16.mxu0 %v5028
    %7042 = vmatpush1.bf16.msra.mxu0 %v5027
    %7043 = vmatprep.subr.bf16.mxu0 %v5032
    %7044 = vmatpush1.bf16.msra.mxu0 %v5031
    %7045 = vmatprep.subr.bf16.mxu0 %v5036
    %7046 = vmatpush1.bf16.msra.mxu0 %v5035
    %7047 = vmatprep.subr.bf16.mxu0 %v5040
    %7048 = vmatpush1.bf16.msra.mxu0 %v5039
    %7049 = vmatprep.subr.bf16.mxu0 %v5044
    %7050 = vmatpush1.bf16.msra.mxu0 %v5043
    %7051 = vmatprep.subr.bf16.mxu0 %v5048
    %7052 = vmatpush1.bf16.msra.mxu0 %v5047
    %7053 = vmatprep.subr.bf16.mxu0 %v5052
    %7054 = vmatpush1.bf16.msra.mxu0 %v5051
    %7055 = vmatprep.subr.bf16.mxu0 %v5056
    %7056 = vmatpush1.bf16.msra.mxu0 %v5055
    %7057 = vmatprep.subr.bf16.mxu0 %v5060
    %7058 = vmatpush1.bf16.msra.mxu0 %v5059
    %7059 = vmatprep.subr.bf16.mxu0 %v5064
    %7060 = vmatpush1.bf16.msra.mxu0 %v5063
    %7061 = vmatprep.mubr.bf16.mxu0 %v1696
    %7062 = vmatmul.mubr.bf16.gmra.mrb[0].mxu0 %v1695
    %v7063 = vpop.f32.mrb[0].mxu0
    %v7064 = vadd.f32 %v6951, %v7063
    %v7065 = vpop.f32.mrb[0].mxu0
    %v7066 = vadd.f32 %v6953, %v7065
    %v7067 = vpop.f32.mrb[0].mxu0
    %v7068 = vadd.f32 %v6955, %v7067
    %v7069 = vpop.f32.mrb[0].mxu0
    %v7070 = vadd.f32 %v6957, %v7069
    %7071 = vmatprep.mubr.bf16.mxu0 %v1720
    %7072 = vmatmul.mubr.bf16.gmra.mrb[0].mxu0 %v1719
    %v7073 = vpop.f32.mrb[0].mxu0
    %v7074 = vadd.f32 %v6961, %v7073
    %v7075 = vpop.f32.mrb[0].mxu0
    %v7076 = vadd.f32 %v6963, %v7075
    %v7077 = vpop.f32.mrb[0].mxu0
    %v7078 = vadd.f32 %v6965, %v7077
    %v7079 = vpop.f32.mrb[0].mxu0
    %v7080 = vadd.f32 %v6967, %v7079
    %7081 = vmatprep.mubr.bf16.mxu0 %v1744
    %7082 = vmatmul.mubr.bf16.gmra.mrb[0].mxu0 %v1743
    %v7083 = vpop.f32.mrb[0].mxu0
    %v7084 = vadd.f32 %v6971, %v7083
    %v7085 = vpop.f32.mrb[0].mxu0
    %v7086 = vadd.f32 %v6973, %v7085
    %v7087 = vpop.f32.mrb[0].mxu0
    %v7088 = vadd.f32 %v6975, %v7087
    %v7089 = vpop.f32.mrb[0].mxu0
    %v7090 = vadd.f32 %v6977, %v7089
    %7091 = vmatprep.mubr.bf16.mxu0 %v1768
    %7092 = vmatmul.mubr.bf16.gmra.mrb[0].mxu0 %v1767
    %v7093 = vpop.f32.mrb[0].mxu0
    %v7094 = vadd.f32 %v6981, %v7093
    %v7095 = vpop.f32.mrb[0].mxu0
    %v7096 = vadd.f32 %v6983, %v7095
    %v7097 = vpop.f32.mrb[0].mxu0
    %v7098 = vadd.f32 %v6985, %v7097
    %v7099 = vpop.f32.mrb[0].mxu0
    %v7100 = vadd.f32 %v6987, %v7099
    %7101 = vmatprep.mubr.bf16.mxu0 %v1792
    %7102 = vmatmul.mubr.bf16.gmra.mrb[0].mxu0 %v1791
    %v7103 = vpop.f32.mrb[0].mxu0
    %v7104 = vadd.f32 %v6991, %v7103
    %v7105 = vpop.f32.mrb[0].mxu0
    %v7106 = vadd.f32 %v6993, %v7105
    %v7107 = vpop.f32.mrb[0].mxu0
    %v7108 = vadd.f32 %v6995, %v7107
    %v7109 = vpop.f32.mrb[0].mxu0
    %v7110 = vadd.f32 %v6997, %v7109
    %7111 = vmatprep.mubr.bf16.mxu0 %v1816
    %7112 = vmatmul.mubr.bf16.gmra.mrb[0].mxu0 %v1815
    %v7113 = vpop.f32.mrb[0].mxu0
    %v7114 = vadd.f32 %v7001, %v7113
    %v7115 = vpop.f32.mrb[0].mxu0
    %v7116 = vadd.f32 %v7003, %v7115
    %v7117 = vpop.f32.mrb[0].mxu0
    %v7118 = vadd.f32 %v7005, %v7117
    %v7119 = vpop.f32.mrb[0].mxu0
    %v7120 = vadd.f32 %v7007, %v7119
    %7121 = vmatprep.mubr.bf16.mxu0 %v1840
    %7122 = vmatmul.mubr.bf16.gmra.mrb[0].mxu0 %v1839
    %v7123 = vpop.f32.mrb[0].mxu0
    %v7124 = vadd.f32 %v7011, %v7123
    %v7125 = vpop.f32.mrb[0].mxu0
    %v7126 = vadd.f32 %v7013, %v7125
    %v7127 = vpop.f32.mrb[0].mxu0
    %v7128 = vadd.f32 %v7015, %v7127
    %v7129 = vpop.f32.mrb[0].mxu0
    %v7130 = vadd.f32 %v7017, %v7129
    %7131 = vmatprep.mubr.bf16.mxu0 %v1864
    %7132 = vmatmul.mubr.bf16.gmra.mrb[0].mxu0 %v1863
    %v7133 = vpop.f32.mrb[0].mxu0
    %v7134 = vadd.f32 %v7021, %v7133
    %v7135 = vpop.f32.mrb[0].mxu0
    %v7136 = vadd.f32 %v7023, %v7135
    %v7137 = vpop.f32.mrb[0].mxu0
    %v7138 = vadd.f32 %v7025, %v7137
    %v7139 = vpop.f32.mrb[0].mxu0
    %v7140 = vadd.f32 %v7027, %v7139
    %7141 = vdwg.mxu0
    %7142 = vmatprep.subr.bf16.mxu0 %v5068
    %7143 = vmatpush1.bf16.msra.mxu0 %v5067
    %7144 = vmatprep.subr.bf16.mxu0 %v5072
    %7145 = vmatpush1.bf16.msra.mxu0 %v5071
    %7146 = vmatprep.subr.bf16.mxu0 %v5076
    %7147 = vmatpush1.bf16.msra.mxu0 %v5075
    %7148 = vmatprep.subr.bf16.mxu0 %v5080
    %7149 = vmatpush1.bf16.msra.mxu0 %v5079
    %7150 = vmatprep.subr.bf16.mxu0 %v5084
    %7151 = vmatpush1.bf16.msra.mxu0 %v5083
    %7152 = vmatprep.subr.bf16.mxu0 %v5088
    %7153 = vmatpush1.bf16.msra.mxu0 %v5087
    %7154 = vmatprep.subr.bf16.mxu0 %v5092
    %7155 = vmatpush1.bf16.msra.mxu0 %v5091
    %7156 = vmatprep.subr.bf16.mxu0 %v5096
    %7157 = vmatpush1.bf16.msra.mxu0 %v5095
    %7158 = vmatprep.subr.bf16.mxu0 %v5100
    %7159 = vmatpush1.bf16.msra.mxu0 %v5099
    %7160 = vmatprep.subr.bf16.mxu0 %v5104
    %7161 = vmatpush1.bf16.msra.mxu0 %v5103
    %7162 = vmatprep.subr.bf16.mxu0 %v5108
    %7163 = vmatpush1.bf16.msra.mxu0 %v5107
    %7164 = vmatprep.subr.bf16.mxu0 %v5112
    %7165 = vmatpush1.bf16.msra.mxu0 %v5111
    %7166 = vmatprep.subr.bf16.mxu0 %v5116
    %7167 = vmatpush1.bf16.msra.mxu0 %v5115
    %7168 = vmatprep.subr.bf16.mxu0 %v5120
    %7169 = vmatpush1.bf16.msra.mxu0 %v5119
    %7170 = vmatprep.subr.bf16.mxu0 %v5124
    %7171 = vmatpush1.bf16.msra.mxu0 %v5123
    %7172 = vmatprep.subr.bf16.mxu0 %v5128
    %7173 = vmatpush1.bf16.msra.mxu0 %v5127
    %7174 = vmatprep.mubr.bf16.mxu0 %v1698
    %7175 = vmatmul.mubr.bf16.gmra.mrb[0].mxu0 %v1697
    %v7176 = vpop.f32.mrb[0].mxu0
    %v7177 = vadd.f32 %v7064, %v7176
    %v7178 = vpop.f32.mrb[0].mxu0
    %v7179 = vadd.f32 %v7066, %v7178
    %v7180 = vpop.f32.mrb[0].mxu0
    %v7181 = vadd.f32 %v7068, %v7180
    %v7182 = vpop.f32.mrb[0].mxu0
    %v7183 = vadd.f32 %v7070, %v7182
    %7184 = vmatprep.mubr.bf16.mxu0 %v1722
    %7185 = vmatmul.mubr.bf16.gmra.mrb[0].mxu0 %v1721
    %v7186 = vpop.f32.mrb[0].mxu0
    %v7187 = vadd.f32 %v7074, %v7186
    %v7188 = vpop.f32.mrb[0].mxu0
    %v7189 = vadd.f32 %v7076, %v7188
    %v7190 = vpop.f32.mrb[0].mxu0
    %v7191 = vadd.f32 %v7078, %v7190
    %v7192 = vpop.f32.mrb[0].mxu0
    %v7193 = vadd.f32 %v7080, %v7192
    %7194 = vmatprep.mubr.bf16.mxu0 %v1746
    %7195 = vmatmul.mubr.bf16.gmra.mrb[0].mxu0 %v1745
    %v7196 = vpop.f32.mrb[0].mxu0
    %v7197 = vadd.f32 %v7084, %v7196
    %v7198 = vpop.f32.mrb[0].mxu0
    %v7199 = vadd.f32 %v7086, %v7198
    %v7200 = vpop.f32.mrb[0].mxu0
    %v7201 = vadd.f32 %v7088, %v7200
    %v7202 = vpop.f32.mrb[0].mxu0
    %v7203 = vadd.f32 %v7090, %v7202
    %7204 = vmatprep.mubr.bf16.mxu0 %v1770
    %7205 = vmatmul.mubr.bf16.gmra.mrb[0].mxu0 %v1769
    %v7206 = vpop.f32.mrb[0].mxu0
    %v7207 = vadd.f32 %v7094, %v7206
    %v7208 = vpop.f32.mrb[0].mxu0
    %v7209 = vadd.f32 %v7096, %v7208
    %v7210 = vpop.f32.mrb[0].mxu0
    %v7211 = vadd.f32 %v7098, %v7210
    %v7212 = vpop.f32.mrb[0].mxu0
    %v7213 = vadd.f32 %v7100, %v7212
    %7214 = vmatprep.mubr.bf16.mxu0 %v1794
    %7215 = vmatmul.mubr.bf16.gmra.mrb[0].mxu0 %v1793
    %v7216 = vpop.f32.mrb[0].mxu0
    %v7217 = vadd.f32 %v7104, %v7216
    %v7218 = vpop.f32.mrb[0].mxu0
    %v7219 = vadd.f32 %v7106, %v7218
    %v7220 = vpop.f32.mrb[0].mxu0
    %v7221 = vadd.f32 %v7108, %v7220
    %v7222 = vpop.f32.mrb[0].mxu0
    %v7223 = vadd.f32 %v7110, %v7222
    %7224 = vmatprep.mubr.bf16.mxu0 %v1818
    %7225 = vmatmul.mubr.bf16.gmra.mrb[0].mxu0 %v1817
    %v7226 = vpop.f32.mrb[0].mxu0
    %v7227 = vadd.f32 %v7114, %v7226
    %v7228 = vpop.f32.mrb[0].mxu0
    %v7229 = vadd.f32 %v7116, %v7228
    %v7230 = vpop.f32.mrb[0].mxu0
    %v7231 = vadd.f32 %v7118, %v7230
    %v7232 = vpop.f32.mrb[0].mxu0
    %v7233 = vadd.f32 %v7120, %v7232
    %7234 = vmatprep.mubr.bf16.mxu0 %v1842
    %7235 = vmatmul.mubr.bf16.gmra.mrb[0].mxu0 %v1841
    %v7236 = vpop.f32.mrb[0].mxu0
    %v7237 = vadd.f32 %v7124, %v7236
    %v7238 = vpop.f32.mrb[0].mxu0
    %v7239 = vadd.f32 %v7126, %v7238
    %v7240 = vpop.f32.mrb[0].mxu0
    %v7241 = vadd.f32 %v7128, %v7240
    %v7242 = vpop.f32.mrb[0].mxu0
    %v7243 = vadd.f32 %v7130, %v7242
    %7244 = vmatprep.mubr.bf16.mxu0 %v1866
    %7245 = vmatmul.mubr.bf16.gmra.mrb[0].mxu0 %v1865
    %v7246 = vpop.f32.mrb[0].mxu0
    %v7247 = vadd.f32 %v7134, %v7246
    %v7248 = vpop.f32.mrb[0].mxu0
    %v7249 = vadd.f32 %v7136, %v7248
    %v7250 = vpop.f32.mrb[0].mxu0
    %v7251 = vadd.f32 %v7138, %v7250
    %v7252 = vpop.f32.mrb[0].mxu0
    %v7253 = vadd.f32 %v7140, %v7252
    %7254 = vdwg.mxu0
    %7255 = vmatprep.subr.bf16.mxu0 %v4366
    %7256 = vmatpush1.bf16.msra.mxu0 %v4365
    %7257 = vmatprep.subr.bf16.mxu0 %v4370
    %7258 = vmatpush1.bf16.msra.mxu0 %v4369
    %7259 = vmatprep.subr.bf16.mxu0 %v4374
    %7260 = vmatpush1.bf16.msra.mxu0 %v4373
    %7261 = vmatprep.subr.bf16.mxu0 %v4378
    %7262 = vmatpush1.bf16.msra.mxu0 %v4377
    %7263 = vmatprep.subr.bf16.mxu0 %v4382
    %7264 = vmatpush1.bf16.msra.mxu0 %v4381
    %7265 = vmatprep.subr.bf16.mxu0 %v4386
    %7266 = vmatpush1.bf16.msra.mxu0 %v4385
    %7267 = vmatprep.subr.bf16.mxu0 %v4390
    %7268 = vmatpush1.bf16.msra.mxu0 %v4389
    %7269 = vmatprep.subr.bf16.mxu0 %v4394
    %7270 = vmatpush1.bf16.msra.mxu0 %v4393
    %7271 = vmatprep.subr.bf16.mxu0 %v4398
    %7272 = vmatpush1.bf16.msra.mxu0 %v4397
    %7273 = vmatprep.subr.bf16.mxu0 %v4402
    %7274 = vmatpush1.bf16.msra.mxu0 %v4401
    %7275 = vmatprep.subr.bf16.mxu0 %v4406
    %7276 = vmatpush1.bf16.msra.mxu0 %v4405
    %7277 = vmatprep.subr.bf16.mxu0 %v4410
    %7278 = vmatpush1.bf16.msra.mxu0 %v4409
    %7279 = vmatprep.subr.bf16.mxu0 %v4414
    %7280 = vmatpush1.bf16.msra.mxu0 %v4413
    %7281 = vmatprep.subr.bf16.mxu0 %v4418
    %7282 = vmatpush1.bf16.msra.mxu0 %v4417
    %7283 = vmatprep.subr.bf16.mxu0 %v4422
    %7284 = vmatpush1.bf16.msra.mxu0 %v4421
    %7285 = vmatprep.subr.bf16.mxu0 %v4426
    %7286 = vmatpush1.bf16.msra.mxu0 %v4425
    %7287 = vmatprep.mubr.bf16.mxu0 %v1676
    %7288 = vmatmul.mubr.bf16.gmra.mrb[0].mxu0 %v1675
    %v7289 = vpop.f32.mrb[0].mxu0
    %v7290 = vadd.f32 %v1090, %v7289
    %v7291 = vpop.f32.mrb[0].mxu0
    %v7292 = vadd.f32 %v1094, %v7291
    %v7293 = vpop.f32.mrb[0].mxu0
    %v7294 = vadd.f32 %v1090, %v7293
    %v7295 = vpop.f32.mrb[0].mxu0
    %v7296 = vadd.f32 %v1094, %v7295
    %7297 = vmatprep.mubr.bf16.mxu0 %v1700
    %7298 = vmatmul.mubr.bf16.gmra.mrb[0].mxu0 %v1699
    %v7299 = vpop.f32.mrb[0].mxu0
    %v7300 = vadd.f32 %v1090, %v7299
    %v7301 = vpop.f32.mrb[0].mxu0
    %v7302 = vadd.f32 %v1094, %v7301
    %v7303 = vpop.f32.mrb[0].mxu0
    %v7304 = vadd.f32 %v1090, %v7303
    %v7305 = vpop.f32.mrb[0].mxu0
    %v7306 = vadd.f32 %v1094, %v7305
    %7307 = vmatprep.mubr.bf16.mxu0 %v1724
    %7308 = vmatmul.mubr.bf16.gmra.mrb[0].mxu0 %v1723
    %v7309 = vpop.f32.mrb[0].mxu0
    %v7310 = vadd.f32 %v1090, %v7309
    %v7311 = vpop.f32.mrb[0].mxu0
    %v7312 = vadd.f32 %v1094, %v7311
    %v7313 = vpop.f32.mrb[0].mxu0
    %v7314 = vadd.f32 %v1090, %v7313
    %v7315 = vpop.f32.mrb[0].mxu0
    %v7316 = vadd.f32 %v1094, %v7315
    %7317 = vmatprep.mubr.bf16.mxu0 %v1748
    %7318 = vmatmul.mubr.bf16.gmra.mrb[0].mxu0 %v1747
    %v7319 = vpop.f32.mrb[0].mxu0
    %v7320 = vadd.f32 %v1090, %v7319
    %v7321 = vpop.f32.mrb[0].mxu0
    %v7322 = vadd.f32 %v1094, %v7321
    %v7323 = vpop.f32.mrb[0].mxu0
    %v7324 = vadd.f32 %v1090, %v7323
    %v7325 = vpop.f32.mrb[0].mxu0
    %v7326 = vadd.f32 %v1094, %v7325
    %7327 = vmatprep.mubr.bf16.mxu0 %v1772
    %7328 = vmatmul.mubr.bf16.gmra.mrb[0].mxu0 %v1771
    %v7329 = vpop.f32.mrb[0].mxu0
    %v7330 = vadd.f32 %v1090, %v7329
    %v7331 = vpop.f32.mrb[0].mxu0
    %v7332 = vadd.f32 %v1094, %v7331
    %v7333 = vpop.f32.mrb[0].mxu0
    %v7334 = vadd.f32 %v1090, %v7333
    %v7335 = vpop.f32.mrb[0].mxu0
    %v7336 = vadd.f32 %v1094, %v7335
    %7337 = vmatprep.mubr.bf16.mxu0 %v1796
    %7338 = vmatmul.mubr.bf16.gmra.mrb[0].mxu0 %v1795
    %v7339 = vpop.f32.mrb[0].mxu0
    %v7340 = vadd.f32 %v1090, %v7339
    %v7341 = vpop.f32.mrb[0].mxu0
    %v7342 = vadd.f32 %v1094, %v7341
    %v7343 = vpop.f32.mrb[0].mxu0
    %v7344 = vadd.f32 %v1090, %v7343
    %v7345 = vpop.f32.mrb[0].mxu0
    %v7346 = vadd.f32 %v1094, %v7345
    %7347 = vmatprep.mubr.bf16.mxu0 %v1820
    %7348 = vmatmul.mubr.bf16.gmra.mrb[0].mxu0 %v1819
    %v7349 = vpop.f32.mrb[0].mxu0
    %v7350 = vadd.f32 %v1090, %v7349
    %v7351 = vpop.f32.mrb[0].mxu0
    %v7352 = vadd.f32 %v1094, %v7351
    %v7353 = vpop.f32.mrb[0].mxu0
    %v7354 = vadd.f32 %v1090, %v7353
    %v7355 = vpop.f32.mrb[0].mxu0
    %v7356 = vadd.f32 %v1094, %v7355
    %7357 = vmatprep.mubr.bf16.mxu0 %v1844
    %7358 = vmatmul.mubr.bf16.gmra.mrb[0].mxu0 %v1843
    %v7359 = vpop.f32.mrb[0].mxu0
    %v7360 = vadd.f32 %v1090, %v7359
    %v7361 = vpop.f32.mrb[0].mxu0
    %v7362 = vadd.f32 %v1094, %v7361
    %v7363 = vpop.f32.mrb[0].mxu0
    %v7364 = vadd.f32 %v1090, %v7363
    %v7365 = vpop.f32.mrb[0].mxu0
    %v7366 = vadd.f32 %v1094, %v7365
    %7367 = vdwg.mxu0
    %7368 = vmatprep.subr.bf16.mxu0 %v4430
    %7369 = vmatpush1.bf16.msra.mxu0 %v4429
    %7370 = vmatprep.subr.bf16.mxu0 %v4434
    %7371 = vmatpush1.bf16.msra.mxu0 %v4433
    %7372 = vmatprep.subr.bf16.mxu0 %v4438
    %7373 = vmatpush1.bf16.msra.mxu0 %v4437
    %7374 = vmatprep.subr.bf16.mxu0 %v4442
    %7375 = vmatpush1.bf16.msra.mxu0 %v4441
    %7376 = vmatprep.subr.bf16.mxu0 %v4446
    %7377 = vmatpush1.bf16.msra.mxu0 %v4445
    %7378 = vmatprep.subr.bf16.mxu0 %v4450
    %7379 = vmatpush1.bf16.msra.mxu0 %v4449
    %7380 = vmatprep.subr.bf16.mxu0 %v4454
    %7381 = vmatpush1.bf16.msra.mxu0 %v4453
    %7382 = vmatprep.subr.bf16.mxu0 %v4458
    %7383 = vmatpush1.bf16.msra.mxu0 %v4457
    %7384 = vmatprep.subr.bf16.mxu0 %v4462
    %7385 = vmatpush1.bf16.msra.mxu0 %v4461
    %7386 = vmatprep.subr.bf16.mxu0 %v4466
    %7387 = vmatpush1.bf16.msra.mxu0 %v4465
    %7388 = vmatprep.subr.bf16.mxu0 %v4470
    %7389 = vmatpush1.bf16.msra.mxu0 %v4469
    %7390 = vmatprep.subr.bf16.mxu0 %v4474
    %7391 = vmatpush1.bf16.msra.mxu0 %v4473
    %7392 = vmatprep.subr.bf16.mxu0 %v4478
    %7393 = vmatpush1.bf16.msra.mxu0 %v4477
    %7394 = vmatprep.subr.bf16.mxu0 %v4482
    %7395 = vmatpush1.bf16.msra.mxu0 %v4481
    %7396 = vmatprep.subr.bf16.mxu0 %v4486
    %7397 = vmatpush1.bf16.msra.mxu0 %v4485
    %7398 = vmatprep.subr.bf16.mxu0 %v4490
    %7399 = vmatpush1.bf16.msra.mxu0 %v4489
    %7400 = vmatprep.mubr.bf16.mxu0 %v1678
    %7401 = vmatmul.mubr.bf16.gmra.mrb[0].mxu0 %v1677
    %v7402 = vpop.f32.mrb[0].mxu0
    %v7403 = vadd.f32 %v7290, %v7402
    %v7404 = vpop.f32.mrb[0].mxu0
    %v7405 = vadd.f32 %v7292, %v7404
    %v7406 = vpop.f32.mrb[0].mxu0
    %v7407 = vadd.f32 %v7294, %v7406
    %v7408 = vpop.f32.mrb[0].mxu0
    %v7409 = vadd.f32 %v7296, %v7408
    %7410 = vmatprep.mubr.bf16.mxu0 %v1702
    %7411 = vmatmul.mubr.bf16.gmra.mrb[0].mxu0 %v1701
    %v7412 = vpop.f32.mrb[0].mxu0
    %v7413 = vadd.f32 %v7300, %v7412
    %v7414 = vpop.f32.mrb[0].mxu0
    %v7415 = vadd.f32 %v7302, %v7414
    %v7416 = vpop.f32.mrb[0].mxu0
    %v7417 = vadd.f32 %v7304, %v7416
    %v7418 = vpop.f32.mrb[0].mxu0
    %v7419 = vadd.f32 %v7306, %v7418
    %7420 = vmatprep.mubr.bf16.mxu0 %v1726
    %7421 = vmatmul.mubr.bf16.gmra.mrb[0].mxu0 %v1725
    %v7422 = vpop.f32.mrb[0].mxu0
    %v7423 = vadd.f32 %v7310, %v7422
    %v7424 = vpop.f32.mrb[0].mxu0
    %v7425 = vadd.f32 %v7312, %v7424
    %v7426 = vpop.f32.mrb[0].mxu0
    %v7427 = vadd.f32 %v7314, %v7426
    %v7428 = vpop.f32.mrb[0].mxu0
    %v7429 = vadd.f32 %v7316, %v7428
    %7430 = vmatprep.mubr.bf16.mxu0 %v1750
    %7431 = vmatmul.mubr.bf16.gmra.mrb[0].mxu0 %v1749
    %v7432 = vpop.f32.mrb[0].mxu0
    %v7433 = vadd.f32 %v7320, %v7432
    %v7434 = vpop.f32.mrb[0].mxu0
    %v7435 = vadd.f32 %v7322, %v7434
    %v7436 = vpop.f32.mrb[0].mxu0
    %v7437 = vadd.f32 %v7324, %v7436
    %v7438 = vpop.f32.mrb[0].mxu0
    %v7439 = vadd.f32 %v7326, %v7438
    %7440 = vmatprep.mubr.bf16.mxu0 %v1774
    %7441 = vmatmul.mubr.bf16.gmra.mrb[0].mxu0 %v1773
    %v7442 = vpop.f32.mrb[0].mxu0
    %v7443 = vadd.f32 %v7330, %v7442
    %v7444 = vpop.f32.mrb[0].mxu0
    %v7445 = vadd.f32 %v7332, %v7444
    %v7446 = vpop.f32.mrb[0].mxu0
    %v7447 = vadd.f32 %v7334, %v7446
    %v7448 = vpop.f32.mrb[0].mxu0
    %v7449 = vadd.f32 %v7336, %v7448
    %7450 = vmatprep.mubr.bf16.mxu0 %v1798
    %7451 = vmatmul.mubr.bf16.gmra.mrb[0].mxu0 %v1797
    %v7452 = vpop.f32.mrb[0].mxu0
    %v7453 = vadd.f32 %v7340, %v7452
    %v7454 = vpop.f32.mrb[0].mxu0
    %v7455 = vadd.f32 %v7342, %v7454
    %v7456 = vpop.f32.mrb[0].mxu0
    %v7457 = vadd.f32 %v7344, %v7456
    %v7458 = vpop.f32.mrb[0].mxu0
    %v7459 = vadd.f32 %v7346, %v7458
    %7460 = vmatprep.mubr.bf16.mxu0 %v1822
    %7461 = vmatmul.mubr.bf16.gmra.mrb[0].mxu0 %v1821
    %v7462 = vpop.f32.mrb[0].mxu0
    %v7463 = vadd.f32 %v7350, %v7462
    %v7464 = vpop.f32.mrb[0].mxu0
    %v7465 = vadd.f32 %v7352, %v7464
    %v7466 = vpop.f32.mrb[0].mxu0
    %v7467 = vadd.f32 %v7354, %v7466
    %v7468 = vpop.f32.mrb[0].mxu0
    %v7469 = vadd.f32 %v7356, %v7468
    %7470 = vmatprep.mubr.bf16.mxu0 %v1846
    %7471 = vmatmul.mubr.bf16.gmra.mrb[0].mxu0 %v1845
    %v7472 = vpop.f32.mrb[0].mxu0
    %v7473 = vadd.f32 %v7360, %v7472
    %v7474 = vpop.f32.mrb[0].mxu0
    %v7475 = vadd.f32 %v7362, %v7474
    %v7476 = vpop.f32.mrb[0].mxu0
    %v7477 = vadd.f32 %v7364, %v7476
    %v7478 = vpop.f32.mrb[0].mxu0
    %v7479 = vadd.f32 %v7366, %v7478
    %7480 = vdwg.mxu0
    %7481 = vmatprep.subr.bf16.mxu0 %v4494
    %7482 = vmatpush1.bf16.msra.mxu0 %v4493
    %7483 = vmatprep.subr.bf16.mxu0 %v4498
    %7484 = vmatpush1.bf16.msra.mxu0 %v4497
    %7485 = vmatprep.subr.bf16.mxu0 %v4502
    %7486 = vmatpush1.bf16.msra.mxu0 %v4501
    %7487 = vmatprep.subr.bf16.mxu0 %v4506
    %7488 = vmatpush1.bf16.msra.mxu0 %v4505
    %7489 = vmatprep.subr.bf16.mxu0 %v4510
    %7490 = vmatpush1.bf16.msra.mxu0 %v4509
    %7491 = vmatprep.subr.bf16.mxu0 %v4514
    %7492 = vmatpush1.bf16.msra.mxu0 %v4513
    %7493 = vmatprep.subr.bf16.mxu0 %v4518
    %7494 = vmatpush1.bf16.msra.mxu0 %v4517
    %7495 = vmatprep.subr.bf16.mxu0 %v4522
    %7496 = vmatpush1.bf16.msra.mxu0 %v4521
    %7497 = vmatprep.subr.bf16.mxu0 %v4526
    %7498 = vmatpush1.bf16.msra.mxu0 %v4525
    %7499 = vmatprep.subr.bf16.mxu0 %v4530
    %7500 = vmatpush1.bf16.msra.mxu0 %v4529
    %7501 = vmatprep.subr.bf16.mxu0 %v4534
    %7502 = vmatpush1.bf16.msra.mxu0 %v4533
    %7503 = vmatprep.subr.bf16.mxu0 %v4538
    %7504 = vmatpush1.bf16.msra.mxu0 %v4537
    %7505 = vmatprep.subr.bf16.mxu0 %v4542
    %7506 = vmatpush1.bf16.msra.mxu0 %v4541
    %7507 = vmatprep.subr.bf16.mxu0 %v4546
    %7508 = vmatpush1.bf16.msra.mxu0 %v4545
    %7509 = vmatprep.subr.bf16.mxu0 %v4550
    %7510 = vmatpush1.bf16.msra.mxu0 %v4549
    %7511 = vmatprep.subr.bf16.mxu0 %v4554
    %7512 = vmatpush1.bf16.msra.mxu0 %v4553
    %7513 = vmatprep.mubr.bf16.mxu0 %v1680
    %7514 = vmatmul.mubr.bf16.gmra.mrb[0].mxu0 %v1679
    %v7515 = vpop.f32.mrb[0].mxu0
    %v7516 = vadd.f32 %v7403, %v7515
    %v7517 = vpop.f32.mrb[0].mxu0
    %v7518 = vadd.f32 %v7405, %v7517
    %v7519 = vpop.f32.mrb[0].mxu0
    %v7520 = vadd.f32 %v7407, %v7519
    %v7521 = vpop.f32.mrb[0].mxu0
    %v7522 = vadd.f32 %v7409, %v7521
    %7523 = vmatprep.mubr.bf16.mxu0 %v1704
    %7524 = vmatmul.mubr.bf16.gmra.mrb[0].mxu0 %v1703
    %v7525 = vpop.f32.mrb[0].mxu0
    %v7526 = vadd.f32 %v7413, %v7525
    %v7527 = vpop.f32.mrb[0].mxu0
    %v7528 = vadd.f32 %v7415, %v7527
    %v7529 = vpop.f32.mrb[0].mxu0
    %v7530 = vadd.f32 %v7417, %v7529
    %v7531 = vpop.f32.mrb[0].mxu0
    %v7532 = vadd.f32 %v7419, %v7531
    %7533 = vmatprep.mubr.bf16.mxu0 %v1728
    %7534 = vmatmul.mubr.bf16.gmra.mrb[0].mxu0 %v1727
    %v7535 = vpop.f32.mrb[0].mxu0
    %v7536 = vadd.f32 %v7423, %v7535
    %v7537 = vpop.f32.mrb[0].mxu0
    %v7538 = vadd.f32 %v7425, %v7537
    %v7539 = vpop.f32.mrb[0].mxu0
    %v7540 = vadd.f32 %v7427, %v7539
    %v7541 = vpop.f32.mrb[0].mxu0
    %v7542 = vadd.f32 %v7429, %v7541
    %7543 = vmatprep.mubr.bf16.mxu0 %v1752
    %7544 = vmatmul.mubr.bf16.gmra.mrb[0].mxu0 %v1751
    %v7545 = vpop.f32.mrb[0].mxu0
    %v7546 = vadd.f32 %v7433, %v7545
    %v7547 = vpop.f32.mrb[0].mxu0
    %v7548 = vadd.f32 %v7435, %v7547
    %v7549 = vpop.f32.mrb[0].mxu0
    %v7550 = vadd.f32 %v7437, %v7549
    %v7551 = vpop.f32.mrb[0].mxu0
    %v7552 = vadd.f32 %v7439, %v7551
    %7553 = vmatprep.mubr.bf16.mxu0 %v1776
    %7554 = vmatmul.mubr.bf16.gmra.mrb[0].mxu0 %v1775
    %v7555 = vpop.f32.mrb[0].mxu0
    %v7556 = vadd.f32 %v7443, %v7555
    %v7557 = vpop.f32.mrb[0].mxu0
    %v7558 = vadd.f32 %v7445, %v7557
    %v7559 = vpop.f32.mrb[0].mxu0
    %v7560 = vadd.f32 %v7447, %v7559
    %v7561 = vpop.f32.mrb[0].mxu0
    %v7562 = vadd.f32 %v7449, %v7561
    %7563 = vmatprep.mubr.bf16.mxu0 %v1800
    %7564 = vmatmul.mubr.bf16.gmra.mrb[0].mxu0 %v1799
    %v7565 = vpop.f32.mrb[0].mxu0
    %v7566 = vadd.f32 %v7453, %v7565
    %v7567 = vpop.f32.mrb[0].mxu0
    %v7568 = vadd.f32 %v7455, %v7567
    %v7569 = vpop.f32.mrb[0].mxu0
    %v7570 = vadd.f32 %v7457, %v7569
    %v7571 = vpop.f32.mrb[0].mxu0
    %v7572 = vadd.f32 %v7459, %v7571
    %7573 = vmatprep.mubr.bf16.mxu0 %v1824
    %7574 = vmatmul.mubr.bf16.gmra.mrb[0].mxu0 %v1823
    %v7575 = vpop.f32.mrb[0].mxu0
    %v7576 = vadd.f32 %v7463, %v7575
    %v7577 = vpop.f32.mrb[0].mxu0
    %v7578 = vadd.f32 %v7465, %v7577
    %v7579 = vpop.f32.mrb[0].mxu0
    %v7580 = vadd.f32 %v7467, %v7579
    %v7581 = vpop.f32.mrb[0].mxu0
    %v7582 = vadd.f32 %v7469, %v7581
    %7583 = vmatprep.mubr.bf16.mxu0 %v1848
    %7584 = vmatmul.mubr.bf16.gmra.mrb[0].mxu0 %v1847
    %v7585 = vpop.f32.mrb[0].mxu0
    %v7586 = vadd.f32 %v7473, %v7585
    %v7587 = vpop.f32.mrb[0].mxu0
    %v7588 = vadd.f32 %v7475, %v7587
    %v7589 = vpop.f32.mrb[0].mxu0
    %v7590 = vadd.f32 %v7477, %v7589
    %v7591 = vpop.f32.mrb[0].mxu0
    %v7592 = vadd.f32 %v7479, %v7591
    %7593 = vdwg.mxu0
    %7594 = vmatprep.subr.bf16.mxu0 %v4558
    %7595 = vmatpush1.bf16.msra.mxu0 %v4557
    %7596 = vmatprep.subr.bf16.mxu0 %v4562
    %7597 = vmatpush1.bf16.msra.mxu0 %v4561
    %7598 = vmatprep.subr.bf16.mxu0 %v4566
    %7599 = vmatpush1.bf16.msra.mxu0 %v4565
    %7600 = vmatprep.subr.bf16.mxu0 %v4570
    %7601 = vmatpush1.bf16.msra.mxu0 %v4569
    %7602 = vmatprep.subr.bf16.mxu0 %v4574
    %7603 = vmatpush1.bf16.msra.mxu0 %v4573
    %7604 = vmatprep.subr.bf16.mxu0 %v4578
    %7605 = vmatpush1.bf16.msra.mxu0 %v4577
    %7606 = vmatprep.subr.bf16.mxu0 %v4582
    %7607 = vmatpush1.bf16.msra.mxu0 %v4581
    %7608 = vmatprep.subr.bf16.mxu0 %v4586
    %7609 = vmatpush1.bf16.msra.mxu0 %v4585
    %7610 = vmatprep.subr.bf16.mxu0 %v4590
    %7611 = vmatpush1.bf16.msra.mxu0 %v4589
    %7612 = vmatprep.subr.bf16.mxu0 %v4594
    %7613 = vmatpush1.bf16.msra.mxu0 %v4593
    %7614 = vmatprep.subr.bf16.mxu0 %v4598
    %7615 = vmatpush1.bf16.msra.mxu0 %v4597
    %7616 = vmatprep.subr.bf16.mxu0 %v4602
    %7617 = vmatpush1.bf16.msra.mxu0 %v4601
    %7618 = vmatprep.subr.bf16.mxu0 %v4606
    %7619 = vmatpush1.bf16.msra.mxu0 %v4605
    %7620 = vmatprep.subr.bf16.mxu0 %v4610
    %7621 = vmatpush1.bf16.msra.mxu0 %v4609
    %7622 = vmatprep.subr.bf16.mxu0 %v4614
    %7623 = vmatpush1.bf16.msra.mxu0 %v4613
    %7624 = vmatprep.subr.bf16.mxu0 %v4618
    %7625 = vmatpush1.bf16.msra.mxu0 %v4617
    %7626 = vmatprep.mubr.bf16.mxu0 %v1682
    %7627 = vmatmul.mubr.bf16.gmra.mrb[0].mxu0 %v1681
    %v7628 = vpop.f32.mrb[0].mxu0
    %v7629 = vadd.f32 %v7516, %v7628
    %v7630 = vpop.f32.mrb[0].mxu0
    %v7631 = vadd.f32 %v7518, %v7630
    %v7632 = vpop.f32.mrb[0].mxu0
    %v7633 = vadd.f32 %v7520, %v7632
    %v7634 = vpop.f32.mrb[0].mxu0
    %v7635 = vadd.f32 %v7522, %v7634
    %7636 = vmatprep.mubr.bf16.mxu0 %v1706
    %7637 = vmatmul.mubr.bf16.gmra.mrb[0].mxu0 %v1705
    %v7638 = vpop.f32.mrb[0].mxu0
    %v7639 = vadd.f32 %v7526, %v7638
    %v7640 = vpop.f32.mrb[0].mxu0
    %v7641 = vadd.f32 %v7528, %v7640
    %v7642 = vpop.f32.mrb[0].mxu0
    %v7643 = vadd.f32 %v7530, %v7642
    %v7644 = vpop.f32.mrb[0].mxu0
    %v7645 = vadd.f32 %v7532, %v7644
    %7646 = vmatprep.mubr.bf16.mxu0 %v1730
    %7647 = vmatmul.mubr.bf16.gmra.mrb[0].mxu0 %v1729
    %v7648 = vpop.f32.mrb[0].mxu0
    %v7649 = vadd.f32 %v7536, %v7648
    %v7650 = vpop.f32.mrb[0].mxu0
    %v7651 = vadd.f32 %v7538, %v7650
    %v7652 = vpop.f32.mrb[0].mxu0
    %v7653 = vadd.f32 %v7540, %v7652
    %v7654 = vpop.f32.mrb[0].mxu0
    %v7655 = vadd.f32 %v7542, %v7654
    %7656 = vmatprep.mubr.bf16.mxu0 %v1754
    %7657 = vmatmul.mubr.bf16.gmra.mrb[0].mxu0 %v1753
    %v7658 = vpop.f32.mrb[0].mxu0
    %v7659 = vadd.f32 %v7546, %v7658
    %v7660 = vpop.f32.mrb[0].mxu0
    %v7661 = vadd.f32 %v7548, %v7660
    %v7662 = vpop.f32.mrb[0].mxu0
    %v7663 = vadd.f32 %v7550, %v7662
    %v7664 = vpop.f32.mrb[0].mxu0
    %v7665 = vadd.f32 %v7552, %v7664
    %7666 = vmatprep.mubr.bf16.mxu0 %v1778
    %7667 = vmatmul.mubr.bf16.gmra.mrb[0].mxu0 %v1777
    %v7668 = vpop.f32.mrb[0].mxu0
    %v7669 = vadd.f32 %v7556, %v7668
    %v7670 = vpop.f32.mrb[0].mxu0
    %v7671 = vadd.f32 %v7558, %v7670
    %v7672 = vpop.f32.mrb[0].mxu0
    %v7673 = vadd.f32 %v7560, %v7672
    %v7674 = vpop.f32.mrb[0].mxu0
    %v7675 = vadd.f32 %v7562, %v7674
    %7676 = vmatprep.mubr.bf16.mxu0 %v1802
    %7677 = vmatmul.mubr.bf16.gmra.mrb[0].mxu0 %v1801
    %v7678 = vpop.f32.mrb[0].mxu0
    %v7679 = vadd.f32 %v7566, %v7678
    %v7680 = vpop.f32.mrb[0].mxu0
    %v7681 = vadd.f32 %v7568, %v7680
    %v7682 = vpop.f32.mrb[0].mxu0
    %v7683 = vadd.f32 %v7570, %v7682
    %v7684 = vpop.f32.mrb[0].mxu0
    %v7685 = vadd.f32 %v7572, %v7684
    %7686 = vmatprep.mubr.bf16.mxu0 %v1826
    %7687 = vmatmul.mubr.bf16.gmra.mrb[0].mxu0 %v1825
    %v7688 = vpop.f32.mrb[0].mxu0
    %v7689 = vadd.f32 %v7576, %v7688
    %v7690 = vpop.f32.mrb[0].mxu0
    %v7691 = vadd.f32 %v7578, %v7690
    %v7692 = vpop.f32.mrb[0].mxu0
    %v7693 = vadd.f32 %v7580, %v7692
    %v7694 = vpop.f32.mrb[0].mxu0
    %v7695 = vadd.f32 %v7582, %v7694
    %7696 = vmatprep.mubr.bf16.mxu0 %v1850
    %7697 = vmatmul.mubr.bf16.gmra.mrb[0].mxu0 %v1849
    %v7698 = vpop.f32.mrb[0].mxu0
    %v7699 = vadd.f32 %v7586, %v7698
    %v7700 = vpop.f32.mrb[0].mxu0
    %v7701 = vadd.f32 %v7588, %v7700
    %v7702 = vpop.f32.mrb[0].mxu0
    %v7703 = vadd.f32 %v7590, %v7702
    %v7704 = vpop.f32.mrb[0].mxu0
    %v7705 = vadd.f32 %v7592, %v7704
    %7706 = vdwg.mxu0
    %7707 = vmatprep.subr.bf16.mxu0 %v4622
    %7708 = vmatpush1.bf16.msra.mxu0 %v4621
    %7709 = vmatprep.subr.bf16.mxu0 %v4626
    %7710 = vmatpush1.bf16.msra.mxu0 %v4625
    %7711 = vmatprep.subr.bf16.mxu0 %v4630
    %7712 = vmatpush1.bf16.msra.mxu0 %v4629
    %7713 = vmatprep.subr.bf16.mxu0 %v4634
    %7714 = vmatpush1.bf16.msra.mxu0 %v4633
    %7715 = vmatprep.subr.bf16.mxu0 %v4638
    %7716 = vmatpush1.bf16.msra.mxu0 %v4637
    %7717 = vmatprep.subr.bf16.mxu0 %v4642
    %7718 = vmatpush1.bf16.msra.mxu0 %v4641
    %7719 = vmatprep.subr.bf16.mxu0 %v4646
    %7720 = vmatpush1.bf16.msra.mxu0 %v4645
    %7721 = vmatprep.subr.bf16.mxu0 %v4650
    %7722 = vmatpush1.bf16.msra.mxu0 %v4649
    %7723 = vmatprep.subr.bf16.mxu0 %v4654
    %7724 = vmatpush1.bf16.msra.mxu0 %v4653
    %7725 = vmatprep.subr.bf16.mxu0 %v4658
    %7726 = vmatpush1.bf16.msra.mxu0 %v4657
    %7727 = vmatprep.subr.bf16.mxu0 %v4662
    %7728 = vmatpush1.bf16.msra.mxu0 %v4661
    %7729 = vmatprep.subr.bf16.mxu0 %v4666
    %7730 = vmatpush1.bf16.msra.mxu0 %v4665
    %7731 = vmatprep.subr.bf16.mxu0 %v4670
    %7732 = vmatpush1.bf16.msra.mxu0 %v4669
    %7733 = vmatprep.subr.bf16.mxu0 %v4674
    %7734 = vmatpush1.bf16.msra.mxu0 %v4673
    %7735 = vmatprep.subr.bf16.mxu0 %v4678
    %7736 = vmatpush1.bf16.msra.mxu0 %v4677
    %7737 = vmatprep.subr.bf16.mxu0 %v4682
    %7738 = vmatpush1.bf16.msra.mxu0 %v4681
    %7739 = vmatprep.mubr.bf16.mxu0 %v1684
    %7740 = vmatmul.mubr.bf16.gmra.mrb[0].mxu0 %v1683
    %v7741 = vpop.f32.mrb[0].mxu0
    %v7742 = vadd.f32 %v7629, %v7741
    %v7743 = vpop.f32.mrb[0].mxu0
    %v7744 = vadd.f32 %v7631, %v7743
    %v7745 = vpop.f32.mrb[0].mxu0
    %v7746 = vadd.f32 %v7633, %v7745
    %v7747 = vpop.f32.mrb[0].mxu0
    %v7748 = vadd.f32 %v7635, %v7747
    %7749 = vmatprep.mubr.bf16.mxu0 %v1708
    %7750 = vmatmul.mubr.bf16.gmra.mrb[0].mxu0 %v1707
    %v7751 = vpop.f32.mrb[0].mxu0
    %v7752 = vadd.f32 %v7639, %v7751
    %v7753 = vpop.f32.mrb[0].mxu0
    %v7754 = vadd.f32 %v7641, %v7753
    %v7755 = vpop.f32.mrb[0].mxu0
    %v7756 = vadd.f32 %v7643, %v7755
    %v7757 = vpop.f32.mrb[0].mxu0
    %v7758 = vadd.f32 %v7645, %v7757
    %7759 = vmatprep.mubr.bf16.mxu0 %v1732
    %7760 = vmatmul.mubr.bf16.gmra.mrb[0].mxu0 %v1731
    %v7761 = vpop.f32.mrb[0].mxu0
    %v7762 = vadd.f32 %v7649, %v7761
    %v7763 = vpop.f32.mrb[0].mxu0
    %v7764 = vadd.f32 %v7651, %v7763
    %v7765 = vpop.f32.mrb[0].mxu0
    %v7766 = vadd.f32 %v7653, %v7765
    %v7767 = vpop.f32.mrb[0].mxu0
    %v7768 = vadd.f32 %v7655, %v7767
    %7769 = vmatprep.mubr.bf16.mxu0 %v1756
    %7770 = vmatmul.mubr.bf16.gmra.mrb[0].mxu0 %v1755
    %v7771 = vpop.f32.mrb[0].mxu0
    %v7772 = vadd.f32 %v7659, %v7771
    %v7773 = vpop.f32.mrb[0].mxu0
    %v7774 = vadd.f32 %v7661, %v7773
    %v7775 = vpop.f32.mrb[0].mxu0
    %v7776 = vadd.f32 %v7663, %v7775
    %v7777 = vpop.f32.mrb[0].mxu0
    %v7778 = vadd.f32 %v7665, %v7777
    %7779 = vmatprep.mubr.bf16.mxu0 %v1780
    %7780 = vmatmul.mubr.bf16.gmra.mrb[0].mxu0 %v1779
    %v7781 = vpop.f32.mrb[0].mxu0
    %v7782 = vadd.f32 %v7669, %v7781
    %v7783 = vpop.f32.mrb[0].mxu0
    %v7784 = vadd.f32 %v7671, %v7783
    %v7785 = vpop.f32.mrb[0].mxu0
    %v7786 = vadd.f32 %v7673, %v7785
    %v7787 = vpop.f32.mrb[0].mxu0
    %v7788 = vadd.f32 %v7675, %v7787
    %7789 = vmatprep.mubr.bf16.mxu0 %v1804
    %7790 = vmatmul.mubr.bf16.gmra.mrb[0].mxu0 %v1803
    %v7791 = vpop.f32.mrb[0].mxu0
    %v7792 = vadd.f32 %v7679, %v7791
    %v7793 = vpop.f32.mrb[0].mxu0
    %v7794 = vadd.f32 %v7681, %v7793
    %v7795 = vpop.f32.mrb[0].mxu0
    %v7796 = vadd.f32 %v7683, %v7795
    %v7797 = vpop.f32.mrb[0].mxu0
    %v7798 = vadd.f32 %v7685, %v7797
    %7799 = vmatprep.mubr.bf16.mxu0 %v1828
    %7800 = vmatmul.mubr.bf16.gmra.mrb[0].mxu0 %v1827
    %v7801 = vpop.f32.mrb[0].mxu0
    %v7802 = vadd.f32 %v7689, %v7801
    %v7803 = vpop.f32.mrb[0].mxu0
    %v7804 = vadd.f32 %v7691, %v7803
    %v7805 = vpop.f32.mrb[0].mxu0
    %v7806 = vadd.f32 %v7693, %v7805
    %v7807 = vpop.f32.mrb[0].mxu0
    %v7808 = vadd.f32 %v7695, %v7807
    %7809 = vmatprep.mubr.bf16.mxu0 %v1852
    %7810 = vmatmul.mubr.bf16.gmra.mrb[0].mxu0 %v1851
    %v7811 = vpop.f32.mrb[0].mxu0
    %v7812 = vadd.f32 %v7699, %v7811
    %v7813 = vpop.f32.mrb[0].mxu0
    %v7814 = vadd.f32 %v7701, %v7813
    %v7815 = vpop.f32.mrb[0].mxu0
    %v7816 = vadd.f32 %v7703, %v7815
    %v7817 = vpop.f32.mrb[0].mxu0
    %v7818 = vadd.f32 %v7705, %v7817
    %7819 = vdwg.mxu0
    %7820 = vmatprep.subr.bf16.mxu0 %v4686
    %7821 = vmatpush1.bf16.msra.mxu0 %v4685
    %7822 = vmatprep.subr.bf16.mxu0 %v4690
    %7823 = vmatpush1.bf16.msra.mxu0 %v4689
    %7824 = vmatprep.subr.bf16.mxu0 %v4694
    %7825 = vmatpush1.bf16.msra.mxu0 %v4693
    %7826 = vmatprep.subr.bf16.mxu0 %v4698
    %7827 = vmatpush1.bf16.msra.mxu0 %v4697
    %7828 = vmatprep.subr.bf16.mxu0 %v4702
    %7829 = vmatpush1.bf16.msra.mxu0 %v4701
    %7830 = vmatprep.subr.bf16.mxu0 %v4706
    %7831 = vmatpush1.bf16.msra.mxu0 %v4705
    %7832 = vmatprep.subr.bf16.mxu0 %v4710
    %7833 = vmatpush1.bf16.msra.mxu0 %v4709
    %7834 = vmatprep.subr.bf16.mxu0 %v4714
    %7835 = vmatpush1.bf16.msra.mxu0 %v4713
    %7836 = vmatprep.subr.bf16.mxu0 %v4718
    %7837 = vmatpush1.bf16.msra.mxu0 %v4717
    %7838 = vmatprep.subr.bf16.mxu0 %v4722
    %7839 = vmatpush1.bf16.msra.mxu0 %v4721
    %7840 = vmatprep.subr.bf16.mxu0 %v4726
    %7841 = vmatpush1.bf16.msra.mxu0 %v4725
    %7842 = vmatprep.subr.bf16.mxu0 %v4730
    %7843 = vmatpush1.bf16.msra.mxu0 %v4729
    %7844 = vmatprep.subr.bf16.mxu0 %v4734
    %7845 = vmatpush1.bf16.msra.mxu0 %v4733
    %7846 = vmatprep.subr.bf16.mxu0 %v4738
    %7847 = vmatpush1.bf16.msra.mxu0 %v4737
    %7848 = vmatprep.subr.bf16.mxu0 %v4742
    %7849 = vmatpush1.bf16.msra.mxu0 %v4741
    %7850 = vmatprep.subr.bf16.mxu0 %v4746
    %7851 = vmatpush1.bf16.msra.mxu0 %v4745
    %7852 = vmatprep.mubr.bf16.mxu0 %v1686
    %7853 = vmatmul.mubr.bf16.gmra.mrb[0].mxu0 %v1685
    %v7854 = vpop.f32.mrb[0].mxu0
    %v7855 = vadd.f32 %v7742, %v7854
    %v7856 = vpop.f32.mrb[0].mxu0
    %v7857 = vadd.f32 %v7744, %v7856
    %v7858 = vpop.f32.mrb[0].mxu0
    %v7859 = vadd.f32 %v7746, %v7858
    %v7860 = vpop.f32.mrb[0].mxu0
    %v7861 = vadd.f32 %v7748, %v7860
    %7862 = vmatprep.mubr.bf16.mxu0 %v1710
    %7863 = vmatmul.mubr.bf16.gmra.mrb[0].mxu0 %v1709
    %v7864 = vpop.f32.mrb[0].mxu0
    %v7865 = vadd.f32 %v7752, %v7864
    %v7866 = vpop.f32.mrb[0].mxu0
    %v7867 = vadd.f32 %v7754, %v7866
    %v7868 = vpop.f32.mrb[0].mxu0
    %v7869 = vadd.f32 %v7756, %v7868
    %v7870 = vpop.f32.mrb[0].mxu0
    %v7871 = vadd.f32 %v7758, %v7870
    %7872 = vmatprep.mubr.bf16.mxu0 %v1734
    %7873 = vmatmul.mubr.bf16.gmra.mrb[0].mxu0 %v1733
    %v7874 = vpop.f32.mrb[0].mxu0
    %v7875 = vadd.f32 %v7762, %v7874
    %v7876 = vpop.f32.mrb[0].mxu0
    %v7877 = vadd.f32 %v7764, %v7876
    %v7878 = vpop.f32.mrb[0].mxu0
    %v7879 = vadd.f32 %v7766, %v7878
    %v7880 = vpop.f32.mrb[0].mxu0
    %v7881 = vadd.f32 %v7768, %v7880
    %7882 = vmatprep.mubr.bf16.mxu0 %v1758
    %7883 = vmatmul.mubr.bf16.gmra.mrb[0].mxu0 %v1757
    %v7884 = vpop.f32.mrb[0].mxu0
    %v7885 = vadd.f32 %v7772, %v7884
    %v7886 = vpop.f32.mrb[0].mxu0
    %v7887 = vadd.f32 %v7774, %v7886
    %v7888 = vpop.f32.mrb[0].mxu0
    %v7889 = vadd.f32 %v7776, %v7888
    %v7890 = vpop.f32.mrb[0].mxu0
    %v7891 = vadd.f32 %v7778, %v7890
    %7892 = vmatprep.mubr.bf16.mxu0 %v1782
    %7893 = vmatmul.mubr.bf16.gmra.mrb[0].mxu0 %v1781
    %v7894 = vpop.f32.mrb[0].mxu0
    %v7895 = vadd.f32 %v7782, %v7894
    %v7896 = vpop.f32.mrb[0].mxu0
    %v7897 = vadd.f32 %v7784, %v7896
    %v7898 = vpop.f32.mrb[0].mxu0
    %v7899 = vadd.f32 %v7786, %v7898
    %v7900 = vpop.f32.mrb[0].mxu0
    %v7901 = vadd.f32 %v7788, %v7900
    %7902 = vmatprep.mubr.bf16.mxu0 %v1806
    %7903 = vmatmul.mubr.bf16.gmra.mrb[0].mxu0 %v1805
    %v7904 = vpop.f32.mrb[0].mxu0
    %v7905 = vadd.f32 %v7792, %v7904
    %v7906 = vpop.f32.mrb[0].mxu0
    %v7907 = vadd.f32 %v7794, %v7906
    %v7908 = vpop.f32.mrb[0].mxu0
    %v7909 = vadd.f32 %v7796, %v7908
    %v7910 = vpop.f32.mrb[0].mxu0
    %v7911 = vadd.f32 %v7798, %v7910
    %7912 = vmatprep.mubr.bf16.mxu0 %v1830
    %7913 = vmatmul.mubr.bf16.gmra.mrb[0].mxu0 %v1829
    %v7914 = vpop.f32.mrb[0].mxu0
    %v7915 = vadd.f32 %v7802, %v7914
    %v7916 = vpop.f32.mrb[0].mxu0
    %v7917 = vadd.f32 %v7804, %v7916
    %v7918 = vpop.f32.mrb[0].mxu0
    %v7919 = vadd.f32 %v7806, %v7918
    %v7920 = vpop.f32.mrb[0].mxu0
    %v7921 = vadd.f32 %v7808, %v7920
    %7922 = vmatprep.mubr.bf16.mxu0 %v1854
    %7923 = vmatmul.mubr.bf16.gmra.mrb[0].mxu0 %v1853
    %v7924 = vpop.f32.mrb[0].mxu0
    %v7925 = vadd.f32 %v7812, %v7924
    %v7926 = vpop.f32.mrb[0].mxu0
    %v7927 = vadd.f32 %v7814, %v7926
    %v7928 = vpop.f32.mrb[0].mxu0
    %v7929 = vadd.f32 %v7816, %v7928
    %v7930 = vpop.f32.mrb[0].mxu0
    %v7931 = vadd.f32 %v7818, %v7930
    %7932 = vdwg.mxu0
    %7933 = vmatprep.subr.bf16.mxu0 %v4750
    %7934 = vmatpush1.bf16.msra.mxu0 %v4749
    %7935 = vmatprep.subr.bf16.mxu0 %v4754
    %7936 = vmatpush1.bf16.msra.mxu0 %v4753
    %7937 = vmatprep.subr.bf16.mxu0 %v4758
    %7938 = vmatpush1.bf16.msra.mxu0 %v4757
    %7939 = vmatprep.subr.bf16.mxu0 %v4762
    %7940 = vmatpush1.bf16.msra.mxu0 %v4761
    %7941 = vmatprep.subr.bf16.mxu0 %v4766
    %7942 = vmatpush1.bf16.msra.mxu0 %v4765
    %7943 = vmatprep.subr.bf16.mxu0 %v4770
    %7944 = vmatpush1.bf16.msra.mxu0 %v4769
    %7945 = vmatprep.subr.bf16.mxu0 %v4774
    %7946 = vmatpush1.bf16.msra.mxu0 %v4773
    %7947 = vmatprep.subr.bf16.mxu0 %v4778
    %7948 = vmatpush1.bf16.msra.mxu0 %v4777
    %7949 = vmatprep.subr.bf16.mxu0 %v4782
    %7950 = vmatpush1.bf16.msra.mxu0 %v4781
    %7951 = vmatprep.subr.bf16.mxu0 %v4786
    %7952 = vmatpush1.bf16.msra.mxu0 %v4785
    %7953 = vmatprep.subr.bf16.mxu0 %v4790
    %7954 = vmatpush1.bf16.msra.mxu0 %v4789
    %7955 = vmatprep.subr.bf16.mxu0 %v4794
    %7956 = vmatpush1.bf16.msra.mxu0 %v4793
    %7957 = vmatprep.subr.bf16.mxu0 %v4798
    %7958 = vmatpush1.bf16.msra.mxu0 %v4797
    %7959 = vmatprep.subr.bf16.mxu0 %v4802
    %7960 = vmatpush1.bf16.msra.mxu0 %v4801
    %7961 = vmatprep.subr.bf16.mxu0 %v4806
    %7962 = vmatpush1.bf16.msra.mxu0 %v4805
    %7963 = vmatprep.subr.bf16.mxu0 %v4810
    %7964 = vmatpush1.bf16.msra.mxu0 %v4809
    %7965 = vmatprep.mubr.bf16.mxu0 %v1688
    %7966 = vmatmul.mubr.bf16.gmra.mrb[0].mxu0 %v1687
    %v7967 = vpop.f32.mrb[0].mxu0
    %v7968 = vadd.f32 %v7855, %v7967
    %v7969 = vpop.f32.mrb[0].mxu0
    %v7970 = vadd.f32 %v7857, %v7969
    %v7971 = vpop.f32.mrb[0].mxu0
    %v7972 = vadd.f32 %v7859, %v7971
    %v7973 = vpop.f32.mrb[0].mxu0
    %v7974 = vadd.f32 %v7861, %v7973
    %7975 = vmatprep.mubr.bf16.mxu0 %v1712
    %7976 = vmatmul.mubr.bf16.gmra.mrb[0].mxu0 %v1711
    %v7977 = vpop.f32.mrb[0].mxu0
    %v7978 = vadd.f32 %v7865, %v7977
    %v7979 = vpop.f32.mrb[0].mxu0
    %v7980 = vadd.f32 %v7867, %v7979
    %v7981 = vpop.f32.mrb[0].mxu0
    %v7982 = vadd.f32 %v7869, %v7981
    %v7983 = vpop.f32.mrb[0].mxu0
    %v7984 = vadd.f32 %v7871, %v7983
    %7985 = vmatprep.mubr.bf16.mxu0 %v1736
    %7986 = vmatmul.mubr.bf16.gmra.mrb[0].mxu0 %v1735
    %v7987 = vpop.f32.mrb[0].mxu0
    %v7988 = vadd.f32 %v7875, %v7987
    %v7989 = vpop.f32.mrb[0].mxu0
    %v7990 = vadd.f32 %v7877, %v7989
    %v7991 = vpop.f32.mrb[0].mxu0
    %v7992 = vadd.f32 %v7879, %v7991
    %v7993 = vpop.f32.mrb[0].mxu0
    %v7994 = vadd.f32 %v7881, %v7993
    %7995 = vmatprep.mubr.bf16.mxu0 %v1760
    %7996 = vmatmul.mubr.bf16.gmra.mrb[0].mxu0 %v1759
    %v7997 = vpop.f32.mrb[0].mxu0
    %v7998 = vadd.f32 %v7885, %v7997
    %v7999 = vpop.f32.mrb[0].mxu0
    %v8000 = vadd.f32 %v7887, %v7999
    %v8001 = vpop.f32.mrb[0].mxu0
    %v8002 = vadd.f32 %v7889, %v8001
    %v8003 = vpop.f32.mrb[0].mxu0
    %v8004 = vadd.f32 %v7891, %v8003
    %8005 = vmatprep.mubr.bf16.mxu0 %v1784
    %8006 = vmatmul.mubr.bf16.gmra.mrb[0].mxu0 %v1783
    %v8007 = vpop.f32.mrb[0].mxu0
    %v8008 = vadd.f32 %v7895, %v8007
    %v8009 = vpop.f32.mrb[0].mxu0
    %v8010 = vadd.f32 %v7897, %v8009
    %v8011 = vpop.f32.mrb[0].mxu0
    %v8012 = vadd.f32 %v7899, %v8011
    %v8013 = vpop.f32.mrb[0].mxu0
    %v8014 = vadd.f32 %v7901, %v8013
    %8015 = vmatprep.mubr.bf16.mxu0 %v1808
    %8016 = vmatmul.mubr.bf16.gmra.mrb[0].mxu0 %v1807
    %v8017 = vpop.f32.mrb[0].mxu0
    %v8018 = vadd.f32 %v7905, %v8017
    %v8019 = vpop.f32.mrb[0].mxu0
    %v8020 = vadd.f32 %v7907, %v8019
    %v8021 = vpop.f32.mrb[0].mxu0
    %v8022 = vadd.f32 %v7909, %v8021
    %v8023 = vpop.f32.mrb[0].mxu0
    %v8024 = vadd.f32 %v7911, %v8023
    %8025 = vmatprep.mubr.bf16.mxu0 %v1832
    %8026 = vmatmul.mubr.bf16.gmra.mrb[0].mxu0 %v1831
    %v8027 = vpop.f32.mrb[0].mxu0
    %v8028 = vadd.f32 %v7915, %v8027
    %v8029 = vpop.f32.mrb[0].mxu0
    %v8030 = vadd.f32 %v7917, %v8029
    %v8031 = vpop.f32.mrb[0].mxu0
    %v8032 = vadd.f32 %v7919, %v8031
    %v8033 = vpop.f32.mrb[0].mxu0
    %v8034 = vadd.f32 %v7921, %v8033
    %8035 = vmatprep.mubr.bf16.mxu0 %v1856
    %8036 = vmatmul.mubr.bf16.gmra.mrb[0].mxu0 %v1855
    %v8037 = vpop.f32.mrb[0].mxu0
    %v8038 = vadd.f32 %v7925, %v8037
    %v8039 = vpop.f32.mrb[0].mxu0
    %v8040 = vadd.f32 %v7927, %v8039
    %v8041 = vpop.f32.mrb[0].mxu0
    %v8042 = vadd.f32 %v7929, %v8041
    %v8043 = vpop.f32.mrb[0].mxu0
    %v8044 = vadd.f32 %v7931, %v8043
    %8045 = vdwg.mxu0
    %8046 = vmatprep.subr.bf16.mxu0 %v4814
    %8047 = vmatpush1.bf16.msra.mxu0 %v4813
    %8048 = vmatprep.subr.bf16.mxu0 %v4818
    %8049 = vmatpush1.bf16.msra.mxu0 %v4817
    %8050 = vmatprep.subr.bf16.mxu0 %v4822
    %8051 = vmatpush1.bf16.msra.mxu0 %v4821
    %8052 = vmatprep.subr.bf16.mxu0 %v4826
    %8053 = vmatpush1.bf16.msra.mxu0 %v4825
    %8054 = vmatprep.subr.bf16.mxu0 %v4830
    %8055 = vmatpush1.bf16.msra.mxu0 %v4829
    %8056 = vmatprep.subr.bf16.mxu0 %v4834
    %8057 = vmatpush1.bf16.msra.mxu0 %v4833
    %8058 = vmatprep.subr.bf16.mxu0 %v4838
    %8059 = vmatpush1.bf16.msra.mxu0 %v4837
    %8060 = vmatprep.subr.bf16.mxu0 %v4842
    %8061 = vmatpush1.bf16.msra.mxu0 %v4841
    %8062 = vmatprep.subr.bf16.mxu0 %v4846
    %8063 = vmatpush1.bf16.msra.mxu0 %v4845
    %8064 = vmatprep.subr.bf16.mxu0 %v4850
    %8065 = vmatpush1.bf16.msra.mxu0 %v4849
    %8066 = vmatprep.subr.bf16.mxu0 %v4854
    %8067 = vmatpush1.bf16.msra.mxu0 %v4853
    %8068 = vmatprep.subr.bf16.mxu0 %v4858
    %8069 = vmatpush1.bf16.msra.mxu0 %v4857
    %8070 = vmatprep.subr.bf16.mxu0 %v4862
    %8071 = vmatpush1.bf16.msra.mxu0 %v4861
    %8072 = vmatprep.subr.bf16.mxu0 %v4866
    %8073 = vmatpush1.bf16.msra.mxu0 %v4865
    %8074 = vmatprep.subr.bf16.mxu0 %v4870
    %8075 = vmatpush1.bf16.msra.mxu0 %v4869
    %8076 = vmatprep.subr.bf16.mxu0 %v4874
    %8077 = vmatpush1.bf16.msra.mxu0 %v4873
    %8078 = vmatprep.mubr.bf16.mxu0 %v1690
    %8079 = vmatmul.mubr.bf16.gmra.mrb[0].mxu0 %v1689
    %v8080 = vpop.f32.mrb[0].mxu0
    %v8081 = vadd.f32 %v7968, %v8080
    %v8082 = vpop.f32.mrb[0].mxu0
    %v8083 = vadd.f32 %v7970, %v8082
    %v8084 = vpop.f32.mrb[0].mxu0
    %v8085 = vadd.f32 %v7972, %v8084
    %v8086 = vpop.f32.mrb[0].mxu0
    %v8087 = vadd.f32 %v7974, %v8086
    %8088 = vmatprep.mubr.bf16.mxu0 %v1714
    %8089 = vmatmul.mubr.bf16.gmra.mrb[0].mxu0 %v1713
    %v8090 = vpop.f32.mrb[0].mxu0
    %v8091 = vadd.f32 %v7978, %v8090
    %v8092 = vpop.f32.mrb[0].mxu0
    %v8093 = vadd.f32 %v7980, %v8092
    %v8094 = vpop.f32.mrb[0].mxu0
    %v8095 = vadd.f32 %v7982, %v8094
    %v8096 = vpop.f32.mrb[0].mxu0
    %v8097 = vadd.f32 %v7984, %v8096
    %8098 = vmatprep.mubr.bf16.mxu0 %v1738
    %8099 = vmatmul.mubr.bf16.gmra.mrb[0].mxu0 %v1737
    %v8100 = vpop.f32.mrb[0].mxu0
    %v8101 = vadd.f32 %v7988, %v8100
    %v8102 = vpop.f32.mrb[0].mxu0
    %v8103 = vadd.f32 %v7990, %v8102
    %v8104 = vpop.f32.mrb[0].mxu0
    %v8105 = vadd.f32 %v7992, %v8104
    %v8106 = vpop.f32.mrb[0].mxu0
    %v8107 = vadd.f32 %v7994, %v8106
    %8108 = vmatprep.mubr.bf16.mxu0 %v1762
    %8109 = vmatmul.mubr.bf16.gmra.mrb[0].mxu0 %v1761
    %v8110 = vpop.f32.mrb[0].mxu0
    %v8111 = vadd.f32 %v7998, %v8110
    %v8112 = vpop.f32.mrb[0].mxu0
    %v8113 = vadd.f32 %v8000, %v8112
    %v8114 = vpop.f32.mrb[0].mxu0
    %v8115 = vadd.f32 %v8002, %v8114
    %v8116 = vpop.f32.mrb[0].mxu0
    %v8117 = vadd.f32 %v8004, %v8116
    %8118 = vmatprep.mubr.bf16.mxu0 %v1786
    %8119 = vmatmul.mubr.bf16.gmra.mrb[0].mxu0 %v1785
    %v8120 = vpop.f32.mrb[0].mxu0
    %v8121 = vadd.f32 %v8008, %v8120
    %v8122 = vpop.f32.mrb[0].mxu0
    %v8123 = vadd.f32 %v8010, %v8122
    %v8124 = vpop.f32.mrb[0].mxu0
    %v8125 = vadd.f32 %v8012, %v8124
    %v8126 = vpop.f32.mrb[0].mxu0
    %v8127 = vadd.f32 %v8014, %v8126
    %8128 = vmatprep.mubr.bf16.mxu0 %v1810
    %8129 = vmatmul.mubr.bf16.gmra.mrb[0].mxu0 %v1809
    %v8130 = vpop.f32.mrb[0].mxu0
    %v8131 = vadd.f32 %v8018, %v8130
    %v8132 = vpop.f32.mrb[0].mxu0
    %v8133 = vadd.f32 %v8020, %v8132
    %v8134 = vpop.f32.mrb[0].mxu0
    %v8135 = vadd.f32 %v8022, %v8134
    %v8136 = vpop.f32.mrb[0].mxu0
    %v8137 = vadd.f32 %v8024, %v8136
    %8138 = vmatprep.mubr.bf16.mxu0 %v1834
    %8139 = vmatmul.mubr.bf16.gmra.mrb[0].mxu0 %v1833
    %v8140 = vpop.f32.mrb[0].mxu0
    %v8141 = vadd.f32 %v8028, %v8140
    %v8142 = vpop.f32.mrb[0].mxu0
    %v8143 = vadd.f32 %v8030, %v8142
    %v8144 = vpop.f32.mrb[0].mxu0
    %v8145 = vadd.f32 %v8032, %v8144
    %v8146 = vpop.f32.mrb[0].mxu0
    %v8147 = vadd.f32 %v8034, %v8146
    %8148 = vmatprep.mubr.bf16.mxu0 %v1858
    %8149 = vmatmul.mubr.bf16.gmra.mrb[0].mxu0 %v1857
    %v8150 = vpop.f32.mrb[0].mxu0
    %v8151 = vadd.f32 %v8038, %v8150
    %v8152 = vpop.f32.mrb[0].mxu0
    %v8153 = vadd.f32 %v8040, %v8152
    %v8154 = vpop.f32.mrb[0].mxu0
    %v8155 = vadd.f32 %v8042, %v8154
    %v8156 = vpop.f32.mrb[0].mxu0
    %v8157 = vadd.f32 %v8044, %v8156
    %8158 = vdwg.mxu0
    %8159 = vmatprep.subr.bf16.mxu0 %v4878
    %8160 = vmatpush1.bf16.msra.mxu0 %v4877
    %8161 = vmatprep.subr.bf16.mxu0 %v4882
    %8162 = vmatpush1.bf16.msra.mxu0 %v4881
    %8163 = vmatprep.subr.bf16.mxu0 %v4886
    %8164 = vmatpush1.bf16.msra.mxu0 %v4885
    %8165 = vmatprep.subr.bf16.mxu0 %v4890
    %8166 = vmatpush1.bf16.msra.mxu0 %v4889
    %8167 = vmatprep.subr.bf16.mxu0 %v4894
    %8168 = vmatpush1.bf16.msra.mxu0 %v4893
    %8169 = vmatprep.subr.bf16.mxu0 %v4898
    %8170 = vmatpush1.bf16.msra.mxu0 %v4897
    %8171 = vmatprep.subr.bf16.mxu0 %v4902
    %8172 = vmatpush1.bf16.msra.mxu0 %v4901
    %8173 = vmatprep.subr.bf16.mxu0 %v4906
    %8174 = vmatpush1.bf16.msra.mxu0 %v4905
    %8175 = vmatprep.subr.bf16.mxu0 %v4910
    %8176 = vmatpush1.bf16.msra.mxu0 %v4909
    %8177 = vmatprep.subr.bf16.mxu0 %v4914
    %8178 = vmatpush1.bf16.msra.mxu0 %v4913
    %8179 = vmatprep.subr.bf16.mxu0 %v4918
    %8180 = vmatpush1.bf16.msra.mxu0 %v4917
    %8181 = vmatprep.subr.bf16.mxu0 %v4922
    %8182 = vmatpush1.bf16.msra.mxu0 %v4921
    %8183 = vmatprep.subr.bf16.mxu0 %v4926
    %8184 = vmatpush1.bf16.msra.mxu0 %v4925
    %8185 = vmatprep.subr.bf16.mxu0 %v4930
    %8186 = vmatpush1.bf16.msra.mxu0 %v4929
    %8187 = vmatprep.subr.bf16.mxu0 %v4934
    %8188 = vmatpush1.bf16.msra.mxu0 %v4933
    %8189 = vmatprep.subr.bf16.mxu0 %v4938
    %8190 = vmatpush1.bf16.msra.mxu0 %v4937
    %8191 = vmatprep.mubr.bf16.mxu0 %v1692
    %8192 = vmatmul.mubr.bf16.gmra.mrb[0].mxu0 %v1691
    %v8193 = vpop.f32.mrb[0].mxu0
    %v8194 = vadd.f32 %v8081, %v8193
    %v8195 = vpop.f32.mrb[0].mxu0
    %v8196 = vadd.f32 %v8083, %v8195
    %v8197 = vpop.f32.mrb[0].mxu0
    %v8198 = vadd.f32 %v8085, %v8197
    %v8199 = vpop.f32.mrb[0].mxu0
    %v8200 = vadd.f32 %v8087, %v8199
    %8201 = vmatprep.mubr.bf16.mxu0 %v1716
    %8202 = vmatmul.mubr.bf16.gmra.mrb[0].mxu0 %v1715
    %v8203 = vpop.f32.mrb[0].mxu0
    %v8204 = vadd.f32 %v8091, %v8203
    %v8205 = vpop.f32.mrb[0].mxu0
    %v8206 = vadd.f32 %v8093, %v8205
    %v8207 = vpop.f32.mrb[0].mxu0
    %v8208 = vadd.f32 %v8095, %v8207
    %v8209 = vpop.f32.mrb[0].mxu0
    %v8210 = vadd.f32 %v8097, %v8209
    %8211 = vmatprep.mubr.bf16.mxu0 %v1740
    %8212 = vmatmul.mubr.bf16.gmra.mrb[0].mxu0 %v1739
    %v8213 = vpop.f32.mrb[0].mxu0
    %v8214 = vadd.f32 %v8101, %v8213
    %v8215 = vpop.f32.mrb[0].mxu0
    %v8216 = vadd.f32 %v8103, %v8215
    %v8217 = vpop.f32.mrb[0].mxu0
    %v8218 = vadd.f32 %v8105, %v8217
    %v8219 = vpop.f32.mrb[0].mxu0
    %v8220 = vadd.f32 %v8107, %v8219
    %8221 = vmatprep.mubr.bf16.mxu0 %v1764
    %8222 = vmatmul.mubr.bf16.gmra.mrb[0].mxu0 %v1763
    %v8223 = vpop.f32.mrb[0].mxu0
    %v8224 = vadd.f32 %v8111, %v8223
    %v8225 = vpop.f32.mrb[0].mxu0
    %v8226 = vadd.f32 %v8113, %v8225
    %v8227 = vpop.f32.mrb[0].mxu0
    %v8228 = vadd.f32 %v8115, %v8227
    %v8229 = vpop.f32.mrb[0].mxu0
    %v8230 = vadd.f32 %v8117, %v8229
    %8231 = vmatprep.mubr.bf16.mxu0 %v1788
    %8232 = vmatmul.mubr.bf16.gmra.mrb[0].mxu0 %v1787
    %v8233 = vpop.f32.mrb[0].mxu0
    %v8234 = vadd.f32 %v8121, %v8233
    %v8235 = vpop.f32.mrb[0].mxu0
    %v8236 = vadd.f32 %v8123, %v8235
    %v8237 = vpop.f32.mrb[0].mxu0
    %v8238 = vadd.f32 %v8125, %v8237
    %v8239 = vpop.f32.mrb[0].mxu0
    %v8240 = vadd.f32 %v8127, %v8239
    %8241 = vmatprep.mubr.bf16.mxu0 %v1812
    %8242 = vmatmul.mubr.bf16.gmra.mrb[0].mxu0 %v1811
    %v8243 = vpop.f32.mrb[0].mxu0
    %v8244 = vadd.f32 %v8131, %v8243
    %v8245 = vpop.f32.mrb[0].mxu0
    %v8246 = vadd.f32 %v8133, %v8245
    %v8247 = vpop.f32.mrb[0].mxu0
    %v8248 = vadd.f32 %v8135, %v8247
    %v8249 = vpop.f32.mrb[0].mxu0
    %v8250 = vadd.f32 %v8137, %v8249
    %8251 = vmatprep.mubr.bf16.mxu0 %v1836
    %8252 = vmatmul.mubr.bf16.gmra.mrb[0].mxu0 %v1835
    %v8253 = vpop.f32.mrb[0].mxu0
    %v8254 = vadd.f32 %v8141, %v8253
    %v8255 = vpop.f32.mrb[0].mxu0
    %v8256 = vadd.f32 %v8143, %v8255
    %v8257 = vpop.f32.mrb[0].mxu0
    %v8258 = vadd.f32 %v8145, %v8257
    %v8259 = vpop.f32.mrb[0].mxu0
    %v8260 = vadd.f32 %v8147, %v8259
    %8261 = vmatprep.mubr.bf16.mxu0 %v1860
    %8262 = vmatmul.mubr.bf16.gmra.mrb[0].mxu0 %v1859
    %v8263 = vpop.f32.mrb[0].mxu0
    %v8264 = vadd.f32 %v8151, %v8263
    %v8265 = vpop.f32.mrb[0].mxu0
    %v8266 = vadd.f32 %v8153, %v8265
    %v8267 = vpop.f32.mrb[0].mxu0
    %v8268 = vadd.f32 %v8155, %v8267
    %v8269 = vpop.f32.mrb[0].mxu0
    %v8270 = vadd.f32 %v8157, %v8269
    %8271 = vdwg.mxu0
    %8272 = vmatprep.subr.bf16.mxu0 %v4942
    %8273 = vmatpush1.bf16.msra.mxu0 %v4941
    %8274 = vmatprep.subr.bf16.mxu0 %v4946
    %8275 = vmatpush1.bf16.msra.mxu0 %v4945
    %8276 = vmatprep.subr.bf16.mxu0 %v4950
    %8277 = vmatpush1.bf16.msra.mxu0 %v4949
    %8278 = vmatprep.subr.bf16.mxu0 %v4954
    %8279 = vmatpush1.bf16.msra.mxu0 %v4953
    %8280 = vmatprep.subr.bf16.mxu0 %v4958
    %8281 = vmatpush1.bf16.msra.mxu0 %v4957
    %8282 = vmatprep.subr.bf16.mxu0 %v4962
    %8283 = vmatpush1.bf16.msra.mxu0 %v4961
    %8284 = vmatprep.subr.bf16.mxu0 %v4966
    %8285 = vmatpush1.bf16.msra.mxu0 %v4965
    %8286 = vmatprep.subr.bf16.mxu0 %v4970
    %8287 = vmatpush1.bf16.msra.mxu0 %v4969
    %8288 = vmatprep.subr.bf16.mxu0 %v4974
    %8289 = vmatpush1.bf16.msra.mxu0 %v4973
    %8290 = vmatprep.subr.bf16.mxu0 %v4978
    %8291 = vmatpush1.bf16.msra.mxu0 %v4977
    %8292 = vmatprep.subr.bf16.mxu0 %v4982
    %8293 = vmatpush1.bf16.msra.mxu0 %v4981
    %8294 = vmatprep.subr.bf16.mxu0 %v4986
    %8295 = vmatpush1.bf16.msra.mxu0 %v4985
    %8296 = vmatprep.subr.bf16.mxu0 %v4990
    %8297 = vmatpush1.bf16.msra.mxu0 %v4989
    %8298 = vmatprep.subr.bf16.mxu0 %v4994
    %8299 = vmatpush1.bf16.msra.mxu0 %v4993
    %8300 = vmatprep.subr.bf16.mxu0 %v4998
    %8301 = vmatpush1.bf16.msra.mxu0 %v4997
    %8302 = vmatprep.subr.bf16.mxu0 %v5002
    %8303 = vmatpush1.bf16.msra.mxu0 %v5001
    %8304 = vmatprep.mubr.bf16.mxu0 %v1694
    %8305 = vmatmul.mubr.bf16.gmra.mrb[0].mxu0 %v1693
    %v8306 = vpop.f32.mrb[0].mxu0
    %v8307 = vadd.f32 %v8194, %v8306
    %v8308 = vpop.f32.mrb[0].mxu0
    %v8309 = vadd.f32 %v8196, %v8308
    %v8310 = vpop.f32.mrb[0].mxu0
    %v8311 = vadd.f32 %v8198, %v8310
    %v8312 = vpop.f32.mrb[0].mxu0
    %v8313 = vadd.f32 %v8200, %v8312
    %8314 = vmatprep.mubr.bf16.mxu0 %v1718
    %8315 = vmatmul.mubr.bf16.gmra.mrb[0].mxu0 %v1717
    %v8316 = vpop.f32.mrb[0].mxu0
    %v8317 = vadd.f32 %v8204, %v8316
    %v8318 = vpop.f32.mrb[0].mxu0
    %v8319 = vadd.f32 %v8206, %v8318
    %v8320 = vpop.f32.mrb[0].mxu0
    %v8321 = vadd.f32 %v8208, %v8320
    %v8322 = vpop.f32.mrb[0].mxu0
    %v8323 = vadd.f32 %v8210, %v8322
    %8324 = vmatprep.mubr.bf16.mxu0 %v1742
    %8325 = vmatmul.mubr.bf16.gmra.mrb[0].mxu0 %v1741
    %v8326 = vpop.f32.mrb[0].mxu0
    %v8327 = vadd.f32 %v8214, %v8326
    %v8328 = vpop.f32.mrb[0].mxu0
    %v8329 = vadd.f32 %v8216, %v8328
    %v8330 = vpop.f32.mrb[0].mxu0
    %v8331 = vadd.f32 %v8218, %v8330
    %v8332 = vpop.f32.mrb[0].mxu0
    %v8333 = vadd.f32 %v8220, %v8332
    %8334 = vmatprep.mubr.bf16.mxu0 %v1766
    %8335 = vmatmul.mubr.bf16.gmra.mrb[0].mxu0 %v1765
    %v8336 = vpop.f32.mrb[0].mxu0
    %v8337 = vadd.f32 %v8224, %v8336
    %v8338 = vpop.f32.mrb[0].mxu0
    %v8339 = vadd.f32 %v8226, %v8338
    %v8340 = vpop.f32.mrb[0].mxu0
    %v8341 = vadd.f32 %v8228, %v8340
    %v8342 = vpop.f32.mrb[0].mxu0
    %v8343 = vadd.f32 %v8230, %v8342
    %8344 = vmatprep.mubr.bf16.mxu0 %v1790
    %8345 = vmatmul.mubr.bf16.gmra.mrb[0].mxu0 %v1789
    %v8346 = vpop.f32.mrb[0].mxu0
    %v8347 = vadd.f32 %v8234, %v8346
    %v8348 = vpop.f32.mrb[0].mxu0
    %v8349 = vadd.f32 %v8236, %v8348
    %v8350 = vpop.f32.mrb[0].mxu0
    %v8351 = vadd.f32 %v8238, %v8350
    %v8352 = vpop.f32.mrb[0].mxu0
    %v8353 = vadd.f32 %v8240, %v8352
    %8354 = vmatprep.mubr.bf16.mxu0 %v1814
    %8355 = vmatmul.mubr.bf16.gmra.mrb[0].mxu0 %v1813
    %v8356 = vpop.f32.mrb[0].mxu0
    %v8357 = vadd.f32 %v8244, %v8356
    %v8358 = vpop.f32.mrb[0].mxu0
    %v8359 = vadd.f32 %v8246, %v8358
    %v8360 = vpop.f32.mrb[0].mxu0
    %v8361 = vadd.f32 %v8248, %v8360
    %v8362 = vpop.f32.mrb[0].mxu0
    %v8363 = vadd.f32 %v8250, %v8362
    %8364 = vmatprep.mubr.bf16.mxu0 %v1838
    %8365 = vmatmul.mubr.bf16.gmra.mrb[0].mxu0 %v1837
    %v8366 = vpop.f32.mrb[0].mxu0
    %v8367 = vadd.f32 %v8254, %v8366
    %v8368 = vpop.f32.mrb[0].mxu0
    %v8369 = vadd.f32 %v8256, %v8368
    %v8370 = vpop.f32.mrb[0].mxu0
    %v8371 = vadd.f32 %v8258, %v8370
    %v8372 = vpop.f32.mrb[0].mxu0
    %v8373 = vadd.f32 %v8260, %v8372
    %8374 = vmatprep.mubr.bf16.mxu0 %v1862
    %8375 = vmatmul.mubr.bf16.gmra.mrb[0].mxu0 %v1861
    %v8376 = vpop.f32.mrb[0].mxu0
    %v8377 = vadd.f32 %v8264, %v8376
    %v8378 = vpop.f32.mrb[0].mxu0
    %v8379 = vadd.f32 %v8266, %v8378
    %v8380 = vpop.f32.mrb[0].mxu0
    %v8381 = vadd.f32 %v8268, %v8380
    %v8382 = vpop.f32.mrb[0].mxu0
    %v8383 = vadd.f32 %v8270, %v8382
    %8384 = vdwg.mxu0
    %8385 = vmatprep.subr.bf16.mxu0 %v5006
    %8386 = vmatpush1.bf16.msra.mxu0 %v5005
    %8387 = vmatprep.subr.bf16.mxu0 %v5010
    %8388 = vmatpush1.bf16.msra.mxu0 %v5009
    %8389 = vmatprep.subr.bf16.mxu0 %v5014
    %8390 = vmatpush1.bf16.msra.mxu0 %v5013
    %8391 = vmatprep.subr.bf16.mxu0 %v5018
    %8392 = vmatpush1.bf16.msra.mxu0 %v5017
    %8393 = vmatprep.subr.bf16.mxu0 %v5022
    %8394 = vmatpush1.bf16.msra.mxu0 %v5021
    %8395 = vmatprep.subr.bf16.mxu0 %v5026
    %8396 = vmatpush1.bf16.msra.mxu0 %v5025
    %8397 = vmatprep.subr.bf16.mxu0 %v5030
    %8398 = vmatpush1.bf16.msra.mxu0 %v5029
    %8399 = vmatprep.subr.bf16.mxu0 %v5034
    %8400 = vmatpush1.bf16.msra.mxu0 %v5033
    %8401 = vmatprep.subr.bf16.mxu0 %v5038
    %8402 = vmatpush1.bf16.msra.mxu0 %v5037
    %8403 = vmatprep.subr.bf16.mxu0 %v5042
    %8404 = vmatpush1.bf16.msra.mxu0 %v5041
    %8405 = vmatprep.subr.bf16.mxu0 %v5046
    %8406 = vmatpush1.bf16.msra.mxu0 %v5045
    %8407 = vmatprep.subr.bf16.mxu0 %v5050
    %8408 = vmatpush1.bf16.msra.mxu0 %v5049
    %8409 = vmatprep.subr.bf16.mxu0 %v5054
    %8410 = vmatpush1.bf16.msra.mxu0 %v5053
    %8411 = vmatprep.subr.bf16.mxu0 %v5058
    %8412 = vmatpush1.bf16.msra.mxu0 %v5057
    %8413 = vmatprep.subr.bf16.mxu0 %v5062
    %8414 = vmatpush1.bf16.msra.mxu0 %v5061
    %8415 = vmatprep.subr.bf16.mxu0 %v5066
    %8416 = vmatpush1.bf16.msra.mxu0 %v5065
    %8417 = vmatprep.mubr.bf16.mxu0 %v1696
    %8418 = vmatmul.mubr.bf16.gmra.mrb[0].mxu0 %v1695
    %v8419 = vpop.f32.mrb[0].mxu0
    %v8420 = vadd.f32 %v8307, %v8419
    %v8421 = vpop.f32.mrb[0].mxu0
    %v8422 = vadd.f32 %v8309, %v8421
    %v8423 = vpop.f32.mrb[0].mxu0
    %v8424 = vadd.f32 %v8311, %v8423
    %v8425 = vpop.f32.mrb[0].mxu0
    %v8426 = vadd.f32 %v8313, %v8425
    %8427 = vmatprep.mubr.bf16.mxu0 %v1720
    %8428 = vmatmul.mubr.bf16.gmra.mrb[0].mxu0 %v1719
    %v8429 = vpop.f32.mrb[0].mxu0
    %v8430 = vadd.f32 %v8317, %v8429
    %v8431 = vpop.f32.mrb[0].mxu0
    %v8432 = vadd.f32 %v8319, %v8431
    %v8433 = vpop.f32.mrb[0].mxu0
    %v8434 = vadd.f32 %v8321, %v8433
    %v8435 = vpop.f32.mrb[0].mxu0
    %v8436 = vadd.f32 %v8323, %v8435
    %8437 = vmatprep.mubr.bf16.mxu0 %v1744
    %8438 = vmatmul.mubr.bf16.gmra.mrb[0].mxu0 %v1743
    %v8439 = vpop.f32.mrb[0].mxu0
    %v8440 = vadd.f32 %v8327, %v8439
    %v8441 = vpop.f32.mrb[0].mxu0
    %v8442 = vadd.f32 %v8329, %v8441
    %v8443 = vpop.f32.mrb[0].mxu0
    %v8444 = vadd.f32 %v8331, %v8443
    %v8445 = vpop.f32.mrb[0].mxu0
    %v8446 = vadd.f32 %v8333, %v8445
    %8447 = vmatprep.mubr.bf16.mxu0 %v1768
    %8448 = vmatmul.mubr.bf16.gmra.mrb[0].mxu0 %v1767
    %v8449 = vpop.f32.mrb[0].mxu0
    %v8450 = vadd.f32 %v8337, %v8449
    %v8451 = vpop.f32.mrb[0].mxu0
    %v8452 = vadd.f32 %v8339, %v8451
    %v8453 = vpop.f32.mrb[0].mxu0
    %v8454 = vadd.f32 %v8341, %v8453
    %v8455 = vpop.f32.mrb[0].mxu0
    %v8456 = vadd.f32 %v8343, %v8455
    %8457 = vmatprep.mubr.bf16.mxu0 %v1792
    %8458 = vmatmul.mubr.bf16.gmra.mrb[0].mxu0 %v1791
    %v8459 = vpop.f32.mrb[0].mxu0
    %v8460 = vadd.f32 %v8347, %v8459
    %v8461 = vpop.f32.mrb[0].mxu0
    %v8462 = vadd.f32 %v8349, %v8461
    %v8463 = vpop.f32.mrb[0].mxu0
    %v8464 = vadd.f32 %v8351, %v8463
    %v8465 = vpop.f32.mrb[0].mxu0
    %v8466 = vadd.f32 %v8353, %v8465
    %8467 = vmatprep.mubr.bf16.mxu0 %v1816
    %8468 = vmatmul.mubr.bf16.gmra.mrb[0].mxu0 %v1815
    %v8469 = vpop.f32.mrb[0].mxu0
    %v8470 = vadd.f32 %v8357, %v8469
    %v8471 = vpop.f32.mrb[0].mxu0
    %v8472 = vadd.f32 %v8359, %v8471
    %v8473 = vpop.f32.mrb[0].mxu0
    %v8474 = vadd.f32 %v8361, %v8473
    %v8475 = vpop.f32.mrb[0].mxu0
    %v8476 = vadd.f32 %v8363, %v8475
    %8477 = vmatprep.mubr.bf16.mxu0 %v1840
    %8478 = vmatmul.mubr.bf16.gmra.mrb[0].mxu0 %v1839
    %v8479 = vpop.f32.mrb[0].mxu0
    %v8480 = vadd.f32 %v8367, %v8479
    %v8481 = vpop.f32.mrb[0].mxu0
    %v8482 = vadd.f32 %v8369, %v8481
    %v8483 = vpop.f32.mrb[0].mxu0
    %v8484 = vadd.f32 %v8371, %v8483
    %v8485 = vpop.f32.mrb[0].mxu0
    %v8486 = vadd.f32 %v8373, %v8485
    %8487 = vmatprep.mubr.bf16.mxu0 %v1864
    %8488 = vmatmul.mubr.bf16.gmra.mrb[0].mxu0 %v1863
    %v8489 = vpop.f32.mrb[0].mxu0
    %v8490 = vadd.f32 %v8377, %v8489
    %v8491 = vpop.f32.mrb[0].mxu0
    %v8492 = vadd.f32 %v8379, %v8491
    %v8493 = vpop.f32.mrb[0].mxu0
    %v8494 = vadd.f32 %v8381, %v8493
    %v8495 = vpop.f32.mrb[0].mxu0
    %v8496 = vadd.f32 %v8383, %v8495
    %8497 = vdwg.mxu0
    %8498 = vmatprep.subr.bf16.mxu0 %v5070
    %8499 = vmatpush1.bf16.msra.mxu0 %v5069
    %8500 = vmatprep.subr.bf16.mxu0 %v5074
    %8501 = vmatpush1.bf16.msra.mxu0 %v5073
    %8502 = vmatprep.subr.bf16.mxu0 %v5078
    %8503 = vmatpush1.bf16.msra.mxu0 %v5077
    %8504 = vmatprep.subr.bf16.mxu0 %v5082
    %8505 = vmatpush1.bf16.msra.mxu0 %v5081
    %8506 = vmatprep.subr.bf16.mxu0 %v5086
    %8507 = vmatpush1.bf16.msra.mxu0 %v5085
    %8508 = vmatprep.subr.bf16.mxu0 %v5090
    %8509 = vmatpush1.bf16.msra.mxu0 %v5089
    %8510 = vmatprep.subr.bf16.mxu0 %v5094
    %8511 = vmatpush1.bf16.msra.mxu0 %v5093
    %8512 = vmatprep.subr.bf16.mxu0 %v5098
    %8513 = vmatpush1.bf16.msra.mxu0 %v5097
    %8514 = vmatprep.subr.bf16.mxu0 %v5102
    %8515 = vmatpush1.bf16.msra.mxu0 %v5101
    %8516 = vmatprep.subr.bf16.mxu0 %v5106
    %8517 = vmatpush1.bf16.msra.mxu0 %v5105
    %8518 = vmatprep.subr.bf16.mxu0 %v5110
    %8519 = vmatpush1.bf16.msra.mxu0 %v5109
    %8520 = vmatprep.subr.bf16.mxu0 %v5114
    %8521 = vmatpush1.bf16.msra.mxu0 %v5113
    %8522 = vmatprep.subr.bf16.mxu0 %v5118
    %8523 = vmatpush1.bf16.msra.mxu0 %v5117
    %8524 = vmatprep.subr.bf16.mxu0 %v5122
    %8525 = vmatpush1.bf16.msra.mxu0 %v5121
    %8526 = vmatprep.subr.bf16.mxu0 %v5126
    %8527 = vmatpush1.bf16.msra.mxu0 %v5125
    %8528 = vmatprep.subr.bf16.mxu0 %v5130
    %8529 = vmatpush1.bf16.msra.mxu0 %v5129
    %8530 = vmatprep.mubr.bf16.mxu0 %v1698
    %8531 = vmatmul.mubr.bf16.gmra.mrb[0].mxu0 %v1697
    %v8532 = vpop.f32.mrb[0].mxu0
    %v8533 = vadd.f32 %v8420, %v8532
    %v8534 = vpop.f32.mrb[0].mxu0
    %v8535 = vadd.f32 %v8422, %v8534
    %v8536 = vpop.f32.mrb[0].mxu0
    %v8537 = vadd.f32 %v8424, %v8536
    %v8538 = vpop.f32.mrb[0].mxu0
    %v8539 = vadd.f32 %v8426, %v8538
    %8540 = vmatprep.mubr.bf16.mxu0 %v1722
    %8541 = vmatmul.mubr.bf16.gmra.mrb[0].mxu0 %v1721
    %v8542 = vpop.f32.mrb[0].mxu0
    %v8543 = vadd.f32 %v8430, %v8542
    %v8544 = vpop.f32.mrb[0].mxu0
    %v8545 = vadd.f32 %v8432, %v8544
    %v8546 = vpop.f32.mrb[0].mxu0
    %v8547 = vadd.f32 %v8434, %v8546
    %v8548 = vpop.f32.mrb[0].mxu0
    %v8549 = vadd.f32 %v8436, %v8548
    %8550 = vmatprep.mubr.bf16.mxu0 %v1746
    %8551 = vmatmul.mubr.bf16.gmra.mrb[0].mxu0 %v1745
    %v8552 = vpop.f32.mrb[0].mxu0
    %v8553 = vadd.f32 %v8440, %v8552
    %v8554 = vpop.f32.mrb[0].mxu0
    %v8555 = vadd.f32 %v8442, %v8554
    %v8556 = vpop.f32.mrb[0].mxu0
    %v8557 = vadd.f32 %v8444, %v8556
    %v8558 = vpop.f32.mrb[0].mxu0
    %v8559 = vadd.f32 %v8446, %v8558
    %8560 = vmatprep.mubr.bf16.mxu0 %v1770
    %8561 = vmatmul.mubr.bf16.gmra.mrb[0].mxu0 %v1769
    %v8562 = vpop.f32.mrb[0].mxu0
    %v8563 = vadd.f32 %v8450, %v8562
    %v8564 = vpop.f32.mrb[0].mxu0
    %v8565 = vadd.f32 %v8452, %v8564
    %v8566 = vpop.f32.mrb[0].mxu0
    %v8567 = vadd.f32 %v8454, %v8566
    %v8568 = vpop.f32.mrb[0].mxu0
    %v8569 = vadd.f32 %v8456, %v8568
    %8570 = vmatprep.mubr.bf16.mxu0 %v1794
    %8571 = vmatmul.mubr.bf16.gmra.mrb[0].mxu0 %v1793
    %v8572 = vpop.f32.mrb[0].mxu0
    %v8573 = vadd.f32 %v8460, %v8572
    %v8574 = vpop.f32.mrb[0].mxu0
    %v8575 = vadd.f32 %v8462, %v8574
    %v8576 = vpop.f32.mrb[0].mxu0
    %v8577 = vadd.f32 %v8464, %v8576
    %v8578 = vpop.f32.mrb[0].mxu0
    %v8579 = vadd.f32 %v8466, %v8578
    %8580 = vmatprep.mubr.bf16.mxu0 %v1818
    %8581 = vmatmul.mubr.bf16.gmra.mrb[0].mxu0 %v1817
    %v8582 = vpop.f32.mrb[0].mxu0
    %v8583 = vadd.f32 %v8470, %v8582
    %v8584 = vpop.f32.mrb[0].mxu0
    %v8585 = vadd.f32 %v8472, %v8584
    %v8586 = vpop.f32.mrb[0].mxu0
    %v8587 = vadd.f32 %v8474, %v8586
    %v8588 = vpop.f32.mrb[0].mxu0
    %v8589 = vadd.f32 %v8476, %v8588
    %8590 = vmatprep.mubr.bf16.mxu0 %v1842
    %8591 = vmatmul.mubr.bf16.gmra.mrb[0].mxu0 %v1841
    %v8592 = vpop.f32.mrb[0].mxu0
    %v8593 = vadd.f32 %v8480, %v8592
    %v8594 = vpop.f32.mrb[0].mxu0
    %v8595 = vadd.f32 %v8482, %v8594
    %v8596 = vpop.f32.mrb[0].mxu0
    %v8597 = vadd.f32 %v8484, %v8596
    %v8598 = vpop.f32.mrb[0].mxu0
    %v8599 = vadd.f32 %v8486, %v8598
    %8600 = vmatprep.mubr.bf16.mxu0 %v1866
    %8601 = vmatmul.mubr.bf16.gmra.mrb[0].mxu0 %v1865
    %v8602 = vpop.f32.mrb[0].mxu0
    %v8603 = vadd.f32 %v8490, %v8602
    %v8604 = vpop.f32.mrb[0].mxu0
    %v8605 = vadd.f32 %v8492, %v8604
    %v8606 = vpop.f32.mrb[0].mxu0
    %v8607 = vadd.f32 %v8494, %v8606
    %v8608 = vpop.f32.mrb[0].mxu0
    %v8609 = vadd.f32 %v8496, %v8608
    %8610 = vdwg.mxu0
    %v8611 = vmax.f32 %v7177, 0.0
    %v8612 = vmax.f32 %v7179, 0.0
    %v8613 = vmax.f32 %v8533, 0.0
    %v8614 = vmax.f32 %v8535, 0.0
    %v8615 = vmax.f32 %v7181, 0.0
    %v8616 = vmax.f32 %v7183, 0.0
    %v8617 = vmax.f32 %v8537, 0.0
    %v8618 = vmax.f32 %v8539, 0.0
    %v8619 = vmax.f32 %v7187, 0.0
    %v8620 = vmax.f32 %v7189, 0.0
    %v8621 = vmax.f32 %v8543, 0.0
    %v8622 = vmax.f32 %v8545, 0.0
    %v8623 = vmax.f32 %v7191, 0.0
    %v8624 = vmax.f32 %v7193, 0.0
    %v8625 = vmax.f32 %v8547, 0.0
    %v8626 = vmax.f32 %v8549, 0.0
    %v8627 = vmax.f32 %v7197, 0.0
    %v8628 = vmax.f32 %v7199, 0.0
    %v8629 = vmax.f32 %v8553, 0.0
    %v8630 = vmax.f32 %v8555, 0.0
    %v8631 = vmax.f32 %v7201, 0.0
    %v8632 = vmax.f32 %v7203, 0.0
    %v8633 = vmax.f32 %v8557, 0.0
    %v8634 = vmax.f32 %v8559, 0.0
    %v8635 = vmax.f32 %v7207, 0.0
    %v8636 = vmax.f32 %v7209, 0.0
    %v8637 = vmax.f32 %v8563, 0.0
    %v8638 = vmax.f32 %v8565, 0.0
    %v8639 = vmax.f32 %v7211, 0.0
    %v8640 = vmax.f32 %v7213, 0.0
    %v8641 = vmax.f32 %v8567, 0.0
    %v8642 = vmax.f32 %v8569, 0.0
    %v8643 = vmax.f32 %v7217, 0.0
    %v8644 = vmax.f32 %v7219, 0.0
    %v8645 = vmax.f32 %v8573, 0.0
    %v8646 = vmax.f32 %v8575, 0.0
    %v8647 = vmax.f32 %v7221, 0.0
    %v8648 = vmax.f32 %v7223, 0.0
    %v8649 = vmax.f32 %v8577, 0.0
    %v8650 = vmax.f32 %v8579, 0.0
    %v8651 = vmax.f32 %v7227, 0.0
    %v8652 = vmax.f32 %v7229, 0.0
    %v8653 = vmax.f32 %v8583, 0.0
    %v8654 = vmax.f32 %v8585, 0.0
    %v8655 = vmax.f32 %v7231, 0.0
    %v8656 = vmax.f32 %v7233, 0.0
    %v8657 = vmax.f32 %v8587, 0.0
    %v8658 = vmax.f32 %v8589, 0.0
    %v8659 = vmax.f32 %v7237, 0.0
    %v8660 = vmax.f32 %v7239, 0.0
    %v8661 = vmax.f32 %v8593, 0.0
    %v8662 = vmax.f32 %v8595, 0.0
    %v8663 = vmax.f32 %v7241, 0.0
    %v8664 = vmax.f32 %v7243, 0.0
    %v8665 = vmax.f32 %v8597, 0.0
    %v8666 = vmax.f32 %v8599, 0.0
    %v8667 = vmax.f32 %v7247, 0.0
    %v8668 = vmax.f32 %v7249, 0.0
    %v8669 = vmax.f32 %v8603, 0.0
    %v8670 = vmax.f32 %v8605, 0.0
    %v8671 = vmax.f32 %v7251, 0.0
    %v8672 = vmax.f32 %v7253, 0.0
    %v8673 = vmax.f32 %v8607, 0.0
    %v8674 = vmax.f32 %v8609, 0.0
    %v8675 = vpack.c.bf16 %v8615, %v8611
    %v8676 = vpack.c.bf16 %v8616, %v8612
    %v8677 = vpack.c.bf16 %v8617, %v8613
    %v8678 = vpack.c.bf16 %v8618, %v8614
    %v8679 = vpack.c.bf16 %v8623, %v8619
    %v8680 = vpack.c.bf16 %v8624, %v8620
    %v8681 = vpack.c.bf16 %v8625, %v8621
    %v8682 = vpack.c.bf16 %v8626, %v8622
    %v8683 = vpack.c.bf16 %v8631, %v8627
    %v8684 = vpack.c.bf16 %v8632, %v8628
    %v8685 = vpack.c.bf16 %v8633, %v8629
    %v8686 = vpack.c.bf16 %v8634, %v8630
    %v8687 = vpack.c.bf16 %v8639, %v8635
    %v8688 = vpack.c.bf16 %v8640, %v8636
    %v8689 = vpack.c.bf16 %v8641, %v8637
    %v8690 = vpack.c.bf16 %v8642, %v8638
    %v8691 = vpack.c.bf16 %v8647, %v8643
    %v8692 = vpack.c.bf16 %v8648, %v8644
    %v8693 = vpack.c.bf16 %v8649, %v8645
    %v8694 = vpack.c.bf16 %v8650, %v8646
    %v8695 = vpack.c.bf16 %v8655, %v8651
    %v8696 = vpack.c.bf16 %v8656, %v8652
    %v8697 = vpack.c.bf16 %v8657, %v8653
    %v8698 = vpack.c.bf16 %v8658, %v8654
    %v8699 = vpack.c.bf16 %v8663, %v8659
    %v8700 = vpack.c.bf16 %v8664, %v8660
    %v8701 = vpack.c.bf16 %v8665, %v8661
    %v8702 = vpack.c.bf16 %v8666, %v8662
    %v8703 = vpack.c.bf16 %v8671, %v8667
    %v8704 = vpack.c.bf16 %v8672, %v8668
    %v8705 = vpack.c.bf16 %v8673, %v8669
    %v8706 = vpack.c.bf16 %v8674, %v8670
    %v8707 = vld [vmem:[#allocation8] sm:$0xff]
    %v8708 = vld [vmem:[#allocation8 + $0x8] sm:$0xff]
    %v8709 = vld [vmem:[#allocation8 + $0x10] sm:$0xff]
    %v8710 = vld [vmem:[#allocation8 + $0x18] sm:$0xff]
    %v8711 = vld [vmem:[#allocation8 + $0x20] sm:$0xff]
    %v8712 = vld [vmem:[#allocation8 + $0x28] sm:$0xff]
    %v8713 = vld [vmem:[#allocation8 + $0x30] sm:$0xff]
    %v8714 = vld [vmem:[#allocation8 + $0x38] sm:$0xff]
    %v8715 = vld [vmem:[#allocation8 + $0x40] sm:$0xff]
    %v8716 = vld [vmem:[#allocation8 + $0x48] sm:$0xff]
    %v8717 = vld [vmem:[#allocation8 + $0x50] sm:$0xff]
    %v8718 = vld [vmem:[#allocation8 + $0x58] sm:$0xff]
    %v8719 = vld [vmem:[#allocation8 + $0x60] sm:$0xff]
    %v8720 = vld [vmem:[#allocation8 + $0x68] sm:$0xff]
    %v8721 = vld [vmem:[#allocation8 + $0x70] sm:$0xff]
    %v8722 = vld [vmem:[#allocation8 + $0x78] sm:$0xff]
    %v8723 = vld [vmem:[#allocation8 + $0x80] sm:$0xff]
    %v8724 = vld [vmem:[#allocation8 + $0x88] sm:$0xff]
    %v8725 = vld [vmem:[#allocation8 + $0x90] sm:$0xff]
    %v8726 = vld [vmem:[#allocation8 + $0x98] sm:$0xff]
    %v8727 = vld [vmem:[#allocation8 + $0xa0] sm:$0xff]
    %v8728 = vld [vmem:[#allocation8 + $0xa8] sm:$0xff]
    %v8729 = vld [vmem:[#allocation8 + $0xb0] sm:$0xff]
    %v8730 = vld [vmem:[#allocation8 + $0xb8] sm:$0xff]
    %v8731 = vld [vmem:[#allocation8 + $0xc0] sm:$0xff]
    %v8732 = vld [vmem:[#allocation8 + $0xc8] sm:$0xff]
    %v8733 = vld [vmem:[#allocation8 + $0xd0] sm:$0xff]
    %v8734 = vld [vmem:[#allocation8 + $0xd8] sm:$0xff]
    %v8735 = vld [vmem:[#allocation8 + $0xe0] sm:$0xff]
    %v8736 = vld [vmem:[#allocation8 + $0xe8] sm:$0xff]
    %v8737 = vld [vmem:[#allocation8 + $0xf0] sm:$0xff]
    %v8738 = vld [vmem:[#allocation8 + $0xf8] sm:$0xff]
    %v8739 = vld [vmem:[#allocation8 + $0x100] sm:$0xff]
    %v8740 = vld [vmem:[#allocation8 + $0x108] sm:$0xff]
    %v8741 = vld [vmem:[#allocation8 + $0x110] sm:$0xff]
    %v8742 = vld [vmem:[#allocation8 + $0x118] sm:$0xff]
    %v8743 = vld [vmem:[#allocation8 + $0x120] sm:$0xff]
    %v8744 = vld [vmem:[#allocation8 + $0x128] sm:$0xff]
    %v8745 = vld [vmem:[#allocation8 + $0x130] sm:$0xff]
    %v8746 = vld [vmem:[#allocation8 + $0x138] sm:$0xff]
    %v8747 = vld [vmem:[#allocation8 + $0x140] sm:$0xff]
    %v8748 = vld [vmem:[#allocation8 + $0x148] sm:$0xff]
    %v8749 = vld [vmem:[#allocation8 + $0x150] sm:$0xff]
    %v8750 = vld [vmem:[#allocation8 + $0x158] sm:$0xff]
    %v8751 = vld [vmem:[#allocation8 + $0x160] sm:$0xff]
    %v8752 = vld [vmem:[#allocation8 + $0x168] sm:$0xff]
    %v8753 = vld [vmem:[#allocation8 + $0x170] sm:$0xff]
    %v8754 = vld [vmem:[#allocation8 + $0x178] sm:$0xff]
    %v8755 = vld [vmem:[#allocation8 + $0x180] sm:$0xff]
    %v8756 = vld [vmem:[#allocation8 + $0x188] sm:$0xff]
    %v8757 = vld [vmem:[#allocation8 + $0x190] sm:$0xff]
    %v8758 = vld [vmem:[#allocation8 + $0x198] sm:$0xff]
    %v8759 = vld [vmem:[#allocation8 + $0x1a0] sm:$0xff]
    %v8760 = vld [vmem:[#allocation8 + $0x1a8] sm:$0xff]
    %v8761 = vld [vmem:[#allocation8 + $0x1b0] sm:$0xff]
    %v8762 = vld [vmem:[#allocation8 + $0x1b8] sm:$0xff]
    %v8763 = vld [vmem:[#allocation8 + $0x1c0] sm:$0xff]
    %v8764 = vld [vmem:[#allocation8 + $0x1c8] sm:$0xff]
    %v8765 = vld [vmem:[#allocation8 + $0x1d0] sm:$0xff]
    %v8766 = vld [vmem:[#allocation8 + $0x1d8] sm:$0xff]
    %v8767 = vld [vmem:[#allocation8 + $0x1e0] sm:$0xff]
    %v8768 = vld [vmem:[#allocation8 + $0x1e8] sm:$0xff]
    %v8769 = vld [vmem:[#allocation8 + $0x1f0] sm:$0xff]
    %v8770 = vld [vmem:[#allocation8 + $0x1f8] sm:$0xff]
    %v8771 = vld [vmem:[#allocation10] sm:$0x3]
    %v8773 = vlaneseq
    %v8774 = vshrl.u32 %v8773, 7
    %v8775 = vsub.s32 0, %v8774
    %v8776 = vrot.slane %v8771, %v8775
    %v8777 = vlaneseq
    %v8778 = vshrl.u32 %v8777, 7
    %v8779 = vsub.s32 1, %v8778
    %v8780 = vrot.slane %v8771, %v8779
    %v8847 = vunpack.c.l.b16 %v8707
    %v8848 = vunpack.c.h.b16 %v8707
    %v8849 = vunpack.c.l.b16 %v8708
    %v8850 = vunpack.c.h.b16 %v8708
    %v8851 = vunpack.c.l.b16 %v8709
    %v8852 = vunpack.c.h.b16 %v8709
    %v8853 = vunpack.c.l.b16 %v8710
    %v8854 = vunpack.c.h.b16 %v8710
    %v8855 = vunpack.c.l.b16 %v8711
    %v8856 = vunpack.c.h.b16 %v8711
    %v8857 = vunpack.c.l.b16 %v8712
    %v8858 = vunpack.c.h.b16 %v8712
    %v8859 = vunpack.c.l.b16 %v8713
    %v8860 = vunpack.c.h.b16 %v8713
    %v8861 = vunpack.c.l.b16 %v8714
    %v8862 = vunpack.c.h.b16 %v8714
    %v8863 = vunpack.c.l.b16 %v8715
    %v8864 = vunpack.c.h.b16 %v8715
    %v8865 = vunpack.c.l.b16 %v8716
    %v8866 = vunpack.c.h.b16 %v8716
    %v8867 = vunpack.c.l.b16 %v8717
    %v8868 = vunpack.c.h.b16 %v8717
    %v8869 = vunpack.c.l.b16 %v8718
    %v8870 = vunpack.c.h.b16 %v8718
    %v8871 = vunpack.c.l.b16 %v8719
    %v8872 = vunpack.c.h.b16 %v8719
    %v8873 = vunpack.c.l.b16 %v8720
    %v8874 = vunpack.c.h.b16 %v8720
    %v8875 = vunpack.c.l.b16 %v8721
    %v8876 = vunpack.c.h.b16 %v8721
    %v8877 = vunpack.c.l.b16 %v8722
    %v8878 = vunpack.c.h.b16 %v8722
    %v8879 = vunpack.c.l.b16 %v8723
    %v8880 = vunpack.c.h.b16 %v8723
    %v8881 = vunpack.c.l.b16 %v8724
    %v8882 = vunpack.c.h.b16 %v8724
    %v8883 = vunpack.c.l.b16 %v8725
    %v8884 = vunpack.c.h.b16 %v8725
    %v8885 = vunpack.c.l.b16 %v8726
    %v8886 = vunpack.c.h.b16 %v8726
    %v8887 = vunpack.c.l.b16 %v8727
    %v8888 = vunpack.c.h.b16 %v8727
    %v8889 = vunpack.c.l.b16 %v8728
    %v8890 = vunpack.c.h.b16 %v8728
    %v8891 = vunpack.c.l.b16 %v8729
    %v8892 = vunpack.c.h.b16 %v8729
    %v8893 = vunpack.c.l.b16 %v8730
    %v8894 = vunpack.c.h.b16 %v8730
    %v8895 = vunpack.c.l.b16 %v8731
    %v8896 = vunpack.c.h.b16 %v8731
    %v8897 = vunpack.c.l.b16 %v8732
    %v8898 = vunpack.c.h.b16 %v8732
    %v8899 = vunpack.c.l.b16 %v8733
    %v8900 = vunpack.c.h.b16 %v8733
    %v8901 = vunpack.c.l.b16 %v8734
    %v8902 = vunpack.c.h.b16 %v8734
    %v8903 = vunpack.c.l.b16 %v8735
    %v8904 = vunpack.c.h.b16 %v8735
    %v8905 = vunpack.c.l.b16 %v8736
    %v8906 = vunpack.c.h.b16 %v8736
    %v8907 = vunpack.c.l.b16 %v8737
    %v8908 = vunpack.c.h.b16 %v8737
    %v8909 = vunpack.c.l.b16 %v8738
    %v8910 = vunpack.c.h.b16 %v8738
    %v8911 = vunpack.c.l.b16 %v8739
    %v8912 = vunpack.c.h.b16 %v8739
    %v8913 = vunpack.c.l.b16 %v8740
    %v8914 = vunpack.c.h.b16 %v8740
    %v8915 = vunpack.c.l.b16 %v8741
    %v8916 = vunpack.c.h.b16 %v8741
    %v8917 = vunpack.c.l.b16 %v8742
    %v8918 = vunpack.c.h.b16 %v8742
    %v8919 = vunpack.c.l.b16 %v8743
    %v8920 = vunpack.c.h.b16 %v8743
    %v8921 = vunpack.c.l.b16 %v8744
    %v8922 = vunpack.c.h.b16 %v8744
    %v8923 = vunpack.c.l.b16 %v8745
    %v8924 = vunpack.c.h.b16 %v8745
    %v8925 = vunpack.c.l.b16 %v8746
    %v8926 = vunpack.c.h.b16 %v8746
    %v8927 = vunpack.c.l.b16 %v8747
    %v8928 = vunpack.c.h.b16 %v8747
    %v8929 = vunpack.c.l.b16 %v8748
    %v8930 = vunpack.c.h.b16 %v8748
    %v8931 = vunpack.c.l.b16 %v8749
    %v8932 = vunpack.c.h.b16 %v8749
    %v8933 = vunpack.c.l.b16 %v8750
    %v8934 = vunpack.c.h.b16 %v8750
    %v8935 = vunpack.c.l.b16 %v8751
    %v8936 = vunpack.c.h.b16 %v8751
    %v8937 = vunpack.c.l.b16 %v8752
    %v8938 = vunpack.c.h.b16 %v8752
    %v8939 = vunpack.c.l.b16 %v8753
    %v8940 = vunpack.c.h.b16 %v8753
    %v8941 = vunpack.c.l.b16 %v8754
    %v8942 = vunpack.c.h.b16 %v8754
    %v8943 = vunpack.c.l.b16 %v8755
    %v8944 = vunpack.c.h.b16 %v8755
    %v8945 = vunpack.c.l.b16 %v8756
    %v8946 = vunpack.c.h.b16 %v8756
    %v8947 = vunpack.c.l.b16 %v8757
    %v8948 = vunpack.c.h.b16 %v8757
    %v8949 = vunpack.c.l.b16 %v8758
    %v8950 = vunpack.c.h.b16 %v8758
    %v8951 = vunpack.c.l.b16 %v8759
    %v8952 = vunpack.c.h.b16 %v8759
    %v8953 = vunpack.c.l.b16 %v8760
    %v8954 = vunpack.c.h.b16 %v8760
    %v8955 = vunpack.c.l.b16 %v8761
    %v8956 = vunpack.c.h.b16 %v8761
    %v8957 = vunpack.c.l.b16 %v8762
    %v8958 = vunpack.c.h.b16 %v8762
    %v8959 = vunpack.c.l.b16 %v8763
    %v8960 = vunpack.c.h.b16 %v8763
    %v8961 = vunpack.c.l.b16 %v8764
    %v8962 = vunpack.c.h.b16 %v8764
    %v8963 = vunpack.c.l.b16 %v8765
    %v8964 = vunpack.c.h.b16 %v8765
    %v8965 = vunpack.c.l.b16 %v8766
    %v8966 = vunpack.c.h.b16 %v8766
    %v8967 = vunpack.c.l.b16 %v8767
    %v8968 = vunpack.c.h.b16 %v8767
    %v8969 = vunpack.c.l.b16 %v8768
    %v8970 = vunpack.c.h.b16 %v8768
    %v8971 = vunpack.c.l.b16 %v8769
    %v8972 = vunpack.c.h.b16 %v8769
    %v8973 = vunpack.c.l.b16 %v8770
    %v8974 = vunpack.c.h.b16 %v8770
    %v8975 = vpack.c.b16 %v8849, %v8847
    %v8976 = vpack.c.b16 %v8850, %v8848
    %v8977 = vpack.c.b16 %v8853, %v8851
    %v8978 = vpack.c.b16 %v8854, %v8852
    %v8979 = vpack.c.b16 %v8857, %v8855
    %v8980 = vpack.c.b16 %v8858, %v8856
    %v8981 = vpack.c.b16 %v8861, %v8859
    %v8982 = vpack.c.b16 %v8862, %v8860
    %v8983 = vpack.c.b16 %v8865, %v8863
    %v8984 = vpack.c.b16 %v8866, %v8864
    %v8985 = vpack.c.b16 %v8869, %v8867
    %v8986 = vpack.c.b16 %v8870, %v8868
    %v8987 = vpack.c.b16 %v8873, %v8871
    %v8988 = vpack.c.b16 %v8874, %v8872
    %v8989 = vpack.c.b16 %v8877, %v8875
    %v8990 = vpack.c.b16 %v8878, %v8876
    %v8991 = vpack.c.b16 %v8881, %v8879
    %v8992 = vpack.c.b16 %v8882, %v8880
    %v8993 = vpack.c.b16 %v8885, %v8883
    %v8994 = vpack.c.b16 %v8886, %v8884
    %v8995 = vpack.c.b16 %v8889, %v8887
    %v8996 = vpack.c.b16 %v8890, %v8888
    %v8997 = vpack.c.b16 %v8893, %v8891
    %v8998 = vpack.c.b16 %v8894, %v8892
    %v8999 = vpack.c.b16 %v8897, %v8895
    %v9000 = vpack.c.b16 %v8898, %v8896
    %v9001 = vpack.c.b16 %v8901, %v8899
    %v9002 = vpack.c.b16 %v8902, %v8900
    %v9003 = vpack.c.b16 %v8905, %v8903
    %v9004 = vpack.c.b16 %v8906, %v8904
    %v9005 = vpack.c.b16 %v8909, %v8907
    %v9006 = vpack.c.b16 %v8910, %v8908
    %v9007 = vpack.c.b16 %v8913, %v8911
    %v9008 = vpack.c.b16 %v8914, %v8912
    %v9009 = vpack.c.b16 %v8917, %v8915
    %v9010 = vpack.c.b16 %v8918, %v8916
    %v9011 = vpack.c.b16 %v8921, %v8919
    %v9012 = vpack.c.b16 %v8922, %v8920
    %v9013 = vpack.c.b16 %v8925, %v8923
    %v9014 = vpack.c.b16 %v8926, %v8924
    %v9015 = vpack.c.b16 %v8929, %v8927
    %v9016 = vpack.c.b16 %v8930, %v8928
    %v9017 = vpack.c.b16 %v8933, %v8931
    %v9018 = vpack.c.b16 %v8934, %v8932
    %v9019 = vpack.c.b16 %v8937, %v8935
    %v9020 = vpack.c.b16 %v8938, %v8936
    %v9021 = vpack.c.b16 %v8941, %v8939
    %v9022 = vpack.c.b16 %v8942, %v8940
    %v9023 = vpack.c.b16 %v8945, %v8943
    %v9024 = vpack.c.b16 %v8946, %v8944
    %v9025 = vpack.c.b16 %v8949, %v8947
    %v9026 = vpack.c.b16 %v8950, %v8948
    %v9027 = vpack.c.b16 %v8953, %v8951
    %v9028 = vpack.c.b16 %v8954, %v8952
    %v9029 = vpack.c.b16 %v8957, %v8955
    %v9030 = vpack.c.b16 %v8958, %v8956
    %v9031 = vpack.c.b16 %v8961, %v8959
    %v9032 = vpack.c.b16 %v8962, %v8960
    %v9033 = vpack.c.b16 %v8965, %v8963
    %v9034 = vpack.c.b16 %v8966, %v8964
    %v9035 = vpack.c.b16 %v8969, %v8967
    %v9036 = vpack.c.b16 %v8970, %v8968
    %v9037 = vpack.c.b16 %v8973, %v8971
    %v9038 = vpack.c.b16 %v8974, %v8972
    %9103 = vmatprep.subr.bf16.mxu0 %v8976
    %9104 = vmatpush1.bf16.msra.mxu0 %v8975
    %9105 = vmatprep.subr.bf16.mxu0 %v8978
    %9106 = vmatpush1.bf16.msra.mxu0 %v8977
    %9107 = vmatprep.subr.bf16.mxu0 %v8980
    %9108 = vmatpush1.bf16.msra.mxu0 %v8979
    %9109 = vmatprep.subr.bf16.mxu0 %v8982
    %9110 = vmatpush1.bf16.msra.mxu0 %v8981
    %9111 = vmatprep.subr.bf16.mxu0 %v8984
    %9112 = vmatpush1.bf16.msra.mxu0 %v8983
    %9113 = vmatprep.subr.bf16.mxu0 %v8986
    %9114 = vmatpush1.bf16.msra.mxu0 %v8985
    %9115 = vmatprep.subr.bf16.mxu0 %v8988
    %9116 = vmatpush1.bf16.msra.mxu0 %v8987
    %9117 = vmatprep.subr.bf16.mxu0 %v8990
    %9118 = vmatpush1.bf16.msra.mxu0 %v8989
    %9119 = vmatprep.subr.bf16.mxu0 %v8992
    %9120 = vmatpush1.bf16.msra.mxu0 %v8991
    %9121 = vmatprep.subr.bf16.mxu0 %v8994
    %9122 = vmatpush1.bf16.msra.mxu0 %v8993
    %9123 = vmatprep.subr.bf16.mxu0 %v8996
    %9124 = vmatpush1.bf16.msra.mxu0 %v8995
    %9125 = vmatprep.subr.bf16.mxu0 %v8998
    %9126 = vmatpush1.bf16.msra.mxu0 %v8997
    %9127 = vmatprep.subr.bf16.mxu0 %v9000
    %9128 = vmatpush1.bf16.msra.mxu0 %v8999
    %9129 = vmatprep.subr.bf16.mxu0 %v9002
    %9130 = vmatpush1.bf16.msra.mxu0 %v9001
    %9131 = vmatprep.subr.bf16.mxu0 %v9004
    %9132 = vmatpush1.bf16.msra.mxu0 %v9003
    %9133 = vmatprep.subr.bf16.mxu0 %v9006
    %9134 = vmatpush1.bf16.msra.mxu0 %v9005
    %9135 = vmatprep.mubr.bf16.mxu0 %v8676
    %9136 = vmatmul.mubr.bf16.gmra.mrb[0].mxu0 %v8675
    %v9137 = vpop.f32.mrb[0].mxu0
    %v9138 = vadd.f32 %v8776, %v9137
    %v9139 = vpop.f32.mrb[0].mxu0
    %v9140 = vadd.f32 %v8780, %v9139
    %v9141 = vpop.f32.mrb[0].mxu0
    %v9142 = vadd.f32 %v8776, %v9141
    %v9143 = vpop.f32.mrb[0].mxu0
    %v9144 = vadd.f32 %v8780, %v9143
    %9145 = vmatprep.mubr.bf16.mxu0 %v8680
    %9146 = vmatmul.mubr.bf16.gmra.mrb[0].mxu0 %v8679
    %v9147 = vpop.f32.mrb[0].mxu0
    %v9148 = vadd.f32 %v8776, %v9147
    %v9149 = vpop.f32.mrb[0].mxu0
    %v9150 = vadd.f32 %v8780, %v9149
    %v9151 = vpop.f32.mrb[0].mxu0
    %v9152 = vadd.f32 %v8776, %v9151
    %v9153 = vpop.f32.mrb[0].mxu0
    %v9154 = vadd.f32 %v8780, %v9153
    %9155 = vmatprep.mubr.bf16.mxu0 %v8684
    %9156 = vmatmul.mubr.bf16.gmra.mrb[0].mxu0 %v8683
    %v9157 = vpop.f32.mrb[0].mxu0
    %v9158 = vadd.f32 %v8776, %v9157
    %v9159 = vpop.f32.mrb[0].mxu0
    %v9160 = vadd.f32 %v8780, %v9159
    %v9161 = vpop.f32.mrb[0].mxu0
    %v9162 = vadd.f32 %v8776, %v9161
    %v9163 = vpop.f32.mrb[0].mxu0
    %v9164 = vadd.f32 %v8780, %v9163
    %9165 = vmatprep.mubr.bf16.mxu0 %v8688
    %9166 = vmatmul.mubr.bf16.gmra.mrb[0].mxu0 %v8687
    %v9167 = vpop.f32.mrb[0].mxu0
    %v9168 = vadd.f32 %v8776, %v9167
    %v9169 = vpop.f32.mrb[0].mxu0
    %v9170 = vadd.f32 %v8780, %v9169
    %v9171 = vpop.f32.mrb[0].mxu0
    %v9172 = vadd.f32 %v8776, %v9171
    %v9173 = vpop.f32.mrb[0].mxu0
    %v9174 = vadd.f32 %v8780, %v9173
    %9175 = vmatprep.mubr.bf16.mxu0 %v8692
    %9176 = vmatmul.mubr.bf16.gmra.mrb[0].mxu0 %v8691
    %v9177 = vpop.f32.mrb[0].mxu0
    %v9178 = vadd.f32 %v8776, %v9177
    %v9179 = vpop.f32.mrb[0].mxu0
    %v9180 = vadd.f32 %v8780, %v9179
    %v9181 = vpop.f32.mrb[0].mxu0
    %v9182 = vadd.f32 %v8776, %v9181
    %v9183 = vpop.f32.mrb[0].mxu0
    %v9184 = vadd.f32 %v8780, %v9183
    %9185 = vmatprep.mubr.bf16.mxu0 %v8696
    %9186 = vmatmul.mubr.bf16.gmra.mrb[0].mxu0 %v8695
    %v9187 = vpop.f32.mrb[0].mxu0
    %v9188 = vadd.f32 %v8776, %v9187
    %v9189 = vpop.f32.mrb[0].mxu0
    %v9190 = vadd.f32 %v8780, %v9189
    %v9191 = vpop.f32.mrb[0].mxu0
    %v9192 = vadd.f32 %v8776, %v9191
    %v9193 = vpop.f32.mrb[0].mxu0
    %v9194 = vadd.f32 %v8780, %v9193
    %9195 = vmatprep.mubr.bf16.mxu0 %v8700
    %9196 = vmatmul.mubr.bf16.gmra.mrb[0].mxu0 %v8699
    %v9197 = vpop.f32.mrb[0].mxu0
    %v9198 = vadd.f32 %v8776, %v9197
    %v9199 = vpop.f32.mrb[0].mxu0
    %v9200 = vadd.f32 %v8780, %v9199
    %v9201 = vpop.f32.mrb[0].mxu0
    %v9202 = vadd.f32 %v8776, %v9201
    %v9203 = vpop.f32.mrb[0].mxu0
    %v9204 = vadd.f32 %v8780, %v9203
    %9205 = vmatprep.mubr.bf16.mxu0 %v8704
    %9206 = vmatmul.mubr.bf16.gmra.mrb[0].mxu0 %v8703
    %v9207 = vpop.f32.mrb[0].mxu0
    %v9208 = vadd.f32 %v8776, %v9207
    %v9209 = vpop.f32.mrb[0].mxu0
    %v9210 = vadd.f32 %v8780, %v9209
    %v9211 = vpop.f32.mrb[0].mxu0
    %v9212 = vadd.f32 %v8776, %v9211
    %v9213 = vpop.f32.mrb[0].mxu0
    %v9214 = vadd.f32 %v8780, %v9213
    %9215 = vdwg.mxu0
    %9216 = vmatprep.subr.bf16.mxu0 %v9008
    %9217 = vmatpush1.bf16.msra.mxu0 %v9007
    %9218 = vmatprep.subr.bf16.mxu0 %v9010
    %9219 = vmatpush1.bf16.msra.mxu0 %v9009
    %9220 = vmatprep.subr.bf16.mxu0 %v9012
    %9221 = vmatpush1.bf16.msra.mxu0 %v9011
    %9222 = vmatprep.subr.bf16.mxu0 %v9014
    %9223 = vmatpush1.bf16.msra.mxu0 %v9013
    %9224 = vmatprep.subr.bf16.mxu0 %v9016
    %9225 = vmatpush1.bf16.msra.mxu0 %v9015
    %9226 = vmatprep.subr.bf16.mxu0 %v9018
    %9227 = vmatpush1.bf16.msra.mxu0 %v9017
    %9228 = vmatprep.subr.bf16.mxu0 %v9020
    %9229 = vmatpush1.bf16.msra.mxu0 %v9019
    %9230 = vmatprep.subr.bf16.mxu0 %v9022
    %9231 = vmatpush1.bf16.msra.mxu0 %v9021
    %9232 = vmatprep.subr.bf16.mxu0 %v9024
    %9233 = vmatpush1.bf16.msra.mxu0 %v9023
    %9234 = vmatprep.subr.bf16.mxu0 %v9026
    %9235 = vmatpush1.bf16.msra.mxu0 %v9025
    %9236 = vmatprep.subr.bf16.mxu0 %v9028
    %9237 = vmatpush1.bf16.msra.mxu0 %v9027
    %9238 = vmatprep.subr.bf16.mxu0 %v9030
    %9239 = vmatpush1.bf16.msra.mxu0 %v9029
    %9240 = vmatprep.subr.bf16.mxu0 %v9032
    %9241 = vmatpush1.bf16.msra.mxu0 %v9031
    %9242 = vmatprep.subr.bf16.mxu0 %v9034
    %9243 = vmatpush1.bf16.msra.mxu0 %v9033
    %9244 = vmatprep.subr.bf16.mxu0 %v9036
    %9245 = vmatpush1.bf16.msra.mxu0 %v9035
    %9246 = vmatprep.subr.bf16.mxu0 %v9038
    %9247 = vmatpush1.bf16.msra.mxu0 %v9037
    %9248 = vmatprep.mubr.bf16.mxu0 %v8678
    %9249 = vmatmul.mubr.bf16.gmra.mrb[0].mxu0 %v8677
    %v9250 = vpop.f32.mrb[0].mxu0
    %v9251 = vadd.f32 %v9138, %v9250
    %v9252 = vpop.f32.mrb[0].mxu0
    %v9253 = vadd.f32 %v9140, %v9252
    %v9254 = vpop.f32.mrb[0].mxu0
    %v9255 = vadd.f32 %v9142, %v9254
    %v9256 = vpop.f32.mrb[0].mxu0
    %v9257 = vadd.f32 %v9144, %v9256
    %9258 = vmatprep.mubr.bf16.mxu0 %v8682
    %9259 = vmatmul.mubr.bf16.gmra.mrb[0].mxu0 %v8681
    %v9260 = vpop.f32.mrb[0].mxu0
    %v9261 = vadd.f32 %v9148, %v9260
    %v9262 = vpop.f32.mrb[0].mxu0
    %v9263 = vadd.f32 %v9150, %v9262
    %v9264 = vpop.f32.mrb[0].mxu0
    %v9265 = vadd.f32 %v9152, %v9264
    %v9266 = vpop.f32.mrb[0].mxu0
    %v9267 = vadd.f32 %v9154, %v9266
    %9268 = vmatprep.mubr.bf16.mxu0 %v8686
    %9269 = vmatmul.mubr.bf16.gmra.mrb[0].mxu0 %v8685
    %v9270 = vpop.f32.mrb[0].mxu0
    %v9271 = vadd.f32 %v9158, %v9270
    %v9272 = vpop.f32.mrb[0].mxu0
    %v9273 = vadd.f32 %v9160, %v9272
    %v9274 = vpop.f32.mrb[0].mxu0
    %v9275 = vadd.f32 %v9162, %v9274
    %v9276 = vpop.f32.mrb[0].mxu0
    %v9277 = vadd.f32 %v9164, %v9276
    %9278 = vmatprep.mubr.bf16.mxu0 %v8690
    %9279 = vmatmul.mubr.bf16.gmra.mrb[0].mxu0 %v8689
    %v9280 = vpop.f32.mrb[0].mxu0
    %v9281 = vadd.f32 %v9168, %v9280
    %v9282 = vpop.f32.mrb[0].mxu0
    %v9283 = vadd.f32 %v9170, %v9282
    %v9284 = vpop.f32.mrb[0].mxu0
    %v9285 = vadd.f32 %v9172, %v9284
    %v9286 = vpop.f32.mrb[0].mxu0
    %v9287 = vadd.f32 %v9174, %v9286
    %9288 = vmatprep.mubr.bf16.mxu0 %v8694
    %9289 = vmatmul.mubr.bf16.gmra.mrb[0].mxu0 %v8693
    %v9290 = vpop.f32.mrb[0].mxu0
    %v9291 = vadd.f32 %v9178, %v9290
    %v9292 = vpop.f32.mrb[0].mxu0
    %v9293 = vadd.f32 %v9180, %v9292
    %v9294 = vpop.f32.mrb[0].mxu0
    %v9295 = vadd.f32 %v9182, %v9294
    %v9296 = vpop.f32.mrb[0].mxu0
    %v9297 = vadd.f32 %v9184, %v9296
    %9298 = vmatprep.mubr.bf16.mxu0 %v8698
    %9299 = vmatmul.mubr.bf16.gmra.mrb[0].mxu0 %v8697
    %v9300 = vpop.f32.mrb[0].mxu0
    %v9301 = vadd.f32 %v9188, %v9300
    %v9302 = vpop.f32.mrb[0].mxu0
    %v9303 = vadd.f32 %v9190, %v9302
    %v9304 = vpop.f32.mrb[0].mxu0
    %v9305 = vadd.f32 %v9192, %v9304
    %v9306 = vpop.f32.mrb[0].mxu0
    %v9307 = vadd.f32 %v9194, %v9306
    %9308 = vmatprep.mubr.bf16.mxu0 %v8702
    %9309 = vmatmul.mubr.bf16.gmra.mrb[0].mxu0 %v8701
    %v9310 = vpop.f32.mrb[0].mxu0
    %v9311 = vadd.f32 %v9198, %v9310
    %v9312 = vpop.f32.mrb[0].mxu0
    %v9313 = vadd.f32 %v9200, %v9312
    %v9314 = vpop.f32.mrb[0].mxu0
    %v9315 = vadd.f32 %v9202, %v9314
    %v9316 = vpop.f32.mrb[0].mxu0
    %v9317 = vadd.f32 %v9204, %v9316
    %9318 = vmatprep.mubr.bf16.mxu0 %v8706
    %9319 = vmatmul.mubr.bf16.gmra.mrb[0].mxu0 %v8705
    %v9320 = vpop.f32.mrb[0].mxu0
    %v9321 = vadd.f32 %v9208, %v9320
    %v9322 = vpop.f32.mrb[0].mxu0
    %v9323 = vadd.f32 %v9210, %v9322
    %v9324 = vpop.f32.mrb[0].mxu0
    %v9325 = vadd.f32 %v9212, %v9324
    %v9326 = vpop.f32.mrb[0].mxu0
    %v9327 = vadd.f32 %v9214, %v9326
    %9328 = vdwg.mxu0
    %v9329 = vmax.f32 %v9251, 0.0
    %v9330 = vmax.f32 %v9253, 0.0
    %v9331 = vmax.f32 %v9255, 0.0
    %v9332 = vmax.f32 %v9257, 0.0
    %v9333 = vmax.f32 %v9261, 0.0
    %v9334 = vmax.f32 %v9263, 0.0
    %v9335 = vmax.f32 %v9265, 0.0
    %v9336 = vmax.f32 %v9267, 0.0
    %v9337 = vmax.f32 %v9271, 0.0
    %v9338 = vmax.f32 %v9273, 0.0
    %v9339 = vmax.f32 %v9275, 0.0
    %v9340 = vmax.f32 %v9277, 0.0
    %v9341 = vmax.f32 %v9281, 0.0
    %v9342 = vmax.f32 %v9283, 0.0
    %v9343 = vmax.f32 %v9285, 0.0
    %v9344 = vmax.f32 %v9287, 0.0
    %v9345 = vmax.f32 %v9291, 0.0
    %v9346 = vmax.f32 %v9293, 0.0
    %v9347 = vmax.f32 %v9295, 0.0
    %v9348 = vmax.f32 %v9297, 0.0
    %v9349 = vmax.f32 %v9301, 0.0
    %v9350 = vmax.f32 %v9303, 0.0
    %v9351 = vmax.f32 %v9305, 0.0
    %v9352 = vmax.f32 %v9307, 0.0
    %v9353 = vmax.f32 %v9311, 0.0
    %v9354 = vmax.f32 %v9313, 0.0
    %v9355 = vmax.f32 %v9315, 0.0
    %v9356 = vmax.f32 %v9317, 0.0
    %v9357 = vmax.f32 %v9321, 0.0
    %v9358 = vmax.f32 %v9323, 0.0
    %v9359 = vmax.f32 %v9325, 0.0
    %v9360 = vmax.f32 %v9327, 0.0
    %v9361 = vpack.c.bf16 %v9331, %v9329
    %v9362 = vpack.c.bf16 %v9332, %v9330
    %v9363 = vpack.c.bf16 %v9335, %v9333
    %v9364 = vpack.c.bf16 %v9336, %v9334
    %v9365 = vpack.c.bf16 %v9339, %v9337
    %v9366 = vpack.c.bf16 %v9340, %v9338
    %v9367 = vpack.c.bf16 %v9343, %v9341
    %v9368 = vpack.c.bf16 %v9344, %v9342
    %v9369 = vpack.c.bf16 %v9347, %v9345
    %v9370 = vpack.c.bf16 %v9348, %v9346
    %v9371 = vpack.c.bf16 %v9351, %v9349
    %v9372 = vpack.c.bf16 %v9352, %v9350
    %v9373 = vpack.c.bf16 %v9355, %v9353
    %v9374 = vpack.c.bf16 %v9356, %v9354
    %v9375 = vpack.c.bf16 %v9359, %v9357
    %v9376 = vpack.c.bf16 %v9360, %v9358
    %v9377 = vld [vmem:[#allocation11] sm:$0xf]
    %v9378 = vld [vmem:[#allocation11 + $0x4] sm:$0xf]
    %v9379 = vld [vmem:[#allocation11 + $0x8] sm:$0xf]
    %v9380 = vld [vmem:[#allocation11 + $0xc] sm:$0xf]
    %v9381 = vld [vmem:[#allocation11 + $0x10] sm:$0xf]
    %v9382 = vld [vmem:[#allocation11 + $0x14] sm:$0xf]
    %v9383 = vld [vmem:[#allocation11 + $0x18] sm:$0xf]
    %v9384 = vld [vmem:[#allocation11 + $0x1c] sm:$0xf]
    %v9385 = vld [vmem:[#allocation11 + $0x20] sm:$0xf]
    %v9386 = vld [vmem:[#allocation11 + $0x24] sm:$0xf]
    %v9387 = vld [vmem:[#allocation11 + $0x28] sm:$0xf]
    %v9388 = vld [vmem:[#allocation11 + $0x2c] sm:$0xf]
    %v9389 = vld [vmem:[#allocation11 + $0x30] sm:$0xf]
    %v9390 = vld [vmem:[#allocation11 + $0x34] sm:$0xf]
    %v9391 = vld [vmem:[#allocation11 + $0x38] sm:$0xf]
    %v9392 = vld [vmem:[#allocation11 + $0x3c] sm:$0xf]
    %v9393 = vld [vmem:[#allocation11 + $0x40] sm:$0xf]
    %v9394 = vld [vmem:[#allocation11 + $0x44] sm:$0xf]
    %v9395 = vld [vmem:[#allocation11 + $0x48] sm:$0xf]
    %v9396 = vld [vmem:[#allocation11 + $0x4c] sm:$0xf]
    %v9397 = vld [vmem:[#allocation11 + $0x50] sm:$0xf]
    %v9398 = vld [vmem:[#allocation11 + $0x54] sm:$0xf]
    %v9399 = vld [vmem:[#allocation11 + $0x58] sm:$0xf]
    %v9400 = vld [vmem:[#allocation11 + $0x5c] sm:$0xf]
    %v9401 = vld [vmem:[#allocation11 + $0x60] sm:$0xf]
    %v9402 = vld [vmem:[#allocation11 + $0x64] sm:$0xf]
    %v9403 = vld [vmem:[#allocation11 + $0x68] sm:$0xf]
    %v9404 = vld [vmem:[#allocation11 + $0x6c] sm:$0xf]
    %v9405 = vld [vmem:[#allocation11 + $0x70] sm:$0xf]
    %v9406 = vld [vmem:[#allocation11 + $0x74] sm:$0xf]
    %v9407 = vld [vmem:[#allocation11 + $0x78] sm:$0xf]
    %v9408 = vld [vmem:[#allocation11 + $0x7c] sm:$0xf]
    %v9409 = vld [vmem:[#allocation13] sm:$0x1]
    %v9411 = vlaneseq
    %v9412 = vshrl.u32 %v9411, 7
    %v9413 = vsub.s32 0, %v9412
    %v9414 = vrot.slane %v9409, %v9413
    %v9448 = vunpack.c.l.b16 %v9377
    %v9449 = vunpack.c.l.b16 %v9378
    %v9450 = vunpack.c.l.b16 %v9379
    %v9451 = vunpack.c.l.b16 %v9380
    %v9452 = vunpack.c.l.b16 %v9381
    %v9453 = vunpack.c.l.b16 %v9382
    %v9454 = vunpack.c.l.b16 %v9383
    %v9455 = vunpack.c.l.b16 %v9384
    %v9456 = vunpack.c.l.b16 %v9385
    %v9457 = vunpack.c.l.b16 %v9386
    %v9458 = vunpack.c.l.b16 %v9387
    %v9459 = vunpack.c.l.b16 %v9388
    %v9460 = vunpack.c.l.b16 %v9389
    %v9461 = vunpack.c.l.b16 %v9390
    %v9462 = vunpack.c.l.b16 %v9391
    %v9463 = vunpack.c.l.b16 %v9392
    %v9464 = vunpack.c.l.b16 %v9393
    %v9465 = vunpack.c.l.b16 %v9394
    %v9466 = vunpack.c.l.b16 %v9395
    %v9467 = vunpack.c.l.b16 %v9396
    %v9468 = vunpack.c.l.b16 %v9397
    %v9469 = vunpack.c.l.b16 %v9398
    %v9470 = vunpack.c.l.b16 %v9399
    %v9471 = vunpack.c.l.b16 %v9400
    %v9472 = vunpack.c.l.b16 %v9401
    %v9473 = vunpack.c.l.b16 %v9402
    %v9474 = vunpack.c.l.b16 %v9403
    %v9475 = vunpack.c.l.b16 %v9404
    %v9476 = vunpack.c.l.b16 %v9405
    %v9477 = vunpack.c.l.b16 %v9406
    %v9478 = vunpack.c.l.b16 %v9407
    %v9479 = vunpack.c.l.b16 %v9408
    %v9480 = vpack.c.b16 %v9449, %v9448
    %v9481 = vpack.c.b16 %v9451, %v9450
    %v9482 = vpack.c.b16 %v9453, %v9452
    %v9483 = vpack.c.b16 %v9455, %v9454
    %v9484 = vpack.c.b16 %v9457, %v9456
    %v9485 = vpack.c.b16 %v9459, %v9458
    %v9486 = vpack.c.b16 %v9461, %v9460
    %v9487 = vpack.c.b16 %v9463, %v9462
    %v9488 = vpack.c.b16 %v9465, %v9464
    %v9489 = vpack.c.b16 %v9467, %v9466
    %v9490 = vpack.c.b16 %v9469, %v9468
    %v9491 = vpack.c.b16 %v9471, %v9470
    %v9492 = vpack.c.b16 %v9473, %v9472
    %v9493 = vpack.c.b16 %v9475, %v9474
    %v9494 = vpack.c.b16 %v9477, %v9476
    %v9495 = vpack.c.b16 %v9479, %v9478
    %9512 = vmatprep.subr.bf16.mxu0 0
    %9513 = vmatpush1.bf16.msra.mxu0 %v9480
    %9514 = vmatprep.subr.bf16.mxu0 0
    %9515 = vmatpush1.bf16.msra.mxu0 %v9481
    %9516 = vmatprep.subr.bf16.mxu0 0
    %9517 = vmatpush1.bf16.msra.mxu0 %v9482
    %9518 = vmatprep.subr.bf16.mxu0 0
    %9519 = vmatpush1.bf16.msra.mxu0 %v9483
    %9520 = vmatprep.subr.bf16.mxu0 0
    %9521 = vmatpush1.bf16.msra.mxu0 %v9484
    %9522 = vmatprep.subr.bf16.mxu0 0
    %9523 = vmatpush1.bf16.msra.mxu0 %v9485
    %9524 = vmatprep.subr.bf16.mxu0 0
    %9525 = vmatpush1.bf16.msra.mxu0 %v9486
    %9526 = vmatprep.subr.bf16.mxu0 0
    %9527 = vmatpush1.bf16.msra.mxu0 %v9487
    %9528 = vmatprep.subr.bf16.mxu0 0
    %9529 = vmatpush1.bf16.msra.mxu0 %v9488
    %9530 = vmatprep.subr.bf16.mxu0 0
    %9531 = vmatpush1.bf16.msra.mxu0 %v9489
    %9532 = vmatprep.subr.bf16.mxu0 0
    %9533 = vmatpush1.bf16.msra.mxu0 %v9490
    %9534 = vmatprep.subr.bf16.mxu0 0
    %9535 = vmatpush1.bf16.msra.mxu0 %v9491
    %9536 = vmatprep.subr.bf16.mxu0 0
    %9537 = vmatpush1.bf16.msra.mxu0 %v9492
    %9538 = vmatprep.subr.bf16.mxu0 0
    %9539 = vmatpush1.bf16.msra.mxu0 %v9493
    %9540 = vmatprep.subr.bf16.mxu0 0
    %9541 = vmatpush1.bf16.msra.mxu0 %v9494
    %9542 = vmatprep.subr.bf16.mxu0 0
    %9543 = vmatpush1.bf16.msra.mxu0 %v9495
    %9544 = vmatprep.mubr.bf16.mxu0 %v9362
    %9545 = vmatmul.mubr.bf16.gmra.mrb[0].mxu0 %v9361
    %v9546 = vpop.f32.mrb[0].mxu0
    %v9547 = vadd.f32 %v9414, %v9546
    %v9548 = vpop.f32.mrb[0].mxu0
    %v9549 = vpop.f32.mrb[0].mxu0
    %v9550 = vadd.f32 %v9414, %v9549
    %v9551 = vpop.f32.mrb[0].mxu0
    %9552 = vmatprep.mubr.bf16.mxu0 %v9364
    %9553 = vmatmul.mubr.bf16.gmra.mrb[0].mxu0 %v9363
    %v9554 = vpop.f32.mrb[0].mxu0
    %v9555 = vadd.f32 %v9414, %v9554
    %v9556 = vpop.f32.mrb[0].mxu0
    %v9557 = vpop.f32.mrb[0].mxu0
    %v9558 = vadd.f32 %v9414, %v9557
    %v9559 = vpop.f32.mrb[0].mxu0
    %9560 = vmatprep.mubr.bf16.mxu0 %v9366
    %9561 = vmatmul.mubr.bf16.gmra.mrb[0].mxu0 %v9365
    %v9562 = vpop.f32.mrb[0].mxu0
    %v9563 = vadd.f32 %v9414, %v9562
    %v9564 = vpop.f32.mrb[0].mxu0
    %v9565 = vpop.f32.mrb[0].mxu0
    %v9566 = vadd.f32 %v9414, %v9565
    %v9567 = vpop.f32.mrb[0].mxu0
    %9568 = vmatprep.mubr.bf16.mxu0 %v9368
    %9569 = vmatmul.mubr.bf16.gmra.mrb[0].mxu0 %v9367
    %v9570 = vpop.f32.mrb[0].mxu0
    %v9571 = vadd.f32 %v9414, %v9570
    %v9572 = vpop.f32.mrb[0].mxu0
    %v9573 = vpop.f32.mrb[0].mxu0
    %v9574 = vadd.f32 %v9414, %v9573
    %v9575 = vpop.f32.mrb[0].mxu0
    %9576 = vmatprep.mubr.bf16.mxu0 %v9370
    %9577 = vmatmul.mubr.bf16.gmra.mrb[0].mxu0 %v9369
    %v9578 = vpop.f32.mrb[0].mxu0
    %v9579 = vadd.f32 %v9414, %v9578
    %v9580 = vpop.f32.mrb[0].mxu0
    %v9581 = vpop.f32.mrb[0].mxu0
    %v9582 = vadd.f32 %v9414, %v9581
    %v9583 = vpop.f32.mrb[0].mxu0
    %9584 = vmatprep.mubr.bf16.mxu0 %v9372
    %9585 = vmatmul.mubr.bf16.gmra.mrb[0].mxu0 %v9371
    %v9586 = vpop.f32.mrb[0].mxu0
    %v9587 = vadd.f32 %v9414, %v9586
    %v9588 = vpop.f32.mrb[0].mxu0
    %v9589 = vpop.f32.mrb[0].mxu0
    %v9590 = vadd.f32 %v9414, %v9589
    %v9591 = vpop.f32.mrb[0].mxu0
    %9592 = vmatprep.mubr.bf16.mxu0 %v9374
    %9593 = vmatmul.mubr.bf16.gmra.mrb[0].mxu0 %v9373
    %v9594 = vpop.f32.mrb[0].mxu0
    %v9595 = vadd.f32 %v9414, %v9594
    %v9596 = vpop.f32.mrb[0].mxu0
    %v9597 = vpop.f32.mrb[0].mxu0
    %v9598 = vadd.f32 %v9414, %v9597
    %v9599 = vpop.f32.mrb[0].mxu0
    %9600 = vmatprep.mubr.bf16.mxu0 %v9376
    %9601 = vmatmul.mubr.bf16.gmra.mrb[0].mxu0 %v9375
    %v9602 = vpop.f32.mrb[0].mxu0
    %v9603 = vadd.f32 %v9414, %v9602
    %v9604 = vpop.f32.mrb[0].mxu0
    %v9605 = vpop.f32.mrb[0].mxu0
    %v9606 = vadd.f32 %v9414, %v9605
    %v9607 = vpop.f32.mrb[0].mxu0
    %9608 = vdwg.mxu0
    %9609 = vst [vmem:[#allocation14] sm:$0xff] %v9547
    %9610 = vst [vmem:[#allocation14 + $0x8] sm:$0xff] %v9550
    %9611 = vst [vmem:[#allocation14 + $0x10] sm:$0xff] %v9555
    %9612 = vst [vmem:[#allocation14 + $0x18] sm:$0xff] %v9558
    %9613 = vst [vmem:[#allocation14 + $0x20] sm:$0xff] %v9563
    %9614 = vst [vmem:[#allocation14 + $0x28] sm:$0xff] %v9566
    %9615 = vst [vmem:[#allocation14 + $0x30] sm:$0xff] %v9571
    %9616 = vst [vmem:[#allocation14 + $0x38] sm:$0xff] %v9574
    %9617 = vst [vmem:[#allocation14 + $0x40] sm:$0xff] %v9579
    %9618 = vst [vmem:[#allocation14 + $0x48] sm:$0xff] %v9582
    %9619 = vst [vmem:[#allocation14 + $0x50] sm:$0xff] %v9587
    %9620 = vst [vmem:[#allocation14 + $0x58] sm:$0xff] %v9590
    %9621 = vst [vmem:[#allocation14 + $0x60] sm:$0xff] %v9595
    %9622 = vst [vmem:[#allocation14 + $0x68] sm:$0xff] %v9598
    %9623 = vst [vmem:[#allocation14 + $0x70] sm:$0xff] %v9603
    %9624 = vst [vmem:[#allocation14 + $0x78] sm:$0xff] %v9606
    // Predicated region
    $region58: #{tpu_custom_call.1} parent=1 // pred_check
      _
    $region59: #{tpu_custom_call.1} parent=1 // pred_check_branch
      %9626 = sbr.rel (0) target = $region61
    $region60: #{tpu_custom_call.1} parent=1 // pred_region
      %s9628 = ssub.s32 2048, 2048
      %9629 = vsyncadd [#allocation4], %s9628
      %s9630 = sshll.u32 [#allocation14], 4
      %s9631 = int_to_ptr.vmem [resolvable:$true] %s9630
      %9636 = dma.vmem_to_hbm [thread:$0]  %s9631, 2048, %s7, [#allocation4], 128, 128, 8
    $region61: #{tpu_custom_call.1} parent=1 // pred_fallthru
      _
    // Predicated region
    $region62: #{tpu_custom_call.1} parent=1 // pred_check
      _
    $region63: #{tpu_custom_call.1} parent=1 // pred_check_branch
      %9638 = sbr.rel (0) target = $region65
    $region64: #{tpu_custom_call.1} parent=1 // pred_region
      %9639 = dma.done [#allocation4], 2048
    $region65: #{tpu_custom_call.1} parent=1 // pred_fallthru
      _
    %9640 = vsyncpa [#allocation3], 1
    %9641 = vsyncpa [#allocation6], 1
    %9642 = vsyncpa [#allocation9], 1
    %9643 = vsyncpa [#allocation12], 1
    %9644 = vsyncpa [#allocation4], 1

</llo_original>
